<compile_context>
chip_gen: v5e
topology: v5e:2x2
jax: 0.10.0
libtpu: 0.0.40
codegen_flags: <defaults>
</compile_context>

<pallas_src>
import jax
import jax.numpy as jnp
from jax.experimental import pallas as pl
from jax.experimental.pallas import tpu as pltpu


def distmat_pair_kernel(yi_ref, yjt_ref, ajb_ref, w2t_ref, out_ref):
    # yi  : (1, T, H)     row tile of y = linear1(x)
    # yjt : (1, H, T)     column tile of y, pre-transposed and pre-scaled by -2
    # ajb : (1, D, 1, T)  a[n, d, j] + b2[d]  (column tile), a = sum_h w2[h,d]*y[j,h]^2
    # w2t : (D, 1, H)     w2t[d, 0, h] = w2[h, d]
    # out : (1, D, T, T)  log_softmax over d of linear2((y_i - y_j)^2), (i, j) layout
    D = w2t_ref.shape[0]
    H = w2t_ref.shape[2]
    TI = yi_ref.shape[1]
    TJ = yjt_ref.shape[2]

    yi = yi_ref[0]                                     # (T, H)
    yjt_m2 = yjt_ref[0]                                # (H, T), already carries the -2

    # scaled[d, i, h] = w2[h, d] * y_i[i, h]
    scaled = w2t_ref[...] * yi[None, :, :]             # (D, T, H)

    # a_i[d, i] = sum_h w2[h, d] * y_i[i, h]^2   (cheap recompute; review item 9)
    ai = jnp.sum(scaled * yi[None, :, :], axis=-1, keepdims=True)   # (D, T, 1)

    # ---- c[d,i,j] = sum_h scaled[d,i,h] * (-2*y_j[j,h]) as ONE flat MXU matmul -----
    # bf16_3x: X = x_hi + x_lo (exact 2-term split); X@Y ~= x_hi@y_hi + x_hi@y_lo
    # + x_lo@y_hi (dropped lo*lo term is ~2^-16 relative -> ~f32 accuracy).
    s = scaled.reshape(D * TI, H)                      # (D*T, H) f32
    s_hi = s.astype(jnp.bfloat16)
    s_lo = (s - s_hi.astype(jnp.float32)).astype(jnp.bfloat16)
    t_hi = yjt_m2.astype(jnp.bfloat16)
    t_lo = (yjt_m2 - t_hi.astype(jnp.float32)).astype(jnp.bfloat16)

    c = jnp.dot(s_hi, t_hi, preferred_element_type=jnp.float32)
    c = c + jnp.dot(s_hi, t_lo, preferred_element_type=jnp.float32)
    c = c + jnp.dot(s_lo, t_hi, preferred_element_type=jnp.float32)
    c = c.reshape(D, TI, TJ)                           # (D, T, T), includes the -2

    # linear2((y_i - y_j)^2) = a_i + (a_j + b2) - 2*<w2-weighted y_i, y_j>
    logits = ai + ajb_ref[0] + c                       # (D, T, T)

    # log-softmax over the class axis d (leading axis -> pure elementwise VPU reduce).
    m = jnp.max(logits, axis=0, keepdims=True)
    lse = jnp.log(jnp.sum(jnp.exp(logits - m), axis=0, keepdims=True))
    out_ref[0] = (logits - (m + lse)).astype(out_ref.dtype)


def dist_mat_prediction(x, w1, b1, w2, b2, *, out_dtype=jnp.float32):
    """x: (N, S, E) -> (N, D, S, S), matching DistMatPrediction.forward.

    Weights are stored transposed relative to nn.Linear: w1 (E, H), w2 (H, D).
    out_dtype=jnp.bfloat16 halves the dominant N*D*S^2 HBM write (helps v5e/v6e) if the
    consumer tolerates it; default float32 matches the PyTorch module.
    """
    N, S, E = x.shape
    H = w1.shape[1]
    D = w2.shape[1]

    hi = jax.lax.Precision.HIGHEST
    # Tiny O(N*S) preamble in plain XLA; all O(N*S^2) pair work is in the kernel.
    y = jnp.dot(x, w1, precision=hi) + b1                         # (N, S, H)

    # Pad S up to a multiple of 128 so every tile (and every output store) is
    # lane-dense; padded pairs are finite (zeros -> b2 logits) and sliced off below.
    S_pad = -(-S // 128) * 128
    if S_pad != S:
        y = jnp.pad(y, ((0, 0), (0, S_pad - S), (0, 0)))
    # T=256 keeps the per-step working set ~20 MiB (fits v7x's 64 MiB physical VMEM
    # after the broadcast/liveness fixes); fall back to 128 otherwise.
    T = 256 if S_pad % 256 == 0 else 128

    a = jnp.einsum("nsh,hd->nds", y * y, w2, precision=hi)        # (N, D, S_pad)
    a_colsb = a[:, :, None, :] + b2.reshape(1, D, 1, 1)           # (N, D, 1, S_pad), +b2 folded
    yt_m2 = -2.0 * jnp.swapaxes(y, 1, 2)                          # (N, H, S_pad), -2 folded (exact)
    w2t = jnp.transpose(w2).reshape(D, 1, H)                      # w2t[d, 0, h] = w2[h, d]

    out = pl.pallas_call(
        distmat_pair_kernel,
        out_shape=jax.ShapeDtypeStruct((N, D, S_pad, S_pad), out_dtype),
        grid_spec=pltpu.PrefetchScalarGridSpec(
            num_scalar_prefetch=0,
            grid=(N, S_pad // T, S_pad // T),
            in_specs=[
                pl.BlockSpec((1, T, H), lambda n, i, j: (n, i, 0)),        # y row tile
                pl.BlockSpec((1, H, T), lambda n, i, j: (n, 0, j)),        # -2*y^T col tile
                pl.BlockSpec((1, D, 1, T), lambda n, i, j: (n, 0, 0, j)),  # a col tile (+b2)
                pl.BlockSpec((D, 1, H), lambda n, i, j: (0, 0, 0)),        # w2^T
            ],
            out_specs=pl.BlockSpec((1, D, T, T), lambda n, i, j: (n, 0, i, j)),
        ),
        compiler_params=pltpu.CompilerParams(
            # Every (n, i, j) tile is independent -> shard freely across TensorCores.
            dimension_semantics=("parallel", "parallel", "parallel"),
            # ~20 MiB working set at T=256 (8 MiB double-buffered output + ~12 MiB
            # intermediates); 48 MiB stays under v7x's 64 MiB physical VMEM.
            vmem_limit_bytes=48 * 1024 * 1024,
        ),
    )(y, yt_m2, a_colsb, w2t)

    if S_pad != S:
        out = out[:, :, :S, :S]
    return out


def reference(x, w1, b1, w2, b2):
    """Pure-JAX reference mirroring the PyTorch forward."""
    hi = jax.lax.Precision.HIGHEST
    y = jnp.dot(x, w1, precision=hi) + b1
    diff = y[:, :, None, :] - y[:, None, :, :]
    logits = jnp.dot(diff * diff, w2, precision=hi) + b2
    lp = jax.nn.log_softmax(logits, axis=-1)
    return jnp.transpose(lp, (0, 3, 2, 1))


def _run_case(key, N, S, hidden, dm_hidden, d_size):
    k1, k2, k3, k4, kx = jax.random.split(key, 5)
    w1 = jax.random.uniform(k1, (hidden, dm_hidden), jnp.float32, -1.0, 1.0) / jnp.sqrt(hidden)
    b1 = jax.random.uniform(k2, (1, dm_hidden), jnp.float32, -1.0, 1.0) / jnp.sqrt(hidden)
    w2 = jax.random.uniform(k3, (dm_hidden, d_size), jnp.float32, -1.0, 1.0) / jnp.sqrt(dm_hidden)
    b2 = jax.random.uniform(k4, (1, d_size), jnp.float32, -1.0, 1.0) / jnp.sqrt(dm_hidden)
    x = jax.random.normal(kx, (N, S, hidden), dtype=jnp.float32)

    out = jax.block_until_ready(dist_mat_prediction(x, w1, b1, w2, b2))
    assert out.shape == (N, d_size, S, S), out.shape

    ref = reference(x, w1, b1, w2, b2)
    err = float(jnp.max(jnp.abs(out - ref)))
    assert jnp.allclose(out, ref, atol=2e-3, rtol=2e-3), err
    return err


if __name__ == "__main__":
    # Module hyperparameters (small, consistent with the forward's shape contract)
    hidden = 32                           # E
    dm_hidden = 32                        # H
    relative_3d_vocab_size = 20
    d_size = relative_3d_vocab_size - 4   # D = 16

    key = jax.random.PRNGKey(0)
    k_a, k_b = jax.random.split(key)

    # Case 1: S=8 exercises the pad-to-128 path (lane-dense stores + slice back).
    _run_case(k_a, N=2, S=8, hidden=hidden, dm_hidden=dm_hidden, d_size=d_size)
    # Case 2: S=128 exercises the aligned (no-pad) path.
    _run_case(k_b, N=1, S=128, hidden=hidden, dm_hidden=dm_hidden, d_size=d_size)

    print("KERNEL_OK")
</pallas_src>

<mosaic_0001>
module attributes {stable_mosaic.version = 11 : i64} {
  func.func @distmat_pair_kernel(%arg0: i32, %arg1: i32, %arg2: i32, %arg3: memref<1x128x32xf32, #tpu.memory_space<vmem>>, %arg4: memref<1x32x128xf32, #tpu.memory_space<vmem>>, %arg5: memref<1x16x1x128xf32, #tpu.memory_space<vmem>>, %arg6: memref<16x1x32xf32, #tpu.memory_space<vmem>>, %arg7: memref<1x16x128x128xf32, #tpu.memory_space<vmem>>) attributes {dimension_semantics = [#tpu.dimension_semantics<parallel>, #tpu.dimension_semantics<parallel>, #tpu.dimension_semantics<parallel>], iteration_bounds = array<i64: 2, 1, 1>, scalar_prefetch = 0 : i64, scratch_operands = 0 : i64, tpu.core_type = #tpu.core_type<tc>, window_params = [{transform_indices = @transform_0, window_bounds = array<i64: 1, 128, 32>}, {transform_indices = @transform_1, window_bounds = array<i64: 1, 32, 128>}, {transform_indices = @transform_2, window_bounds = array<i64: 1, 16, 1, 128>}, {pipeline_mode = #tpu.pipeline_mode<synchronous>, transform_indices = @transform_3, window_bounds = array<i64: 16, 1, 32>}, {transform_indices = @transform_4, window_bounds = array<i64: 1, 16, 128, 128>}]} {
    %c0 = arith.constant 0 : index
    %c0_0 = arith.constant 0 : index
    %c0_1 = arith.constant 0 : index
    %0 = vector.load %arg3[%c0, %c0_0, %c0_1] : memref<1x128x32xf32, #tpu.memory_space<vmem>>, vector<1x128x32xf32>
    %1 = vector.shape_cast %0 : vector<1x128x32xf32> to vector<128x32xf32>
    %c0_2 = arith.constant 0 : index
    %c0_3 = arith.constant 0 : index
    %c0_4 = arith.constant 0 : index
    %2 = vector.load %arg4[%c0_2, %c0_3, %c0_4] : memref<1x32x128xf32, #tpu.memory_space<vmem>>, vector<1x32x128xf32>
    %3 = vector.shape_cast %2 : vector<1x32x128xf32> to vector<32x128xf32>
    %c0_5 = arith.constant 0 : index
    %c0_6 = arith.constant 0 : index
    %c0_7 = arith.constant 0 : index
    %4 = vector.load %arg6[%c0_5, %c0_6, %c0_7] : memref<16x1x32xf32, #tpu.memory_space<vmem>>, vector<16x1x32xf32>
    %5 = vector.shape_cast %1 : vector<128x32xf32> to vector<1x128x32xf32>
    %6 = vector.broadcast %4 : vector<16x1x32xf32> to vector<16x128x32xf32>
    %7 = vector.broadcast %5 : vector<1x128x32xf32> to vector<16x128x32xf32>
    %8 = arith.mulf %6, %7 : vector<16x128x32xf32>
    %9 = vector.shape_cast %1 : vector<128x32xf32> to vector<1x128x32xf32>
    %10 = vector.broadcast %9 : vector<1x128x32xf32> to vector<16x128x32xf32>
    %11 = arith.mulf %8, %10 : vector<16x128x32xf32>
    %cst = arith.constant dense<0.000000e+00> : vector<16x128xf32>
    %12 = vector.multi_reduction <add>, %11, %cst [2] : vector<16x128x32xf32> to vector<16x128xf32>
    %13 = vector.shape_cast %12 : vector<16x128xf32> to vector<16x128x1xf32>
    %14 = vector.shape_cast %8 : vector<16x128x32xf32> to vector<2048x32xf32>
    %15 = arith.truncf %14 : vector<2048x32xf32> to vector<2048x32xbf16>
    %16 = arith.extf %15 : vector<2048x32xbf16> to vector<2048x32xf32>
    %17 = arith.subf %14, %16 : vector<2048x32xf32>
    %18 = arith.truncf %17 : vector<2048x32xf32> to vector<2048x32xbf16>
    %19 = arith.truncf %3 : vector<32x128xf32> to vector<32x128xbf16>
    %20 = arith.extf %19 : vector<32x128xbf16> to vector<32x128xf32>
    %21 = arith.subf %3, %20 : vector<32x128xf32>
    %22 = arith.truncf %21 : vector<32x128xf32> to vector<32x128xbf16>
    %cst_8 = arith.constant dense<0.000000e+00> : vector<2048x128xf32>
    %23 = tpu.matmul %15, %19, %cst_8 {dimension_numbers = #tpu.dot_dimension_numbers<[1], [0], [0], [1], [0, 0, 1, 1], [], []>} : vector<2048x32xbf16>, vector<32x128xbf16>, vector<2048x128xf32> -> vector<2048x128xf32>
    %cst_9 = arith.constant dense<0.000000e+00> : vector<2048x128xf32>
    %24 = tpu.matmul %15, %22, %cst_9 {dimension_numbers = #tpu.dot_dimension_numbers<[1], [0], [0], [1], [0, 0, 1, 1], [], []>} : vector<2048x32xbf16>, vector<32x128xbf16>, vector<2048x128xf32> -> vector<2048x128xf32>
    %25 = arith.addf %23, %24 : vector<2048x128xf32>
    %cst_10 = arith.constant dense<0.000000e+00> : vector<2048x128xf32>
    %26 = tpu.matmul %18, %19, %cst_10 {dimension_numbers = #tpu.dot_dimension_numbers<[1], [0], [0], [1], [0, 0, 1, 1], [], []>} : vector<2048x32xbf16>, vector<32x128xbf16>, vector<2048x128xf32> -> vector<2048x128xf32>
    %27 = arith.addf %25, %26 : vector<2048x128xf32>
    %28 = vector.shape_cast %27 : vector<2048x128xf32> to vector<16x128x128xf32>
    %c0_11 = arith.constant 0 : index
    %c0_12 = arith.constant 0 : index
    %c0_13 = arith.constant 0 : index
    %c0_14 = arith.constant 0 : index
    %29 = vector.load %arg5[%c0_11, %c0_12, %c0_13, %c0_14] : memref<1x16x1x128xf32, #tpu.memory_space<vmem>>, vector<1x16x1x128xf32>
    %30 = vector.shape_cast %29 : vector<1x16x1x128xf32> to vector<16x1x128xf32>
    %31 = vector.broadcast %13 : vector<16x128x1xf32> to vector<16x128x128xf32>
    %32 = vector.broadcast %30 : vector<16x1x128xf32> to vector<16x128x128xf32>
    %33 = arith.addf %31, %32 : vector<16x128x128xf32>
    %34 = arith.addf %33, %28 : vector<16x128x128xf32>
    %cst_15 = arith.constant dense<0xFF800000> : vector<128x128xf32>
    %35 = vector.multi_reduction <maximumf>, %34, %cst_15 [0] : vector<16x128x128xf32> to vector<128x128xf32>
    %36 = vector.shape_cast %35 : vector<128x128xf32> to vector<1x128x128xf32>
    %37 = vector.broadcast %36 : vector<1x128x128xf32> to vector<16x128x128xf32>
    %38 = arith.subf %34, %37 : vector<16x128x128xf32>
    %39 = math.exp %38 : vector<16x128x128xf32>
    %cst_16 = arith.constant dense<0.000000e+00> : vector<128x128xf32>
    %40 = vector.multi_reduction <add>, %39, %cst_16 [0] : vector<16x128x128xf32> to vector<128x128xf32>
    %41 = vector.shape_cast %40 : vector<128x128xf32> to vector<1x128x128xf32>
    %42 = math.log %41 : vector<1x128x128xf32>
    %43 = arith.addf %36, %42 : vector<1x128x128xf32>
    %44 = vector.broadcast %43 : vector<1x128x128xf32> to vector<16x128x128xf32>
    %45 = arith.subf %34, %44 : vector<16x128x128xf32>
    %c0_17 = arith.constant 0 : index
    %c0_18 = arith.constant 0 : index
    %c0_19 = arith.constant 0 : index
    %c0_20 = arith.constant 0 : index
    %46 = vector.load %arg7[%c0_17, %c0_18, %c0_19, %c0_20] : memref<1x16x128x128xf32, #tpu.memory_space<vmem>>, vector<1x16x128x128xf32>
    %47 = vector.shape_cast %46 : vector<1x16x128x128xf32> to vector<16x128x128xf32>
    %48 = vector.shape_cast %45 : vector<16x128x128xf32> to vector<1x16x128x128xf32>
    tpu.vector_store %arg7[%c0_17, %c0_18, %c0_19, %c0_20], %48 {strides = array<i32>} : memref<1x16x128x128xf32, #tpu.memory_space<vmem>>, vector<1x16x128x128xf32>,
    return
  }
  func.func @transform_0(%arg0: i32, %arg1: i32, %arg2: i32) -> (i32, i32, i32) {
    %c0_i32 = arith.constant 0 : i32
    %c0_i32_0 = arith.constant 0 : i32
    return %arg0, %arg1, %c0_i32 : i32, i32, i32
  }
  func.func @transform_1(%arg0: i32, %arg1: i32, %arg2: i32) -> (i32, i32, i32) {
    %c0_i32 = arith.constant 0 : i32
    %c0_i32_0 = arith.constant 0 : i32
    return %arg0, %c0_i32, %arg2 : i32, i32, i32
  }
  func.func @transform_2(%arg0: i32, %arg1: i32, %arg2: i32) -> (i32, i32, i32, i32) {
    %c0_i32 = arith.constant 0 : i32
    %c0_i32_0 = arith.constant 0 : i32
    %c0_i32_1 = arith.constant 0 : i32
    return %arg0, %c0_i32, %c0_i32_0, %arg2 : i32, i32, i32, i32
  }
  func.func @transform_3(%arg0: i32, %arg1: i32, %arg2: i32) -> (i32, i32, i32) {
    %c0_i32 = arith.constant 0 : i32
    %c0_i32_0 = arith.constant 0 : i32
    %c0_i32_1 = arith.constant 0 : i32
    %c0_i32_2 = arith.constant 0 : i32
    return %c0_i32, %c0_i32_0, %c0_i32_1 : i32, i32, i32
  }
  func.func @transform_4(%arg0: i32, %arg1: i32, %arg2: i32) -> (i32, i32, i32, i32) {
    %c0_i32 = arith.constant 0 : i32
    %c0_i32_0 = arith.constant 0 : i32
    return %arg0, %c0_i32, %arg1, %arg2 : i32, i32, i32, i32
  }
}

</mosaic_0001>

<llo_original>
// kernel: tpu_custom_call.1
$region0: #{tpu_custom_call.1}
  #allocation0 [shape = 'u32[]', space=smem, size = 0x4, offset = 0x4, fixed_abs, tag = 'smem constant byte address 0x4 - core index']
  #allocation1 [shape = 'u32[72,128]{1,0:T(1,128)}', space=vmem, size = 0x9000, scoped, tag = 'internal scratch']
  %s0 = inlined_call_operand.vmem [shape: f32[2,128,32], index: 0, kind: input, shape index: {}]
  %s1 = inlined_call_operand.hbm [shape: f32[2,32,128], index: 1, kind: input, shape index: {}]
  %s2 = inlined_call_operand.hbm [shape: f32[2,16,1,128], index: 2, kind: input, shape index: {}]
  %s3 = inlined_call_operand.hbm [shape: f32[16,1,32], index: 3, kind: input, shape index: {}]
  %s4 = inlined_call_operand.hbm [shape: f32[2,16,128,128], index: 4, kind: output, shape index: {}]
  %s5 = sld [smem:[#allocation0]]
  $region61: #{tpu_custom_call.1} parent=0
    _
  %s7 = ssub.s32 1, %s5
  %s8 = scalar_select 0, %s7, %s5
  $region1: #{tpu_custom_call.1} parent=0
    #allocation2 [shape = 'u8[32768]{0}', space=vmem, size = 0x8000, scoped, tag = 'input window, operand 1']
    #allocation3 [shape = 's32[2]{0}', space=sflag, size = 0x8, scoped, tag = 'scoped memory for tpu_custom_call.1']
    #allocation4 [shape = 's32[2]{0}', space=sflag, size = 0x8, scoped, tag = 'scoped memory for tpu_custom_call.1']
    #allocation5 [shape = 'u8[16384]{0}', space=vmem, size = 0x4000, scoped, tag = 'input window, operand 2']
    #allocation6 [shape = 's32[2]{0}', space=sflag, size = 0x8, scoped, tag = 'scoped memory for tpu_custom_call.1']
    #allocation7 [shape = 'u8[8192]{0}', space=vmem, size = 0x2000, scoped, tag = 'input window, operand 3, single buffered']
    #allocation8 [shape = 'u8[2097152]{0}', space=vmem, size = 0x200000, scoped, tag = 'output window, operand 0']
    %9 = vsyncpa [#allocation3], 0
    %s10 = scalar_lea.sflag [#allocation3], 1
    %11 = vsyncpa %s10, 0
    %12 = vsyncpa [#allocation6], 0
    %s13 = scalar_lea.sflag [#allocation6], 1
    %14 = vsyncpa %s13, 0
    %15 = vsyncpa [#allocation4], 0
    %s16 = scalar_lea.sflag [#allocation4], 1
    %17 = vsyncpa %s16, 0
    loop: start=0, step=1, limit=4
    $region2: #{tpu_custom_call.1} parent=1 // loop_pre_header
      _
    $region3: #{tpu_custom_call.1} parent=1 // loop_header
      %s19 = sphi 0, %s23
      %p20 = scmp.ge.s32.totalorder %s19, 4
      %s26 = sphi 0, %s45
      %s27 = sphi 0, %s41
      %s28 = sphi 0, %s37
      %s29 = sphi 0, %s26
      %s30 = sphi 0, %s27
      %s31 = sphi 0, %s28
      %s32 = sphi 0, %s29
      %s33 = sphi 0, %s30
      %s34 = sphi 0, %s31
      %s50 = sphi 0, %s52
      %s53 = sphi 0, %s50
      %s54 = sphi 0, %s53
      %s70 = sphi 0, %s54
      %s78 = sphi 0, %s80
      %s81 = sphi 0, %s78
      %s82 = sphi 0, %s81
      %s98 = sphi 0, %s82
      %s106 = sphi 0, %s108
      %s109 = sphi 0, %s106
      %s110 = sphi 0, %s109
      %s126 = sphi 0, %s110
      %s130 = sphi 0, %s130
      %s132 = sphi 0, %s130
      %s133 = sphi 0, %s132
      %s147 = sphi 0, %s133
      %s157 = sphi 0, %s159
      %s160 = sphi 0, %s157
      %s161 = sphi 0, %s160
      %s177 = sphi 0, %s161
    $region4: #{tpu_custom_call.1} parent=1 // loop_header_branch
      %22 = sbr.rel (%p20) target = $region8
    $region5: #{tpu_custom_call.1} parent=1 // loop_body
      %s24 = ssub.s32 %s19, 1
      %s25 = ssub.s32 %s19, 2
      %s35 = sadd.s32 1, %s28
      %p36 = scmp.ge.s32.totalorder %s35, 1
      %s37 = scalar_select %p36, 0, %s35
      %s38 = sadd.s32 1, %s27
      %s39 = scalar_select %p36, %s38, %s27
      %p40 = scmp.ge.s32.totalorder %s39, 1
      %s41 = scalar_select %p40, 0, %s39
      %s42 = sadd.s32 1, %s26
      %s43 = scalar_select %p40, %s42, %s26
      %p44 = scmp.ge.s32.totalorder %s43, 2
      %s45 = scalar_select %p44, 0, %s43
      %s46 = ssub.s32 %s26, %s45
      %s47 = ssub.s32 %s27, %s41
      %s48 = sor.u32 %s46, %s47
      %p49 = scmp.eq.s32.totalorder %s48, 0
      %s51 = sadd.s32 %s50, 1
      %s52 = scalar_select %p49, %s50, %s51
      %p55 = pneg %p49
      %p56 = scmp.eq.s32.totalorder %s19, 1
      %p57 = por %p55, %p56
      %p58 = scmp.ne.s32.totalorder %s50, %s53
      %p59 = scmp.eq.s32.totalorder %s19, 0
      %p60 = por %p58, %p59
      %p61 = scmp.ne.s32.totalorder %s50, %s53
      %p62 = scmp.eq.s32.totalorder %s24, 1
      %p63 = por %p61, %p62
      %p64 = scmp.ne.s32.totalorder %s53, %s54
      %p65 = scmp.eq.s32.totalorder %s24, 0
      %p66 = por %p64, %p65
      %p67 = scmp.ne.s32.totalorder %s53, %s54
      %p68 = scmp.eq.s32.totalorder %s25, 1
      %p69 = por %p67, %p68
      %p71 = scmp.ne.s32.totalorder %s54, %s70
      %p72 = scmp.eq.s32.totalorder %s25, 0
      %p73 = por %p71, %p72
      %s74 = ssub.s32 %s26, %s45
      %s75 = ssub.s32 %s28, %s37
      %s76 = sor.u32 %s74, %s75
      %p77 = scmp.eq.s32.totalorder %s76, 0
      %s79 = sadd.s32 %s78, 1
      %s80 = scalar_select %p77, %s78, %s79
      %p83 = pneg %p77
      %p84 = scmp.eq.s32.totalorder %s19, 1
      %p85 = por %p83, %p84
      %p86 = scmp.ne.s32.totalorder %s78, %s81
      %p87 = scmp.eq.s32.totalorder %s19, 0
      %p88 = por %p86, %p87
      %p89 = scmp.ne.s32.totalorder %s78, %s81
      %p90 = scmp.eq.s32.totalorder %s24, 1
      %p91 = por %p89, %p90
      %p92 = scmp.ne.s32.totalorder %s81, %s82
      %p93 = scmp.eq.s32.totalorder %s24, 0
      %p94 = por %p92, %p93
      %p95 = scmp.ne.s32.totalorder %s81, %s82
      %p96 = scmp.eq.s32.totalorder %s25, 1
      %p97 = por %p95, %p96
      %p99 = scmp.ne.s32.totalorder %s82, %s98
      %p100 = scmp.eq.s32.totalorder %s25, 0
      %p101 = por %p99, %p100
      %s102 = ssub.s32 %s26, %s45
      %s103 = ssub.s32 %s28, %s37
      %s104 = sor.u32 %s102, %s103
      %p105 = scmp.eq.s32.totalorder %s104, 0
      %s107 = sadd.s32 %s106, 1
      %s108 = scalar_select %p105, %s106, %s107
      %p111 = pneg %p105
      %p112 = scmp.eq.s32.totalorder %s19, 1
      %p113 = por %p111, %p112
      %p114 = scmp.ne.s32.totalorder %s106, %s109
      %p115 = scmp.eq.s32.totalorder %s19, 0
      %p116 = por %p114, %p115
      %p117 = scmp.ne.s32.totalorder %s106, %s109
      %p118 = scmp.eq.s32.totalorder %s24, 1
      %p119 = por %p117, %p118
      %p120 = scmp.ne.s32.totalorder %s109, %s110
      %p121 = scmp.eq.s32.totalorder %s24, 0
      %p122 = por %p120, %p121
      %p123 = scmp.ne.s32.totalorder %s109, %s110
      %p124 = scmp.eq.s32.totalorder %s25, 1
      %p125 = por %p123, %p124
      %p127 = scmp.ne.s32.totalorder %s110, %s126
      %p128 = scmp.eq.s32.totalorder %s25, 0
      %p129 = por %p127, %p128
      %s131 = sadd.s32 %s130, 1
      %p134 = scmp.eq.s32.totalorder %s19, 1
      %p135 = scmp.ne.s32.totalorder %s130, %s132
      %p136 = scmp.eq.s32.totalorder %s19, 0
      %p137 = por %p135, %p136
      %p138 = scmp.ne.s32.totalorder %s130, %s132
      %p139 = scmp.eq.s32.totalorder %s24, 1
      %p140 = por %p138, %p139
      %p141 = scmp.ne.s32.totalorder %s132, %s133
      %p142 = scmp.eq.s32.totalorder %s24, 0
      %p143 = por %p141, %p142
      %p144 = scmp.ne.s32.totalorder %s132, %s133
      %p145 = scmp.eq.s32.totalorder %s25, 1
      %p146 = por %p144, %p145
      %p148 = scmp.ne.s32.totalorder %s133, %s147
      %p149 = scmp.eq.s32.totalorder %s25, 0
      %p150 = por %p148, %p149
      %s151 = ssub.s32 %s26, %s45
      %s152 = ssub.s32 %s27, %s41
      %s153 = sor.u32 %s151, %s152
      %s154 = ssub.s32 %s28, %s37
      %s155 = sor.u32 %s153, %s154
      %p156 = scmp.eq.s32.totalorder %s155, 0
      %s158 = sadd.s32 %s157, 1
      %s159 = scalar_select %p156, %s157, %s158
      %p162 = pneg %p156
      %p163 = scmp.eq.s32.totalorder %s19, 1
      %p164 = por %p162, %p163
      %p165 = scmp.ne.s32.totalorder %s157, %s160
      %p166 = scmp.eq.s32.totalorder %s19, 0
      %p167 = por %p165, %p166
      %p168 = scmp.ne.s32.totalorder %s157, %s160
      %p169 = scmp.eq.s32.totalorder %s24, 1
      %p170 = por %p168, %p169
      %p171 = scmp.ne.s32.totalorder %s160, %s161
      %p172 = scmp.eq.s32.totalorder %s24, 0
      %p173 = por %p171, %p172
      %p174 = scmp.ne.s32.totalorder %s160, %s161
      %p175 = scmp.eq.s32.totalorder %s25, 1
      %p176 = por %p174, %p175
      %p178 = scmp.ne.s32.totalorder %s161, %s177
      %p179 = scmp.eq.s32.totalorder %s25, 0
      %p180 = por %p178, %p179
      %p181 = scmp.le.s32.totalorder 1, %s19
      %p182 = scmp.lt.s32.totalorder %s19, 3
      %p183 = pnand %p181, %p182
      %p184 = pneg %p183
      // Predicated region
      $region9: #{tpu_custom_call.1} parent=5 // pred_check
        _
      $region10: #{tpu_custom_call.1} parent=5 // pred_check_branch
        %186 = sbr.rel (%p183) target = $region12
      $region11: #{tpu_custom_call.1} parent=5 // pred_region
        %s187 = ssub.s32 %s19, 1
        // Predicated region
        $region13: #{tpu_custom_call.1} parent=11 // pred_check
          %p188 = pneg %p143
        $region14: #{tpu_custom_call.1} parent=11 // pred_check_branch
          %190 = sbr.rel (%p188) target = $region16
        $region15: #{tpu_custom_call.1} parent=11 // pred_region
          %192 = vsyncadd [#allocation6], 0
          %s193 = sshll.u32 %s3, 4
          %s194 = int_to_ptr.hbm [resolvable:$true] %s193
          %s195 = sshll.u32 [#allocation7], 4
          %s196 = int_to_ptr.vmem [resolvable:$true] %s195
          %201 = dma.hbm_to_vmem [thread:$0]  %s194, 256, %s196, [#allocation6], 16, 16, 1
        $region16: #{tpu_custom_call.1} parent=11 // pred_fallthru
          _
      $region12: #{tpu_custom_call.1} parent=5 // pred_fallthru
        _
      %p202 = scmp.lt.s32.totalorder %s19, 2
      // Predicated region
      $region17: #{tpu_custom_call.1} parent=5 // pred_check
        %p203 = pneg %p202
      $region18: #{tpu_custom_call.1} parent=5 // pred_check_branch
        %205 = sbr.rel (%p203) target = $region20
      $region19: #{tpu_custom_call.1} parent=5 // pred_region
        // Predicated region
        $region21: #{tpu_custom_call.1} parent=19 // pred_check
          %p206 = pneg %p60
        $region22: #{tpu_custom_call.1} parent=19 // pred_check_branch
          %208 = sbr.rel (%p206) target = $region24
        $region23: #{tpu_custom_call.1} parent=19 // pred_region
          %s209 = smul.u32 16, %s27
          %p210 = scmp.lt.s32.totalorder %s26, 1
          %s211 = scalar_select %p210, %s26, 1
          %p212 = scmp.lt.s32.totalorder %s209, 15
          %s213 = scalar_select %p212, %s209, 15
          %s214 = smul.addr %s211, 16
          %s215 = sadd.s32 %s213, %s214
          %s216 = smul.addr %s215, 8
          %s217 = scalar_lea.vmem %s0, %s216
          %s218 = smul.u32 16, %s27
        $region24: #{tpu_custom_call.1} parent=19 // pred_fallthru
          _
        // Predicated region
        $region25: #{tpu_custom_call.1} parent=19 // pred_check
          %p219 = pneg %p88
        $region26: #{tpu_custom_call.1} parent=19 // pred_check_branch
          %221 = sbr.rel (%p219) target = $region28
        $region27: #{tpu_custom_call.1} parent=19 // pred_region
          %s222 = sand.u32 %s78, 1
          %s223 = scalar_lea.sflag [#allocation3], %s222
          %s224 = sand.u32 %s78, 1
          %s225 = smul.addr %s224, 32
          %s226 = scalar_lea.vmem [#allocation2], %s225
          %228 = vsyncadd %s223, 0
          %s229 = smul.addr %s26, 4
          %s230 = sadd.s32 %s28, %s229
          %s231 = smul.addr %s230, 8
          %s232 = scalar_lea.hbm %s1, %s231
          %s233 = sshll.u32 %s232, 4
          %s234 = int_to_ptr.hbm [resolvable:$true] %s233
          %s235 = sshll.u32 %s226, 4
          %s236 = int_to_ptr.vmem [resolvable:$true] %s235
          %241 = dma.hbm_to_vmem [thread:$0]  %s234, 512, %s236, %s223, 128, 128, 8
        $region28: #{tpu_custom_call.1} parent=19 // pred_fallthru
          _
        // Predicated region
        $region29: #{tpu_custom_call.1} parent=19 // pred_check
          %p242 = pneg %p116
        $region30: #{tpu_custom_call.1} parent=19 // pred_check_branch
          %244 = sbr.rel (%p242) target = $region32
        $region31: #{tpu_custom_call.1} parent=19 // pred_region
          %s245 = sand.u32 %s19, 1
          %s246 = scalar_lea.sflag [#allocation6], %s245
          %s247 = sand.u32 %s106, 1
          %s248 = smul.addr %s247, 16
          %s249 = scalar_lea.vmem [#allocation5], %s248
          %251 = vsyncadd %s246, 0
          %s252 = smul.addr %s26, 16
          %s253 = sadd.s32 %s28, %s252
          %s254 = scalar_lea.hbm %s2, %s253
          %s255 = sshll.u32 %s254, 4
          %s256 = int_to_ptr.hbm [resolvable:$true] %s255
          %s257 = sshll.u32 %s249, 4
          %s258 = int_to_ptr.vmem [resolvable:$true] %s257
          %263 = dma.hbm_to_vmem [thread:$0]  %s256, 256, %s258, %s246, 16, 16, 1
        $region32: #{tpu_custom_call.1} parent=19 // pred_fallthru
          _
      $region20: #{tpu_custom_call.1} parent=5 // pred_fallthru
        _
      %p264 = scmp.le.s32.totalorder 1, %s19
      %p265 = scmp.lt.s32.totalorder %s19, 3
      %p266 = pnand %p264, %p265
      %p267 = pneg %p266
      // Predicated region
      $region33: #{tpu_custom_call.1} parent=5 // pred_check
        _
      $region34: #{tpu_custom_call.1} parent=5 // pred_check_branch
        %269 = sbr.rel (%p266) target = $region36
      $region35: #{tpu_custom_call.1} parent=5 // pred_region
        %s270 = ssub.s32 %s19, 1
        %s271 = sand.u32 %s81, 1
        %s272 = scalar_lea.sflag [#allocation3], %s271
        %s273 = sand.u32 %s81, 1
        %s274 = smul.addr %s273, 32
        %s275 = scalar_lea.vmem [#allocation2], %s274
        // Predicated region
        $region37: #{tpu_custom_call.1} parent=35 // pred_check
          %p276 = pneg %p94
        $region38: #{tpu_custom_call.1} parent=35 // pred_check_branch
          %278 = sbr.rel (%p276) target = $region40
        $region39: #{tpu_custom_call.1} parent=35 // pred_region
          %280 = dma.done %s272, 512
        $region40: #{tpu_custom_call.1} parent=35 // pred_fallthru
          _
        %s281 = sand.u32 %s24, 1
        %s282 = scalar_lea.sflag [#allocation6], %s281
        %s283 = sand.u32 %s109, 1
        %s284 = smul.addr %s283, 16
        %s285 = scalar_lea.vmem [#allocation5], %s284
        // Predicated region
        $region41: #{tpu_custom_call.1} parent=35 // pred_check
          %p286 = pneg %p122
        $region42: #{tpu_custom_call.1} parent=35 // pred_check_branch
          %288 = sbr.rel (%p286) target = $region44
        $region43: #{tpu_custom_call.1} parent=35 // pred_region
          %290 = dma.done %s282, 256
        $region44: #{tpu_custom_call.1} parent=35 // pred_fallthru
          _
        // Predicated region
        $region45: #{tpu_custom_call.1} parent=35 // pred_check
          %p291 = pneg %p143
        $region46: #{tpu_custom_call.1} parent=35 // pred_check_branch
          %293 = sbr.rel (%p291) target = $region48
        $region47: #{tpu_custom_call.1} parent=35 // pred_region
          %295 = dma.done [#allocation6], 256
        $region48: #{tpu_custom_call.1} parent=35 // pred_fallthru
          _
        %s296 = smul.u32 16, %s30
        %p297 = scmp.lt.s32.totalorder %s29, 1
        %s298 = scalar_select %p297, %s29, 1
        %p299 = scmp.lt.s32.totalorder %s296, 15
        %s300 = scalar_select %p299, %s296, 15
        %s301 = smul.addr %s298, 16
        %s302 = sadd.s32 %s300, %s301
        %s303 = smul.addr %s302, 8
        %s304 = scalar_lea.vmem %s0, %s303
        %p305 = pneg %p66
        %p306 = pneg %p63
        %s307 = sand.u32 %s81, 1
        %s308 = scalar_lea.sflag [#allocation3], %s307
        %s309 = sand.u32 %s81, 1
        %s310 = smul.addr %s309, 32
        %s311 = scalar_lea.vmem [#allocation2], %s310
        %p312 = pneg %p94
        %p313 = pneg %p91
        %s314 = sand.u32 %s24, 1
        %s315 = scalar_lea.sflag [#allocation6], %s314
        %s316 = sand.u32 %s109, 1
        %s317 = smul.addr %s316, 16
        %s318 = scalar_lea.vmem [#allocation5], %s317
        %p319 = pneg %p122
        %p320 = pneg %p119
        %p321 = pneg %p143
        %p322 = pneg %p140
        %p323 = pneg %p173
        %p324 = pneg %p170
        %s325 = sand.u32 %s160, 1
        %s326 = scalar_lea.sflag [#allocation4], %s325
        %s327 = sand.u32 %s160, 1
        %s328 = smul.addr %s327, 2048
        %s329 = scalar_lea.vmem [#allocation8], %s328
        %s330 = smul.u32 16, %s30
        %p331 = scmp.lt.s32.totalorder %s29, 1
        %s332 = scalar_select %p331, %s29, 1
        %p333 = scmp.lt.s32.totalorder %s330, 15
        %s334 = scalar_select %p333, %s330, 15
        %s335 = smul.addr %s332, 16
        %s336 = sadd.s32 %s334, %s335
        %s337 = smul.addr %s336, 8
        %s338 = scalar_lea.vmem %s0, %s337
        %s339 = smul.u32 16, %s30
        %s340 = smul.u32 16, %s30
        %v342 = vld [vmem:[%s338] sm:$0xff]
        %v343 = vld [vmem:[%s338 + $0x8] sm:$0xff]
        %v344 = vld [vmem:[%s338 + $0x10] sm:$0xff]
        %v345 = vld [vmem:[%s338 + $0x18] sm:$0xff]
        %v346 = vld [vmem:[%s338 + $0x20] sm:$0xff]
        %v347 = vld [vmem:[%s338 + $0x28] sm:$0xff]
        %v348 = vld [vmem:[%s338 + $0x30] sm:$0xff]
        %v349 = vld [vmem:[%s338 + $0x38] sm:$0xff]
        %v350 = vld [vmem:[%s338 + $0x40] sm:$0xff]
        %v351 = vld [vmem:[%s338 + $0x48] sm:$0xff]
        %v352 = vld [vmem:[%s338 + $0x50] sm:$0xff]
        %v353 = vld [vmem:[%s338 + $0x58] sm:$0xff]
        %v354 = vld [vmem:[%s338 + $0x60] sm:$0xff]
        %v355 = vld [vmem:[%s338 + $0x68] sm:$0xff]
        %v356 = vld [vmem:[%s338 + $0x70] sm:$0xff]
        %v357 = vld [vmem:[%s338 + $0x78] sm:$0xff]
        %v358 = vld [vmem:[%s275] sm:$0xff]
        %v359 = vld [vmem:[%s275 + $0x8] sm:$0xff]
        %v360 = vld [vmem:[%s275 + $0x10] sm:$0xff]
        %v361 = vld [vmem:[%s275 + $0x18] sm:$0xff]
        %v362 = vld [vmem:[#allocation7] sm:$0x1]
        %v363 = vld [vmem:[#allocation7 + $0x1] sm:$0x1]
        %v364 = vld [vmem:[#allocation7 + $0x2] sm:$0x1]
        %v365 = vld [vmem:[#allocation7 + $0x3] sm:$0x1]
        %v366 = vld [vmem:[#allocation7 + $0x4] sm:$0x1]
        %v367 = vld [vmem:[#allocation7 + $0x5] sm:$0x1]
        %v368 = vld [vmem:[#allocation7 + $0x6] sm:$0x1]
        %v369 = vld [vmem:[#allocation7 + $0x7] sm:$0x1]
        %v370 = vld [vmem:[#allocation7 + $0x8] sm:$0x1]
        %v371 = vld [vmem:[#allocation7 + $0x9] sm:$0x1]
        %v372 = vld [vmem:[#allocation7 + $0xa] sm:$0x1]
        %v373 = vld [vmem:[#allocation7 + $0xb] sm:$0x1]
        %v374 = vld [vmem:[#allocation7 + $0xc] sm:$0x1]
        %v375 = vld [vmem:[#allocation7 + $0xd] sm:$0x1]
        %v376 = vld [vmem:[#allocation7 + $0xe] sm:$0x1]
        %v377 = vld [vmem:[#allocation7 + $0xf] sm:$0x1]
        %v394 = vperm.slane %v362, 0
        %v395 = vperm.slane %v363, 0
        %v396 = vperm.slane %v364, 0
        %v397 = vperm.slane %v365, 0
        %v398 = vperm.slane %v366, 0
        %v399 = vperm.slane %v367, 0
        %v400 = vperm.slane %v368, 0
        %v401 = vperm.slane %v369, 0
        %v402 = vperm.slane %v370, 0
        %v403 = vperm.slane %v371, 0
        %v404 = vperm.slane %v372, 0
        %v405 = vperm.slane %v373, 0
        %v406 = vperm.slane %v374, 0
        %v407 = vperm.slane %v375, 0
        %v408 = vperm.slane %v376, 0
        %v409 = vperm.slane %v377, 0
        %v426 = vmul.f32 %v394, %v342
        %v427 = vmul.f32 %v394, %v343
        %v428 = vmul.f32 %v394, %v344
        %v429 = vmul.f32 %v394, %v345
        %v430 = vmul.f32 %v394, %v346
        %v431 = vmul.f32 %v394, %v347
        %v432 = vmul.f32 %v394, %v348
        %v433 = vmul.f32 %v394, %v349
        %v434 = vmul.f32 %v394, %v350
        %v435 = vmul.f32 %v394, %v351
        %v436 = vmul.f32 %v394, %v352
        %v437 = vmul.f32 %v394, %v353
        %v438 = vmul.f32 %v394, %v354
        %v439 = vmul.f32 %v394, %v355
        %v440 = vmul.f32 %v394, %v356
        %v441 = vmul.f32 %v394, %v357
        %v442 = vmul.f32 %v395, %v342
        %v443 = vmul.f32 %v395, %v343
        %v444 = vmul.f32 %v395, %v344
        %v445 = vmul.f32 %v395, %v345
        %v446 = vmul.f32 %v395, %v346
        %v447 = vmul.f32 %v395, %v347
        %v448 = vmul.f32 %v395, %v348
        %v449 = vmul.f32 %v395, %v349
        %v450 = vmul.f32 %v395, %v350
        %v451 = vmul.f32 %v395, %v351
        %v452 = vmul.f32 %v395, %v352
        %v453 = vmul.f32 %v395, %v353
        %v454 = vmul.f32 %v395, %v354
        %v455 = vmul.f32 %v395, %v355
        %v456 = vmul.f32 %v395, %v356
        %v457 = vmul.f32 %v395, %v357
        %v458 = vmul.f32 %v396, %v342
        %v459 = vmul.f32 %v396, %v343
        %v460 = vmul.f32 %v396, %v344
        %v461 = vmul.f32 %v396, %v345
        %v462 = vmul.f32 %v396, %v346
        %v463 = vmul.f32 %v396, %v347
        %v464 = vmul.f32 %v396, %v348
        %v465 = vmul.f32 %v396, %v349
        %v466 = vmul.f32 %v396, %v350
        %v467 = vmul.f32 %v396, %v351
        %v468 = vmul.f32 %v396, %v352
        %v469 = vmul.f32 %v396, %v353
        %v470 = vmul.f32 %v396, %v354
        %v471 = vmul.f32 %v396, %v355
        %v472 = vmul.f32 %v396, %v356
        %v473 = vmul.f32 %v396, %v357
        %v474 = vmul.f32 %v397, %v342
        %v475 = vmul.f32 %v397, %v343
        %v476 = vmul.f32 %v397, %v344
        %v477 = vmul.f32 %v397, %v345
        %v478 = vmul.f32 %v397, %v346
        %v479 = vmul.f32 %v397, %v347
        %v480 = vmul.f32 %v397, %v348
        %v481 = vmul.f32 %v397, %v349
        %v482 = vmul.f32 %v397, %v350
        %v483 = vmul.f32 %v397, %v351
        %v484 = vmul.f32 %v397, %v352
        %v485 = vmul.f32 %v397, %v353
        %v486 = vmul.f32 %v397, %v354
        %v487 = vmul.f32 %v397, %v355
        %v488 = vmul.f32 %v397, %v356
        %v489 = vmul.f32 %v397, %v357
        %v490 = vmul.f32 %v398, %v342
        %v491 = vmul.f32 %v398, %v343
        %v492 = vmul.f32 %v398, %v344
        %v493 = vmul.f32 %v398, %v345
        %v494 = vmul.f32 %v398, %v346
        %v495 = vmul.f32 %v398, %v347
        %v496 = vmul.f32 %v398, %v348
        %v497 = vmul.f32 %v398, %v349
        %v498 = vmul.f32 %v398, %v350
        %v499 = vmul.f32 %v398, %v351
        %v500 = vmul.f32 %v398, %v352
        %v501 = vmul.f32 %v398, %v353
        %v502 = vmul.f32 %v398, %v354
        %v503 = vmul.f32 %v398, %v355
        %v504 = vmul.f32 %v398, %v356
        %v505 = vmul.f32 %v398, %v357
        %v506 = vmul.f32 %v399, %v342
        %v507 = vmul.f32 %v399, %v343
        %v508 = vmul.f32 %v399, %v344
        %v509 = vmul.f32 %v399, %v345
        %v510 = vmul.f32 %v399, %v346
        %v511 = vmul.f32 %v399, %v347
        %v512 = vmul.f32 %v399, %v348
        %v513 = vmul.f32 %v399, %v349
        %v514 = vmul.f32 %v399, %v350
        %v515 = vmul.f32 %v399, %v351
        %v516 = vmul.f32 %v399, %v352
        %v517 = vmul.f32 %v399, %v353
        %v518 = vmul.f32 %v399, %v354
        %v519 = vmul.f32 %v399, %v355
        %v520 = vmul.f32 %v399, %v356
        %v521 = vmul.f32 %v399, %v357
        %v522 = vmul.f32 %v400, %v342
        %v523 = vmul.f32 %v400, %v343
        %v524 = vmul.f32 %v400, %v344
        %v525 = vmul.f32 %v400, %v345
        %v526 = vmul.f32 %v400, %v346
        %v527 = vmul.f32 %v400, %v347
        %v528 = vmul.f32 %v400, %v348
        %v529 = vmul.f32 %v400, %v349
        %v530 = vmul.f32 %v400, %v350
        %v531 = vmul.f32 %v400, %v351
        %v532 = vmul.f32 %v400, %v352
        %v533 = vmul.f32 %v400, %v353
        %v534 = vmul.f32 %v400, %v354
        %v535 = vmul.f32 %v400, %v355
        %v536 = vmul.f32 %v400, %v356
        %v537 = vmul.f32 %v400, %v357
        %v538 = vmul.f32 %v401, %v342
        %v539 = vmul.f32 %v401, %v343
        %v540 = vmul.f32 %v401, %v344
        %v541 = vmul.f32 %v401, %v345
        %v542 = vmul.f32 %v401, %v346
        %v543 = vmul.f32 %v401, %v347
        %v544 = vmul.f32 %v401, %v348
        %v545 = vmul.f32 %v401, %v349
        %v546 = vmul.f32 %v401, %v350
        %v547 = vmul.f32 %v401, %v351
        %v548 = vmul.f32 %v401, %v352
        %v549 = vmul.f32 %v401, %v353
        %v550 = vmul.f32 %v401, %v354
        %v551 = vmul.f32 %v401, %v355
        %v552 = vmul.f32 %v401, %v356
        %v553 = vmul.f32 %v401, %v357
        %v554 = vmul.f32 %v402, %v342
        %v555 = vmul.f32 %v402, %v343
        %v556 = vmul.f32 %v402, %v344
        %v557 = vmul.f32 %v402, %v345
        %v558 = vmul.f32 %v402, %v346
        %v559 = vmul.f32 %v402, %v347
        %v560 = vmul.f32 %v402, %v348
        %v561 = vmul.f32 %v402, %v349
        %v562 = vmul.f32 %v402, %v350
        %v563 = vmul.f32 %v402, %v351
        %v564 = vmul.f32 %v402, %v352
        %v565 = vmul.f32 %v402, %v353
        %v566 = vmul.f32 %v402, %v354
        %v567 = vmul.f32 %v402, %v355
        %v568 = vmul.f32 %v402, %v356
        %v569 = vmul.f32 %v402, %v357
        %v570 = vmul.f32 %v403, %v342
        %v571 = vmul.f32 %v403, %v343
        %v572 = vmul.f32 %v403, %v344
        %v573 = vmul.f32 %v403, %v345
        %v574 = vmul.f32 %v403, %v346
        %v575 = vmul.f32 %v403, %v347
        %v576 = vmul.f32 %v403, %v348
        %v577 = vmul.f32 %v403, %v349
        %v578 = vmul.f32 %v403, %v350
        %v579 = vmul.f32 %v403, %v351
        %v580 = vmul.f32 %v403, %v352
        %v581 = vmul.f32 %v403, %v353
        %v582 = vmul.f32 %v403, %v354
        %v583 = vmul.f32 %v403, %v355
        %v584 = vmul.f32 %v403, %v356
        %v585 = vmul.f32 %v403, %v357
        %v586 = vmul.f32 %v404, %v342
        %v587 = vmul.f32 %v404, %v343
        %v588 = vmul.f32 %v404, %v344
        %v589 = vmul.f32 %v404, %v345
        %v590 = vmul.f32 %v404, %v346
        %v591 = vmul.f32 %v404, %v347
        %v592 = vmul.f32 %v404, %v348
        %v593 = vmul.f32 %v404, %v349
        %v594 = vmul.f32 %v404, %v350
        %v595 = vmul.f32 %v404, %v351
        %v596 = vmul.f32 %v404, %v352
        %v597 = vmul.f32 %v404, %v353
        %v598 = vmul.f32 %v404, %v354
        %v599 = vmul.f32 %v404, %v355
        %v600 = vmul.f32 %v404, %v356
        %v601 = vmul.f32 %v404, %v357
        %v602 = vmul.f32 %v405, %v342
        %v603 = vmul.f32 %v405, %v343
        %v604 = vmul.f32 %v405, %v344
        %v605 = vmul.f32 %v405, %v345
        %v606 = vmul.f32 %v405, %v346
        %v607 = vmul.f32 %v405, %v347
        %v608 = vmul.f32 %v405, %v348
        %v609 = vmul.f32 %v405, %v349
        %v610 = vmul.f32 %v405, %v350
        %v611 = vmul.f32 %v405, %v351
        %v612 = vmul.f32 %v405, %v352
        %v613 = vmul.f32 %v405, %v353
        %v614 = vmul.f32 %v405, %v354
        %v615 = vmul.f32 %v405, %v355
        %v616 = vmul.f32 %v405, %v356
        %v617 = vmul.f32 %v405, %v357
        %v618 = vmul.f32 %v406, %v342
        %v619 = vmul.f32 %v406, %v343
        %v620 = vmul.f32 %v406, %v344
        %v621 = vmul.f32 %v406, %v345
        %v622 = vmul.f32 %v406, %v346
        %v623 = vmul.f32 %v406, %v347
        %v624 = vmul.f32 %v406, %v348
        %v625 = vmul.f32 %v406, %v349
        %v626 = vmul.f32 %v406, %v350
        %v627 = vmul.f32 %v406, %v351
        %v628 = vmul.f32 %v406, %v352
        %v629 = vmul.f32 %v406, %v353
        %v630 = vmul.f32 %v406, %v354
        %v631 = vmul.f32 %v406, %v355
        %v632 = vmul.f32 %v406, %v356
        %v633 = vmul.f32 %v406, %v357
        %v634 = vmul.f32 %v407, %v342
        %v635 = vmul.f32 %v407, %v343
        %v636 = vmul.f32 %v407, %v344
        %v637 = vmul.f32 %v407, %v345
        %v638 = vmul.f32 %v407, %v346
        %v639 = vmul.f32 %v407, %v347
        %v640 = vmul.f32 %v407, %v348
        %v641 = vmul.f32 %v407, %v349
        %v642 = vmul.f32 %v407, %v350
        %v643 = vmul.f32 %v407, %v351
        %v644 = vmul.f32 %v407, %v352
        %v645 = vmul.f32 %v407, %v353
        %v646 = vmul.f32 %v407, %v354
        %v647 = vmul.f32 %v407, %v355
        %v648 = vmul.f32 %v407, %v356
        %v649 = vmul.f32 %v407, %v357
        %v650 = vmul.f32 %v408, %v342
        %v651 = vmul.f32 %v408, %v343
        %v652 = vmul.f32 %v408, %v344
        %v653 = vmul.f32 %v408, %v345
        %v654 = vmul.f32 %v408, %v346
        %v655 = vmul.f32 %v408, %v347
        %v656 = vmul.f32 %v408, %v348
        %v657 = vmul.f32 %v408, %v349
        %v658 = vmul.f32 %v408, %v350
        %v659 = vmul.f32 %v408, %v351
        %v660 = vmul.f32 %v408, %v352
        %v661 = vmul.f32 %v408, %v353
        %v662 = vmul.f32 %v408, %v354
        %v663 = vmul.f32 %v408, %v355
        %v664 = vmul.f32 %v408, %v356
        %v665 = vmul.f32 %v408, %v357
        %v666 = vmul.f32 %v409, %v342
        %v667 = vmul.f32 %v409, %v343
        %v668 = vmul.f32 %v409, %v344
        %v669 = vmul.f32 %v409, %v345
        %v670 = vmul.f32 %v409, %v346
        %v671 = vmul.f32 %v409, %v347
        %v672 = vmul.f32 %v409, %v348
        %v673 = vmul.f32 %v409, %v349
        %v674 = vmul.f32 %v409, %v350
        %v675 = vmul.f32 %v409, %v351
        %v676 = vmul.f32 %v409, %v352
        %v677 = vmul.f32 %v409, %v353
        %v678 = vmul.f32 %v409, %v354
        %v679 = vmul.f32 %v409, %v355
        %v680 = vmul.f32 %v409, %v356
        %v681 = vmul.f32 %v409, %v357
        %v682 = vmul.f32 %v426, %v342
        %v683 = vmul.f32 %v427, %v343
        %v684 = vmul.f32 %v428, %v344
        %v685 = vmul.f32 %v429, %v345
        %v686 = vmul.f32 %v430, %v346
        %v687 = vmul.f32 %v431, %v347
        %v688 = vmul.f32 %v432, %v348
        %v689 = vmul.f32 %v433, %v349
        %v690 = vmul.f32 %v434, %v350
        %v691 = vmul.f32 %v435, %v351
        %v692 = vmul.f32 %v436, %v352
        %v693 = vmul.f32 %v437, %v353
        %v694 = vmul.f32 %v438, %v354
        %v695 = vmul.f32 %v439, %v355
        %v696 = vmul.f32 %v440, %v356
        %v697 = vmul.f32 %v441, %v357
        %v698 = vmul.f32 %v442, %v342
        %v699 = vmul.f32 %v443, %v343
        %v700 = vmul.f32 %v444, %v344
        %v701 = vmul.f32 %v445, %v345
        %v702 = vmul.f32 %v446, %v346
        %v703 = vmul.f32 %v447, %v347
        %v704 = vmul.f32 %v448, %v348
        %v705 = vmul.f32 %v449, %v349
        %v706 = vmul.f32 %v450, %v350
        %v707 = vmul.f32 %v451, %v351
        %v708 = vmul.f32 %v452, %v352
        %v709 = vmul.f32 %v453, %v353
        %v710 = vmul.f32 %v454, %v354
        %v711 = vmul.f32 %v455, %v355
        %v712 = vmul.f32 %v456, %v356
        %v713 = vmul.f32 %v457, %v357
        %v714 = vmul.f32 %v458, %v342
        %v715 = vmul.f32 %v459, %v343
        %v716 = vmul.f32 %v460, %v344
        %v717 = vmul.f32 %v461, %v345
        %v718 = vmul.f32 %v462, %v346
        %v719 = vmul.f32 %v463, %v347
        %v720 = vmul.f32 %v464, %v348
        %v721 = vmul.f32 %v465, %v349
        %v722 = vmul.f32 %v466, %v350
        %v723 = vmul.f32 %v467, %v351
        %v724 = vmul.f32 %v468, %v352
        %v725 = vmul.f32 %v469, %v353
        %v726 = vmul.f32 %v470, %v354
        %v727 = vmul.f32 %v471, %v355
        %v728 = vmul.f32 %v472, %v356
        %v729 = vmul.f32 %v473, %v357
        %v730 = vmul.f32 %v474, %v342
        %v731 = vmul.f32 %v475, %v343
        %v732 = vmul.f32 %v476, %v344
        %v733 = vmul.f32 %v477, %v345
        %v734 = vmul.f32 %v478, %v346
        %v735 = vmul.f32 %v479, %v347
        %v736 = vmul.f32 %v480, %v348
        %v737 = vmul.f32 %v481, %v349
        %v738 = vmul.f32 %v482, %v350
        %v739 = vmul.f32 %v483, %v351
        %v740 = vmul.f32 %v484, %v352
        %v741 = vmul.f32 %v485, %v353
        %v742 = vmul.f32 %v486, %v354
        %v743 = vmul.f32 %v487, %v355
        %v744 = vmul.f32 %v488, %v356
        %v745 = vmul.f32 %v489, %v357
        %v746 = vmul.f32 %v490, %v342
        %v747 = vmul.f32 %v491, %v343
        %v748 = vmul.f32 %v492, %v344
        %v749 = vmul.f32 %v493, %v345
        %v750 = vmul.f32 %v494, %v346
        %v751 = vmul.f32 %v495, %v347
        %v752 = vmul.f32 %v496, %v348
        %v753 = vmul.f32 %v497, %v349
        %v754 = vmul.f32 %v498, %v350
        %v755 = vmul.f32 %v499, %v351
        %v756 = vmul.f32 %v500, %v352
        %v757 = vmul.f32 %v501, %v353
        %v758 = vmul.f32 %v502, %v354
        %v759 = vmul.f32 %v503, %v355
        %v760 = vmul.f32 %v504, %v356
        %v761 = vmul.f32 %v505, %v357
        %v762 = vmul.f32 %v506, %v342
        %v763 = vmul.f32 %v507, %v343
        %v764 = vmul.f32 %v508, %v344
        %v765 = vmul.f32 %v509, %v345
        %v766 = vmul.f32 %v510, %v346
        %v767 = vmul.f32 %v511, %v347
        %v768 = vmul.f32 %v512, %v348
        %v769 = vmul.f32 %v513, %v349
        %v770 = vmul.f32 %v514, %v350
        %v771 = vmul.f32 %v515, %v351
        %v772 = vmul.f32 %v516, %v352
        %v773 = vmul.f32 %v517, %v353
        %v774 = vmul.f32 %v518, %v354
        %v775 = vmul.f32 %v519, %v355
        %v776 = vmul.f32 %v520, %v356
        %v777 = vmul.f32 %v521, %v357
        %v778 = vmul.f32 %v522, %v342
        %v779 = vmul.f32 %v523, %v343
        %v780 = vmul.f32 %v524, %v344
        %v781 = vmul.f32 %v525, %v345
        %v782 = vmul.f32 %v526, %v346
        %v783 = vmul.f32 %v527, %v347
        %v784 = vmul.f32 %v528, %v348
        %v785 = vmul.f32 %v529, %v349
        %v786 = vmul.f32 %v530, %v350
        %v787 = vmul.f32 %v531, %v351
        %v788 = vmul.f32 %v532, %v352
        %v789 = vmul.f32 %v533, %v353
        %v790 = vmul.f32 %v534, %v354
        %v791 = vmul.f32 %v535, %v355
        %v792 = vmul.f32 %v536, %v356
        %v793 = vmul.f32 %v537, %v357
        %v794 = vmul.f32 %v538, %v342
        %v795 = vmul.f32 %v539, %v343
        %v796 = vmul.f32 %v540, %v344
        %v797 = vmul.f32 %v541, %v345
        %v798 = vmul.f32 %v542, %v346
        %v799 = vmul.f32 %v543, %v347
        %v800 = vmul.f32 %v544, %v348
        %v801 = vmul.f32 %v545, %v349
        %v802 = vmul.f32 %v546, %v350
        %v803 = vmul.f32 %v547, %v351
        %v804 = vmul.f32 %v548, %v352
        %v805 = vmul.f32 %v549, %v353
        %v806 = vmul.f32 %v550, %v354
        %v807 = vmul.f32 %v551, %v355
        %v808 = vmul.f32 %v552, %v356
        %v809 = vmul.f32 %v553, %v357
        %v810 = vmul.f32 %v554, %v342
        %v811 = vmul.f32 %v555, %v343
        %v812 = vmul.f32 %v556, %v344
        %v813 = vmul.f32 %v557, %v345
        %v814 = vmul.f32 %v558, %v346
        %v815 = vmul.f32 %v559, %v347
        %v816 = vmul.f32 %v560, %v348
        %v817 = vmul.f32 %v561, %v349
        %v818 = vmul.f32 %v562, %v350
        %v819 = vmul.f32 %v563, %v351
        %v820 = vmul.f32 %v564, %v352
        %v821 = vmul.f32 %v565, %v353
        %v822 = vmul.f32 %v566, %v354
        %v823 = vmul.f32 %v567, %v355
        %v824 = vmul.f32 %v568, %v356
        %v825 = vmul.f32 %v569, %v357
        %v826 = vmul.f32 %v570, %v342
        %v827 = vmul.f32 %v571, %v343
        %v828 = vmul.f32 %v572, %v344
        %v829 = vmul.f32 %v573, %v345
        %v830 = vmul.f32 %v574, %v346
        %v831 = vmul.f32 %v575, %v347
        %v832 = vmul.f32 %v576, %v348
        %v833 = vmul.f32 %v577, %v349
        %v834 = vmul.f32 %v578, %v350
        %v835 = vmul.f32 %v579, %v351
        %v836 = vmul.f32 %v580, %v352
        %v837 = vmul.f32 %v581, %v353
        %v838 = vmul.f32 %v582, %v354
        %v839 = vmul.f32 %v583, %v355
        %v840 = vmul.f32 %v584, %v356
        %v841 = vmul.f32 %v585, %v357
        %v842 = vmul.f32 %v586, %v342
        %v843 = vmul.f32 %v587, %v343
        %v844 = vmul.f32 %v588, %v344
        %v845 = vmul.f32 %v589, %v345
        %v846 = vmul.f32 %v590, %v346
        %v847 = vmul.f32 %v591, %v347
        %v848 = vmul.f32 %v592, %v348
        %v849 = vmul.f32 %v593, %v349
        %v850 = vmul.f32 %v594, %v350
        %v851 = vmul.f32 %v595, %v351
        %v852 = vmul.f32 %v596, %v352
        %v853 = vmul.f32 %v597, %v353
        %v854 = vmul.f32 %v598, %v354
        %v855 = vmul.f32 %v599, %v355
        %v856 = vmul.f32 %v600, %v356
        %v857 = vmul.f32 %v601, %v357
        %v858 = vmul.f32 %v602, %v342
        %v859 = vmul.f32 %v603, %v343
        %v860 = vmul.f32 %v604, %v344
        %v861 = vmul.f32 %v605, %v345
        %v862 = vmul.f32 %v606, %v346
        %v863 = vmul.f32 %v607, %v347
        %v864 = vmul.f32 %v608, %v348
        %v865 = vmul.f32 %v609, %v349
        %v866 = vmul.f32 %v610, %v350
        %v867 = vmul.f32 %v611, %v351
        %v868 = vmul.f32 %v612, %v352
        %v869 = vmul.f32 %v613, %v353
        %v870 = vmul.f32 %v614, %v354
        %v871 = vmul.f32 %v615, %v355
        %v872 = vmul.f32 %v616, %v356
        %v873 = vmul.f32 %v617, %v357
        %v874 = vmul.f32 %v618, %v342
        %v875 = vmul.f32 %v619, %v343
        %v876 = vmul.f32 %v620, %v344
        %v877 = vmul.f32 %v621, %v345
        %v878 = vmul.f32 %v622, %v346
        %v879 = vmul.f32 %v623, %v347
        %v880 = vmul.f32 %v624, %v348
        %v881 = vmul.f32 %v625, %v349
        %v882 = vmul.f32 %v626, %v350
        %v883 = vmul.f32 %v627, %v351
        %v884 = vmul.f32 %v628, %v352
        %v885 = vmul.f32 %v629, %v353
        %v886 = vmul.f32 %v630, %v354
        %v887 = vmul.f32 %v631, %v355
        %v888 = vmul.f32 %v632, %v356
        %v889 = vmul.f32 %v633, %v357
        %v890 = vmul.f32 %v634, %v342
        %v891 = vmul.f32 %v635, %v343
        %v892 = vmul.f32 %v636, %v344
        %v893 = vmul.f32 %v637, %v345
        %v894 = vmul.f32 %v638, %v346
        %v895 = vmul.f32 %v639, %v347
        %v896 = vmul.f32 %v640, %v348
        %v897 = vmul.f32 %v641, %v349
        %v898 = vmul.f32 %v642, %v350
        %v899 = vmul.f32 %v643, %v351
        %v900 = vmul.f32 %v644, %v352
        %v901 = vmul.f32 %v645, %v353
        %v902 = vmul.f32 %v646, %v354
        %v903 = vmul.f32 %v647, %v355
        %v904 = vmul.f32 %v648, %v356
        %v905 = vmul.f32 %v649, %v357
        %v906 = vmul.f32 %v650, %v342
        %v907 = vmul.f32 %v651, %v343
        %v908 = vmul.f32 %v652, %v344
        %v909 = vmul.f32 %v653, %v345
        %v910 = vmul.f32 %v654, %v346
        %v911 = vmul.f32 %v655, %v347
        %v912 = vmul.f32 %v656, %v348
        %v913 = vmul.f32 %v657, %v349
        %v914 = vmul.f32 %v658, %v350
        %v915 = vmul.f32 %v659, %v351
        %v916 = vmul.f32 %v660, %v352
        %v917 = vmul.f32 %v661, %v353
        %v918 = vmul.f32 %v662, %v354
        %v919 = vmul.f32 %v663, %v355
        %v920 = vmul.f32 %v664, %v356
        %v921 = vmul.f32 %v665, %v357
        %v922 = vmul.f32 %v666, %v342
        %v923 = vmul.f32 %v667, %v343
        %v924 = vmul.f32 %v668, %v344
        %v925 = vmul.f32 %v669, %v345
        %v926 = vmul.f32 %v670, %v346
        %v927 = vmul.f32 %v671, %v347
        %v928 = vmul.f32 %v672, %v348
        %v929 = vmul.f32 %v673, %v349
        %v930 = vmul.f32 %v674, %v350
        %v931 = vmul.f32 %v675, %v351
        %v932 = vmul.f32 %v676, %v352
        %v933 = vmul.f32 %v677, %v353
        %v934 = vmul.f32 %v678, %v354
        %v935 = vmul.f32 %v679, %v355
        %v936 = vmul.f32 %v680, %v356
        %v937 = vmul.f32 %v681, %v357
        %vm938 = vcmask 261120
        %v939 = vsel %vm938, %v682, 0.0
        %940 = vadd.xlane.f32.xlu0 %v939
        %v941 = vpop.xlane.xlu0 %940
        %v942 = vsel %vm938, %v683, 0.0
        %943 = vadd.xlane.f32.xlu0 %v942
        %v944 = vpop.xlane.xlu0 %943
        %v945 = vsel %vm938, %v684, 0.0
        %946 = vadd.xlane.f32.xlu0 %v945
        %v947 = vpop.xlane.xlu0 %946
        %v948 = vsel %vm938, %v685, 0.0
        %949 = vadd.xlane.f32.xlu0 %v948
        %v950 = vpop.xlane.xlu0 %949
        %v951 = vsel %vm938, %v686, 0.0
        %952 = vadd.xlane.f32.xlu0 %v951
        %v953 = vpop.xlane.xlu0 %952
        %v954 = vsel %vm938, %v687, 0.0
        %955 = vadd.xlane.f32.xlu0 %v954
        %v956 = vpop.xlane.xlu0 %955
        %v957 = vsel %vm938, %v688, 0.0
        %958 = vadd.xlane.f32.xlu0 %v957
        %v959 = vpop.xlane.xlu0 %958
        %v960 = vsel %vm938, %v689, 0.0
        %961 = vadd.xlane.f32.xlu0 %v960
        %v962 = vpop.xlane.xlu0 %961
        %v963 = vsel %vm938, %v690, 0.0
        %964 = vadd.xlane.f32.xlu0 %v963
        %v965 = vpop.xlane.xlu0 %964
        %v966 = vsel %vm938, %v691, 0.0
        %967 = vadd.xlane.f32.xlu0 %v966
        %v968 = vpop.xlane.xlu0 %967
        %v969 = vsel %vm938, %v692, 0.0
        %970 = vadd.xlane.f32.xlu0 %v969
        %v971 = vpop.xlane.xlu0 %970
        %v972 = vsel %vm938, %v693, 0.0
        %973 = vadd.xlane.f32.xlu0 %v972
        %v974 = vpop.xlane.xlu0 %973
        %v975 = vsel %vm938, %v694, 0.0
        %976 = vadd.xlane.f32.xlu0 %v975
        %v977 = vpop.xlane.xlu0 %976
        %v978 = vsel %vm938, %v695, 0.0
        %979 = vadd.xlane.f32.xlu0 %v978
        %v980 = vpop.xlane.xlu0 %979
        %v981 = vsel %vm938, %v696, 0.0
        %982 = vadd.xlane.f32.xlu0 %v981
        %v983 = vpop.xlane.xlu0 %982
        %v984 = vsel %vm938, %v697, 0.0
        %985 = vadd.xlane.f32.xlu0 %v984
        %v986 = vpop.xlane.xlu0 %985
        %v987 = vsel %vm938, %v698, 0.0
        %988 = vadd.xlane.f32.xlu0 %v987
        %v989 = vpop.xlane.xlu0 %988
        %v990 = vsel %vm938, %v699, 0.0
        %991 = vadd.xlane.f32.xlu0 %v990
        %v992 = vpop.xlane.xlu0 %991
        %v993 = vsel %vm938, %v700, 0.0
        %994 = vadd.xlane.f32.xlu0 %v993
        %v995 = vpop.xlane.xlu0 %994
        %v996 = vsel %vm938, %v701, 0.0
        %997 = vadd.xlane.f32.xlu0 %v996
        %v998 = vpop.xlane.xlu0 %997
        %v999 = vsel %vm938, %v702, 0.0
        %1000 = vadd.xlane.f32.xlu0 %v999
        %v1001 = vpop.xlane.xlu0 %1000
        %v1002 = vsel %vm938, %v703, 0.0
        %1003 = vadd.xlane.f32.xlu0 %v1002
        %v1004 = vpop.xlane.xlu0 %1003
        %v1005 = vsel %vm938, %v704, 0.0
        %1006 = vadd.xlane.f32.xlu0 %v1005
        %v1007 = vpop.xlane.xlu0 %1006
        %v1008 = vsel %vm938, %v705, 0.0
        %1009 = vadd.xlane.f32.xlu0 %v1008
        %v1010 = vpop.xlane.xlu0 %1009
        %v1011 = vsel %vm938, %v706, 0.0
        %1012 = vadd.xlane.f32.xlu0 %v1011
        %v1013 = vpop.xlane.xlu0 %1012
        %v1014 = vsel %vm938, %v707, 0.0
        %1015 = vadd.xlane.f32.xlu0 %v1014
        %v1016 = vpop.xlane.xlu0 %1015
        %v1017 = vsel %vm938, %v708, 0.0
        %1018 = vadd.xlane.f32.xlu0 %v1017
        %v1019 = vpop.xlane.xlu0 %1018
        %v1020 = vsel %vm938, %v709, 0.0
        %1021 = vadd.xlane.f32.xlu0 %v1020
        %v1022 = vpop.xlane.xlu0 %1021
        %v1023 = vsel %vm938, %v710, 0.0
        %1024 = vadd.xlane.f32.xlu0 %v1023
        %v1025 = vpop.xlane.xlu0 %1024
        %v1026 = vsel %vm938, %v711, 0.0
        %1027 = vadd.xlane.f32.xlu0 %v1026
        %v1028 = vpop.xlane.xlu0 %1027
        %v1029 = vsel %vm938, %v712, 0.0
        %1030 = vadd.xlane.f32.xlu0 %v1029
        %v1031 = vpop.xlane.xlu0 %1030
        %v1032 = vsel %vm938, %v713, 0.0
        %1033 = vadd.xlane.f32.xlu0 %v1032
        %v1034 = vpop.xlane.xlu0 %1033
        %v1035 = vsel %vm938, %v714, 0.0
        %1036 = vadd.xlane.f32.xlu0 %v1035
        %v1037 = vpop.xlane.xlu0 %1036
        %v1038 = vsel %vm938, %v715, 0.0
        %1039 = vadd.xlane.f32.xlu0 %v1038
        %v1040 = vpop.xlane.xlu0 %1039
        %v1041 = vsel %vm938, %v716, 0.0
        %1042 = vadd.xlane.f32.xlu0 %v1041
        %v1043 = vpop.xlane.xlu0 %1042
        %v1044 = vsel %vm938, %v717, 0.0
        %1045 = vadd.xlane.f32.xlu0 %v1044
        %v1046 = vpop.xlane.xlu0 %1045
        %v1047 = vsel %vm938, %v718, 0.0
        %1048 = vadd.xlane.f32.xlu0 %v1047
        %v1049 = vpop.xlane.xlu0 %1048
        %v1050 = vsel %vm938, %v719, 0.0
        %1051 = vadd.xlane.f32.xlu0 %v1050
        %v1052 = vpop.xlane.xlu0 %1051
        %v1053 = vsel %vm938, %v720, 0.0
        %1054 = vadd.xlane.f32.xlu0 %v1053
        %v1055 = vpop.xlane.xlu0 %1054
        %v1056 = vsel %vm938, %v721, 0.0
        %1057 = vadd.xlane.f32.xlu0 %v1056
        %v1058 = vpop.xlane.xlu0 %1057
        %v1059 = vsel %vm938, %v722, 0.0
        %1060 = vadd.xlane.f32.xlu0 %v1059
        %v1061 = vpop.xlane.xlu0 %1060
        %v1062 = vsel %vm938, %v723, 0.0
        %1063 = vadd.xlane.f32.xlu0 %v1062
        %v1064 = vpop.xlane.xlu0 %1063
        %v1065 = vsel %vm938, %v724, 0.0
        %1066 = vadd.xlane.f32.xlu0 %v1065
        %v1067 = vpop.xlane.xlu0 %1066
        %v1068 = vsel %vm938, %v725, 0.0
        %1069 = vadd.xlane.f32.xlu0 %v1068
        %v1070 = vpop.xlane.xlu0 %1069
        %v1071 = vsel %vm938, %v726, 0.0
        %1072 = vadd.xlane.f32.xlu0 %v1071
        %v1073 = vpop.xlane.xlu0 %1072
        %v1074 = vsel %vm938, %v727, 0.0
        %1075 = vadd.xlane.f32.xlu0 %v1074
        %v1076 = vpop.xlane.xlu0 %1075
        %v1077 = vsel %vm938, %v728, 0.0
        %1078 = vadd.xlane.f32.xlu0 %v1077
        %v1079 = vpop.xlane.xlu0 %1078
        %v1080 = vsel %vm938, %v729, 0.0
        %1081 = vadd.xlane.f32.xlu0 %v1080
        %v1082 = vpop.xlane.xlu0 %1081
        %v1083 = vsel %vm938, %v730, 0.0
        %1084 = vadd.xlane.f32.xlu0 %v1083
        %v1085 = vpop.xlane.xlu0 %1084
        %v1086 = vsel %vm938, %v731, 0.0
        %1087 = vadd.xlane.f32.xlu0 %v1086
        %v1088 = vpop.xlane.xlu0 %1087
        %v1089 = vsel %vm938, %v732, 0.0
        %1090 = vadd.xlane.f32.xlu0 %v1089
        %v1091 = vpop.xlane.xlu0 %1090
        %v1092 = vsel %vm938, %v733, 0.0
        %1093 = vadd.xlane.f32.xlu0 %v1092
        %v1094 = vpop.xlane.xlu0 %1093
        %v1095 = vsel %vm938, %v734, 0.0
        %1096 = vadd.xlane.f32.xlu0 %v1095
        %v1097 = vpop.xlane.xlu0 %1096
        %v1098 = vsel %vm938, %v735, 0.0
        %1099 = vadd.xlane.f32.xlu0 %v1098
        %v1100 = vpop.xlane.xlu0 %1099
        %v1101 = vsel %vm938, %v736, 0.0
        %1102 = vadd.xlane.f32.xlu0 %v1101
        %v1103 = vpop.xlane.xlu0 %1102
        %v1104 = vsel %vm938, %v737, 0.0
        %1105 = vadd.xlane.f32.xlu0 %v1104
        %v1106 = vpop.xlane.xlu0 %1105
        %v1107 = vsel %vm938, %v738, 0.0
        %1108 = vadd.xlane.f32.xlu0 %v1107
        %v1109 = vpop.xlane.xlu0 %1108
        %v1110 = vsel %vm938, %v739, 0.0
        %1111 = vadd.xlane.f32.xlu0 %v1110
        %v1112 = vpop.xlane.xlu0 %1111
        %v1113 = vsel %vm938, %v740, 0.0
        %1114 = vadd.xlane.f32.xlu0 %v1113
        %v1115 = vpop.xlane.xlu0 %1114
        %v1116 = vsel %vm938, %v741, 0.0
        %1117 = vadd.xlane.f32.xlu0 %v1116
        %v1118 = vpop.xlane.xlu0 %1117
        %v1119 = vsel %vm938, %v742, 0.0
        %1120 = vadd.xlane.f32.xlu0 %v1119
        %v1121 = vpop.xlane.xlu0 %1120
        %v1122 = vsel %vm938, %v743, 0.0
        %1123 = vadd.xlane.f32.xlu0 %v1122
        %v1124 = vpop.xlane.xlu0 %1123
        %v1125 = vsel %vm938, %v744, 0.0
        %1126 = vadd.xlane.f32.xlu0 %v1125
        %v1127 = vpop.xlane.xlu0 %1126
        %v1128 = vsel %vm938, %v745, 0.0
        %1129 = vadd.xlane.f32.xlu0 %v1128
        %v1130 = vpop.xlane.xlu0 %1129
        %v1131 = vsel %vm938, %v746, 0.0
        %1132 = vadd.xlane.f32.xlu0 %v1131
        %v1133 = vpop.xlane.xlu0 %1132
        %v1134 = vsel %vm938, %v747, 0.0
        %1135 = vadd.xlane.f32.xlu0 %v1134
        %v1136 = vpop.xlane.xlu0 %1135
        %v1137 = vsel %vm938, %v748, 0.0
        %1138 = vadd.xlane.f32.xlu0 %v1137
        %v1139 = vpop.xlane.xlu0 %1138
        %v1140 = vsel %vm938, %v749, 0.0
        %1141 = vadd.xlane.f32.xlu0 %v1140
        %v1142 = vpop.xlane.xlu0 %1141
        %v1143 = vsel %vm938, %v750, 0.0
        %1144 = vadd.xlane.f32.xlu0 %v1143
        %v1145 = vpop.xlane.xlu0 %1144
        %v1146 = vsel %vm938, %v751, 0.0
        %1147 = vadd.xlane.f32.xlu0 %v1146
        %v1148 = vpop.xlane.xlu0 %1147
        %v1149 = vsel %vm938, %v752, 0.0
        %1150 = vadd.xlane.f32.xlu0 %v1149
        %v1151 = vpop.xlane.xlu0 %1150
        %v1152 = vsel %vm938, %v753, 0.0
        %1153 = vadd.xlane.f32.xlu0 %v1152
        %v1154 = vpop.xlane.xlu0 %1153
        %v1155 = vsel %vm938, %v754, 0.0
        %1156 = vadd.xlane.f32.xlu0 %v1155
        %v1157 = vpop.xlane.xlu0 %1156
        %v1158 = vsel %vm938, %v755, 0.0
        %1159 = vadd.xlane.f32.xlu0 %v1158
        %v1160 = vpop.xlane.xlu0 %1159
        %v1161 = vsel %vm938, %v756, 0.0
        %1162 = vadd.xlane.f32.xlu0 %v1161
        %v1163 = vpop.xlane.xlu0 %1162
        %v1164 = vsel %vm938, %v757, 0.0
        %1165 = vadd.xlane.f32.xlu0 %v1164
        %v1166 = vpop.xlane.xlu0 %1165
        %v1167 = vsel %vm938, %v758, 0.0
        %1168 = vadd.xlane.f32.xlu0 %v1167
        %v1169 = vpop.xlane.xlu0 %1168
        %v1170 = vsel %vm938, %v759, 0.0
        %1171 = vadd.xlane.f32.xlu0 %v1170
        %v1172 = vpop.xlane.xlu0 %1171
        %v1173 = vsel %vm938, %v760, 0.0
        %1174 = vadd.xlane.f32.xlu0 %v1173
        %v1175 = vpop.xlane.xlu0 %1174
        %v1176 = vsel %vm938, %v761, 0.0
        %1177 = vadd.xlane.f32.xlu0 %v1176
        %v1178 = vpop.xlane.xlu0 %1177
        %v1179 = vsel %vm938, %v762, 0.0
        %1180 = vadd.xlane.f32.xlu0 %v1179
        %v1181 = vpop.xlane.xlu0 %1180
        %v1182 = vsel %vm938, %v763, 0.0
        %1183 = vadd.xlane.f32.xlu0 %v1182
        %v1184 = vpop.xlane.xlu0 %1183
        %v1185 = vsel %vm938, %v764, 0.0
        %1186 = vadd.xlane.f32.xlu0 %v1185
        %v1187 = vpop.xlane.xlu0 %1186
        %v1188 = vsel %vm938, %v765, 0.0
        %1189 = vadd.xlane.f32.xlu0 %v1188
        %v1190 = vpop.xlane.xlu0 %1189
        %v1191 = vsel %vm938, %v766, 0.0
        %1192 = vadd.xlane.f32.xlu0 %v1191
        %v1193 = vpop.xlane.xlu0 %1192
        %v1194 = vsel %vm938, %v767, 0.0
        %1195 = vadd.xlane.f32.xlu0 %v1194
        %v1196 = vpop.xlane.xlu0 %1195
        %v1197 = vsel %vm938, %v768, 0.0
        %1198 = vadd.xlane.f32.xlu0 %v1197
        %v1199 = vpop.xlane.xlu0 %1198
        %v1200 = vsel %vm938, %v769, 0.0
        %1201 = vadd.xlane.f32.xlu0 %v1200
        %v1202 = vpop.xlane.xlu0 %1201
        %v1203 = vsel %vm938, %v770, 0.0
        %1204 = vadd.xlane.f32.xlu0 %v1203
        %v1205 = vpop.xlane.xlu0 %1204
        %v1206 = vsel %vm938, %v771, 0.0
        %1207 = vadd.xlane.f32.xlu0 %v1206
        %v1208 = vpop.xlane.xlu0 %1207
        %v1209 = vsel %vm938, %v772, 0.0
        %1210 = vadd.xlane.f32.xlu0 %v1209
        %v1211 = vpop.xlane.xlu0 %1210
        %v1212 = vsel %vm938, %v773, 0.0
        %1213 = vadd.xlane.f32.xlu0 %v1212
        %v1214 = vpop.xlane.xlu0 %1213
        %v1215 = vsel %vm938, %v774, 0.0
        %1216 = vadd.xlane.f32.xlu0 %v1215
        %v1217 = vpop.xlane.xlu0 %1216
        %v1218 = vsel %vm938, %v775, 0.0
        %1219 = vadd.xlane.f32.xlu0 %v1218
        %v1220 = vpop.xlane.xlu0 %1219
        %v1221 = vsel %vm938, %v776, 0.0
        %1222 = vadd.xlane.f32.xlu0 %v1221
        %v1223 = vpop.xlane.xlu0 %1222
        %v1224 = vsel %vm938, %v777, 0.0
        %1225 = vadd.xlane.f32.xlu0 %v1224
        %v1226 = vpop.xlane.xlu0 %1225
        %v1227 = vsel %vm938, %v778, 0.0
        %1228 = vadd.xlane.f32.xlu0 %v1227
        %v1229 = vpop.xlane.xlu0 %1228
        %v1230 = vsel %vm938, %v779, 0.0
        %1231 = vadd.xlane.f32.xlu0 %v1230
        %v1232 = vpop.xlane.xlu0 %1231
        %v1233 = vsel %vm938, %v780, 0.0
        %1234 = vadd.xlane.f32.xlu0 %v1233
        %v1235 = vpop.xlane.xlu0 %1234
        %v1236 = vsel %vm938, %v781, 0.0
        %1237 = vadd.xlane.f32.xlu0 %v1236
        %v1238 = vpop.xlane.xlu0 %1237
        %v1239 = vsel %vm938, %v782, 0.0
        %1240 = vadd.xlane.f32.xlu0 %v1239
        %v1241 = vpop.xlane.xlu0 %1240
        %v1242 = vsel %vm938, %v783, 0.0
        %1243 = vadd.xlane.f32.xlu0 %v1242
        %v1244 = vpop.xlane.xlu0 %1243
        %v1245 = vsel %vm938, %v784, 0.0
        %1246 = vadd.xlane.f32.xlu0 %v1245
        %v1247 = vpop.xlane.xlu0 %1246
        %v1248 = vsel %vm938, %v785, 0.0
        %1249 = vadd.xlane.f32.xlu0 %v1248
        %v1250 = vpop.xlane.xlu0 %1249
        %v1251 = vsel %vm938, %v786, 0.0
        %1252 = vadd.xlane.f32.xlu0 %v1251
        %v1253 = vpop.xlane.xlu0 %1252
        %v1254 = vsel %vm938, %v787, 0.0
        %1255 = vadd.xlane.f32.xlu0 %v1254
        %v1256 = vpop.xlane.xlu0 %1255
        %v1257 = vsel %vm938, %v788, 0.0
        %1258 = vadd.xlane.f32.xlu0 %v1257
        %v1259 = vpop.xlane.xlu0 %1258
        %v1260 = vsel %vm938, %v789, 0.0
        %1261 = vadd.xlane.f32.xlu0 %v1260
        %v1262 = vpop.xlane.xlu0 %1261
        %v1263 = vsel %vm938, %v790, 0.0
        %1264 = vadd.xlane.f32.xlu0 %v1263
        %v1265 = vpop.xlane.xlu0 %1264
        %v1266 = vsel %vm938, %v791, 0.0
        %1267 = vadd.xlane.f32.xlu0 %v1266
        %v1268 = vpop.xlane.xlu0 %1267
        %v1269 = vsel %vm938, %v792, 0.0
        %1270 = vadd.xlane.f32.xlu0 %v1269
        %v1271 = vpop.xlane.xlu0 %1270
        %v1272 = vsel %vm938, %v793, 0.0
        %1273 = vadd.xlane.f32.xlu0 %v1272
        %v1274 = vpop.xlane.xlu0 %1273
        %v1275 = vsel %vm938, %v794, 0.0
        %1276 = vadd.xlane.f32.xlu0 %v1275
        %v1277 = vpop.xlane.xlu0 %1276
        %v1278 = vsel %vm938, %v795, 0.0
        %1279 = vadd.xlane.f32.xlu0 %v1278
        %v1280 = vpop.xlane.xlu0 %1279
        %v1281 = vsel %vm938, %v796, 0.0
        %1282 = vadd.xlane.f32.xlu0 %v1281
        %v1283 = vpop.xlane.xlu0 %1282
        %v1284 = vsel %vm938, %v797, 0.0
        %1285 = vadd.xlane.f32.xlu0 %v1284
        %v1286 = vpop.xlane.xlu0 %1285
        %v1287 = vsel %vm938, %v798, 0.0
        %1288 = vadd.xlane.f32.xlu0 %v1287
        %v1289 = vpop.xlane.xlu0 %1288
        %v1290 = vsel %vm938, %v799, 0.0
        %1291 = vadd.xlane.f32.xlu0 %v1290
        %v1292 = vpop.xlane.xlu0 %1291
        %v1293 = vsel %vm938, %v800, 0.0
        %1294 = vadd.xlane.f32.xlu0 %v1293
        %v1295 = vpop.xlane.xlu0 %1294
        %v1296 = vsel %vm938, %v801, 0.0
        %1297 = vadd.xlane.f32.xlu0 %v1296
        %v1298 = vpop.xlane.xlu0 %1297
        %v1299 = vsel %vm938, %v802, 0.0
        %1300 = vadd.xlane.f32.xlu0 %v1299
        %v1301 = vpop.xlane.xlu0 %1300
        %v1302 = vsel %vm938, %v803, 0.0
        %1303 = vadd.xlane.f32.xlu0 %v1302
        %v1304 = vpop.xlane.xlu0 %1303
        %v1305 = vsel %vm938, %v804, 0.0
        %1306 = vadd.xlane.f32.xlu0 %v1305
        %v1307 = vpop.xlane.xlu0 %1306
        %v1308 = vsel %vm938, %v805, 0.0
        %1309 = vadd.xlane.f32.xlu0 %v1308
        %v1310 = vpop.xlane.xlu0 %1309
        %v1311 = vsel %vm938, %v806, 0.0
        %1312 = vadd.xlane.f32.xlu0 %v1311
        %v1313 = vpop.xlane.xlu0 %1312
        %v1314 = vsel %vm938, %v807, 0.0
        %1315 = vadd.xlane.f32.xlu0 %v1314
        %v1316 = vpop.xlane.xlu0 %1315
        %v1317 = vsel %vm938, %v808, 0.0
        %1318 = vadd.xlane.f32.xlu0 %v1317
        %v1319 = vpop.xlane.xlu0 %1318
        %v1320 = vsel %vm938, %v809, 0.0
        %1321 = vadd.xlane.f32.xlu0 %v1320
        %v1322 = vpop.xlane.xlu0 %1321
        %v1323 = vsel %vm938, %v810, 0.0
        %1324 = vadd.xlane.f32.xlu0 %v1323
        %v1325 = vpop.xlane.xlu0 %1324
        %v1326 = vsel %vm938, %v811, 0.0
        %1327 = vadd.xlane.f32.xlu0 %v1326
        %v1328 = vpop.xlane.xlu0 %1327
        %v1329 = vsel %vm938, %v812, 0.0
        %1330 = vadd.xlane.f32.xlu0 %v1329
        %v1331 = vpop.xlane.xlu0 %1330
        %v1332 = vsel %vm938, %v813, 0.0
        %1333 = vadd.xlane.f32.xlu0 %v1332
        %v1334 = vpop.xlane.xlu0 %1333
        %v1335 = vsel %vm938, %v814, 0.0
        %1336 = vadd.xlane.f32.xlu0 %v1335
        %v1337 = vpop.xlane.xlu0 %1336
        %v1338 = vsel %vm938, %v815, 0.0
        %1339 = vadd.xlane.f32.xlu0 %v1338
        %v1340 = vpop.xlane.xlu0 %1339
        %v1341 = vsel %vm938, %v816, 0.0
        %1342 = vadd.xlane.f32.xlu0 %v1341
        %v1343 = vpop.xlane.xlu0 %1342
        %v1344 = vsel %vm938, %v817, 0.0
        %1345 = vadd.xlane.f32.xlu0 %v1344
        %v1346 = vpop.xlane.xlu0 %1345
        %v1347 = vsel %vm938, %v818, 0.0
        %1348 = vadd.xlane.f32.xlu0 %v1347
        %v1349 = vpop.xlane.xlu0 %1348
        %v1350 = vsel %vm938, %v819, 0.0
        %1351 = vadd.xlane.f32.xlu0 %v1350
        %v1352 = vpop.xlane.xlu0 %1351
        %v1353 = vsel %vm938, %v820, 0.0
        %1354 = vadd.xlane.f32.xlu0 %v1353
        %v1355 = vpop.xlane.xlu0 %1354
        %v1356 = vsel %vm938, %v821, 0.0
        %1357 = vadd.xlane.f32.xlu0 %v1356
        %v1358 = vpop.xlane.xlu0 %1357
        %v1359 = vsel %vm938, %v822, 0.0
        %1360 = vadd.xlane.f32.xlu0 %v1359
        %v1361 = vpop.xlane.xlu0 %1360
        %v1362 = vsel %vm938, %v823, 0.0
        %1363 = vadd.xlane.f32.xlu0 %v1362
        %v1364 = vpop.xlane.xlu0 %1363
        %v1365 = vsel %vm938, %v824, 0.0
        %1366 = vadd.xlane.f32.xlu0 %v1365
        %v1367 = vpop.xlane.xlu0 %1366
        %v1368 = vsel %vm938, %v825, 0.0
        %1369 = vadd.xlane.f32.xlu0 %v1368
        %v1370 = vpop.xlane.xlu0 %1369
        %v1371 = vsel %vm938, %v826, 0.0
        %1372 = vadd.xlane.f32.xlu0 %v1371
        %v1373 = vpop.xlane.xlu0 %1372
        %v1374 = vsel %vm938, %v827, 0.0
        %1375 = vadd.xlane.f32.xlu0 %v1374
        %v1376 = vpop.xlane.xlu0 %1375
        %v1377 = vsel %vm938, %v828, 0.0
        %1378 = vadd.xlane.f32.xlu0 %v1377
        %v1379 = vpop.xlane.xlu0 %1378
        %v1380 = vsel %vm938, %v829, 0.0
        %1381 = vadd.xlane.f32.xlu0 %v1380
        %v1382 = vpop.xlane.xlu0 %1381
        %v1383 = vsel %vm938, %v830, 0.0
        %1384 = vadd.xlane.f32.xlu0 %v1383
        %v1385 = vpop.xlane.xlu0 %1384
        %v1386 = vsel %vm938, %v831, 0.0
        %1387 = vadd.xlane.f32.xlu0 %v1386
        %v1388 = vpop.xlane.xlu0 %1387
        %v1389 = vsel %vm938, %v832, 0.0
        %1390 = vadd.xlane.f32.xlu0 %v1389
        %v1391 = vpop.xlane.xlu0 %1390
        %v1392 = vsel %vm938, %v833, 0.0
        %1393 = vadd.xlane.f32.xlu0 %v1392
        %v1394 = vpop.xlane.xlu0 %1393
        %v1395 = vsel %vm938, %v834, 0.0
        %1396 = vadd.xlane.f32.xlu0 %v1395
        %v1397 = vpop.xlane.xlu0 %1396
        %v1398 = vsel %vm938, %v835, 0.0
        %1399 = vadd.xlane.f32.xlu0 %v1398
        %v1400 = vpop.xlane.xlu0 %1399
        %v1401 = vsel %vm938, %v836, 0.0
        %1402 = vadd.xlane.f32.xlu0 %v1401
        %v1403 = vpop.xlane.xlu0 %1402
        %v1404 = vsel %vm938, %v837, 0.0
        %1405 = vadd.xlane.f32.xlu0 %v1404
        %v1406 = vpop.xlane.xlu0 %1405
        %v1407 = vsel %vm938, %v838, 0.0
        %1408 = vadd.xlane.f32.xlu0 %v1407
        %v1409 = vpop.xlane.xlu0 %1408
        %v1410 = vsel %vm938, %v839, 0.0
        %1411 = vadd.xlane.f32.xlu0 %v1410
        %v1412 = vpop.xlane.xlu0 %1411
        %v1413 = vsel %vm938, %v840, 0.0
        %1414 = vadd.xlane.f32.xlu0 %v1413
        %v1415 = vpop.xlane.xlu0 %1414
        %v1416 = vsel %vm938, %v841, 0.0
        %1417 = vadd.xlane.f32.xlu0 %v1416
        %v1418 = vpop.xlane.xlu0 %1417
        %v1419 = vsel %vm938, %v842, 0.0
        %1420 = vadd.xlane.f32.xlu0 %v1419
        %v1421 = vpop.xlane.xlu0 %1420
        %v1422 = vsel %vm938, %v843, 0.0
        %1423 = vadd.xlane.f32.xlu0 %v1422
        %v1424 = vpop.xlane.xlu0 %1423
        %v1425 = vsel %vm938, %v844, 0.0
        %1426 = vadd.xlane.f32.xlu0 %v1425
        %v1427 = vpop.xlane.xlu0 %1426
        %v1428 = vsel %vm938, %v845, 0.0
        %1429 = vadd.xlane.f32.xlu0 %v1428
        %v1430 = vpop.xlane.xlu0 %1429
        %v1431 = vsel %vm938, %v846, 0.0
        %1432 = vadd.xlane.f32.xlu0 %v1431
        %v1433 = vpop.xlane.xlu0 %1432
        %v1434 = vsel %vm938, %v847, 0.0
        %1435 = vadd.xlane.f32.xlu0 %v1434
        %v1436 = vpop.xlane.xlu0 %1435
        %v1437 = vsel %vm938, %v848, 0.0
        %1438 = vadd.xlane.f32.xlu0 %v1437
        %v1439 = vpop.xlane.xlu0 %1438
        %v1440 = vsel %vm938, %v849, 0.0
        %1441 = vadd.xlane.f32.xlu0 %v1440
        %v1442 = vpop.xlane.xlu0 %1441
        %v1443 = vsel %vm938, %v850, 0.0
        %1444 = vadd.xlane.f32.xlu0 %v1443
        %v1445 = vpop.xlane.xlu0 %1444
        %v1446 = vsel %vm938, %v851, 0.0
        %1447 = vadd.xlane.f32.xlu0 %v1446
        %v1448 = vpop.xlane.xlu0 %1447
        %v1449 = vsel %vm938, %v852, 0.0
        %1450 = vadd.xlane.f32.xlu0 %v1449
        %v1451 = vpop.xlane.xlu0 %1450
        %v1452 = vsel %vm938, %v853, 0.0
        %1453 = vadd.xlane.f32.xlu0 %v1452
        %v1454 = vpop.xlane.xlu0 %1453
        %v1455 = vsel %vm938, %v854, 0.0
        %1456 = vadd.xlane.f32.xlu0 %v1455
        %v1457 = vpop.xlane.xlu0 %1456
        %v1458 = vsel %vm938, %v855, 0.0
        %1459 = vadd.xlane.f32.xlu0 %v1458
        %v1460 = vpop.xlane.xlu0 %1459
        %v1461 = vsel %vm938, %v856, 0.0
        %1462 = vadd.xlane.f32.xlu0 %v1461
        %v1463 = vpop.xlane.xlu0 %1462
        %v1464 = vsel %vm938, %v857, 0.0
        %1465 = vadd.xlane.f32.xlu0 %v1464
        %v1466 = vpop.xlane.xlu0 %1465
        %v1467 = vsel %vm938, %v858, 0.0
        %1468 = vadd.xlane.f32.xlu0 %v1467
        %v1469 = vpop.xlane.xlu0 %1468
        %v1470 = vsel %vm938, %v859, 0.0
        %1471 = vadd.xlane.f32.xlu0 %v1470
        %v1472 = vpop.xlane.xlu0 %1471
        %v1473 = vsel %vm938, %v860, 0.0
        %1474 = vadd.xlane.f32.xlu0 %v1473
        %v1475 = vpop.xlane.xlu0 %1474
        %v1476 = vsel %vm938, %v861, 0.0
        %1477 = vadd.xlane.f32.xlu0 %v1476
        %v1478 = vpop.xlane.xlu0 %1477
        %v1479 = vsel %vm938, %v862, 0.0
        %1480 = vadd.xlane.f32.xlu0 %v1479
        %v1481 = vpop.xlane.xlu0 %1480
        %v1482 = vsel %vm938, %v863, 0.0
        %1483 = vadd.xlane.f32.xlu0 %v1482
        %v1484 = vpop.xlane.xlu0 %1483
        %v1485 = vsel %vm938, %v864, 0.0
        %1486 = vadd.xlane.f32.xlu0 %v1485
        %v1487 = vpop.xlane.xlu0 %1486
        %v1488 = vsel %vm938, %v865, 0.0
        %1489 = vadd.xlane.f32.xlu0 %v1488
        %v1490 = vpop.xlane.xlu0 %1489
        %v1491 = vsel %vm938, %v866, 0.0
        %1492 = vadd.xlane.f32.xlu0 %v1491
        %v1493 = vpop.xlane.xlu0 %1492
        %v1494 = vsel %vm938, %v867, 0.0
        %1495 = vadd.xlane.f32.xlu0 %v1494
        %v1496 = vpop.xlane.xlu0 %1495
        %v1497 = vsel %vm938, %v868, 0.0
        %1498 = vadd.xlane.f32.xlu0 %v1497
        %v1499 = vpop.xlane.xlu0 %1498
        %v1500 = vsel %vm938, %v869, 0.0
        %1501 = vadd.xlane.f32.xlu0 %v1500
        %v1502 = vpop.xlane.xlu0 %1501
        %v1503 = vsel %vm938, %v870, 0.0
        %1504 = vadd.xlane.f32.xlu0 %v1503
        %v1505 = vpop.xlane.xlu0 %1504
        %v1506 = vsel %vm938, %v871, 0.0
        %1507 = vadd.xlane.f32.xlu0 %v1506
        %v1508 = vpop.xlane.xlu0 %1507
        %v1509 = vsel %vm938, %v872, 0.0
        %1510 = vadd.xlane.f32.xlu0 %v1509
        %v1511 = vpop.xlane.xlu0 %1510
        %v1512 = vsel %vm938, %v873, 0.0
        %1513 = vadd.xlane.f32.xlu0 %v1512
        %v1514 = vpop.xlane.xlu0 %1513
        %v1515 = vsel %vm938, %v874, 0.0
        %1516 = vadd.xlane.f32.xlu0 %v1515
        %v1517 = vpop.xlane.xlu0 %1516
        %v1518 = vsel %vm938, %v875, 0.0
        %1519 = vadd.xlane.f32.xlu0 %v1518
        %v1520 = vpop.xlane.xlu0 %1519
        %v1521 = vsel %vm938, %v876, 0.0
        %1522 = vadd.xlane.f32.xlu0 %v1521
        %v1523 = vpop.xlane.xlu0 %1522
        %v1524 = vsel %vm938, %v877, 0.0
        %1525 = vadd.xlane.f32.xlu0 %v1524
        %v1526 = vpop.xlane.xlu0 %1525
        %v1527 = vsel %vm938, %v878, 0.0
        %1528 = vadd.xlane.f32.xlu0 %v1527
        %v1529 = vpop.xlane.xlu0 %1528
        %v1530 = vsel %vm938, %v879, 0.0
        %1531 = vadd.xlane.f32.xlu0 %v1530
        %v1532 = vpop.xlane.xlu0 %1531
        %v1533 = vsel %vm938, %v880, 0.0
        %1534 = vadd.xlane.f32.xlu0 %v1533
        %v1535 = vpop.xlane.xlu0 %1534
        %v1536 = vsel %vm938, %v881, 0.0
        %1537 = vadd.xlane.f32.xlu0 %v1536
        %v1538 = vpop.xlane.xlu0 %1537
        %v1539 = vsel %vm938, %v882, 0.0
        %1540 = vadd.xlane.f32.xlu0 %v1539
        %v1541 = vpop.xlane.xlu0 %1540
        %v1542 = vsel %vm938, %v883, 0.0
        %1543 = vadd.xlane.f32.xlu0 %v1542
        %v1544 = vpop.xlane.xlu0 %1543
        %v1545 = vsel %vm938, %v884, 0.0
        %1546 = vadd.xlane.f32.xlu0 %v1545
        %v1547 = vpop.xlane.xlu0 %1546
        %v1548 = vsel %vm938, %v885, 0.0
        %1549 = vadd.xlane.f32.xlu0 %v1548
        %v1550 = vpop.xlane.xlu0 %1549
        %v1551 = vsel %vm938, %v886, 0.0
        %1552 = vadd.xlane.f32.xlu0 %v1551
        %v1553 = vpop.xlane.xlu0 %1552
        %v1554 = vsel %vm938, %v887, 0.0
        %1555 = vadd.xlane.f32.xlu0 %v1554
        %v1556 = vpop.xlane.xlu0 %1555
        %v1557 = vsel %vm938, %v888, 0.0
        %1558 = vadd.xlane.f32.xlu0 %v1557
        %v1559 = vpop.xlane.xlu0 %1558
        %v1560 = vsel %vm938, %v889, 0.0
        %1561 = vadd.xlane.f32.xlu0 %v1560
        %v1562 = vpop.xlane.xlu0 %1561
        %v1563 = vsel %vm938, %v890, 0.0
        %1564 = vadd.xlane.f32.xlu0 %v1563
        %v1565 = vpop.xlane.xlu0 %1564
        %v1566 = vsel %vm938, %v891, 0.0
        %1567 = vadd.xlane.f32.xlu0 %v1566
        %v1568 = vpop.xlane.xlu0 %1567
        %v1569 = vsel %vm938, %v892, 0.0
        %1570 = vadd.xlane.f32.xlu0 %v1569
        %v1571 = vpop.xlane.xlu0 %1570
        %v1572 = vsel %vm938, %v893, 0.0
        %1573 = vadd.xlane.f32.xlu0 %v1572
        %v1574 = vpop.xlane.xlu0 %1573
        %v1575 = vsel %vm938, %v894, 0.0
        %1576 = vadd.xlane.f32.xlu0 %v1575
        %v1577 = vpop.xlane.xlu0 %1576
        %v1578 = vsel %vm938, %v895, 0.0
        %1579 = vadd.xlane.f32.xlu0 %v1578
        %v1580 = vpop.xlane.xlu0 %1579
        %v1581 = vsel %vm938, %v896, 0.0
        %1582 = vadd.xlane.f32.xlu0 %v1581
        %v1583 = vpop.xlane.xlu0 %1582
        %v1584 = vsel %vm938, %v897, 0.0
        %1585 = vadd.xlane.f32.xlu0 %v1584
        %v1586 = vpop.xlane.xlu0 %1585
        %v1587 = vsel %vm938, %v898, 0.0
        %1588 = vadd.xlane.f32.xlu0 %v1587
        %v1589 = vpop.xlane.xlu0 %1588
        %v1590 = vsel %vm938, %v899, 0.0
        %1591 = vadd.xlane.f32.xlu0 %v1590
        %v1592 = vpop.xlane.xlu0 %1591
        %v1593 = vsel %vm938, %v900, 0.0
        %1594 = vadd.xlane.f32.xlu0 %v1593
        %v1595 = vpop.xlane.xlu0 %1594
        %v1596 = vsel %vm938, %v901, 0.0
        %1597 = vadd.xlane.f32.xlu0 %v1596
        %v1598 = vpop.xlane.xlu0 %1597
        %v1599 = vsel %vm938, %v902, 0.0
        %1600 = vadd.xlane.f32.xlu0 %v1599
        %v1601 = vpop.xlane.xlu0 %1600
        %v1602 = vsel %vm938, %v903, 0.0
        %1603 = vadd.xlane.f32.xlu0 %v1602
        %v1604 = vpop.xlane.xlu0 %1603
        %v1605 = vsel %vm938, %v904, 0.0
        %1606 = vadd.xlane.f32.xlu0 %v1605
        %v1607 = vpop.xlane.xlu0 %1606
        %v1608 = vsel %vm938, %v905, 0.0
        %1609 = vadd.xlane.f32.xlu0 %v1608
        %v1610 = vpop.xlane.xlu0 %1609
        %v1611 = vsel %vm938, %v906, 0.0
        %1612 = vadd.xlane.f32.xlu0 %v1611
        %v1613 = vpop.xlane.xlu0 %1612
        %v1614 = vsel %vm938, %v907, 0.0
        %1615 = vadd.xlane.f32.xlu0 %v1614
        %v1616 = vpop.xlane.xlu0 %1615
        %v1617 = vsel %vm938, %v908, 0.0
        %1618 = vadd.xlane.f32.xlu0 %v1617
        %v1619 = vpop.xlane.xlu0 %1618
        %v1620 = vsel %vm938, %v909, 0.0
        %1621 = vadd.xlane.f32.xlu0 %v1620
        %v1622 = vpop.xlane.xlu0 %1621
        %v1623 = vsel %vm938, %v910, 0.0
        %1624 = vadd.xlane.f32.xlu0 %v1623
        %v1625 = vpop.xlane.xlu0 %1624
        %v1626 = vsel %vm938, %v911, 0.0
        %1627 = vadd.xlane.f32.xlu0 %v1626
        %v1628 = vpop.xlane.xlu0 %1627
        %v1629 = vsel %vm938, %v912, 0.0
        %1630 = vadd.xlane.f32.xlu0 %v1629
        %v1631 = vpop.xlane.xlu0 %1630
        %v1632 = vsel %vm938, %v913, 0.0
        %1633 = vadd.xlane.f32.xlu0 %v1632
        %v1634 = vpop.xlane.xlu0 %1633
        %v1635 = vsel %vm938, %v914, 0.0
        %1636 = vadd.xlane.f32.xlu0 %v1635
        %v1637 = vpop.xlane.xlu0 %1636
        %v1638 = vsel %vm938, %v915, 0.0
        %1639 = vadd.xlane.f32.xlu0 %v1638
        %v1640 = vpop.xlane.xlu0 %1639
        %v1641 = vsel %vm938, %v916, 0.0
        %1642 = vadd.xlane.f32.xlu0 %v1641
        %v1643 = vpop.xlane.xlu0 %1642
        %v1644 = vsel %vm938, %v917, 0.0
        %1645 = vadd.xlane.f32.xlu0 %v1644
        %v1646 = vpop.xlane.xlu0 %1645
        %v1647 = vsel %vm938, %v918, 0.0
        %1648 = vadd.xlane.f32.xlu0 %v1647
        %v1649 = vpop.xlane.xlu0 %1648
        %v1650 = vsel %vm938, %v919, 0.0
        %1651 = vadd.xlane.f32.xlu0 %v1650
        %v1652 = vpop.xlane.xlu0 %1651
        %v1653 = vsel %vm938, %v920, 0.0
        %1654 = vadd.xlane.f32.xlu0 %v1653
        %v1655 = vpop.xlane.xlu0 %1654
        %v1656 = vsel %vm938, %v921, 0.0
        %1657 = vadd.xlane.f32.xlu0 %v1656
        %v1658 = vpop.xlane.xlu0 %1657
        %v1659 = vsel %vm938, %v922, 0.0
        %1660 = vadd.xlane.f32.xlu0 %v1659
        %v1661 = vpop.xlane.xlu0 %1660
        %v1662 = vsel %vm938, %v923, 0.0
        %1663 = vadd.xlane.f32.xlu0 %v1662
        %v1664 = vpop.xlane.xlu0 %1663
        %v1665 = vsel %vm938, %v924, 0.0
        %1666 = vadd.xlane.f32.xlu0 %v1665
        %v1667 = vpop.xlane.xlu0 %1666
        %v1668 = vsel %vm938, %v925, 0.0
        %1669 = vadd.xlane.f32.xlu0 %v1668
        %v1670 = vpop.xlane.xlu0 %1669
        %v1671 = vsel %vm938, %v926, 0.0
        %1672 = vadd.xlane.f32.xlu0 %v1671
        %v1673 = vpop.xlane.xlu0 %1672
        %v1674 = vsel %vm938, %v927, 0.0
        %1675 = vadd.xlane.f32.xlu0 %v1674
        %v1676 = vpop.xlane.xlu0 %1675
        %v1677 = vsel %vm938, %v928, 0.0
        %1678 = vadd.xlane.f32.xlu0 %v1677
        %v1679 = vpop.xlane.xlu0 %1678
        %v1680 = vsel %vm938, %v929, 0.0
        %1681 = vadd.xlane.f32.xlu0 %v1680
        %v1682 = vpop.xlane.xlu0 %1681
        %v1683 = vsel %vm938, %v930, 0.0
        %1684 = vadd.xlane.f32.xlu0 %v1683
        %v1685 = vpop.xlane.xlu0 %1684
        %v1686 = vsel %vm938, %v931, 0.0
        %1687 = vadd.xlane.f32.xlu0 %v1686
        %v1688 = vpop.xlane.xlu0 %1687
        %v1689 = vsel %vm938, %v932, 0.0
        %1690 = vadd.xlane.f32.xlu0 %v1689
        %v1691 = vpop.xlane.xlu0 %1690
        %v1692 = vsel %vm938, %v933, 0.0
        %1693 = vadd.xlane.f32.xlu0 %v1692
        %v1694 = vpop.xlane.xlu0 %1693
        %v1695 = vsel %vm938, %v934, 0.0
        %1696 = vadd.xlane.f32.xlu0 %v1695
        %v1697 = vpop.xlane.xlu0 %1696
        %v1698 = vsel %vm938, %v935, 0.0
        %1699 = vadd.xlane.f32.xlu0 %v1698
        %v1700 = vpop.xlane.xlu0 %1699
        %v1701 = vsel %vm938, %v936, 0.0
        %1702 = vadd.xlane.f32.xlu0 %v1701
        %v1703 = vpop.xlane.xlu0 %1702
        %v1704 = vsel %vm938, %v937, 0.0
        %1705 = vadd.xlane.f32.xlu0 %v1704
        %v1706 = vpop.xlane.xlu0 %1705
        %v1707 = vpack.c.bf16 %v426, %v426
        %v1708 = vpack.c.bf16 %v427, %v427
        %v1709 = vpack.c.bf16 %v428, %v428
        %v1710 = vpack.c.bf16 %v429, %v429
        %v1711 = vpack.c.bf16 %v430, %v430
        %v1712 = vpack.c.bf16 %v431, %v431
        %v1713 = vpack.c.bf16 %v432, %v432
        %v1714 = vpack.c.bf16 %v433, %v433
        %v1715 = vpack.c.bf16 %v434, %v434
        %v1716 = vpack.c.bf16 %v435, %v435
        %v1717 = vpack.c.bf16 %v436, %v436
        %v1718 = vpack.c.bf16 %v437, %v437
        %v1719 = vpack.c.bf16 %v438, %v438
        %v1720 = vpack.c.bf16 %v439, %v439
        %v1721 = vpack.c.bf16 %v440, %v440
        %v1722 = vpack.c.bf16 %v441, %v441
        %v1723 = vpack.c.bf16 %v442, %v442
        %v1724 = vpack.c.bf16 %v443, %v443
        %v1725 = vpack.c.bf16 %v444, %v444
        %v1726 = vpack.c.bf16 %v445, %v445
        %v1727 = vpack.c.bf16 %v446, %v446
        %v1728 = vpack.c.bf16 %v447, %v447
        %v1729 = vpack.c.bf16 %v448, %v448
        %v1730 = vpack.c.bf16 %v449, %v449
        %v1731 = vpack.c.bf16 %v450, %v450
        %v1732 = vpack.c.bf16 %v451, %v451
        %v1733 = vpack.c.bf16 %v452, %v452
        %v1734 = vpack.c.bf16 %v453, %v453
        %v1735 = vpack.c.bf16 %v454, %v454
        %v1736 = vpack.c.bf16 %v455, %v455
        %v1737 = vpack.c.bf16 %v456, %v456
        %v1738 = vpack.c.bf16 %v457, %v457
        %v1739 = vpack.c.bf16 %v458, %v458
        %v1740 = vpack.c.bf16 %v459, %v459
        %v1741 = vpack.c.bf16 %v460, %v460
        %v1742 = vpack.c.bf16 %v461, %v461
        %v1743 = vpack.c.bf16 %v462, %v462
        %v1744 = vpack.c.bf16 %v463, %v463
        %v1745 = vpack.c.bf16 %v464, %v464
        %v1746 = vpack.c.bf16 %v465, %v465
        %v1747 = vpack.c.bf16 %v466, %v466
        %v1748 = vpack.c.bf16 %v467, %v467
        %v1749 = vpack.c.bf16 %v468, %v468
        %v1750 = vpack.c.bf16 %v469, %v469
        %v1751 = vpack.c.bf16 %v470, %v470
        %v1752 = vpack.c.bf16 %v471, %v471
        %v1753 = vpack.c.bf16 %v472, %v472
        %v1754 = vpack.c.bf16 %v473, %v473
        %v1755 = vpack.c.bf16 %v474, %v474
        %v1756 = vpack.c.bf16 %v475, %v475
        %v1757 = vpack.c.bf16 %v476, %v476
        %v1758 = vpack.c.bf16 %v477, %v477
        %v1759 = vpack.c.bf16 %v478, %v478
        %v1760 = vpack.c.bf16 %v479, %v479
        %v1761 = vpack.c.bf16 %v480, %v480
        %v1762 = vpack.c.bf16 %v481, %v481
        %v1763 = vpack.c.bf16 %v482, %v482
        %v1764 = vpack.c.bf16 %v483, %v483
        %v1765 = vpack.c.bf16 %v484, %v484
        %v1766 = vpack.c.bf16 %v485, %v485
        %v1767 = vpack.c.bf16 %v486, %v486
        %v1768 = vpack.c.bf16 %v487, %v487
        %v1769 = vpack.c.bf16 %v488, %v488
        %v1770 = vpack.c.bf16 %v489, %v489
        %v1771 = vpack.c.bf16 %v490, %v490
        %v1772 = vpack.c.bf16 %v491, %v491
        %v1773 = vpack.c.bf16 %v492, %v492
        %v1774 = vpack.c.bf16 %v493, %v493
        %v1775 = vpack.c.bf16 %v494, %v494
        %v1776 = vpack.c.bf16 %v495, %v495
        %v1777 = vpack.c.bf16 %v496, %v496
        %v1778 = vpack.c.bf16 %v497, %v497
        %v1779 = vpack.c.bf16 %v498, %v498
        %v1780 = vpack.c.bf16 %v499, %v499
        %v1781 = vpack.c.bf16 %v500, %v500
        %v1782 = vpack.c.bf16 %v501, %v501
        %v1783 = vpack.c.bf16 %v502, %v502
        %v1784 = vpack.c.bf16 %v503, %v503
        %v1785 = vpack.c.bf16 %v504, %v504
        %v1786 = vpack.c.bf16 %v505, %v505
        %v1787 = vpack.c.bf16 %v506, %v506
        %v1788 = vpack.c.bf16 %v507, %v507
        %v1789 = vpack.c.bf16 %v508, %v508
        %v1790 = vpack.c.bf16 %v509, %v509
        %v1791 = vpack.c.bf16 %v510, %v510
        %v1792 = vpack.c.bf16 %v511, %v511
        %v1793 = vpack.c.bf16 %v512, %v512
        %v1794 = vpack.c.bf16 %v513, %v513
        %v1795 = vpack.c.bf16 %v514, %v514
        %v1796 = vpack.c.bf16 %v515, %v515
        %v1797 = vpack.c.bf16 %v516, %v516
        %v1798 = vpack.c.bf16 %v517, %v517
        %v1799 = vpack.c.bf16 %v518, %v518
        %v1800 = vpack.c.bf16 %v519, %v519
        %v1801 = vpack.c.bf16 %v520, %v520
        %v1802 = vpack.c.bf16 %v521, %v521
        %v1803 = vpack.c.bf16 %v522, %v522
        %v1804 = vpack.c.bf16 %v523, %v523
        %v1805 = vpack.c.bf16 %v524, %v524
        %v1806 = vpack.c.bf16 %v525, %v525
        %v1807 = vpack.c.bf16 %v526, %v526
        %v1808 = vpack.c.bf16 %v527, %v527
        %v1809 = vpack.c.bf16 %v528, %v528
        %v1810 = vpack.c.bf16 %v529, %v529
        %v1811 = vpack.c.bf16 %v530, %v530
        %v1812 = vpack.c.bf16 %v531, %v531
        %v1813 = vpack.c.bf16 %v532, %v532
        %v1814 = vpack.c.bf16 %v533, %v533
        %v1815 = vpack.c.bf16 %v534, %v534
        %v1816 = vpack.c.bf16 %v535, %v535
        %v1817 = vpack.c.bf16 %v536, %v536
        %v1818 = vpack.c.bf16 %v537, %v537
        %v1819 = vpack.c.bf16 %v538, %v538
        %v1820 = vpack.c.bf16 %v539, %v539
        %v1821 = vpack.c.bf16 %v540, %v540
        %v1822 = vpack.c.bf16 %v541, %v541
        %v1823 = vpack.c.bf16 %v542, %v542
        %v1824 = vpack.c.bf16 %v543, %v543
        %v1825 = vpack.c.bf16 %v544, %v544
        %v1826 = vpack.c.bf16 %v545, %v545
        %v1827 = vpack.c.bf16 %v546, %v546
        %v1828 = vpack.c.bf16 %v547, %v547
        %v1829 = vpack.c.bf16 %v548, %v548
        %v1830 = vpack.c.bf16 %v549, %v549
        %v1831 = vpack.c.bf16 %v550, %v550
        %v1832 = vpack.c.bf16 %v551, %v551
        %v1833 = vpack.c.bf16 %v552, %v552
        %v1834 = vpack.c.bf16 %v553, %v553
        %v1835 = vpack.c.bf16 %v554, %v554
        %v1836 = vpack.c.bf16 %v555, %v555
        %v1837 = vpack.c.bf16 %v556, %v556
        %v1838 = vpack.c.bf16 %v557, %v557
        %v1839 = vpack.c.bf16 %v558, %v558
        %v1840 = vpack.c.bf16 %v559, %v559
        %v1841 = vpack.c.bf16 %v560, %v560
        %v1842 = vpack.c.bf16 %v561, %v561
        %v1843 = vpack.c.bf16 %v562, %v562
        %v1844 = vpack.c.bf16 %v563, %v563
        %v1845 = vpack.c.bf16 %v564, %v564
        %v1846 = vpack.c.bf16 %v565, %v565
        %v1847 = vpack.c.bf16 %v566, %v566
        %v1848 = vpack.c.bf16 %v567, %v567
        %v1849 = vpack.c.bf16 %v568, %v568
        %v1850 = vpack.c.bf16 %v569, %v569
        %v1851 = vpack.c.bf16 %v570, %v570
        %v1852 = vpack.c.bf16 %v571, %v571
        %v1853 = vpack.c.bf16 %v572, %v572
        %v1854 = vpack.c.bf16 %v573, %v573
        %v1855 = vpack.c.bf16 %v574, %v574
        %v1856 = vpack.c.bf16 %v575, %v575
        %v1857 = vpack.c.bf16 %v576, %v576
        %v1858 = vpack.c.bf16 %v577, %v577
        %v1859 = vpack.c.bf16 %v578, %v578
        %v1860 = vpack.c.bf16 %v579, %v579
        %v1861 = vpack.c.bf16 %v580, %v580
        %v1862 = vpack.c.bf16 %v581, %v581
        %v1863 = vpack.c.bf16 %v582, %v582
        %v1864 = vpack.c.bf16 %v583, %v583
        %v1865 = vpack.c.bf16 %v584, %v584
        %v1866 = vpack.c.bf16 %v585, %v585
        %v1867 = vpack.c.bf16 %v586, %v586
        %v1868 = vpack.c.bf16 %v587, %v587
        %v1869 = vpack.c.bf16 %v588, %v588
        %v1870 = vpack.c.bf16 %v589, %v589
        %v1871 = vpack.c.bf16 %v590, %v590
        %v1872 = vpack.c.bf16 %v591, %v591
        %v1873 = vpack.c.bf16 %v592, %v592
        %v1874 = vpack.c.bf16 %v593, %v593
        %v1875 = vpack.c.bf16 %v594, %v594
        %v1876 = vpack.c.bf16 %v595, %v595
        %v1877 = vpack.c.bf16 %v596, %v596
        %v1878 = vpack.c.bf16 %v597, %v597
        %v1879 = vpack.c.bf16 %v598, %v598
        %v1880 = vpack.c.bf16 %v599, %v599
        %v1881 = vpack.c.bf16 %v600, %v600
        %v1882 = vpack.c.bf16 %v601, %v601
        %v1883 = vpack.c.bf16 %v602, %v602
        %v1884 = vpack.c.bf16 %v603, %v603
        %v1885 = vpack.c.bf16 %v604, %v604
        %v1886 = vpack.c.bf16 %v605, %v605
        %v1887 = vpack.c.bf16 %v606, %v606
        %v1888 = vpack.c.bf16 %v607, %v607
        %v1889 = vpack.c.bf16 %v608, %v608
        %v1890 = vpack.c.bf16 %v609, %v609
        %v1891 = vpack.c.bf16 %v610, %v610
        %v1892 = vpack.c.bf16 %v611, %v611
        %v1893 = vpack.c.bf16 %v612, %v612
        %v1894 = vpack.c.bf16 %v613, %v613
        %v1895 = vpack.c.bf16 %v614, %v614
        %v1896 = vpack.c.bf16 %v615, %v615
        %v1897 = vpack.c.bf16 %v616, %v616
        %v1898 = vpack.c.bf16 %v617, %v617
        %v1899 = vpack.c.bf16 %v618, %v618
        %v1900 = vpack.c.bf16 %v619, %v619
        %v1901 = vpack.c.bf16 %v620, %v620
        %v1902 = vpack.c.bf16 %v621, %v621
        %v1903 = vpack.c.bf16 %v622, %v622
        %v1904 = vpack.c.bf16 %v623, %v623
        %v1905 = vpack.c.bf16 %v624, %v624
        %v1906 = vpack.c.bf16 %v625, %v625
        %v1907 = vpack.c.bf16 %v626, %v626
        %v1908 = vpack.c.bf16 %v627, %v627
        %v1909 = vpack.c.bf16 %v628, %v628
        %v1910 = vpack.c.bf16 %v629, %v629
        %v1911 = vpack.c.bf16 %v630, %v630
        %v1912 = vpack.c.bf16 %v631, %v631
        %v1913 = vpack.c.bf16 %v632, %v632
        %v1914 = vpack.c.bf16 %v633, %v633
        %v1915 = vpack.c.bf16 %v634, %v634
        %v1916 = vpack.c.bf16 %v635, %v635
        %v1917 = vpack.c.bf16 %v636, %v636
        %v1918 = vpack.c.bf16 %v637, %v637
        %v1919 = vpack.c.bf16 %v638, %v638
        %v1920 = vpack.c.bf16 %v639, %v639
        %v1921 = vpack.c.bf16 %v640, %v640
        %v1922 = vpack.c.bf16 %v641, %v641
        %v1923 = vpack.c.bf16 %v642, %v642
        %v1924 = vpack.c.bf16 %v643, %v643
        %v1925 = vpack.c.bf16 %v644, %v644
        %v1926 = vpack.c.bf16 %v645, %v645
        %v1927 = vpack.c.bf16 %v646, %v646
        %v1928 = vpack.c.bf16 %v647, %v647
        %v1929 = vpack.c.bf16 %v648, %v648
        %v1930 = vpack.c.bf16 %v649, %v649
        %v1931 = vpack.c.bf16 %v650, %v650
        %v1932 = vpack.c.bf16 %v651, %v651
        %v1933 = vpack.c.bf16 %v652, %v652
        %v1934 = vpack.c.bf16 %v653, %v653
        %v1935 = vpack.c.bf16 %v654, %v654
        %v1936 = vpack.c.bf16 %v655, %v655
        %v1937 = vpack.c.bf16 %v656, %v656
        %v1938 = vpack.c.bf16 %v657, %v657
        %v1939 = vpack.c.bf16 %v658, %v658
        %v1940 = vpack.c.bf16 %v659, %v659
        %v1941 = vpack.c.bf16 %v660, %v660
        %v1942 = vpack.c.bf16 %v661, %v661
        %v1943 = vpack.c.bf16 %v662, %v662
        %v1944 = vpack.c.bf16 %v663, %v663
        %v1945 = vpack.c.bf16 %v664, %v664
        %v1946 = vpack.c.bf16 %v665, %v665
        %v1947 = vpack.c.bf16 %v666, %v666
        %v1948 = vpack.c.bf16 %v667, %v667
        %v1949 = vpack.c.bf16 %v668, %v668
        %v1950 = vpack.c.bf16 %v669, %v669
        %v1951 = vpack.c.bf16 %v670, %v670
        %v1952 = vpack.c.bf16 %v671, %v671
        %v1953 = vpack.c.bf16 %v672, %v672
        %v1954 = vpack.c.bf16 %v673, %v673
        %v1955 = vpack.c.bf16 %v674, %v674
        %v1956 = vpack.c.bf16 %v675, %v675
        %v1957 = vpack.c.bf16 %v676, %v676
        %v1958 = vpack.c.bf16 %v677, %v677
        %v1959 = vpack.c.bf16 %v678, %v678
        %v1960 = vpack.c.bf16 %v679, %v679
        %v1961 = vpack.c.bf16 %v680, %v680
        %v1962 = vpack.c.bf16 %v681, %v681
        %v1963 = vunpack.c.l.bf16 %v1707
        %v1964 = vunpack.c.l.bf16 %v1708
        %v1965 = vunpack.c.l.bf16 %v1709
        %v1966 = vunpack.c.l.bf16 %v1710
        %v1967 = vunpack.c.l.bf16 %v1711
        %v1968 = vunpack.c.l.bf16 %v1712
        %v1969 = vunpack.c.l.bf16 %v1713
        %v1970 = vunpack.c.l.bf16 %v1714
        %v1971 = vunpack.c.l.bf16 %v1715
        %v1972 = vunpack.c.l.bf16 %v1716
        %v1973 = vunpack.c.l.bf16 %v1717
        %v1974 = vunpack.c.l.bf16 %v1718
        %v1975 = vunpack.c.l.bf16 %v1719
        %v1976 = vunpack.c.l.bf16 %v1720
        %v1977 = vunpack.c.l.bf16 %v1721
        %v1978 = vunpack.c.l.bf16 %v1722
        %v1979 = vunpack.c.l.bf16 %v1723
        %v1980 = vunpack.c.l.bf16 %v1724
        %v1981 = vunpack.c.l.bf16 %v1725
        %v1982 = vunpack.c.l.bf16 %v1726
        %v1983 = vunpack.c.l.bf16 %v1727
        %v1984 = vunpack.c.l.bf16 %v1728
        %v1985 = vunpack.c.l.bf16 %v1729
        %v1986 = vunpack.c.l.bf16 %v1730
        %v1987 = vunpack.c.l.bf16 %v1731
        %v1988 = vunpack.c.l.bf16 %v1732
        %v1989 = vunpack.c.l.bf16 %v1733
        %v1990 = vunpack.c.l.bf16 %v1734
        %v1991 = vunpack.c.l.bf16 %v1735
        %v1992 = vunpack.c.l.bf16 %v1736
        %v1993 = vunpack.c.l.bf16 %v1737
        %v1994 = vunpack.c.l.bf16 %v1738
        %v1995 = vunpack.c.l.bf16 %v1739
        %v1996 = vunpack.c.l.bf16 %v1740
        %v1997 = vunpack.c.l.bf16 %v1741
        %v1998 = vunpack.c.l.bf16 %v1742
        %v1999 = vunpack.c.l.bf16 %v1743
        %v2000 = vunpack.c.l.bf16 %v1744
        %v2001 = vunpack.c.l.bf16 %v1745
        %v2002 = vunpack.c.l.bf16 %v1746
        %v2003 = vunpack.c.l.bf16 %v1747
        %v2004 = vunpack.c.l.bf16 %v1748
        %v2005 = vunpack.c.l.bf16 %v1749
        %v2006 = vunpack.c.l.bf16 %v1750
        %v2007 = vunpack.c.l.bf16 %v1751
        %v2008 = vunpack.c.l.bf16 %v1752
        %v2009 = vunpack.c.l.bf16 %v1753
        %v2010 = vunpack.c.l.bf16 %v1754
        %v2011 = vunpack.c.l.bf16 %v1755
        %v2012 = vunpack.c.l.bf16 %v1756
        %v2013 = vunpack.c.l.bf16 %v1757
        %v2014 = vunpack.c.l.bf16 %v1758
        %v2015 = vunpack.c.l.bf16 %v1759
        %v2016 = vunpack.c.l.bf16 %v1760
        %v2017 = vunpack.c.l.bf16 %v1761
        %v2018 = vunpack.c.l.bf16 %v1762
        %v2019 = vunpack.c.l.bf16 %v1763
        %v2020 = vunpack.c.l.bf16 %v1764
        %v2021 = vunpack.c.l.bf16 %v1765
        %v2022 = vunpack.c.l.bf16 %v1766
        %v2023 = vunpack.c.l.bf16 %v1767
        %v2024 = vunpack.c.l.bf16 %v1768
        %v2025 = vunpack.c.l.bf16 %v1769
        %v2026 = vunpack.c.l.bf16 %v1770
        %v2027 = vunpack.c.l.bf16 %v1771
        %v2028 = vunpack.c.l.bf16 %v1772
        %v2029 = vunpack.c.l.bf16 %v1773
        %v2030 = vunpack.c.l.bf16 %v1774
        %v2031 = vunpack.c.l.bf16 %v1775
        %v2032 = vunpack.c.l.bf16 %v1776
        %v2033 = vunpack.c.l.bf16 %v1777
        %v2034 = vunpack.c.l.bf16 %v1778
        %v2035 = vunpack.c.l.bf16 %v1779
        %v2036 = vunpack.c.l.bf16 %v1780
        %v2037 = vunpack.c.l.bf16 %v1781
        %v2038 = vunpack.c.l.bf16 %v1782
        %v2039 = vunpack.c.l.bf16 %v1783
        %v2040 = vunpack.c.l.bf16 %v1784
        %v2041 = vunpack.c.l.bf16 %v1785
        %v2042 = vunpack.c.l.bf16 %v1786
        %v2043 = vunpack.c.l.bf16 %v1787
        %v2044 = vunpack.c.l.bf16 %v1788
        %v2045 = vunpack.c.l.bf16 %v1789
        %v2046 = vunpack.c.l.bf16 %v1790
        %v2047 = vunpack.c.l.bf16 %v1791
        %v2048 = vunpack.c.l.bf16 %v1792
        %v2049 = vunpack.c.l.bf16 %v1793
        %v2050 = vunpack.c.l.bf16 %v1794
        %v2051 = vunpack.c.l.bf16 %v1795
        %v2052 = vunpack.c.l.bf16 %v1796
        %v2053 = vunpack.c.l.bf16 %v1797
        %v2054 = vunpack.c.l.bf16 %v1798
        %v2055 = vunpack.c.l.bf16 %v1799
        %v2056 = vunpack.c.l.bf16 %v1800
        %v2057 = vunpack.c.l.bf16 %v1801
        %v2058 = vunpack.c.l.bf16 %v1802
        %v2059 = vunpack.c.l.bf16 %v1803
        %v2060 = vunpack.c.l.bf16 %v1804
        %v2061 = vunpack.c.l.bf16 %v1805
        %v2062 = vunpack.c.l.bf16 %v1806
        %v2063 = vunpack.c.l.bf16 %v1807
        %v2064 = vunpack.c.l.bf16 %v1808
        %v2065 = vunpack.c.l.bf16 %v1809
        %v2066 = vunpack.c.l.bf16 %v1810
        %v2067 = vunpack.c.l.bf16 %v1811
        %v2068 = vunpack.c.l.bf16 %v1812
        %v2069 = vunpack.c.l.bf16 %v1813
        %v2070 = vunpack.c.l.bf16 %v1814
        %v2071 = vunpack.c.l.bf16 %v1815
        %v2072 = vunpack.c.l.bf16 %v1816
        %v2073 = vunpack.c.l.bf16 %v1817
        %v2074 = vunpack.c.l.bf16 %v1818
        %v2075 = vunpack.c.l.bf16 %v1819
        %v2076 = vunpack.c.l.bf16 %v1820
        %v2077 = vunpack.c.l.bf16 %v1821
        %v2078 = vunpack.c.l.bf16 %v1822
        %v2079 = vunpack.c.l.bf16 %v1823
        %v2080 = vunpack.c.l.bf16 %v1824
        %v2081 = vunpack.c.l.bf16 %v1825
        %v2082 = vunpack.c.l.bf16 %v1826
        %v2083 = vunpack.c.l.bf16 %v1827
        %v2084 = vunpack.c.l.bf16 %v1828
        %v2085 = vunpack.c.l.bf16 %v1829
        %v2086 = vunpack.c.l.bf16 %v1830
        %v2087 = vunpack.c.l.bf16 %v1831
        %v2088 = vunpack.c.l.bf16 %v1832
        %v2089 = vunpack.c.l.bf16 %v1833
        %v2090 = vunpack.c.l.bf16 %v1834
        %v2091 = vunpack.c.l.bf16 %v1835
        %v2092 = vunpack.c.l.bf16 %v1836
        %v2093 = vunpack.c.l.bf16 %v1837
        %v2094 = vunpack.c.l.bf16 %v1838
        %v2095 = vunpack.c.l.bf16 %v1839
        %v2096 = vunpack.c.l.bf16 %v1840
        %v2097 = vunpack.c.l.bf16 %v1841
        %v2098 = vunpack.c.l.bf16 %v1842
        %v2099 = vunpack.c.l.bf16 %v1843
        %v2100 = vunpack.c.l.bf16 %v1844
        %v2101 = vunpack.c.l.bf16 %v1845
        %v2102 = vunpack.c.l.bf16 %v1846
        %v2103 = vunpack.c.l.bf16 %v1847
        %v2104 = vunpack.c.l.bf16 %v1848
        %v2105 = vunpack.c.l.bf16 %v1849
        %v2106 = vunpack.c.l.bf16 %v1850
        %v2107 = vunpack.c.l.bf16 %v1851
        %v2108 = vunpack.c.l.bf16 %v1852
        %v2109 = vunpack.c.l.bf16 %v1853
        %v2110 = vunpack.c.l.bf16 %v1854
        %v2111 = vunpack.c.l.bf16 %v1855
        %v2112 = vunpack.c.l.bf16 %v1856
        %v2113 = vunpack.c.l.bf16 %v1857
        %v2114 = vunpack.c.l.bf16 %v1858
        %v2115 = vunpack.c.l.bf16 %v1859
        %v2116 = vunpack.c.l.bf16 %v1860
        %v2117 = vunpack.c.l.bf16 %v1861
        %v2118 = vunpack.c.l.bf16 %v1862
        %v2119 = vunpack.c.l.bf16 %v1863
        %v2120 = vunpack.c.l.bf16 %v1864
        %v2121 = vunpack.c.l.bf16 %v1865
        %v2122 = vunpack.c.l.bf16 %v1866
        %v2123 = vunpack.c.l.bf16 %v1867
        %v2124 = vunpack.c.l.bf16 %v1868
        %v2125 = vunpack.c.l.bf16 %v1869
        %v2126 = vunpack.c.l.bf16 %v1870
        %v2127 = vunpack.c.l.bf16 %v1871
        %v2128 = vunpack.c.l.bf16 %v1872
        %v2129 = vunpack.c.l.bf16 %v1873
        %v2130 = vunpack.c.l.bf16 %v1874
        %v2131 = vunpack.c.l.bf16 %v1875
        %v2132 = vunpack.c.l.bf16 %v1876
        %v2133 = vunpack.c.l.bf16 %v1877
        %v2134 = vunpack.c.l.bf16 %v1878
        %v2135 = vunpack.c.l.bf16 %v1879
        %v2136 = vunpack.c.l.bf16 %v1880
        %v2137 = vunpack.c.l.bf16 %v1881
        %v2138 = vunpack.c.l.bf16 %v1882
        %v2139 = vunpack.c.l.bf16 %v1883
        %v2140 = vunpack.c.l.bf16 %v1884
        %v2141 = vunpack.c.l.bf16 %v1885
        %v2142 = vunpack.c.l.bf16 %v1886
        %v2143 = vunpack.c.l.bf16 %v1887
        %v2144 = vunpack.c.l.bf16 %v1888
        %v2145 = vunpack.c.l.bf16 %v1889
        %v2146 = vunpack.c.l.bf16 %v1890
        %v2147 = vunpack.c.l.bf16 %v1891
        %v2148 = vunpack.c.l.bf16 %v1892
        %v2149 = vunpack.c.l.bf16 %v1893
        %v2150 = vunpack.c.l.bf16 %v1894
        %v2151 = vunpack.c.l.bf16 %v1895
        %v2152 = vunpack.c.l.bf16 %v1896
        %v2153 = vunpack.c.l.bf16 %v1897
        %v2154 = vunpack.c.l.bf16 %v1898
        %v2155 = vunpack.c.l.bf16 %v1899
        %v2156 = vunpack.c.l.bf16 %v1900
        %v2157 = vunpack.c.l.bf16 %v1901
        %v2158 = vunpack.c.l.bf16 %v1902
        %v2159 = vunpack.c.l.bf16 %v1903
        %v2160 = vunpack.c.l.bf16 %v1904
        %v2161 = vunpack.c.l.bf16 %v1905
        %v2162 = vunpack.c.l.bf16 %v1906
        %v2163 = vunpack.c.l.bf16 %v1907
        %v2164 = vunpack.c.l.bf16 %v1908
        %v2165 = vunpack.c.l.bf16 %v1909
        %v2166 = vunpack.c.l.bf16 %v1910
        %v2167 = vunpack.c.l.bf16 %v1911
        %v2168 = vunpack.c.l.bf16 %v1912
        %v2169 = vunpack.c.l.bf16 %v1913
        %v2170 = vunpack.c.l.bf16 %v1914
        %v2171 = vunpack.c.l.bf16 %v1915
        %v2172 = vunpack.c.l.bf16 %v1916
        %v2173 = vunpack.c.l.bf16 %v1917
        %v2174 = vunpack.c.l.bf16 %v1918
        %v2175 = vunpack.c.l.bf16 %v1919
        %v2176 = vunpack.c.l.bf16 %v1920
        %v2177 = vunpack.c.l.bf16 %v1921
        %v2178 = vunpack.c.l.bf16 %v1922
        %v2179 = vunpack.c.l.bf16 %v1923
        %v2180 = vunpack.c.l.bf16 %v1924
        %v2181 = vunpack.c.l.bf16 %v1925
        %v2182 = vunpack.c.l.bf16 %v1926
        %v2183 = vunpack.c.l.bf16 %v1927
        %v2184 = vunpack.c.l.bf16 %v1928
        %v2185 = vunpack.c.l.bf16 %v1929
        %v2186 = vunpack.c.l.bf16 %v1930
        %v2187 = vunpack.c.l.bf16 %v1931
        %v2188 = vunpack.c.l.bf16 %v1932
        %v2189 = vunpack.c.l.bf16 %v1933
        %v2190 = vunpack.c.l.bf16 %v1934
        %v2191 = vunpack.c.l.bf16 %v1935
        %v2192 = vunpack.c.l.bf16 %v1936
        %v2193 = vunpack.c.l.bf16 %v1937
        %v2194 = vunpack.c.l.bf16 %v1938
        %v2195 = vunpack.c.l.bf16 %v1939
        %v2196 = vunpack.c.l.bf16 %v1940
        %v2197 = vunpack.c.l.bf16 %v1941
        %v2198 = vunpack.c.l.bf16 %v1942
        %v2199 = vunpack.c.l.bf16 %v1943
        %v2200 = vunpack.c.l.bf16 %v1944
        %v2201 = vunpack.c.l.bf16 %v1945
        %v2202 = vunpack.c.l.bf16 %v1946
        %v2203 = vunpack.c.l.bf16 %v1947
        %v2204 = vunpack.c.l.bf16 %v1948
        %v2205 = vunpack.c.l.bf16 %v1949
        %v2206 = vunpack.c.l.bf16 %v1950
        %v2207 = vunpack.c.l.bf16 %v1951
        %v2208 = vunpack.c.l.bf16 %v1952
        %v2209 = vunpack.c.l.bf16 %v1953
        %v2210 = vunpack.c.l.bf16 %v1954
        %v2211 = vunpack.c.l.bf16 %v1955
        %v2212 = vunpack.c.l.bf16 %v1956
        %v2213 = vunpack.c.l.bf16 %v1957
        %v2214 = vunpack.c.l.bf16 %v1958
        %v2215 = vunpack.c.l.bf16 %v1959
        %v2216 = vunpack.c.l.bf16 %v1960
        %v2217 = vunpack.c.l.bf16 %v1961
        %v2218 = vunpack.c.l.bf16 %v1962
        %v2219 = vsub.f32 %v426, %v1963
        %v2220 = vsub.f32 %v427, %v1964
        %v2221 = vsub.f32 %v428, %v1965
        %v2222 = vsub.f32 %v429, %v1966
        %v2223 = vsub.f32 %v430, %v1967
        %v2224 = vsub.f32 %v431, %v1968
        %v2225 = vsub.f32 %v432, %v1969
        %v2226 = vsub.f32 %v433, %v1970
        %v2227 = vsub.f32 %v434, %v1971
        %v2228 = vsub.f32 %v435, %v1972
        %v2229 = vsub.f32 %v436, %v1973
        %v2230 = vsub.f32 %v437, %v1974
        %v2231 = vsub.f32 %v438, %v1975
        %v2232 = vsub.f32 %v439, %v1976
        %v2233 = vsub.f32 %v440, %v1977
        %v2234 = vsub.f32 %v441, %v1978
        %v2235 = vsub.f32 %v442, %v1979
        %v2236 = vsub.f32 %v443, %v1980
        %v2237 = vsub.f32 %v444, %v1981
        %v2238 = vsub.f32 %v445, %v1982
        %v2239 = vsub.f32 %v446, %v1983
        %v2240 = vsub.f32 %v447, %v1984
        %v2241 = vsub.f32 %v448, %v1985
        %v2242 = vsub.f32 %v449, %v1986
        %v2243 = vsub.f32 %v450, %v1987
        %v2244 = vsub.f32 %v451, %v1988
        %v2245 = vsub.f32 %v452, %v1989
        %v2246 = vsub.f32 %v453, %v1990
        %v2247 = vsub.f32 %v454, %v1991
        %v2248 = vsub.f32 %v455, %v1992
        %v2249 = vsub.f32 %v456, %v1993
        %v2250 = vsub.f32 %v457, %v1994
        %v2251 = vsub.f32 %v458, %v1995
        %v2252 = vsub.f32 %v459, %v1996
        %v2253 = vsub.f32 %v460, %v1997
        %v2254 = vsub.f32 %v461, %v1998
        %v2255 = vsub.f32 %v462, %v1999
        %v2256 = vsub.f32 %v463, %v2000
        %v2257 = vsub.f32 %v464, %v2001
        %v2258 = vsub.f32 %v465, %v2002
        %v2259 = vsub.f32 %v466, %v2003
        %v2260 = vsub.f32 %v467, %v2004
        %v2261 = vsub.f32 %v468, %v2005
        %v2262 = vsub.f32 %v469, %v2006
        %v2263 = vsub.f32 %v470, %v2007
        %v2264 = vsub.f32 %v471, %v2008
        %v2265 = vsub.f32 %v472, %v2009
        %v2266 = vsub.f32 %v473, %v2010
        %v2267 = vsub.f32 %v474, %v2011
        %v2268 = vsub.f32 %v475, %v2012
        %v2269 = vsub.f32 %v476, %v2013
        %v2270 = vsub.f32 %v477, %v2014
        %v2271 = vsub.f32 %v478, %v2015
        %v2272 = vsub.f32 %v479, %v2016
        %v2273 = vsub.f32 %v480, %v2017
        %v2274 = vsub.f32 %v481, %v2018
        %v2275 = vsub.f32 %v482, %v2019
        %v2276 = vsub.f32 %v483, %v2020
        %v2277 = vsub.f32 %v484, %v2021
        %v2278 = vsub.f32 %v485, %v2022
        %v2279 = vsub.f32 %v486, %v2023
        %v2280 = vsub.f32 %v487, %v2024
        %v2281 = vsub.f32 %v488, %v2025
        %v2282 = vsub.f32 %v489, %v2026
        %v2283 = vsub.f32 %v490, %v2027
        %v2284 = vsub.f32 %v491, %v2028
        %v2285 = vsub.f32 %v492, %v2029
        %v2286 = vsub.f32 %v493, %v2030
        %v2287 = vsub.f32 %v494, %v2031
        %v2288 = vsub.f32 %v495, %v2032
        %v2289 = vsub.f32 %v496, %v2033
        %v2290 = vsub.f32 %v497, %v2034
        %v2291 = vsub.f32 %v498, %v2035
        %v2292 = vsub.f32 %v499, %v2036
        %v2293 = vsub.f32 %v500, %v2037
        %v2294 = vsub.f32 %v501, %v2038
        %v2295 = vsub.f32 %v502, %v2039
        %v2296 = vsub.f32 %v503, %v2040
        %v2297 = vsub.f32 %v504, %v2041
        %v2298 = vsub.f32 %v505, %v2042
        %v2299 = vsub.f32 %v506, %v2043
        %v2300 = vsub.f32 %v507, %v2044
        %v2301 = vsub.f32 %v508, %v2045
        %v2302 = vsub.f32 %v509, %v2046
        %v2303 = vsub.f32 %v510, %v2047
        %v2304 = vsub.f32 %v511, %v2048
        %v2305 = vsub.f32 %v512, %v2049
        %v2306 = vsub.f32 %v513, %v2050
        %v2307 = vsub.f32 %v514, %v2051
        %v2308 = vsub.f32 %v515, %v2052
        %v2309 = vsub.f32 %v516, %v2053
        %v2310 = vsub.f32 %v517, %v2054
        %v2311 = vsub.f32 %v518, %v2055
        %v2312 = vsub.f32 %v519, %v2056
        %v2313 = vsub.f32 %v520, %v2057
        %v2314 = vsub.f32 %v521, %v2058
        %v2315 = vsub.f32 %v522, %v2059
        %v2316 = vsub.f32 %v523, %v2060
        %v2317 = vsub.f32 %v524, %v2061
        %v2318 = vsub.f32 %v525, %v2062
        %v2319 = vsub.f32 %v526, %v2063
        %v2320 = vsub.f32 %v527, %v2064
        %v2321 = vsub.f32 %v528, %v2065
        %v2322 = vsub.f32 %v529, %v2066
        %v2323 = vsub.f32 %v530, %v2067
        %v2324 = vsub.f32 %v531, %v2068
        %v2325 = vsub.f32 %v532, %v2069
        %v2326 = vsub.f32 %v533, %v2070
        %v2327 = vsub.f32 %v534, %v2071
        %v2328 = vsub.f32 %v535, %v2072
        %v2329 = vsub.f32 %v536, %v2073
        %v2330 = vsub.f32 %v537, %v2074
        %v2331 = vsub.f32 %v538, %v2075
        %v2332 = vsub.f32 %v539, %v2076
        %v2333 = vsub.f32 %v540, %v2077
        %v2334 = vsub.f32 %v541, %v2078
        %v2335 = vsub.f32 %v542, %v2079
        %v2336 = vsub.f32 %v543, %v2080
        %v2337 = vsub.f32 %v544, %v2081
        %v2338 = vsub.f32 %v545, %v2082
        %v2339 = vsub.f32 %v546, %v2083
        %v2340 = vsub.f32 %v547, %v2084
        %v2341 = vsub.f32 %v548, %v2085
        %v2342 = vsub.f32 %v549, %v2086
        %v2343 = vsub.f32 %v550, %v2087
        %v2344 = vsub.f32 %v551, %v2088
        %v2345 = vsub.f32 %v552, %v2089
        %v2346 = vsub.f32 %v553, %v2090
        %v2347 = vsub.f32 %v554, %v2091
        %v2348 = vsub.f32 %v555, %v2092
        %v2349 = vsub.f32 %v556, %v2093
        %v2350 = vsub.f32 %v557, %v2094
        %v2351 = vsub.f32 %v558, %v2095
        %v2352 = vsub.f32 %v559, %v2096
        %v2353 = vsub.f32 %v560, %v2097
        %v2354 = vsub.f32 %v561, %v2098
        %v2355 = vsub.f32 %v562, %v2099
        %v2356 = vsub.f32 %v563, %v2100
        %v2357 = vsub.f32 %v564, %v2101
        %v2358 = vsub.f32 %v565, %v2102
        %v2359 = vsub.f32 %v566, %v2103
        %v2360 = vsub.f32 %v567, %v2104
        %v2361 = vsub.f32 %v568, %v2105
        %v2362 = vsub.f32 %v569, %v2106
        %v2363 = vsub.f32 %v570, %v2107
        %v2364 = vsub.f32 %v571, %v2108
        %v2365 = vsub.f32 %v572, %v2109
        %v2366 = vsub.f32 %v573, %v2110
        %v2367 = vsub.f32 %v574, %v2111
        %v2368 = vsub.f32 %v575, %v2112
        %v2369 = vsub.f32 %v576, %v2113
        %v2370 = vsub.f32 %v577, %v2114
        %v2371 = vsub.f32 %v578, %v2115
        %v2372 = vsub.f32 %v579, %v2116
        %v2373 = vsub.f32 %v580, %v2117
        %v2374 = vsub.f32 %v581, %v2118
        %v2375 = vsub.f32 %v582, %v2119
        %v2376 = vsub.f32 %v583, %v2120
        %v2377 = vsub.f32 %v584, %v2121
        %v2378 = vsub.f32 %v585, %v2122
        %v2379 = vsub.f32 %v586, %v2123
        %v2380 = vsub.f32 %v587, %v2124
        %v2381 = vsub.f32 %v588, %v2125
        %v2382 = vsub.f32 %v589, %v2126
        %v2383 = vsub.f32 %v590, %v2127
        %v2384 = vsub.f32 %v591, %v2128
        %v2385 = vsub.f32 %v592, %v2129
        %v2386 = vsub.f32 %v593, %v2130
        %v2387 = vsub.f32 %v594, %v2131
        %v2388 = vsub.f32 %v595, %v2132
        %v2389 = vsub.f32 %v596, %v2133
        %v2390 = vsub.f32 %v597, %v2134
        %v2391 = vsub.f32 %v598, %v2135
        %v2392 = vsub.f32 %v599, %v2136
        %v2393 = vsub.f32 %v600, %v2137
        %v2394 = vsub.f32 %v601, %v2138
        %v2395 = vsub.f32 %v602, %v2139
        %v2396 = vsub.f32 %v603, %v2140
        %v2397 = vsub.f32 %v604, %v2141
        %v2398 = vsub.f32 %v605, %v2142
        %v2399 = vsub.f32 %v606, %v2143
        %v2400 = vsub.f32 %v607, %v2144
        %v2401 = vsub.f32 %v608, %v2145
        %v2402 = vsub.f32 %v609, %v2146
        %v2403 = vsub.f32 %v610, %v2147
        %v2404 = vsub.f32 %v611, %v2148
        %v2405 = vsub.f32 %v612, %v2149
        %v2406 = vsub.f32 %v613, %v2150
        %v2407 = vsub.f32 %v614, %v2151
        %v2408 = vsub.f32 %v615, %v2152
        %v2409 = vsub.f32 %v616, %v2153
        %v2410 = vsub.f32 %v617, %v2154
        %v2411 = vsub.f32 %v618, %v2155
        %v2412 = vsub.f32 %v619, %v2156
        %v2413 = vsub.f32 %v620, %v2157
        %v2414 = vsub.f32 %v621, %v2158
        %v2415 = vsub.f32 %v622, %v2159
        %v2416 = vsub.f32 %v623, %v2160
        %v2417 = vsub.f32 %v624, %v2161
        %v2418 = vsub.f32 %v625, %v2162
        %v2419 = vsub.f32 %v626, %v2163
        %v2420 = vsub.f32 %v627, %v2164
        %v2421 = vsub.f32 %v628, %v2165
        %v2422 = vsub.f32 %v629, %v2166
        %v2423 = vsub.f32 %v630, %v2167
        %v2424 = vsub.f32 %v631, %v2168
        %v2425 = vsub.f32 %v632, %v2169
        %v2426 = vsub.f32 %v633, %v2170
        %v2427 = vsub.f32 %v634, %v2171
        %v2428 = vsub.f32 %v635, %v2172
        %v2429 = vsub.f32 %v636, %v2173
        %v2430 = vsub.f32 %v637, %v2174
        %v2431 = vsub.f32 %v638, %v2175
        %v2432 = vsub.f32 %v639, %v2176
        %v2433 = vsub.f32 %v640, %v2177
        %v2434 = vsub.f32 %v641, %v2178
        %v2435 = vsub.f32 %v642, %v2179
        %v2436 = vsub.f32 %v643, %v2180
        %v2437 = vsub.f32 %v644, %v2181
        %v2438 = vsub.f32 %v645, %v2182
        %v2439 = vsub.f32 %v646, %v2183
        %v2440 = vsub.f32 %v647, %v2184
        %v2441 = vsub.f32 %v648, %v2185
        %v2442 = vsub.f32 %v649, %v2186
        %v2443 = vsub.f32 %v650, %v2187
        %v2444 = vsub.f32 %v651, %v2188
        %v2445 = vsub.f32 %v652, %v2189
        %v2446 = vsub.f32 %v653, %v2190
        %v2447 = vsub.f32 %v654, %v2191
        %v2448 = vsub.f32 %v655, %v2192
        %v2449 = vsub.f32 %v656, %v2193
        %v2450 = vsub.f32 %v657, %v2194
        %v2451 = vsub.f32 %v658, %v2195
        %v2452 = vsub.f32 %v659, %v2196
        %v2453 = vsub.f32 %v660, %v2197
        %v2454 = vsub.f32 %v661, %v2198
        %v2455 = vsub.f32 %v662, %v2199
        %v2456 = vsub.f32 %v663, %v2200
        %v2457 = vsub.f32 %v664, %v2201
        %v2458 = vsub.f32 %v665, %v2202
        %v2459 = vsub.f32 %v666, %v2203
        %v2460 = vsub.f32 %v667, %v2204
        %v2461 = vsub.f32 %v668, %v2205
        %v2462 = vsub.f32 %v669, %v2206
        %v2463 = vsub.f32 %v670, %v2207
        %v2464 = vsub.f32 %v671, %v2208
        %v2465 = vsub.f32 %v672, %v2209
        %v2466 = vsub.f32 %v673, %v2210
        %v2467 = vsub.f32 %v674, %v2211
        %v2468 = vsub.f32 %v675, %v2212
        %v2469 = vsub.f32 %v676, %v2213
        %v2470 = vsub.f32 %v677, %v2214
        %v2471 = vsub.f32 %v678, %v2215
        %v2472 = vsub.f32 %v679, %v2216
        %v2473 = vsub.f32 %v680, %v2217
        %v2474 = vsub.f32 %v681, %v2218
        %v2475 = vpack.c.bf16 %v2220, %v2219
        %v2476 = vpack.c.bf16 %v2222, %v2221
        %v2477 = vpack.c.bf16 %v2224, %v2223
        %v2478 = vpack.c.bf16 %v2226, %v2225
        %v2479 = vpack.c.bf16 %v2228, %v2227
        %v2480 = vpack.c.bf16 %v2230, %v2229
        %v2481 = vpack.c.bf16 %v2232, %v2231
        %v2482 = vpack.c.bf16 %v2234, %v2233
        %v2483 = vpack.c.bf16 %v2236, %v2235
        %v2484 = vpack.c.bf16 %v2238, %v2237
        %v2485 = vpack.c.bf16 %v2240, %v2239
        %v2486 = vpack.c.bf16 %v2242, %v2241
        %v2487 = vpack.c.bf16 %v2244, %v2243
        %v2488 = vpack.c.bf16 %v2246, %v2245
        %v2489 = vpack.c.bf16 %v2248, %v2247
        %v2490 = vpack.c.bf16 %v2250, %v2249
        %v2491 = vpack.c.bf16 %v2252, %v2251
        %v2492 = vpack.c.bf16 %v2254, %v2253
        %v2493 = vpack.c.bf16 %v2256, %v2255
        %v2494 = vpack.c.bf16 %v2258, %v2257
        %v2495 = vpack.c.bf16 %v2260, %v2259
        %v2496 = vpack.c.bf16 %v2262, %v2261
        %v2497 = vpack.c.bf16 %v2264, %v2263
        %v2498 = vpack.c.bf16 %v2266, %v2265
        %v2499 = vpack.c.bf16 %v2268, %v2267
        %v2500 = vpack.c.bf16 %v2270, %v2269
        %v2501 = vpack.c.bf16 %v2272, %v2271
        %v2502 = vpack.c.bf16 %v2274, %v2273
        %v2503 = vpack.c.bf16 %v2276, %v2275
        %v2504 = vpack.c.bf16 %v2278, %v2277
        %v2505 = vpack.c.bf16 %v2280, %v2279
        %v2506 = vpack.c.bf16 %v2282, %v2281
        %v2507 = vpack.c.bf16 %v2284, %v2283
        %v2508 = vpack.c.bf16 %v2286, %v2285
        %v2509 = vpack.c.bf16 %v2288, %v2287
        %v2510 = vpack.c.bf16 %v2290, %v2289
        %v2511 = vpack.c.bf16 %v2292, %v2291
        %v2512 = vpack.c.bf16 %v2294, %v2293
        %v2513 = vpack.c.bf16 %v2296, %v2295
        %v2514 = vpack.c.bf16 %v2298, %v2297
        %v2515 = vpack.c.bf16 %v2300, %v2299
        %v2516 = vpack.c.bf16 %v2302, %v2301
        %v2517 = vpack.c.bf16 %v2304, %v2303
        %v2518 = vpack.c.bf16 %v2306, %v2305
        %v2519 = vpack.c.bf16 %v2308, %v2307
        %v2520 = vpack.c.bf16 %v2310, %v2309
        %v2521 = vpack.c.bf16 %v2312, %v2311
        %v2522 = vpack.c.bf16 %v2314, %v2313
        %v2523 = vpack.c.bf16 %v2316, %v2315
        %v2524 = vpack.c.bf16 %v2318, %v2317
        %v2525 = vpack.c.bf16 %v2320, %v2319
        %v2526 = vpack.c.bf16 %v2322, %v2321
        %v2527 = vpack.c.bf16 %v2324, %v2323
        %v2528 = vpack.c.bf16 %v2326, %v2325
        %v2529 = vpack.c.bf16 %v2328, %v2327
        %v2530 = vpack.c.bf16 %v2330, %v2329
        %v2531 = vpack.c.bf16 %v2332, %v2331
        %v2532 = vpack.c.bf16 %v2334, %v2333
        %v2533 = vpack.c.bf16 %v2336, %v2335
        %v2534 = vpack.c.bf16 %v2338, %v2337
        %v2535 = vpack.c.bf16 %v2340, %v2339
        %v2536 = vpack.c.bf16 %v2342, %v2341
        %v2537 = vpack.c.bf16 %v2344, %v2343
        %v2538 = vpack.c.bf16 %v2346, %v2345
        %v2539 = vpack.c.bf16 %v2348, %v2347
        %v2540 = vpack.c.bf16 %v2350, %v2349
        %v2541 = vpack.c.bf16 %v2352, %v2351
        %v2542 = vpack.c.bf16 %v2354, %v2353
        %v2543 = vpack.c.bf16 %v2356, %v2355
        %v2544 = vpack.c.bf16 %v2358, %v2357
        %v2545 = vpack.c.bf16 %v2360, %v2359
        %v2546 = vpack.c.bf16 %v2362, %v2361
        %v2547 = vpack.c.bf16 %v2364, %v2363
        %v2548 = vpack.c.bf16 %v2366, %v2365
        %v2549 = vpack.c.bf16 %v2368, %v2367
        %v2550 = vpack.c.bf16 %v2370, %v2369
        %v2551 = vpack.c.bf16 %v2372, %v2371
        %v2552 = vpack.c.bf16 %v2374, %v2373
        %v2553 = vpack.c.bf16 %v2376, %v2375
        %v2554 = vpack.c.bf16 %v2378, %v2377
        %v2555 = vpack.c.bf16 %v2380, %v2379
        %v2556 = vpack.c.bf16 %v2382, %v2381
        %v2557 = vpack.c.bf16 %v2384, %v2383
        %v2558 = vpack.c.bf16 %v2386, %v2385
        %v2559 = vpack.c.bf16 %v2388, %v2387
        %v2560 = vpack.c.bf16 %v2390, %v2389
        %v2561 = vpack.c.bf16 %v2392, %v2391
        %v2562 = vpack.c.bf16 %v2394, %v2393
        %v2563 = vpack.c.bf16 %v2396, %v2395
        %v2564 = vpack.c.bf16 %v2398, %v2397
        %v2565 = vpack.c.bf16 %v2400, %v2399
        %v2566 = vpack.c.bf16 %v2402, %v2401
        %v2567 = vpack.c.bf16 %v2404, %v2403
        %v2568 = vpack.c.bf16 %v2406, %v2405
        %v2569 = vpack.c.bf16 %v2408, %v2407
        %v2570 = vpack.c.bf16 %v2410, %v2409
        %v2571 = vpack.c.bf16 %v2412, %v2411
        %v2572 = vpack.c.bf16 %v2414, %v2413
        %v2573 = vpack.c.bf16 %v2416, %v2415
        %v2574 = vpack.c.bf16 %v2418, %v2417
        %v2575 = vpack.c.bf16 %v2420, %v2419
        %v2576 = vpack.c.bf16 %v2422, %v2421
        %v2577 = vpack.c.bf16 %v2424, %v2423
        %v2578 = vpack.c.bf16 %v2426, %v2425
        %v2579 = vpack.c.bf16 %v2428, %v2427
        %v2580 = vpack.c.bf16 %v2430, %v2429
        %v2581 = vpack.c.bf16 %v2432, %v2431
        %v2582 = vpack.c.bf16 %v2434, %v2433
        %v2583 = vpack.c.bf16 %v2436, %v2435
        %v2584 = vpack.c.bf16 %v2438, %v2437
        %v2585 = vpack.c.bf16 %v2440, %v2439
        %v2586 = vpack.c.bf16 %v2442, %v2441
        %v2587 = vpack.c.bf16 %v2444, %v2443
        %v2588 = vpack.c.bf16 %v2446, %v2445
        %v2589 = vpack.c.bf16 %v2448, %v2447
        %v2590 = vpack.c.bf16 %v2450, %v2449
        %v2591 = vpack.c.bf16 %v2452, %v2451
        %v2592 = vpack.c.bf16 %v2454, %v2453
        %v2593 = vpack.c.bf16 %v2456, %v2455
        %v2594 = vpack.c.bf16 %v2458, %v2457
        %v2595 = vpack.c.bf16 %v2460, %v2459
        %v2596 = vpack.c.bf16 %v2462, %v2461
        %v2597 = vpack.c.bf16 %v2464, %v2463
        %v2598 = vpack.c.bf16 %v2466, %v2465
        %v2599 = vpack.c.bf16 %v2468, %v2467
        %v2600 = vpack.c.bf16 %v2470, %v2469
        %v2601 = vpack.c.bf16 %v2472, %v2471
        %v2602 = vpack.c.bf16 %v2474, %v2473
        %v2603 = vpack.c.bf16 %v358, %v358
        %v2604 = vpack.c.bf16 %v359, %v359
        %v2605 = vpack.c.bf16 %v360, %v360
        %v2606 = vpack.c.bf16 %v361, %v361
        %v2607 = vunpack.c.l.bf16 %v2603
        %v2608 = vunpack.c.l.bf16 %v2604
        %v2609 = vunpack.c.l.bf16 %v2605
        %v2610 = vunpack.c.l.bf16 %v2606
        %v2611 = vsub.f32 %v358, %v2607
        %v2612 = vsub.f32 %v359, %v2608
        %v2613 = vsub.f32 %v360, %v2609
        %v2614 = vsub.f32 %v361, %v2610
        %v2615 = vpack.c.bf16 %v2612, %v2611
        %v2616 = vpack.c.bf16 %v2614, %v2613
        %v2873 = vunpack.c.l.b16 %v1707
        %v2874 = vunpack.c.l.b16 %v1708
        %v2875 = vunpack.c.l.b16 %v1709
        %v2876 = vunpack.c.l.b16 %v1710
        %v2877 = vunpack.c.l.b16 %v1711
        %v2878 = vunpack.c.l.b16 %v1712
        %v2879 = vunpack.c.l.b16 %v1713
        %v2880 = vunpack.c.l.b16 %v1714
        %v2881 = vunpack.c.l.b16 %v1715
        %v2882 = vunpack.c.l.b16 %v1716
        %v2883 = vunpack.c.l.b16 %v1717
        %v2884 = vunpack.c.l.b16 %v1718
        %v2885 = vunpack.c.l.b16 %v1719
        %v2886 = vunpack.c.l.b16 %v1720
        %v2887 = vunpack.c.l.b16 %v1721
        %v2888 = vunpack.c.l.b16 %v1722
        %v2889 = vunpack.c.l.b16 %v1723
        %v2890 = vunpack.c.l.b16 %v1724
        %v2891 = vunpack.c.l.b16 %v1725
        %v2892 = vunpack.c.l.b16 %v1726
        %v2893 = vunpack.c.l.b16 %v1727
        %v2894 = vunpack.c.l.b16 %v1728
        %v2895 = vunpack.c.l.b16 %v1729
        %v2896 = vunpack.c.l.b16 %v1730
        %v2897 = vunpack.c.l.b16 %v1731
        %v2898 = vunpack.c.l.b16 %v1732
        %v2899 = vunpack.c.l.b16 %v1733
        %v2900 = vunpack.c.l.b16 %v1734
        %v2901 = vunpack.c.l.b16 %v1735
        %v2902 = vunpack.c.l.b16 %v1736
        %v2903 = vunpack.c.l.b16 %v1737
        %v2904 = vunpack.c.l.b16 %v1738
        %v2905 = vunpack.c.l.b16 %v1739
        %v2906 = vunpack.c.l.b16 %v1740
        %v2907 = vunpack.c.l.b16 %v1741
        %v2908 = vunpack.c.l.b16 %v1742
        %v2909 = vunpack.c.l.b16 %v1743
        %v2910 = vunpack.c.l.b16 %v1744
        %v2911 = vunpack.c.l.b16 %v1745
        %v2912 = vunpack.c.l.b16 %v1746
        %v2913 = vunpack.c.l.b16 %v1747
        %v2914 = vunpack.c.l.b16 %v1748
        %v2915 = vunpack.c.l.b16 %v1749
        %v2916 = vunpack.c.l.b16 %v1750
        %v2917 = vunpack.c.l.b16 %v1751
        %v2918 = vunpack.c.l.b16 %v1752
        %v2919 = vunpack.c.l.b16 %v1753
        %v2920 = vunpack.c.l.b16 %v1754
        %v2921 = vunpack.c.l.b16 %v1755
        %v2922 = vunpack.c.l.b16 %v1756
        %v2923 = vunpack.c.l.b16 %v1757
        %v2924 = vunpack.c.l.b16 %v1758
        %v2925 = vunpack.c.l.b16 %v1759
        %v2926 = vunpack.c.l.b16 %v1760
        %v2927 = vunpack.c.l.b16 %v1761
        %v2928 = vunpack.c.l.b16 %v1762
        %v2929 = vunpack.c.l.b16 %v1763
        %v2930 = vunpack.c.l.b16 %v1764
        %v2931 = vunpack.c.l.b16 %v1765
        %v2932 = vunpack.c.l.b16 %v1766
        %v2933 = vunpack.c.l.b16 %v1767
        %v2934 = vunpack.c.l.b16 %v1768
        %v2935 = vunpack.c.l.b16 %v1769
        %v2936 = vunpack.c.l.b16 %v1770
        %v2937 = vunpack.c.l.b16 %v1771
        %v2938 = vunpack.c.l.b16 %v1772
        %v2939 = vunpack.c.l.b16 %v1773
        %v2940 = vunpack.c.l.b16 %v1774
        %v2941 = vunpack.c.l.b16 %v1775
        %v2942 = vunpack.c.l.b16 %v1776
        %v2943 = vunpack.c.l.b16 %v1777
        %v2944 = vunpack.c.l.b16 %v1778
        %v2945 = vunpack.c.l.b16 %v1779
        %v2946 = vunpack.c.l.b16 %v1780
        %v2947 = vunpack.c.l.b16 %v1781
        %v2948 = vunpack.c.l.b16 %v1782
        %v2949 = vunpack.c.l.b16 %v1783
        %v2950 = vunpack.c.l.b16 %v1784
        %v2951 = vunpack.c.l.b16 %v1785
        %v2952 = vunpack.c.l.b16 %v1786
        %v2953 = vunpack.c.l.b16 %v1787
        %v2954 = vunpack.c.l.b16 %v1788
        %v2955 = vunpack.c.l.b16 %v1789
        %v2956 = vunpack.c.l.b16 %v1790
        %v2957 = vunpack.c.l.b16 %v1791
        %v2958 = vunpack.c.l.b16 %v1792
        %v2959 = vunpack.c.l.b16 %v1793
        %v2960 = vunpack.c.l.b16 %v1794
        %v2961 = vunpack.c.l.b16 %v1795
        %v2962 = vunpack.c.l.b16 %v1796
        %v2963 = vunpack.c.l.b16 %v1797
        %v2964 = vunpack.c.l.b16 %v1798
        %v2965 = vunpack.c.l.b16 %v1799
        %v2966 = vunpack.c.l.b16 %v1800
        %v2967 = vunpack.c.l.b16 %v1801
        %v2968 = vunpack.c.l.b16 %v1802
        %v2969 = vunpack.c.l.b16 %v1803
        %v2970 = vunpack.c.l.b16 %v1804
        %v2971 = vunpack.c.l.b16 %v1805
        %v2972 = vunpack.c.l.b16 %v1806
        %v2973 = vunpack.c.l.b16 %v1807
        %v2974 = vunpack.c.l.b16 %v1808
        %v2975 = vunpack.c.l.b16 %v1809
        %v2976 = vunpack.c.l.b16 %v1810
        %v2977 = vunpack.c.l.b16 %v1811
        %v2978 = vunpack.c.l.b16 %v1812
        %v2979 = vunpack.c.l.b16 %v1813
        %v2980 = vunpack.c.l.b16 %v1814
        %v2981 = vunpack.c.l.b16 %v1815
        %v2982 = vunpack.c.l.b16 %v1816
        %v2983 = vunpack.c.l.b16 %v1817
        %v2984 = vunpack.c.l.b16 %v1818
        %v2985 = vunpack.c.l.b16 %v1819
        %v2986 = vunpack.c.l.b16 %v1820
        %v2987 = vunpack.c.l.b16 %v1821
        %v2988 = vunpack.c.l.b16 %v1822
        %v2989 = vunpack.c.l.b16 %v1823
        %v2990 = vunpack.c.l.b16 %v1824
        %v2991 = vunpack.c.l.b16 %v1825
        %v2992 = vunpack.c.l.b16 %v1826
        %v2993 = vunpack.c.l.b16 %v1827
        %v2994 = vunpack.c.l.b16 %v1828
        %v2995 = vunpack.c.l.b16 %v1829
        %v2996 = vunpack.c.l.b16 %v1830
        %v2997 = vunpack.c.l.b16 %v1831
        %v2998 = vunpack.c.l.b16 %v1832
        %v2999 = vunpack.c.l.b16 %v1833
        %v3000 = vunpack.c.l.b16 %v1834
        %v3001 = vunpack.c.l.b16 %v1835
        %v3002 = vunpack.c.l.b16 %v1836
        %v3003 = vunpack.c.l.b16 %v1837
        %v3004 = vunpack.c.l.b16 %v1838
        %v3005 = vunpack.c.l.b16 %v1839
        %v3006 = vunpack.c.l.b16 %v1840
        %v3007 = vunpack.c.l.b16 %v1841
        %v3008 = vunpack.c.l.b16 %v1842
        %v3009 = vunpack.c.l.b16 %v1843
        %v3010 = vunpack.c.l.b16 %v1844
        %v3011 = vunpack.c.l.b16 %v1845
        %v3012 = vunpack.c.l.b16 %v1846
        %v3013 = vunpack.c.l.b16 %v1847
        %v3014 = vunpack.c.l.b16 %v1848
        %v3015 = vunpack.c.l.b16 %v1849
        %v3016 = vunpack.c.l.b16 %v1850
        %v3017 = vunpack.c.l.b16 %v1851
        %v3018 = vunpack.c.l.b16 %v1852
        %v3019 = vunpack.c.l.b16 %v1853
        %v3020 = vunpack.c.l.b16 %v1854
        %v3021 = vunpack.c.l.b16 %v1855
        %v3022 = vunpack.c.l.b16 %v1856
        %v3023 = vunpack.c.l.b16 %v1857
        %v3024 = vunpack.c.l.b16 %v1858
        %v3025 = vunpack.c.l.b16 %v1859
        %v3026 = vunpack.c.l.b16 %v1860
        %v3027 = vunpack.c.l.b16 %v1861
        %v3028 = vunpack.c.l.b16 %v1862
        %v3029 = vunpack.c.l.b16 %v1863
        %v3030 = vunpack.c.l.b16 %v1864
        %v3031 = vunpack.c.l.b16 %v1865
        %v3032 = vunpack.c.l.b16 %v1866
        %v3033 = vunpack.c.l.b16 %v1867
        %v3034 = vunpack.c.l.b16 %v1868
        %v3035 = vunpack.c.l.b16 %v1869
        %v3036 = vunpack.c.l.b16 %v1870
        %v3037 = vunpack.c.l.b16 %v1871
        %v3038 = vunpack.c.l.b16 %v1872
        %v3039 = vunpack.c.l.b16 %v1873
        %v3040 = vunpack.c.l.b16 %v1874
        %v3041 = vunpack.c.l.b16 %v1875
        %v3042 = vunpack.c.l.b16 %v1876
        %v3043 = vunpack.c.l.b16 %v1877
        %v3044 = vunpack.c.l.b16 %v1878
        %v3045 = vunpack.c.l.b16 %v1879
        %v3046 = vunpack.c.l.b16 %v1880
        %v3047 = vunpack.c.l.b16 %v1881
        %v3048 = vunpack.c.l.b16 %v1882
        %v3049 = vunpack.c.l.b16 %v1883
        %v3050 = vunpack.c.l.b16 %v1884
        %v3051 = vunpack.c.l.b16 %v1885
        %v3052 = vunpack.c.l.b16 %v1886
        %v3053 = vunpack.c.l.b16 %v1887
        %v3054 = vunpack.c.l.b16 %v1888
        %v3055 = vunpack.c.l.b16 %v1889
        %v3056 = vunpack.c.l.b16 %v1890
        %v3057 = vunpack.c.l.b16 %v1891
        %v3058 = vunpack.c.l.b16 %v1892
        %v3059 = vunpack.c.l.b16 %v1893
        %v3060 = vunpack.c.l.b16 %v1894
        %v3061 = vunpack.c.l.b16 %v1895
        %v3062 = vunpack.c.l.b16 %v1896
        %v3063 = vunpack.c.l.b16 %v1897
        %v3064 = vunpack.c.l.b16 %v1898
        %v3065 = vunpack.c.l.b16 %v1899
        %v3066 = vunpack.c.l.b16 %v1900
        %v3067 = vunpack.c.l.b16 %v1901
        %v3068 = vunpack.c.l.b16 %v1902
        %v3069 = vunpack.c.l.b16 %v1903
        %v3070 = vunpack.c.l.b16 %v1904
        %v3071 = vunpack.c.l.b16 %v1905
        %v3072 = vunpack.c.l.b16 %v1906
        %v3073 = vunpack.c.l.b16 %v1907
        %v3074 = vunpack.c.l.b16 %v1908
        %v3075 = vunpack.c.l.b16 %v1909
        %v3076 = vunpack.c.l.b16 %v1910
        %v3077 = vunpack.c.l.b16 %v1911
        %v3078 = vunpack.c.l.b16 %v1912
        %v3079 = vunpack.c.l.b16 %v1913
        %v3080 = vunpack.c.l.b16 %v1914
        %v3081 = vunpack.c.l.b16 %v1915
        %v3082 = vunpack.c.l.b16 %v1916
        %v3083 = vunpack.c.l.b16 %v1917
        %v3084 = vunpack.c.l.b16 %v1918
        %v3085 = vunpack.c.l.b16 %v1919
        %v3086 = vunpack.c.l.b16 %v1920
        %v3087 = vunpack.c.l.b16 %v1921
        %v3088 = vunpack.c.l.b16 %v1922
        %v3089 = vunpack.c.l.b16 %v1923
        %v3090 = vunpack.c.l.b16 %v1924
        %v3091 = vunpack.c.l.b16 %v1925
        %v3092 = vunpack.c.l.b16 %v1926
        %v3093 = vunpack.c.l.b16 %v1927
        %v3094 = vunpack.c.l.b16 %v1928
        %v3095 = vunpack.c.l.b16 %v1929
        %v3096 = vunpack.c.l.b16 %v1930
        %v3097 = vunpack.c.l.b16 %v1931
        %v3098 = vunpack.c.l.b16 %v1932
        %v3099 = vunpack.c.l.b16 %v1933
        %v3100 = vunpack.c.l.b16 %v1934
        %v3101 = vunpack.c.l.b16 %v1935
        %v3102 = vunpack.c.l.b16 %v1936
        %v3103 = vunpack.c.l.b16 %v1937
        %v3104 = vunpack.c.l.b16 %v1938
        %v3105 = vunpack.c.l.b16 %v1939
        %v3106 = vunpack.c.l.b16 %v1940
        %v3107 = vunpack.c.l.b16 %v1941
        %v3108 = vunpack.c.l.b16 %v1942
        %v3109 = vunpack.c.l.b16 %v1943
        %v3110 = vunpack.c.l.b16 %v1944
        %v3111 = vunpack.c.l.b16 %v1945
        %v3112 = vunpack.c.l.b16 %v1946
        %v3113 = vunpack.c.l.b16 %v1947
        %v3114 = vunpack.c.l.b16 %v1948
        %v3115 = vunpack.c.l.b16 %v1949
        %v3116 = vunpack.c.l.b16 %v1950
        %v3117 = vunpack.c.l.b16 %v1951
        %v3118 = vunpack.c.l.b16 %v1952
        %v3119 = vunpack.c.l.b16 %v1953
        %v3120 = vunpack.c.l.b16 %v1954
        %v3121 = vunpack.c.l.b16 %v1955
        %v3122 = vunpack.c.l.b16 %v1956
        %v3123 = vunpack.c.l.b16 %v1957
        %v3124 = vunpack.c.l.b16 %v1958
        %v3125 = vunpack.c.l.b16 %v1959
        %v3126 = vunpack.c.l.b16 %v1960
        %v3127 = vunpack.c.l.b16 %v1961
        %v3128 = vunpack.c.l.b16 %v1962
        %v3129 = vpack.c.b16 %v2874, %v2873
        %v3130 = vpack.c.b16 %v2876, %v2875
        %v3131 = vpack.c.b16 %v2878, %v2877
        %v3132 = vpack.c.b16 %v2880, %v2879
        %v3133 = vpack.c.b16 %v2882, %v2881
        %v3134 = vpack.c.b16 %v2884, %v2883
        %v3135 = vpack.c.b16 %v2886, %v2885
        %v3136 = vpack.c.b16 %v2888, %v2887
        %v3137 = vpack.c.b16 %v2890, %v2889
        %v3138 = vpack.c.b16 %v2892, %v2891
        %v3139 = vpack.c.b16 %v2894, %v2893
        %v3140 = vpack.c.b16 %v2896, %v2895
        %v3141 = vpack.c.b16 %v2898, %v2897
        %v3142 = vpack.c.b16 %v2900, %v2899
        %v3143 = vpack.c.b16 %v2902, %v2901
        %v3144 = vpack.c.b16 %v2904, %v2903
        %v3145 = vpack.c.b16 %v2906, %v2905
        %v3146 = vpack.c.b16 %v2908, %v2907
        %v3147 = vpack.c.b16 %v2910, %v2909
        %v3148 = vpack.c.b16 %v2912, %v2911
        %v3149 = vpack.c.b16 %v2914, %v2913
        %v3150 = vpack.c.b16 %v2916, %v2915
        %v3151 = vpack.c.b16 %v2918, %v2917
        %v3152 = vpack.c.b16 %v2920, %v2919
        %v3153 = vpack.c.b16 %v2922, %v2921
        %v3154 = vpack.c.b16 %v2924, %v2923
        %v3155 = vpack.c.b16 %v2926, %v2925
        %v3156 = vpack.c.b16 %v2928, %v2927
        %v3157 = vpack.c.b16 %v2930, %v2929
        %v3158 = vpack.c.b16 %v2932, %v2931
        %v3159 = vpack.c.b16 %v2934, %v2933
        %v3160 = vpack.c.b16 %v2936, %v2935
        %v3161 = vpack.c.b16 %v2938, %v2937
        %v3162 = vpack.c.b16 %v2940, %v2939
        %v3163 = vpack.c.b16 %v2942, %v2941
        %v3164 = vpack.c.b16 %v2944, %v2943
        %v3165 = vpack.c.b16 %v2946, %v2945
        %v3166 = vpack.c.b16 %v2948, %v2947
        %v3167 = vpack.c.b16 %v2950, %v2949
        %v3168 = vpack.c.b16 %v2952, %v2951
        %v3169 = vpack.c.b16 %v2954, %v2953
        %v3170 = vpack.c.b16 %v2956, %v2955
        %v3171 = vpack.c.b16 %v2958, %v2957
        %v3172 = vpack.c.b16 %v2960, %v2959
        %v3173 = vpack.c.b16 %v2962, %v2961
        %v3174 = vpack.c.b16 %v2964, %v2963
        %v3175 = vpack.c.b16 %v2966, %v2965
        %v3176 = vpack.c.b16 %v2968, %v2967
        %v3177 = vpack.c.b16 %v2970, %v2969
        %v3178 = vpack.c.b16 %v2972, %v2971
        %v3179 = vpack.c.b16 %v2974, %v2973
        %v3180 = vpack.c.b16 %v2976, %v2975
        %v3181 = vpack.c.b16 %v2978, %v2977
        %v3182 = vpack.c.b16 %v2980, %v2979
        %v3183 = vpack.c.b16 %v2982, %v2981
        %v3184 = vpack.c.b16 %v2984, %v2983
        %v3185 = vpack.c.b16 %v2986, %v2985
        %v3186 = vpack.c.b16 %v2988, %v2987
        %v3187 = vpack.c.b16 %v2990, %v2989
        %v3188 = vpack.c.b16 %v2992, %v2991
        %v3189 = vpack.c.b16 %v2994, %v2993
        %v3190 = vpack.c.b16 %v2996, %v2995
        %v3191 = vpack.c.b16 %v2998, %v2997
        %v3192 = vpack.c.b16 %v3000, %v2999
        %v3193 = vpack.c.b16 %v3002, %v3001
        %v3194 = vpack.c.b16 %v3004, %v3003
        %v3195 = vpack.c.b16 %v3006, %v3005
        %v3196 = vpack.c.b16 %v3008, %v3007
        %v3197 = vpack.c.b16 %v3010, %v3009
        %v3198 = vpack.c.b16 %v3012, %v3011
        %v3199 = vpack.c.b16 %v3014, %v3013
        %v3200 = vpack.c.b16 %v3016, %v3015
        %v3201 = vpack.c.b16 %v3018, %v3017
        %v3202 = vpack.c.b16 %v3020, %v3019
        %v3203 = vpack.c.b16 %v3022, %v3021
        %v3204 = vpack.c.b16 %v3024, %v3023
        %v3205 = vpack.c.b16 %v3026, %v3025
        %v3206 = vpack.c.b16 %v3028, %v3027
        %v3207 = vpack.c.b16 %v3030, %v3029
        %v3208 = vpack.c.b16 %v3032, %v3031
        %v3209 = vpack.c.b16 %v3034, %v3033
        %v3210 = vpack.c.b16 %v3036, %v3035
        %v3211 = vpack.c.b16 %v3038, %v3037
        %v3212 = vpack.c.b16 %v3040, %v3039
        %v3213 = vpack.c.b16 %v3042, %v3041
        %v3214 = vpack.c.b16 %v3044, %v3043
        %v3215 = vpack.c.b16 %v3046, %v3045
        %v3216 = vpack.c.b16 %v3048, %v3047
        %v3217 = vpack.c.b16 %v3050, %v3049
        %v3218 = vpack.c.b16 %v3052, %v3051
        %v3219 = vpack.c.b16 %v3054, %v3053
        %v3220 = vpack.c.b16 %v3056, %v3055
        %v3221 = vpack.c.b16 %v3058, %v3057
        %v3222 = vpack.c.b16 %v3060, %v3059
        %v3223 = vpack.c.b16 %v3062, %v3061
        %v3224 = vpack.c.b16 %v3064, %v3063
        %v3225 = vpack.c.b16 %v3066, %v3065
        %v3226 = vpack.c.b16 %v3068, %v3067
        %v3227 = vpack.c.b16 %v3070, %v3069
        %v3228 = vpack.c.b16 %v3072, %v3071
        %v3229 = vpack.c.b16 %v3074, %v3073
        %v3230 = vpack.c.b16 %v3076, %v3075
        %v3231 = vpack.c.b16 %v3078, %v3077
        %v3232 = vpack.c.b16 %v3080, %v3079
        %v3233 = vpack.c.b16 %v3082, %v3081
        %v3234 = vpack.c.b16 %v3084, %v3083
        %v3235 = vpack.c.b16 %v3086, %v3085
        %v3236 = vpack.c.b16 %v3088, %v3087
        %v3237 = vpack.c.b16 %v3090, %v3089
        %v3238 = vpack.c.b16 %v3092, %v3091
        %v3239 = vpack.c.b16 %v3094, %v3093
        %v3240 = vpack.c.b16 %v3096, %v3095
        %v3241 = vpack.c.b16 %v3098, %v3097
        %v3242 = vpack.c.b16 %v3100, %v3099
        %v3243 = vpack.c.b16 %v3102, %v3101
        %v3244 = vpack.c.b16 %v3104, %v3103
        %v3245 = vpack.c.b16 %v3106, %v3105
        %v3246 = vpack.c.b16 %v3108, %v3107
        %v3247 = vpack.c.b16 %v3110, %v3109
        %v3248 = vpack.c.b16 %v3112, %v3111
        %v3249 = vpack.c.b16 %v3114, %v3113
        %v3250 = vpack.c.b16 %v3116, %v3115
        %v3251 = vpack.c.b16 %v3118, %v3117
        %v3252 = vpack.c.b16 %v3120, %v3119
        %v3253 = vpack.c.b16 %v3122, %v3121
        %v3254 = vpack.c.b16 %v3124, %v3123
        %v3255 = vpack.c.b16 %v3126, %v3125
        %v3256 = vpack.c.b16 %v3128, %v3127
        %v3258 = vsel %vm938, %v3129, 0
        %v3261 = vsel %vm938, %v3130, 0
        %v3264 = vsel %vm938, %v3131, 0
        %v3267 = vsel %vm938, %v3132, 0
        %v3270 = vsel %vm938, %v3133, 0
        %v3273 = vsel %vm938, %v3134, 0
        %v3276 = vsel %vm938, %v3135, 0
        %v3279 = vsel %vm938, %v3136, 0
        %v3282 = vsel %vm938, %v3137, 0
        %v3285 = vsel %vm938, %v3138, 0
        %v3288 = vsel %vm938, %v3139, 0
        %v3291 = vsel %vm938, %v3140, 0
        %v3294 = vsel %vm938, %v3141, 0
        %v3297 = vsel %vm938, %v3142, 0
        %v3300 = vsel %vm938, %v3143, 0
        %v3303 = vsel %vm938, %v3144, 0
        %v3306 = vsel %vm938, %v3145, 0
        %v3309 = vsel %vm938, %v3146, 0
        %v3312 = vsel %vm938, %v3147, 0
        %v3315 = vsel %vm938, %v3148, 0
        %v3318 = vsel %vm938, %v3149, 0
        %v3321 = vsel %vm938, %v3150, 0
        %v3324 = vsel %vm938, %v3151, 0
        %v3327 = vsel %vm938, %v3152, 0
        %v3330 = vsel %vm938, %v3153, 0
        %v3333 = vsel %vm938, %v3154, 0
        %v3336 = vsel %vm938, %v3155, 0
        %v3339 = vsel %vm938, %v3156, 0
        %v3342 = vsel %vm938, %v3157, 0
        %v3345 = vsel %vm938, %v3158, 0
        %v3348 = vsel %vm938, %v3159, 0
        %v3351 = vsel %vm938, %v3160, 0
        %v3354 = vsel %vm938, %v3161, 0
        %v3357 = vsel %vm938, %v3162, 0
        %v3360 = vsel %vm938, %v3163, 0
        %v3363 = vsel %vm938, %v3164, 0
        %v3366 = vsel %vm938, %v3165, 0
        %v3369 = vsel %vm938, %v3166, 0
        %v3372 = vsel %vm938, %v3167, 0
        %v3375 = vsel %vm938, %v3168, 0
        %v3378 = vsel %vm938, %v3169, 0
        %v3381 = vsel %vm938, %v3170, 0
        %v3384 = vsel %vm938, %v3171, 0
        %v3387 = vsel %vm938, %v3172, 0
        %v3390 = vsel %vm938, %v3173, 0
        %v3393 = vsel %vm938, %v3174, 0
        %v3396 = vsel %vm938, %v3175, 0
        %v3399 = vsel %vm938, %v3176, 0
        %v3402 = vsel %vm938, %v3177, 0
        %v3405 = vsel %vm938, %v3178, 0
        %v3408 = vsel %vm938, %v3179, 0
        %v3411 = vsel %vm938, %v3180, 0
        %v3414 = vsel %vm938, %v3181, 0
        %v3417 = vsel %vm938, %v3182, 0
        %v3420 = vsel %vm938, %v3183, 0
        %v3423 = vsel %vm938, %v3184, 0
        %v3426 = vsel %vm938, %v3185, 0
        %v3429 = vsel %vm938, %v3186, 0
        %v3432 = vsel %vm938, %v3187, 0
        %v3435 = vsel %vm938, %v3188, 0
        %v3438 = vsel %vm938, %v3189, 0
        %v3441 = vsel %vm938, %v3190, 0
        %v3444 = vsel %vm938, %v3191, 0
        %v3447 = vsel %vm938, %v3192, 0
        %v3450 = vsel %vm938, %v3193, 0
        %v3453 = vsel %vm938, %v3194, 0
        %v3456 = vsel %vm938, %v3195, 0
        %v3459 = vsel %vm938, %v3196, 0
        %v3462 = vsel %vm938, %v3197, 0
        %v3465 = vsel %vm938, %v3198, 0
        %v3468 = vsel %vm938, %v3199, 0
        %v3471 = vsel %vm938, %v3200, 0
        %v3474 = vsel %vm938, %v3201, 0
        %v3477 = vsel %vm938, %v3202, 0
        %v3480 = vsel %vm938, %v3203, 0
        %v3483 = vsel %vm938, %v3204, 0
        %v3486 = vsel %vm938, %v3205, 0
        %v3489 = vsel %vm938, %v3206, 0
        %v3492 = vsel %vm938, %v3207, 0
        %v3495 = vsel %vm938, %v3208, 0
        %v3498 = vsel %vm938, %v3209, 0
        %v3501 = vsel %vm938, %v3210, 0
        %v3504 = vsel %vm938, %v3211, 0
        %v3507 = vsel %vm938, %v3212, 0
        %v3510 = vsel %vm938, %v3213, 0
        %v3513 = vsel %vm938, %v3214, 0
        %v3516 = vsel %vm938, %v3215, 0
        %v3519 = vsel %vm938, %v3216, 0
        %v3522 = vsel %vm938, %v3217, 0
        %v3525 = vsel %vm938, %v3218, 0
        %v3528 = vsel %vm938, %v3219, 0
        %v3531 = vsel %vm938, %v3220, 0
        %v3534 = vsel %vm938, %v3221, 0
        %v3537 = vsel %vm938, %v3222, 0
        %v3540 = vsel %vm938, %v3223, 0
        %v3543 = vsel %vm938, %v3224, 0
        %v3546 = vsel %vm938, %v3225, 0
        %v3549 = vsel %vm938, %v3226, 0
        %v3552 = vsel %vm938, %v3227, 0
        %v3555 = vsel %vm938, %v3228, 0
        %v3558 = vsel %vm938, %v3229, 0
        %v3561 = vsel %vm938, %v3230, 0
        %v3564 = vsel %vm938, %v3231, 0
        %v3567 = vsel %vm938, %v3232, 0
        %v3570 = vsel %vm938, %v3233, 0
        %v3573 = vsel %vm938, %v3234, 0
        %v3576 = vsel %vm938, %v3235, 0
        %v3579 = vsel %vm938, %v3236, 0
        %v3582 = vsel %vm938, %v3237, 0
        %v3585 = vsel %vm938, %v3238, 0
        %v3588 = vsel %vm938, %v3239, 0
        %v3591 = vsel %vm938, %v3240, 0
        %v3594 = vsel %vm938, %v3241, 0
        %v3597 = vsel %vm938, %v3242, 0
        %v3600 = vsel %vm938, %v3243, 0
        %v3603 = vsel %vm938, %v3244, 0
        %v3606 = vsel %vm938, %v3245, 0
        %v3609 = vsel %vm938, %v3246, 0
        %v3612 = vsel %vm938, %v3247, 0
        %v3615 = vsel %vm938, %v3248, 0
        %v3618 = vsel %vm938, %v3249, 0
        %v3621 = vsel %vm938, %v3250, 0
        %v3624 = vsel %vm938, %v3251, 0
        %v3627 = vsel %vm938, %v3252, 0
        %v3630 = vsel %vm938, %v3253, 0
        %v3633 = vsel %vm938, %v3254, 0
        %v3636 = vsel %vm938, %v3255, 0
        %v3639 = vsel %vm938, %v3256, 0
        %3641 = vmatpush.bf16.msra.mxu0 0
        %3642 = vmatpush.bf16.msra.mxu0 0
        %3643 = vmatpush.bf16.msra.mxu0 0
        %3644 = vmatpush.bf16.msra.mxu0 0
        %3645 = vmatpush.bf16.msra.mxu0 0
        %3646 = vmatpush.bf16.msra.mxu0 0
        %3647 = vmatpush.bf16.msra.mxu0 %v2616
        %3648 = vmatpush.bf16.msra.mxu0 %v2615
        %3649 = vmatmul.bf16.gmra.mxu0 %v3258
        %v3650 = vpop.f32.mrf.mxu0
        %v3651 = vadd.f32 0.0, %v3650
        %v3652 = vpop.f32.mrf.mxu0
        %v3653 = vadd.f32 0.0, %v3652
        %3654 = vmatmul.bf16.gmra.mxu0 %v3261
        %v3655 = vpop.f32.mrf.mxu0
        %v3656 = vadd.f32 0.0, %v3655
        %v3657 = vpop.f32.mrf.mxu0
        %v3658 = vadd.f32 0.0, %v3657
        %3659 = vmatmul.bf16.gmra.mxu0 %v3264
        %v3660 = vpop.f32.mrf.mxu0
        %v3661 = vadd.f32 0.0, %v3660
        %v3662 = vpop.f32.mrf.mxu0
        %v3663 = vadd.f32 0.0, %v3662
        %3664 = vmatmul.bf16.gmra.mxu0 %v3267
        %v3665 = vpop.f32.mrf.mxu0
        %v3666 = vadd.f32 0.0, %v3665
        %v3667 = vpop.f32.mrf.mxu0
        %v3668 = vadd.f32 0.0, %v3667
        %3669 = vmatmul.bf16.gmra.mxu0 %v3270
        %v3670 = vpop.f32.mrf.mxu0
        %v3671 = vadd.f32 0.0, %v3670
        %v3672 = vpop.f32.mrf.mxu0
        %v3673 = vadd.f32 0.0, %v3672
        %3674 = vmatmul.bf16.gmra.mxu0 %v3273
        %v3675 = vpop.f32.mrf.mxu0
        %v3676 = vadd.f32 0.0, %v3675
        %v3677 = vpop.f32.mrf.mxu0
        %v3678 = vadd.f32 0.0, %v3677
        %3679 = vmatmul.bf16.gmra.mxu0 %v3276
        %v3680 = vpop.f32.mrf.mxu0
        %v3681 = vadd.f32 0.0, %v3680
        %v3682 = vpop.f32.mrf.mxu0
        %v3683 = vadd.f32 0.0, %v3682
        %3684 = vmatmul.bf16.gmra.mxu0 %v3279
        %v3685 = vpop.f32.mrf.mxu0
        %v3686 = vadd.f32 0.0, %v3685
        %v3687 = vpop.f32.mrf.mxu0
        %v3688 = vadd.f32 0.0, %v3687
        %3689 = vmatmul.bf16.gmra.mxu0 %v3282
        %v3690 = vpop.f32.mrf.mxu0
        %v3691 = vadd.f32 0.0, %v3690
        %v3692 = vpop.f32.mrf.mxu0
        %v3693 = vadd.f32 0.0, %v3692
        %3694 = vmatmul.bf16.gmra.mxu0 %v3285
        %v3695 = vpop.f32.mrf.mxu0
        %v3696 = vadd.f32 0.0, %v3695
        %v3697 = vpop.f32.mrf.mxu0
        %v3698 = vadd.f32 0.0, %v3697
        %3699 = vmatmul.bf16.gmra.mxu0 %v3288
        %v3700 = vpop.f32.mrf.mxu0
        %v3701 = vadd.f32 0.0, %v3700
        %v3702 = vpop.f32.mrf.mxu0
        %v3703 = vadd.f32 0.0, %v3702
        %3704 = vmatmul.bf16.gmra.mxu0 %v3291
        %v3705 = vpop.f32.mrf.mxu0
        %v3706 = vadd.f32 0.0, %v3705
        %v3707 = vpop.f32.mrf.mxu0
        %v3708 = vadd.f32 0.0, %v3707
        %3709 = vmatmul.bf16.gmra.mxu0 %v3294
        %v3710 = vpop.f32.mrf.mxu0
        %v3711 = vadd.f32 0.0, %v3710
        %v3712 = vpop.f32.mrf.mxu0
        %v3713 = vadd.f32 0.0, %v3712
        %3714 = vmatmul.bf16.gmra.mxu0 %v3297
        %v3715 = vpop.f32.mrf.mxu0
        %v3716 = vadd.f32 0.0, %v3715
        %v3717 = vpop.f32.mrf.mxu0
        %v3718 = vadd.f32 0.0, %v3717
        %3719 = vmatmul.bf16.gmra.mxu0 %v3300
        %v3720 = vpop.f32.mrf.mxu0
        %v3721 = vadd.f32 0.0, %v3720
        %v3722 = vpop.f32.mrf.mxu0
        %v3723 = vadd.f32 0.0, %v3722
        %3724 = vmatmul.bf16.gmra.mxu0 %v3303
        %v3725 = vpop.f32.mrf.mxu0
        %v3726 = vadd.f32 0.0, %v3725
        %v3727 = vpop.f32.mrf.mxu0
        %v3728 = vadd.f32 0.0, %v3727
        %3729 = vmatmul.bf16.gmra.mxu0 %v3306
        %v3730 = vpop.f32.mrf.mxu0
        %v3731 = vadd.f32 0.0, %v3730
        %v3732 = vpop.f32.mrf.mxu0
        %v3733 = vadd.f32 0.0, %v3732
        %3734 = vmatmul.bf16.gmra.mxu0 %v3309
        %v3735 = vpop.f32.mrf.mxu0
        %v3736 = vadd.f32 0.0, %v3735
        %v3737 = vpop.f32.mrf.mxu0
        %v3738 = vadd.f32 0.0, %v3737
        %3739 = vmatmul.bf16.gmra.mxu0 %v3312
        %v3740 = vpop.f32.mrf.mxu0
        %v3741 = vadd.f32 0.0, %v3740
        %v3742 = vpop.f32.mrf.mxu0
        %v3743 = vadd.f32 0.0, %v3742
        %3744 = vmatmul.bf16.gmra.mxu0 %v3315
        %v3745 = vpop.f32.mrf.mxu0
        %v3746 = vadd.f32 0.0, %v3745
        %v3747 = vpop.f32.mrf.mxu0
        %v3748 = vadd.f32 0.0, %v3747
        %3749 = vmatmul.bf16.gmra.mxu0 %v3318
        %v3750 = vpop.f32.mrf.mxu0
        %v3751 = vadd.f32 0.0, %v3750
        %v3752 = vpop.f32.mrf.mxu0
        %v3753 = vadd.f32 0.0, %v3752
        %3754 = vmatmul.bf16.gmra.mxu0 %v3321
        %v3755 = vpop.f32.mrf.mxu0
        %v3756 = vadd.f32 0.0, %v3755
        %v3757 = vpop.f32.mrf.mxu0
        %v3758 = vadd.f32 0.0, %v3757
        %3759 = vmatmul.bf16.gmra.mxu0 %v3324
        %v3760 = vpop.f32.mrf.mxu0
        %v3761 = vadd.f32 0.0, %v3760
        %v3762 = vpop.f32.mrf.mxu0
        %v3763 = vadd.f32 0.0, %v3762
        %3764 = vmatmul.bf16.gmra.mxu0 %v3327
        %v3765 = vpop.f32.mrf.mxu0
        %v3766 = vadd.f32 0.0, %v3765
        %v3767 = vpop.f32.mrf.mxu0
        %v3768 = vadd.f32 0.0, %v3767
        %3769 = vmatmul.bf16.gmra.mxu0 %v3330
        %v3770 = vpop.f32.mrf.mxu0
        %v3771 = vadd.f32 0.0, %v3770
        %v3772 = vpop.f32.mrf.mxu0
        %v3773 = vadd.f32 0.0, %v3772
        %3774 = vmatmul.bf16.gmra.mxu0 %v3333
        %v3775 = vpop.f32.mrf.mxu0
        %v3776 = vadd.f32 0.0, %v3775
        %v3777 = vpop.f32.mrf.mxu0
        %v3778 = vadd.f32 0.0, %v3777
        %3779 = vmatmul.bf16.gmra.mxu0 %v3336
        %v3780 = vpop.f32.mrf.mxu0
        %v3781 = vadd.f32 0.0, %v3780
        %v3782 = vpop.f32.mrf.mxu0
        %v3783 = vadd.f32 0.0, %v3782
        %3784 = vmatmul.bf16.gmra.mxu0 %v3339
        %v3785 = vpop.f32.mrf.mxu0
        %v3786 = vadd.f32 0.0, %v3785
        %v3787 = vpop.f32.mrf.mxu0
        %v3788 = vadd.f32 0.0, %v3787
        %3789 = vmatmul.bf16.gmra.mxu0 %v3342
        %v3790 = vpop.f32.mrf.mxu0
        %v3791 = vadd.f32 0.0, %v3790
        %v3792 = vpop.f32.mrf.mxu0
        %v3793 = vadd.f32 0.0, %v3792
        %3794 = vmatmul.bf16.gmra.mxu0 %v3345
        %v3795 = vpop.f32.mrf.mxu0
        %v3796 = vadd.f32 0.0, %v3795
        %v3797 = vpop.f32.mrf.mxu0
        %v3798 = vadd.f32 0.0, %v3797
        %3799 = vmatmul.bf16.gmra.mxu0 %v3348
        %v3800 = vpop.f32.mrf.mxu0
        %v3801 = vadd.f32 0.0, %v3800
        %v3802 = vpop.f32.mrf.mxu0
        %v3803 = vadd.f32 0.0, %v3802
        %3804 = vmatmul.bf16.gmra.mxu0 %v3351
        %v3805 = vpop.f32.mrf.mxu0
        %v3806 = vadd.f32 0.0, %v3805
        %v3807 = vpop.f32.mrf.mxu0
        %v3808 = vadd.f32 0.0, %v3807
        %3809 = vmatmul.bf16.gmra.mxu0 %v3354
        %v3810 = vpop.f32.mrf.mxu0
        %v3811 = vadd.f32 0.0, %v3810
        %v3812 = vpop.f32.mrf.mxu0
        %v3813 = vadd.f32 0.0, %v3812
        %3814 = vmatmul.bf16.gmra.mxu0 %v3357
        %v3815 = vpop.f32.mrf.mxu0
        %v3816 = vadd.f32 0.0, %v3815
        %v3817 = vpop.f32.mrf.mxu0
        %v3818 = vadd.f32 0.0, %v3817
        %3819 = vmatmul.bf16.gmra.mxu0 %v3360
        %v3820 = vpop.f32.mrf.mxu0
        %v3821 = vadd.f32 0.0, %v3820
        %v3822 = vpop.f32.mrf.mxu0
        %v3823 = vadd.f32 0.0, %v3822
        %3824 = vmatmul.bf16.gmra.mxu0 %v3363
        %v3825 = vpop.f32.mrf.mxu0
        %v3826 = vadd.f32 0.0, %v3825
        %v3827 = vpop.f32.mrf.mxu0
        %v3828 = vadd.f32 0.0, %v3827
        %3829 = vmatmul.bf16.gmra.mxu0 %v3366
        %v3830 = vpop.f32.mrf.mxu0
        %v3831 = vadd.f32 0.0, %v3830
        %v3832 = vpop.f32.mrf.mxu0
        %v3833 = vadd.f32 0.0, %v3832
        %3834 = vmatmul.bf16.gmra.mxu0 %v3369
        %v3835 = vpop.f32.mrf.mxu0
        %v3836 = vadd.f32 0.0, %v3835
        %v3837 = vpop.f32.mrf.mxu0
        %v3838 = vadd.f32 0.0, %v3837
        %3839 = vmatmul.bf16.gmra.mxu0 %v3372
        %v3840 = vpop.f32.mrf.mxu0
        %v3841 = vadd.f32 0.0, %v3840
        %v3842 = vpop.f32.mrf.mxu0
        %v3843 = vadd.f32 0.0, %v3842
        %3844 = vmatmul.bf16.gmra.mxu0 %v3375
        %v3845 = vpop.f32.mrf.mxu0
        %v3846 = vadd.f32 0.0, %v3845
        %v3847 = vpop.f32.mrf.mxu0
        %v3848 = vadd.f32 0.0, %v3847
        %3849 = vmatmul.bf16.gmra.mxu0 %v3378
        %v3850 = vpop.f32.mrf.mxu0
        %v3851 = vadd.f32 0.0, %v3850
        %v3852 = vpop.f32.mrf.mxu0
        %v3853 = vadd.f32 0.0, %v3852
        %3854 = vmatmul.bf16.gmra.mxu0 %v3381
        %v3855 = vpop.f32.mrf.mxu0
        %v3856 = vadd.f32 0.0, %v3855
        %v3857 = vpop.f32.mrf.mxu0
        %v3858 = vadd.f32 0.0, %v3857
        %3859 = vmatmul.bf16.gmra.mxu0 %v3384
        %v3860 = vpop.f32.mrf.mxu0
        %v3861 = vadd.f32 0.0, %v3860
        %v3862 = vpop.f32.mrf.mxu0
        %v3863 = vadd.f32 0.0, %v3862
        %3864 = vmatmul.bf16.gmra.mxu0 %v3387
        %v3865 = vpop.f32.mrf.mxu0
        %v3866 = vadd.f32 0.0, %v3865
        %v3867 = vpop.f32.mrf.mxu0
        %v3868 = vadd.f32 0.0, %v3867
        %3869 = vmatmul.bf16.gmra.mxu0 %v3390
        %v3870 = vpop.f32.mrf.mxu0
        %v3871 = vadd.f32 0.0, %v3870
        %v3872 = vpop.f32.mrf.mxu0
        %v3873 = vadd.f32 0.0, %v3872
        %3874 = vmatmul.bf16.gmra.mxu0 %v3393
        %v3875 = vpop.f32.mrf.mxu0
        %v3876 = vadd.f32 0.0, %v3875
        %v3877 = vpop.f32.mrf.mxu0
        %v3878 = vadd.f32 0.0, %v3877
        %3879 = vmatmul.bf16.gmra.mxu0 %v3396
        %v3880 = vpop.f32.mrf.mxu0
        %v3881 = vadd.f32 0.0, %v3880
        %v3882 = vpop.f32.mrf.mxu0
        %v3883 = vadd.f32 0.0, %v3882
        %3884 = vmatmul.bf16.gmra.mxu0 %v3399
        %v3885 = vpop.f32.mrf.mxu0
        %v3886 = vadd.f32 0.0, %v3885
        %v3887 = vpop.f32.mrf.mxu0
        %v3888 = vadd.f32 0.0, %v3887
        %3889 = vmatmul.bf16.gmra.mxu0 %v3402
        %v3890 = vpop.f32.mrf.mxu0
        %v3891 = vadd.f32 0.0, %v3890
        %v3892 = vpop.f32.mrf.mxu0
        %v3893 = vadd.f32 0.0, %v3892
        %3894 = vmatmul.bf16.gmra.mxu0 %v3405
        %v3895 = vpop.f32.mrf.mxu0
        %v3896 = vadd.f32 0.0, %v3895
        %v3897 = vpop.f32.mrf.mxu0
        %v3898 = vadd.f32 0.0, %v3897
        %3899 = vmatmul.bf16.gmra.mxu0 %v3408
        %v3900 = vpop.f32.mrf.mxu0
        %v3901 = vadd.f32 0.0, %v3900
        %v3902 = vpop.f32.mrf.mxu0
        %v3903 = vadd.f32 0.0, %v3902
        %3904 = vmatmul.bf16.gmra.mxu0 %v3411
        %v3905 = vpop.f32.mrf.mxu0
        %v3906 = vadd.f32 0.0, %v3905
        %v3907 = vpop.f32.mrf.mxu0
        %v3908 = vadd.f32 0.0, %v3907
        %3909 = vmatmul.bf16.gmra.mxu0 %v3414
        %v3910 = vpop.f32.mrf.mxu0
        %v3911 = vadd.f32 0.0, %v3910
        %v3912 = vpop.f32.mrf.mxu0
        %v3913 = vadd.f32 0.0, %v3912
        %3914 = vmatmul.bf16.gmra.mxu0 %v3417
        %v3915 = vpop.f32.mrf.mxu0
        %v3916 = vadd.f32 0.0, %v3915
        %v3917 = vpop.f32.mrf.mxu0
        %v3918 = vadd.f32 0.0, %v3917
        %3919 = vmatmul.bf16.gmra.mxu0 %v3420
        %v3920 = vpop.f32.mrf.mxu0
        %v3921 = vadd.f32 0.0, %v3920
        %v3922 = vpop.f32.mrf.mxu0
        %v3923 = vadd.f32 0.0, %v3922
        %3924 = vmatmul.bf16.gmra.mxu0 %v3423
        %v3925 = vpop.f32.mrf.mxu0
        %v3926 = vadd.f32 0.0, %v3925
        %v3927 = vpop.f32.mrf.mxu0
        %v3928 = vadd.f32 0.0, %v3927
        %3929 = vmatmul.bf16.gmra.mxu0 %v3426
        %v3930 = vpop.f32.mrf.mxu0
        %v3931 = vadd.f32 0.0, %v3930
        %v3932 = vpop.f32.mrf.mxu0
        %v3933 = vadd.f32 0.0, %v3932
        %3934 = vmatmul.bf16.gmra.mxu0 %v3429
        %v3935 = vpop.f32.mrf.mxu0
        %v3936 = vadd.f32 0.0, %v3935
        %v3937 = vpop.f32.mrf.mxu0
        %v3938 = vadd.f32 0.0, %v3937
        %3939 = vmatmul.bf16.gmra.mxu0 %v3432
        %v3940 = vpop.f32.mrf.mxu0
        %v3941 = vadd.f32 0.0, %v3940
        %v3942 = vpop.f32.mrf.mxu0
        %v3943 = vadd.f32 0.0, %v3942
        %3944 = vmatmul.bf16.gmra.mxu0 %v3435
        %v3945 = vpop.f32.mrf.mxu0
        %v3946 = vadd.f32 0.0, %v3945
        %v3947 = vpop.f32.mrf.mxu0
        %v3948 = vadd.f32 0.0, %v3947
        %3949 = vmatmul.bf16.gmra.mxu0 %v3438
        %v3950 = vpop.f32.mrf.mxu0
        %v3951 = vadd.f32 0.0, %v3950
        %v3952 = vpop.f32.mrf.mxu0
        %v3953 = vadd.f32 0.0, %v3952
        %3954 = vmatmul.bf16.gmra.mxu0 %v3441
        %v3955 = vpop.f32.mrf.mxu0
        %v3956 = vadd.f32 0.0, %v3955
        %v3957 = vpop.f32.mrf.mxu0
        %v3958 = vadd.f32 0.0, %v3957
        %3959 = vmatmul.bf16.gmra.mxu0 %v3444
        %v3960 = vpop.f32.mrf.mxu0
        %v3961 = vadd.f32 0.0, %v3960
        %v3962 = vpop.f32.mrf.mxu0
        %v3963 = vadd.f32 0.0, %v3962
        %3964 = vmatmul.bf16.gmra.mxu0 %v3447
        %v3965 = vpop.f32.mrf.mxu0
        %v3966 = vadd.f32 0.0, %v3965
        %v3967 = vpop.f32.mrf.mxu0
        %v3968 = vadd.f32 0.0, %v3967
        %3969 = vmatmul.bf16.gmra.mxu0 %v3450
        %v3970 = vpop.f32.mrf.mxu0
        %v3971 = vadd.f32 0.0, %v3970
        %v3972 = vpop.f32.mrf.mxu0
        %v3973 = vadd.f32 0.0, %v3972
        %3974 = vmatmul.bf16.gmra.mxu0 %v3453
        %v3975 = vpop.f32.mrf.mxu0
        %v3976 = vadd.f32 0.0, %v3975
        %v3977 = vpop.f32.mrf.mxu0
        %v3978 = vadd.f32 0.0, %v3977
        %3979 = vmatmul.bf16.gmra.mxu0 %v3456
        %v3980 = vpop.f32.mrf.mxu0
        %v3981 = vadd.f32 0.0, %v3980
        %v3982 = vpop.f32.mrf.mxu0
        %v3983 = vadd.f32 0.0, %v3982
        %3984 = vmatmul.bf16.gmra.mxu0 %v3459
        %v3985 = vpop.f32.mrf.mxu0
        %v3986 = vadd.f32 0.0, %v3985
        %v3987 = vpop.f32.mrf.mxu0
        %v3988 = vadd.f32 0.0, %v3987
        %3989 = vmatmul.bf16.gmra.mxu0 %v3462
        %v3990 = vpop.f32.mrf.mxu0
        %v3991 = vadd.f32 0.0, %v3990
        %v3992 = vpop.f32.mrf.mxu0
        %v3993 = vadd.f32 0.0, %v3992
        %3994 = vmatmul.bf16.gmra.mxu0 %v3465
        %v3995 = vpop.f32.mrf.mxu0
        %v3996 = vadd.f32 0.0, %v3995
        %v3997 = vpop.f32.mrf.mxu0
        %v3998 = vadd.f32 0.0, %v3997
        %3999 = vmatmul.bf16.gmra.mxu0 %v3468
        %v4000 = vpop.f32.mrf.mxu0
        %v4001 = vadd.f32 0.0, %v4000
        %v4002 = vpop.f32.mrf.mxu0
        %v4003 = vadd.f32 0.0, %v4002
        %4004 = vmatmul.bf16.gmra.mxu0 %v3471
        %v4005 = vpop.f32.mrf.mxu0
        %v4006 = vadd.f32 0.0, %v4005
        %v4007 = vpop.f32.mrf.mxu0
        %v4008 = vadd.f32 0.0, %v4007
        %4009 = vmatmul.bf16.gmra.mxu0 %v3474
        %v4010 = vpop.f32.mrf.mxu0
        %v4011 = vadd.f32 0.0, %v4010
        %v4012 = vpop.f32.mrf.mxu0
        %v4013 = vadd.f32 0.0, %v4012
        %4014 = vmatmul.bf16.gmra.mxu0 %v3477
        %v4015 = vpop.f32.mrf.mxu0
        %v4016 = vadd.f32 0.0, %v4015
        %v4017 = vpop.f32.mrf.mxu0
        %v4018 = vadd.f32 0.0, %v4017
        %4019 = vmatmul.bf16.gmra.mxu0 %v3480
        %v4020 = vpop.f32.mrf.mxu0
        %v4021 = vadd.f32 0.0, %v4020
        %v4022 = vpop.f32.mrf.mxu0
        %v4023 = vadd.f32 0.0, %v4022
        %4024 = vmatmul.bf16.gmra.mxu0 %v3483
        %v4025 = vpop.f32.mrf.mxu0
        %v4026 = vadd.f32 0.0, %v4025
        %v4027 = vpop.f32.mrf.mxu0
        %v4028 = vadd.f32 0.0, %v4027
        %4029 = vmatmul.bf16.gmra.mxu0 %v3486
        %v4030 = vpop.f32.mrf.mxu0
        %v4031 = vadd.f32 0.0, %v4030
        %v4032 = vpop.f32.mrf.mxu0
        %v4033 = vadd.f32 0.0, %v4032
        %4034 = vmatmul.bf16.gmra.mxu0 %v3489
        %v4035 = vpop.f32.mrf.mxu0
        %v4036 = vadd.f32 0.0, %v4035
        %v4037 = vpop.f32.mrf.mxu0
        %v4038 = vadd.f32 0.0, %v4037
        %4039 = vmatmul.bf16.gmra.mxu0 %v3492
        %v4040 = vpop.f32.mrf.mxu0
        %v4041 = vadd.f32 0.0, %v4040
        %v4042 = vpop.f32.mrf.mxu0
        %v4043 = vadd.f32 0.0, %v4042
        %4044 = vmatmul.bf16.gmra.mxu0 %v3495
        %v4045 = vpop.f32.mrf.mxu0
        %v4046 = vadd.f32 0.0, %v4045
        %v4047 = vpop.f32.mrf.mxu0
        %v4048 = vadd.f32 0.0, %v4047
        %4049 = vmatmul.bf16.gmra.mxu0 %v3498
        %v4050 = vpop.f32.mrf.mxu0
        %v4051 = vadd.f32 0.0, %v4050
        %v4052 = vpop.f32.mrf.mxu0
        %v4053 = vadd.f32 0.0, %v4052
        %4054 = vmatmul.bf16.gmra.mxu0 %v3501
        %v4055 = vpop.f32.mrf.mxu0
        %v4056 = vadd.f32 0.0, %v4055
        %v4057 = vpop.f32.mrf.mxu0
        %v4058 = vadd.f32 0.0, %v4057
        %4059 = vmatmul.bf16.gmra.mxu0 %v3504
        %v4060 = vpop.f32.mrf.mxu0
        %v4061 = vadd.f32 0.0, %v4060
        %v4062 = vpop.f32.mrf.mxu0
        %v4063 = vadd.f32 0.0, %v4062
        %4064 = vmatmul.bf16.gmra.mxu0 %v3507
        %v4065 = vpop.f32.mrf.mxu0
        %v4066 = vadd.f32 0.0, %v4065
        %v4067 = vpop.f32.mrf.mxu0
        %v4068 = vadd.f32 0.0, %v4067
        %4069 = vmatmul.bf16.gmra.mxu0 %v3510
        %v4070 = vpop.f32.mrf.mxu0
        %v4071 = vadd.f32 0.0, %v4070
        %v4072 = vpop.f32.mrf.mxu0
        %v4073 = vadd.f32 0.0, %v4072
        %4074 = vmatmul.bf16.gmra.mxu0 %v3513
        %v4075 = vpop.f32.mrf.mxu0
        %v4076 = vadd.f32 0.0, %v4075
        %v4077 = vpop.f32.mrf.mxu0
        %v4078 = vadd.f32 0.0, %v4077
        %4079 = vmatmul.bf16.gmra.mxu0 %v3516
        %v4080 = vpop.f32.mrf.mxu0
        %v4081 = vadd.f32 0.0, %v4080
        %v4082 = vpop.f32.mrf.mxu0
        %v4083 = vadd.f32 0.0, %v4082
        %4084 = vmatmul.bf16.gmra.mxu0 %v3519
        %v4085 = vpop.f32.mrf.mxu0
        %v4086 = vadd.f32 0.0, %v4085
        %v4087 = vpop.f32.mrf.mxu0
        %v4088 = vadd.f32 0.0, %v4087
        %4089 = vmatmul.bf16.gmra.mxu0 %v3522
        %v4090 = vpop.f32.mrf.mxu0
        %v4091 = vadd.f32 0.0, %v4090
        %v4092 = vpop.f32.mrf.mxu0
        %v4093 = vadd.f32 0.0, %v4092
        %4094 = vmatmul.bf16.gmra.mxu0 %v3525
        %v4095 = vpop.f32.mrf.mxu0
        %v4096 = vadd.f32 0.0, %v4095
        %v4097 = vpop.f32.mrf.mxu0
        %v4098 = vadd.f32 0.0, %v4097
        %4099 = vmatmul.bf16.gmra.mxu0 %v3528
        %v4100 = vpop.f32.mrf.mxu0
        %v4101 = vadd.f32 0.0, %v4100
        %v4102 = vpop.f32.mrf.mxu0
        %v4103 = vadd.f32 0.0, %v4102
        %4104 = vmatmul.bf16.gmra.mxu0 %v3531
        %v4105 = vpop.f32.mrf.mxu0
        %v4106 = vadd.f32 0.0, %v4105
        %v4107 = vpop.f32.mrf.mxu0
        %v4108 = vadd.f32 0.0, %v4107
        %4109 = vmatmul.bf16.gmra.mxu0 %v3534
        %v4110 = vpop.f32.mrf.mxu0
        %v4111 = vadd.f32 0.0, %v4110
        %v4112 = vpop.f32.mrf.mxu0
        %v4113 = vadd.f32 0.0, %v4112
        %4114 = vmatmul.bf16.gmra.mxu0 %v3537
        %v4115 = vpop.f32.mrf.mxu0
        %v4116 = vadd.f32 0.0, %v4115
        %v4117 = vpop.f32.mrf.mxu0
        %v4118 = vadd.f32 0.0, %v4117
        %4119 = vmatmul.bf16.gmra.mxu0 %v3540
        %v4120 = vpop.f32.mrf.mxu0
        %v4121 = vadd.f32 0.0, %v4120
        %v4122 = vpop.f32.mrf.mxu0
        %v4123 = vadd.f32 0.0, %v4122
        %4124 = vmatmul.bf16.gmra.mxu0 %v3543
        %v4125 = vpop.f32.mrf.mxu0
        %v4126 = vadd.f32 0.0, %v4125
        %v4127 = vpop.f32.mrf.mxu0
        %v4128 = vadd.f32 0.0, %v4127
        %4129 = vmatmul.bf16.gmra.mxu0 %v3546
        %v4130 = vpop.f32.mrf.mxu0
        %v4131 = vadd.f32 0.0, %v4130
        %v4132 = vpop.f32.mrf.mxu0
        %v4133 = vadd.f32 0.0, %v4132
        %4134 = vmatmul.bf16.gmra.mxu0 %v3549
        %v4135 = vpop.f32.mrf.mxu0
        %v4136 = vadd.f32 0.0, %v4135
        %v4137 = vpop.f32.mrf.mxu0
        %v4138 = vadd.f32 0.0, %v4137
        %4139 = vmatmul.bf16.gmra.mxu0 %v3552
        %v4140 = vpop.f32.mrf.mxu0
        %v4141 = vadd.f32 0.0, %v4140
        %v4142 = vpop.f32.mrf.mxu0
        %v4143 = vadd.f32 0.0, %v4142
        %4144 = vmatmul.bf16.gmra.mxu0 %v3555
        %v4145 = vpop.f32.mrf.mxu0
        %v4146 = vadd.f32 0.0, %v4145
        %v4147 = vpop.f32.mrf.mxu0
        %v4148 = vadd.f32 0.0, %v4147
        %4149 = vmatmul.bf16.gmra.mxu0 %v3558
        %v4150 = vpop.f32.mrf.mxu0
        %v4151 = vadd.f32 0.0, %v4150
        %v4152 = vpop.f32.mrf.mxu0
        %v4153 = vadd.f32 0.0, %v4152
        %4154 = vmatmul.bf16.gmra.mxu0 %v3561
        %v4155 = vpop.f32.mrf.mxu0
        %v4156 = vadd.f32 0.0, %v4155
        %v4157 = vpop.f32.mrf.mxu0
        %v4158 = vadd.f32 0.0, %v4157
        %4159 = vmatmul.bf16.gmra.mxu0 %v3564
        %v4160 = vpop.f32.mrf.mxu0
        %v4161 = vadd.f32 0.0, %v4160
        %v4162 = vpop.f32.mrf.mxu0
        %v4163 = vadd.f32 0.0, %v4162
        %4164 = vmatmul.bf16.gmra.mxu0 %v3567
        %v4165 = vpop.f32.mrf.mxu0
        %v4166 = vadd.f32 0.0, %v4165
        %v4167 = vpop.f32.mrf.mxu0
        %v4168 = vadd.f32 0.0, %v4167
        %4169 = vmatmul.bf16.gmra.mxu0 %v3570
        %v4170 = vpop.f32.mrf.mxu0
        %v4171 = vadd.f32 0.0, %v4170
        %v4172 = vpop.f32.mrf.mxu0
        %v4173 = vadd.f32 0.0, %v4172
        %4174 = vmatmul.bf16.gmra.mxu0 %v3573
        %v4175 = vpop.f32.mrf.mxu0
        %v4176 = vadd.f32 0.0, %v4175
        %v4177 = vpop.f32.mrf.mxu0
        %v4178 = vadd.f32 0.0, %v4177
        %4179 = vmatmul.bf16.gmra.mxu0 %v3576
        %v4180 = vpop.f32.mrf.mxu0
        %v4181 = vadd.f32 0.0, %v4180
        %v4182 = vpop.f32.mrf.mxu0
        %v4183 = vadd.f32 0.0, %v4182
        %4184 = vmatmul.bf16.gmra.mxu0 %v3579
        %v4185 = vpop.f32.mrf.mxu0
        %v4186 = vadd.f32 0.0, %v4185
        %v4187 = vpop.f32.mrf.mxu0
        %v4188 = vadd.f32 0.0, %v4187
        %4189 = vmatmul.bf16.gmra.mxu0 %v3582
        %v4190 = vpop.f32.mrf.mxu0
        %v4191 = vadd.f32 0.0, %v4190
        %v4192 = vpop.f32.mrf.mxu0
        %v4193 = vadd.f32 0.0, %v4192
        %4194 = vmatmul.bf16.gmra.mxu0 %v3585
        %v4195 = vpop.f32.mrf.mxu0
        %v4196 = vadd.f32 0.0, %v4195
        %v4197 = vpop.f32.mrf.mxu0
        %v4198 = vadd.f32 0.0, %v4197
        %4199 = vmatmul.bf16.gmra.mxu0 %v3588
        %v4200 = vpop.f32.mrf.mxu0
        %v4201 = vadd.f32 0.0, %v4200
        %v4202 = vpop.f32.mrf.mxu0
        %v4203 = vadd.f32 0.0, %v4202
        %4204 = vmatmul.bf16.gmra.mxu0 %v3591
        %v4205 = vpop.f32.mrf.mxu0
        %v4206 = vadd.f32 0.0, %v4205
        %v4207 = vpop.f32.mrf.mxu0
        %v4208 = vadd.f32 0.0, %v4207
        %4209 = vmatmul.bf16.gmra.mxu0 %v3594
        %v4210 = vpop.f32.mrf.mxu0
        %v4211 = vadd.f32 0.0, %v4210
        %v4212 = vpop.f32.mrf.mxu0
        %v4213 = vadd.f32 0.0, %v4212
        %4214 = vmatmul.bf16.gmra.mxu0 %v3597
        %v4215 = vpop.f32.mrf.mxu0
        %v4216 = vadd.f32 0.0, %v4215
        %v4217 = vpop.f32.mrf.mxu0
        %v4218 = vadd.f32 0.0, %v4217
        %4219 = vmatmul.bf16.gmra.mxu0 %v3600
        %v4220 = vpop.f32.mrf.mxu0
        %v4221 = vadd.f32 0.0, %v4220
        %v4222 = vpop.f32.mrf.mxu0
        %v4223 = vadd.f32 0.0, %v4222
        %4224 = vmatmul.bf16.gmra.mxu0 %v3603
        %v4225 = vpop.f32.mrf.mxu0
        %v4226 = vadd.f32 0.0, %v4225
        %v4227 = vpop.f32.mrf.mxu0
        %v4228 = vadd.f32 0.0, %v4227
        %4229 = vmatmul.bf16.gmra.mxu0 %v3606
        %v4230 = vpop.f32.mrf.mxu0
        %v4231 = vadd.f32 0.0, %v4230
        %v4232 = vpop.f32.mrf.mxu0
        %v4233 = vadd.f32 0.0, %v4232
        %4234 = vmatmul.bf16.gmra.mxu0 %v3609
        %v4235 = vpop.f32.mrf.mxu0
        %v4236 = vadd.f32 0.0, %v4235
        %v4237 = vpop.f32.mrf.mxu0
        %v4238 = vadd.f32 0.0, %v4237
        %4239 = vmatmul.bf16.gmra.mxu0 %v3612
        %v4240 = vpop.f32.mrf.mxu0
        %v4241 = vadd.f32 0.0, %v4240
        %v4242 = vpop.f32.mrf.mxu0
        %v4243 = vadd.f32 0.0, %v4242
        %4244 = vmatmul.bf16.gmra.mxu0 %v3615
        %v4245 = vpop.f32.mrf.mxu0
        %v4246 = vadd.f32 0.0, %v4245
        %v4247 = vpop.f32.mrf.mxu0
        %v4248 = vadd.f32 0.0, %v4247
        %4249 = vmatmul.bf16.gmra.mxu0 %v3618
        %v4250 = vpop.f32.mrf.mxu0
        %v4251 = vadd.f32 0.0, %v4250
        %v4252 = vpop.f32.mrf.mxu0
        %v4253 = vadd.f32 0.0, %v4252
        %4254 = vmatmul.bf16.gmra.mxu0 %v3621
        %v4255 = vpop.f32.mrf.mxu0
        %v4256 = vadd.f32 0.0, %v4255
        %v4257 = vpop.f32.mrf.mxu0
        %v4258 = vadd.f32 0.0, %v4257
        %4259 = vmatmul.bf16.gmra.mxu0 %v3624
        %v4260 = vpop.f32.mrf.mxu0
        %v4261 = vadd.f32 0.0, %v4260
        %v4262 = vpop.f32.mrf.mxu0
        %v4263 = vadd.f32 0.0, %v4262
        %4264 = vmatmul.bf16.gmra.mxu0 %v3627
        %v4265 = vpop.f32.mrf.mxu0
        %v4266 = vadd.f32 0.0, %v4265
        %v4267 = vpop.f32.mrf.mxu0
        %v4268 = vadd.f32 0.0, %v4267
        %4269 = vmatmul.bf16.gmra.mxu0 %v3630
        %v4270 = vpop.f32.mrf.mxu0
        %v4271 = vadd.f32 0.0, %v4270
        %v4272 = vpop.f32.mrf.mxu0
        %v4273 = vadd.f32 0.0, %v4272
        %4274 = vmatmul.bf16.gmra.mxu0 %v3633
        %v4275 = vpop.f32.mrf.mxu0
        %v4276 = vadd.f32 0.0, %v4275
        %v4277 = vpop.f32.mrf.mxu0
        %v4278 = vadd.f32 0.0, %v4277
        %4279 = vmatmul.bf16.gmra.mxu0 %v3636
        %v4280 = vpop.f32.mrf.mxu0
        %v4281 = vadd.f32 0.0, %v4280
        %v4282 = vpop.f32.mrf.mxu0
        %v4283 = vadd.f32 0.0, %v4282
        %4284 = vmatmul.bf16.gmra.mxu0 %v3639
        %v4285 = vpop.f32.mrf.mxu0
        %v4286 = vadd.f32 0.0, %v4285
        %v4287 = vpop.f32.mrf.mxu0
        %v4288 = vadd.f32 0.0, %v4287
        %4289 = vdwg.mxu0
        %v4294 = vunpack.c.l.b16 %v2603
        %v4295 = vunpack.c.l.b16 %v2604
        %v4296 = vunpack.c.l.b16 %v2605
        %v4297 = vunpack.c.l.b16 %v2606
        %v4298 = vpack.c.b16 %v4295, %v4294
        %v4299 = vpack.c.b16 %v4297, %v4296
        %4302 = vmatpush.bf16.msra.mxu0 0
        %4303 = vmatpush.bf16.msra.mxu0 0
        %4304 = vmatpush.bf16.msra.mxu0 0
        %4305 = vmatpush.bf16.msra.mxu0 0
        %4306 = vmatpush.bf16.msra.mxu0 0
        %4307 = vmatpush.bf16.msra.mxu0 0
        %4308 = vmatpush.bf16.msra.mxu0 %v4299
        %4309 = vmatpush.bf16.msra.mxu0 %v4298
        %4310 = vmatmul.bf16.gmra.mxu0 %v3258
        %v4311 = vpop.f32.mrf.mxu0
        %v4312 = vadd.f32 %v3651, %v4311
        %v4313 = vpop.f32.mrf.mxu0
        %v4314 = vadd.f32 %v3653, %v4313
        %4315 = vmatmul.bf16.gmra.mxu0 %v3261
        %v4316 = vpop.f32.mrf.mxu0
        %v4317 = vadd.f32 %v3656, %v4316
        %v4318 = vpop.f32.mrf.mxu0
        %v4319 = vadd.f32 %v3658, %v4318
        %4320 = vmatmul.bf16.gmra.mxu0 %v3264
        %v4321 = vpop.f32.mrf.mxu0
        %v4322 = vadd.f32 %v3661, %v4321
        %v4323 = vpop.f32.mrf.mxu0
        %v4324 = vadd.f32 %v3663, %v4323
        %4325 = vmatmul.bf16.gmra.mxu0 %v3267
        %v4326 = vpop.f32.mrf.mxu0
        %v4327 = vadd.f32 %v3666, %v4326
        %v4328 = vpop.f32.mrf.mxu0
        %v4329 = vadd.f32 %v3668, %v4328
        %4330 = vmatmul.bf16.gmra.mxu0 %v3270
        %v4331 = vpop.f32.mrf.mxu0
        %v4332 = vadd.f32 %v3671, %v4331
        %v4333 = vpop.f32.mrf.mxu0
        %v4334 = vadd.f32 %v3673, %v4333
        %4335 = vmatmul.bf16.gmra.mxu0 %v3273
        %v4336 = vpop.f32.mrf.mxu0
        %v4337 = vadd.f32 %v3676, %v4336
        %v4338 = vpop.f32.mrf.mxu0
        %v4339 = vadd.f32 %v3678, %v4338
        %4340 = vmatmul.bf16.gmra.mxu0 %v3276
        %v4341 = vpop.f32.mrf.mxu0
        %v4342 = vadd.f32 %v3681, %v4341
        %v4343 = vpop.f32.mrf.mxu0
        %v4344 = vadd.f32 %v3683, %v4343
        %4345 = vmatmul.bf16.gmra.mxu0 %v3279
        %v4346 = vpop.f32.mrf.mxu0
        %v4347 = vadd.f32 %v3686, %v4346
        %v4348 = vpop.f32.mrf.mxu0
        %v4349 = vadd.f32 %v3688, %v4348
        %4350 = vmatmul.bf16.gmra.mxu0 %v3282
        %v4351 = vpop.f32.mrf.mxu0
        %v4352 = vadd.f32 %v3691, %v4351
        %v4353 = vpop.f32.mrf.mxu0
        %v4354 = vadd.f32 %v3693, %v4353
        %4355 = vmatmul.bf16.gmra.mxu0 %v3285
        %v4356 = vpop.f32.mrf.mxu0
        %v4357 = vadd.f32 %v3696, %v4356
        %v4358 = vpop.f32.mrf.mxu0
        %v4359 = vadd.f32 %v3698, %v4358
        %4360 = vmatmul.bf16.gmra.mxu0 %v3288
        %v4361 = vpop.f32.mrf.mxu0
        %v4362 = vadd.f32 %v3701, %v4361
        %v4363 = vpop.f32.mrf.mxu0
        %v4364 = vadd.f32 %v3703, %v4363
        %4365 = vmatmul.bf16.gmra.mxu0 %v3291
        %v4366 = vpop.f32.mrf.mxu0
        %v4367 = vadd.f32 %v3706, %v4366
        %v4368 = vpop.f32.mrf.mxu0
        %v4369 = vadd.f32 %v3708, %v4368
        %4370 = vmatmul.bf16.gmra.mxu0 %v3294
        %v4371 = vpop.f32.mrf.mxu0
        %v4372 = vadd.f32 %v3711, %v4371
        %v4373 = vpop.f32.mrf.mxu0
        %v4374 = vadd.f32 %v3713, %v4373
        %4375 = vmatmul.bf16.gmra.mxu0 %v3297
        %v4376 = vpop.f32.mrf.mxu0
        %v4377 = vadd.f32 %v3716, %v4376
        %v4378 = vpop.f32.mrf.mxu0
        %v4379 = vadd.f32 %v3718, %v4378
        %4380 = vmatmul.bf16.gmra.mxu0 %v3300
        %v4381 = vpop.f32.mrf.mxu0
        %v4382 = vadd.f32 %v3721, %v4381
        %v4383 = vpop.f32.mrf.mxu0
        %v4384 = vadd.f32 %v3723, %v4383
        %4385 = vmatmul.bf16.gmra.mxu0 %v3303
        %v4386 = vpop.f32.mrf.mxu0
        %v4387 = vadd.f32 %v3726, %v4386
        %v4388 = vpop.f32.mrf.mxu0
        %v4389 = vadd.f32 %v3728, %v4388
        %4390 = vmatmul.bf16.gmra.mxu0 %v3306
        %v4391 = vpop.f32.mrf.mxu0
        %v4392 = vadd.f32 %v3731, %v4391
        %v4393 = vpop.f32.mrf.mxu0
        %v4394 = vadd.f32 %v3733, %v4393
        %4395 = vmatmul.bf16.gmra.mxu0 %v3309
        %v4396 = vpop.f32.mrf.mxu0
        %v4397 = vadd.f32 %v3736, %v4396
        %v4398 = vpop.f32.mrf.mxu0
        %v4399 = vadd.f32 %v3738, %v4398
        %4400 = vmatmul.bf16.gmra.mxu0 %v3312
        %v4401 = vpop.f32.mrf.mxu0
        %v4402 = vadd.f32 %v3741, %v4401
        %v4403 = vpop.f32.mrf.mxu0
        %v4404 = vadd.f32 %v3743, %v4403
        %4405 = vmatmul.bf16.gmra.mxu0 %v3315
        %v4406 = vpop.f32.mrf.mxu0
        %v4407 = vadd.f32 %v3746, %v4406
        %v4408 = vpop.f32.mrf.mxu0
        %v4409 = vadd.f32 %v3748, %v4408
        %4410 = vmatmul.bf16.gmra.mxu0 %v3318
        %v4411 = vpop.f32.mrf.mxu0
        %v4412 = vadd.f32 %v3751, %v4411
        %v4413 = vpop.f32.mrf.mxu0
        %v4414 = vadd.f32 %v3753, %v4413
        %4415 = vmatmul.bf16.gmra.mxu0 %v3321
        %v4416 = vpop.f32.mrf.mxu0
        %v4417 = vadd.f32 %v3756, %v4416
        %v4418 = vpop.f32.mrf.mxu0
        %v4419 = vadd.f32 %v3758, %v4418
        %4420 = vmatmul.bf16.gmra.mxu0 %v3324
        %v4421 = vpop.f32.mrf.mxu0
        %v4422 = vadd.f32 %v3761, %v4421
        %v4423 = vpop.f32.mrf.mxu0
        %v4424 = vadd.f32 %v3763, %v4423
        %4425 = vmatmul.bf16.gmra.mxu0 %v3327
        %v4426 = vpop.f32.mrf.mxu0
        %v4427 = vadd.f32 %v3766, %v4426
        %v4428 = vpop.f32.mrf.mxu0
        %v4429 = vadd.f32 %v3768, %v4428
        %4430 = vmatmul.bf16.gmra.mxu0 %v3330
        %v4431 = vpop.f32.mrf.mxu0
        %v4432 = vadd.f32 %v3771, %v4431
        %v4433 = vpop.f32.mrf.mxu0
        %v4434 = vadd.f32 %v3773, %v4433
        %4435 = vmatmul.bf16.gmra.mxu0 %v3333
        %v4436 = vpop.f32.mrf.mxu0
        %v4437 = vadd.f32 %v3776, %v4436
        %v4438 = vpop.f32.mrf.mxu0
        %v4439 = vadd.f32 %v3778, %v4438
        %4440 = vmatmul.bf16.gmra.mxu0 %v3336
        %v4441 = vpop.f32.mrf.mxu0
        %v4442 = vadd.f32 %v3781, %v4441
        %v4443 = vpop.f32.mrf.mxu0
        %v4444 = vadd.f32 %v3783, %v4443
        %4445 = vmatmul.bf16.gmra.mxu0 %v3339
        %v4446 = vpop.f32.mrf.mxu0
        %v4447 = vadd.f32 %v3786, %v4446
        %v4448 = vpop.f32.mrf.mxu0
        %v4449 = vadd.f32 %v3788, %v4448
        %4450 = vmatmul.bf16.gmra.mxu0 %v3342
        %v4451 = vpop.f32.mrf.mxu0
        %v4452 = vadd.f32 %v3791, %v4451
        %v4453 = vpop.f32.mrf.mxu0
        %v4454 = vadd.f32 %v3793, %v4453
        %4455 = vmatmul.bf16.gmra.mxu0 %v3345
        %v4456 = vpop.f32.mrf.mxu0
        %v4457 = vadd.f32 %v3796, %v4456
        %v4458 = vpop.f32.mrf.mxu0
        %v4459 = vadd.f32 %v3798, %v4458
        %4460 = vmatmul.bf16.gmra.mxu0 %v3348
        %v4461 = vpop.f32.mrf.mxu0
        %v4462 = vadd.f32 %v3801, %v4461
        %v4463 = vpop.f32.mrf.mxu0
        %v4464 = vadd.f32 %v3803, %v4463
        %4465 = vmatmul.bf16.gmra.mxu0 %v3351
        %v4466 = vpop.f32.mrf.mxu0
        %v4467 = vadd.f32 %v3806, %v4466
        %v4468 = vpop.f32.mrf.mxu0
        %v4469 = vadd.f32 %v3808, %v4468
        %4470 = vmatmul.bf16.gmra.mxu0 %v3354
        %v4471 = vpop.f32.mrf.mxu0
        %v4472 = vadd.f32 %v3811, %v4471
        %v4473 = vpop.f32.mrf.mxu0
        %v4474 = vadd.f32 %v3813, %v4473
        %4475 = vmatmul.bf16.gmra.mxu0 %v3357
        %v4476 = vpop.f32.mrf.mxu0
        %v4477 = vadd.f32 %v3816, %v4476
        %v4478 = vpop.f32.mrf.mxu0
        %v4479 = vadd.f32 %v3818, %v4478
        %4480 = vmatmul.bf16.gmra.mxu0 %v3360
        %v4481 = vpop.f32.mrf.mxu0
        %v4482 = vadd.f32 %v3821, %v4481
        %v4483 = vpop.f32.mrf.mxu0
        %v4484 = vadd.f32 %v3823, %v4483
        %4485 = vmatmul.bf16.gmra.mxu0 %v3363
        %v4486 = vpop.f32.mrf.mxu0
        %v4487 = vadd.f32 %v3826, %v4486
        %v4488 = vpop.f32.mrf.mxu0
        %v4489 = vadd.f32 %v3828, %v4488
        %4490 = vmatmul.bf16.gmra.mxu0 %v3366
        %v4491 = vpop.f32.mrf.mxu0
        %v4492 = vadd.f32 %v3831, %v4491
        %v4493 = vpop.f32.mrf.mxu0
        %v4494 = vadd.f32 %v3833, %v4493
        %4495 = vmatmul.bf16.gmra.mxu0 %v3369
        %v4496 = vpop.f32.mrf.mxu0
        %v4497 = vadd.f32 %v3836, %v4496
        %v4498 = vpop.f32.mrf.mxu0
        %v4499 = vadd.f32 %v3838, %v4498
        %4500 = vmatmul.bf16.gmra.mxu0 %v3372
        %v4501 = vpop.f32.mrf.mxu0
        %v4502 = vadd.f32 %v3841, %v4501
        %v4503 = vpop.f32.mrf.mxu0
        %v4504 = vadd.f32 %v3843, %v4503
        %4505 = vmatmul.bf16.gmra.mxu0 %v3375
        %v4506 = vpop.f32.mrf.mxu0
        %v4507 = vadd.f32 %v3846, %v4506
        %v4508 = vpop.f32.mrf.mxu0
        %v4509 = vadd.f32 %v3848, %v4508
        %4510 = vmatmul.bf16.gmra.mxu0 %v3378
        %v4511 = vpop.f32.mrf.mxu0
        %v4512 = vadd.f32 %v3851, %v4511
        %v4513 = vpop.f32.mrf.mxu0
        %v4514 = vadd.f32 %v3853, %v4513
        %4515 = vmatmul.bf16.gmra.mxu0 %v3381
        %v4516 = vpop.f32.mrf.mxu0
        %v4517 = vadd.f32 %v3856, %v4516
        %v4518 = vpop.f32.mrf.mxu0
        %v4519 = vadd.f32 %v3858, %v4518
        %4520 = vmatmul.bf16.gmra.mxu0 %v3384
        %v4521 = vpop.f32.mrf.mxu0
        %v4522 = vadd.f32 %v3861, %v4521
        %v4523 = vpop.f32.mrf.mxu0
        %v4524 = vadd.f32 %v3863, %v4523
        %4525 = vmatmul.bf16.gmra.mxu0 %v3387
        %v4526 = vpop.f32.mrf.mxu0
        %v4527 = vadd.f32 %v3866, %v4526
        %v4528 = vpop.f32.mrf.mxu0
        %v4529 = vadd.f32 %v3868, %v4528
        %4530 = vmatmul.bf16.gmra.mxu0 %v3390
        %v4531 = vpop.f32.mrf.mxu0
        %v4532 = vadd.f32 %v3871, %v4531
        %v4533 = vpop.f32.mrf.mxu0
        %v4534 = vadd.f32 %v3873, %v4533
        %4535 = vmatmul.bf16.gmra.mxu0 %v3393
        %v4536 = vpop.f32.mrf.mxu0
        %v4537 = vadd.f32 %v3876, %v4536
        %v4538 = vpop.f32.mrf.mxu0
        %v4539 = vadd.f32 %v3878, %v4538
        %4540 = vmatmul.bf16.gmra.mxu0 %v3396
        %v4541 = vpop.f32.mrf.mxu0
        %v4542 = vadd.f32 %v3881, %v4541
        %v4543 = vpop.f32.mrf.mxu0
        %v4544 = vadd.f32 %v3883, %v4543
        %4545 = vmatmul.bf16.gmra.mxu0 %v3399
        %v4546 = vpop.f32.mrf.mxu0
        %v4547 = vadd.f32 %v3886, %v4546
        %v4548 = vpop.f32.mrf.mxu0
        %v4549 = vadd.f32 %v3888, %v4548
        %4550 = vmatmul.bf16.gmra.mxu0 %v3402
        %v4551 = vpop.f32.mrf.mxu0
        %v4552 = vadd.f32 %v3891, %v4551
        %v4553 = vpop.f32.mrf.mxu0
        %v4554 = vadd.f32 %v3893, %v4553
        %4555 = vmatmul.bf16.gmra.mxu0 %v3405
        %v4556 = vpop.f32.mrf.mxu0
        %v4557 = vadd.f32 %v3896, %v4556
        %v4558 = vpop.f32.mrf.mxu0
        %v4559 = vadd.f32 %v3898, %v4558
        %4560 = vmatmul.bf16.gmra.mxu0 %v3408
        %v4561 = vpop.f32.mrf.mxu0
        %v4562 = vadd.f32 %v3901, %v4561
        %v4563 = vpop.f32.mrf.mxu0
        %v4564 = vadd.f32 %v3903, %v4563
        %4565 = vmatmul.bf16.gmra.mxu0 %v3411
        %v4566 = vpop.f32.mrf.mxu0
        %v4567 = vadd.f32 %v3906, %v4566
        %v4568 = vpop.f32.mrf.mxu0
        %v4569 = vadd.f32 %v3908, %v4568
        %4570 = vmatmul.bf16.gmra.mxu0 %v3414
        %v4571 = vpop.f32.mrf.mxu0
        %v4572 = vadd.f32 %v3911, %v4571
        %v4573 = vpop.f32.mrf.mxu0
        %v4574 = vadd.f32 %v3913, %v4573
        %4575 = vmatmul.bf16.gmra.mxu0 %v3417
        %v4576 = vpop.f32.mrf.mxu0
        %v4577 = vadd.f32 %v3916, %v4576
        %v4578 = vpop.f32.mrf.mxu0
        %v4579 = vadd.f32 %v3918, %v4578
        %4580 = vmatmul.bf16.gmra.mxu0 %v3420
        %v4581 = vpop.f32.mrf.mxu0
        %v4582 = vadd.f32 %v3921, %v4581
        %v4583 = vpop.f32.mrf.mxu0
        %v4584 = vadd.f32 %v3923, %v4583
        %4585 = vmatmul.bf16.gmra.mxu0 %v3423
        %v4586 = vpop.f32.mrf.mxu0
        %v4587 = vadd.f32 %v3926, %v4586
        %v4588 = vpop.f32.mrf.mxu0
        %v4589 = vadd.f32 %v3928, %v4588
        %4590 = vmatmul.bf16.gmra.mxu0 %v3426
        %v4591 = vpop.f32.mrf.mxu0
        %v4592 = vadd.f32 %v3931, %v4591
        %v4593 = vpop.f32.mrf.mxu0
        %v4594 = vadd.f32 %v3933, %v4593
        %4595 = vmatmul.bf16.gmra.mxu0 %v3429
        %v4596 = vpop.f32.mrf.mxu0
        %v4597 = vadd.f32 %v3936, %v4596
        %v4598 = vpop.f32.mrf.mxu0
        %v4599 = vadd.f32 %v3938, %v4598
        %4600 = vmatmul.bf16.gmra.mxu0 %v3432
        %v4601 = vpop.f32.mrf.mxu0
        %v4602 = vadd.f32 %v3941, %v4601
        %v4603 = vpop.f32.mrf.mxu0
        %v4604 = vadd.f32 %v3943, %v4603
        %4605 = vmatmul.bf16.gmra.mxu0 %v3435
        %v4606 = vpop.f32.mrf.mxu0
        %v4607 = vadd.f32 %v3946, %v4606
        %v4608 = vpop.f32.mrf.mxu0
        %v4609 = vadd.f32 %v3948, %v4608
        %4610 = vmatmul.bf16.gmra.mxu0 %v3438
        %v4611 = vpop.f32.mrf.mxu0
        %v4612 = vadd.f32 %v3951, %v4611
        %v4613 = vpop.f32.mrf.mxu0
        %v4614 = vadd.f32 %v3953, %v4613
        %4615 = vmatmul.bf16.gmra.mxu0 %v3441
        %v4616 = vpop.f32.mrf.mxu0
        %v4617 = vadd.f32 %v3956, %v4616
        %v4618 = vpop.f32.mrf.mxu0
        %v4619 = vadd.f32 %v3958, %v4618
        %4620 = vmatmul.bf16.gmra.mxu0 %v3444
        %v4621 = vpop.f32.mrf.mxu0
        %v4622 = vadd.f32 %v3961, %v4621
        %v4623 = vpop.f32.mrf.mxu0
        %v4624 = vadd.f32 %v3963, %v4623
        %4625 = vmatmul.bf16.gmra.mxu0 %v3447
        %v4626 = vpop.f32.mrf.mxu0
        %v4627 = vadd.f32 %v3966, %v4626
        %v4628 = vpop.f32.mrf.mxu0
        %v4629 = vadd.f32 %v3968, %v4628
        %4630 = vmatmul.bf16.gmra.mxu0 %v3450
        %v4631 = vpop.f32.mrf.mxu0
        %v4632 = vadd.f32 %v3971, %v4631
        %v4633 = vpop.f32.mrf.mxu0
        %v4634 = vadd.f32 %v3973, %v4633
        %4635 = vmatmul.bf16.gmra.mxu0 %v3453
        %v4636 = vpop.f32.mrf.mxu0
        %v4637 = vadd.f32 %v3976, %v4636
        %v4638 = vpop.f32.mrf.mxu0
        %v4639 = vadd.f32 %v3978, %v4638
        %4640 = vmatmul.bf16.gmra.mxu0 %v3456
        %v4641 = vpop.f32.mrf.mxu0
        %v4642 = vadd.f32 %v3981, %v4641
        %v4643 = vpop.f32.mrf.mxu0
        %v4644 = vadd.f32 %v3983, %v4643
        %4645 = vmatmul.bf16.gmra.mxu0 %v3459
        %v4646 = vpop.f32.mrf.mxu0
        %v4647 = vadd.f32 %v3986, %v4646
        %v4648 = vpop.f32.mrf.mxu0
        %v4649 = vadd.f32 %v3988, %v4648
        %4650 = vmatmul.bf16.gmra.mxu0 %v3462
        %v4651 = vpop.f32.mrf.mxu0
        %v4652 = vadd.f32 %v3991, %v4651
        %v4653 = vpop.f32.mrf.mxu0
        %v4654 = vadd.f32 %v3993, %v4653
        %4655 = vmatmul.bf16.gmra.mxu0 %v3465
        %v4656 = vpop.f32.mrf.mxu0
        %v4657 = vadd.f32 %v3996, %v4656
        %v4658 = vpop.f32.mrf.mxu0
        %v4659 = vadd.f32 %v3998, %v4658
        %4660 = vmatmul.bf16.gmra.mxu0 %v3468
        %v4661 = vpop.f32.mrf.mxu0
        %v4662 = vadd.f32 %v4001, %v4661
        %v4663 = vpop.f32.mrf.mxu0
        %v4664 = vadd.f32 %v4003, %v4663
        %4665 = vmatmul.bf16.gmra.mxu0 %v3471
        %v4666 = vpop.f32.mrf.mxu0
        %v4667 = vadd.f32 %v4006, %v4666
        %v4668 = vpop.f32.mrf.mxu0
        %v4669 = vadd.f32 %v4008, %v4668
        %4670 = vmatmul.bf16.gmra.mxu0 %v3474
        %v4671 = vpop.f32.mrf.mxu0
        %v4672 = vadd.f32 %v4011, %v4671
        %v4673 = vpop.f32.mrf.mxu0
        %v4674 = vadd.f32 %v4013, %v4673
        %4675 = vmatmul.bf16.gmra.mxu0 %v3477
        %v4676 = vpop.f32.mrf.mxu0
        %v4677 = vadd.f32 %v4016, %v4676
        %v4678 = vpop.f32.mrf.mxu0
        %v4679 = vadd.f32 %v4018, %v4678
        %4680 = vmatmul.bf16.gmra.mxu0 %v3480
        %v4681 = vpop.f32.mrf.mxu0
        %v4682 = vadd.f32 %v4021, %v4681
        %v4683 = vpop.f32.mrf.mxu0
        %v4684 = vadd.f32 %v4023, %v4683
        %4685 = vmatmul.bf16.gmra.mxu0 %v3483
        %v4686 = vpop.f32.mrf.mxu0
        %v4687 = vadd.f32 %v4026, %v4686
        %v4688 = vpop.f32.mrf.mxu0
        %v4689 = vadd.f32 %v4028, %v4688
        %4690 = vmatmul.bf16.gmra.mxu0 %v3486
        %v4691 = vpop.f32.mrf.mxu0
        %v4692 = vadd.f32 %v4031, %v4691
        %v4693 = vpop.f32.mrf.mxu0
        %v4694 = vadd.f32 %v4033, %v4693
        %4695 = vmatmul.bf16.gmra.mxu0 %v3489
        %v4696 = vpop.f32.mrf.mxu0
        %v4697 = vadd.f32 %v4036, %v4696
        %v4698 = vpop.f32.mrf.mxu0
        %v4699 = vadd.f32 %v4038, %v4698
        %4700 = vmatmul.bf16.gmra.mxu0 %v3492
        %v4701 = vpop.f32.mrf.mxu0
        %v4702 = vadd.f32 %v4041, %v4701
        %v4703 = vpop.f32.mrf.mxu0
        %v4704 = vadd.f32 %v4043, %v4703
        %4705 = vmatmul.bf16.gmra.mxu0 %v3495
        %v4706 = vpop.f32.mrf.mxu0
        %v4707 = vadd.f32 %v4046, %v4706
        %v4708 = vpop.f32.mrf.mxu0
        %v4709 = vadd.f32 %v4048, %v4708
        %4710 = vmatmul.bf16.gmra.mxu0 %v3498
        %v4711 = vpop.f32.mrf.mxu0
        %v4712 = vadd.f32 %v4051, %v4711
        %v4713 = vpop.f32.mrf.mxu0
        %v4714 = vadd.f32 %v4053, %v4713
        %4715 = vmatmul.bf16.gmra.mxu0 %v3501
        %v4716 = vpop.f32.mrf.mxu0
        %v4717 = vadd.f32 %v4056, %v4716
        %v4718 = vpop.f32.mrf.mxu0
        %v4719 = vadd.f32 %v4058, %v4718
        %4720 = vmatmul.bf16.gmra.mxu0 %v3504
        %v4721 = vpop.f32.mrf.mxu0
        %v4722 = vadd.f32 %v4061, %v4721
        %v4723 = vpop.f32.mrf.mxu0
        %v4724 = vadd.f32 %v4063, %v4723
        %4725 = vmatmul.bf16.gmra.mxu0 %v3507
        %v4726 = vpop.f32.mrf.mxu0
        %v4727 = vadd.f32 %v4066, %v4726
        %v4728 = vpop.f32.mrf.mxu0
        %v4729 = vadd.f32 %v4068, %v4728
        %4730 = vmatmul.bf16.gmra.mxu0 %v3510
        %v4731 = vpop.f32.mrf.mxu0
        %v4732 = vadd.f32 %v4071, %v4731
        %v4733 = vpop.f32.mrf.mxu0
        %v4734 = vadd.f32 %v4073, %v4733
        %4735 = vmatmul.bf16.gmra.mxu0 %v3513
        %v4736 = vpop.f32.mrf.mxu0
        %v4737 = vadd.f32 %v4076, %v4736
        %v4738 = vpop.f32.mrf.mxu0
        %v4739 = vadd.f32 %v4078, %v4738
        %4740 = vmatmul.bf16.gmra.mxu0 %v3516
        %v4741 = vpop.f32.mrf.mxu0
        %v4742 = vadd.f32 %v4081, %v4741
        %v4743 = vpop.f32.mrf.mxu0
        %v4744 = vadd.f32 %v4083, %v4743
        %4745 = vmatmul.bf16.gmra.mxu0 %v3519
        %v4746 = vpop.f32.mrf.mxu0
        %v4747 = vadd.f32 %v4086, %v4746
        %v4748 = vpop.f32.mrf.mxu0
        %v4749 = vadd.f32 %v4088, %v4748
        %4750 = vmatmul.bf16.gmra.mxu0 %v3522
        %v4751 = vpop.f32.mrf.mxu0
        %v4752 = vadd.f32 %v4091, %v4751
        %v4753 = vpop.f32.mrf.mxu0
        %v4754 = vadd.f32 %v4093, %v4753
        %4755 = vmatmul.bf16.gmra.mxu0 %v3525
        %v4756 = vpop.f32.mrf.mxu0
        %v4757 = vadd.f32 %v4096, %v4756
        %v4758 = vpop.f32.mrf.mxu0
        %v4759 = vadd.f32 %v4098, %v4758
        %4760 = vmatmul.bf16.gmra.mxu0 %v3528
        %v4761 = vpop.f32.mrf.mxu0
        %v4762 = vadd.f32 %v4101, %v4761
        %v4763 = vpop.f32.mrf.mxu0
        %v4764 = vadd.f32 %v4103, %v4763
        %4765 = vmatmul.bf16.gmra.mxu0 %v3531
        %v4766 = vpop.f32.mrf.mxu0
        %v4767 = vadd.f32 %v4106, %v4766
        %v4768 = vpop.f32.mrf.mxu0
        %v4769 = vadd.f32 %v4108, %v4768
        %4770 = vmatmul.bf16.gmra.mxu0 %v3534
        %v4771 = vpop.f32.mrf.mxu0
        %v4772 = vadd.f32 %v4111, %v4771
        %v4773 = vpop.f32.mrf.mxu0
        %v4774 = vadd.f32 %v4113, %v4773
        %4775 = vmatmul.bf16.gmra.mxu0 %v3537
        %v4776 = vpop.f32.mrf.mxu0
        %v4777 = vadd.f32 %v4116, %v4776
        %v4778 = vpop.f32.mrf.mxu0
        %v4779 = vadd.f32 %v4118, %v4778
        %4780 = vmatmul.bf16.gmra.mxu0 %v3540
        %v4781 = vpop.f32.mrf.mxu0
        %v4782 = vadd.f32 %v4121, %v4781
        %v4783 = vpop.f32.mrf.mxu0
        %v4784 = vadd.f32 %v4123, %v4783
        %4785 = vmatmul.bf16.gmra.mxu0 %v3543
        %v4786 = vpop.f32.mrf.mxu0
        %v4787 = vadd.f32 %v4126, %v4786
        %v4788 = vpop.f32.mrf.mxu0
        %v4789 = vadd.f32 %v4128, %v4788
        %4790 = vmatmul.bf16.gmra.mxu0 %v3546
        %v4791 = vpop.f32.mrf.mxu0
        %v4792 = vadd.f32 %v4131, %v4791
        %v4793 = vpop.f32.mrf.mxu0
        %v4794 = vadd.f32 %v4133, %v4793
        %4795 = vmatmul.bf16.gmra.mxu0 %v3549
        %v4796 = vpop.f32.mrf.mxu0
        %v4797 = vadd.f32 %v4136, %v4796
        %v4798 = vpop.f32.mrf.mxu0
        %v4799 = vadd.f32 %v4138, %v4798
        %4800 = vmatmul.bf16.gmra.mxu0 %v3552
        %v4801 = vpop.f32.mrf.mxu0
        %v4802 = vadd.f32 %v4141, %v4801
        %v4803 = vpop.f32.mrf.mxu0
        %v4804 = vadd.f32 %v4143, %v4803
        %4805 = vmatmul.bf16.gmra.mxu0 %v3555
        %v4806 = vpop.f32.mrf.mxu0
        %v4807 = vadd.f32 %v4146, %v4806
        %v4808 = vpop.f32.mrf.mxu0
        %v4809 = vadd.f32 %v4148, %v4808
        %4810 = vmatmul.bf16.gmra.mxu0 %v3558
        %v4811 = vpop.f32.mrf.mxu0
        %v4812 = vadd.f32 %v4151, %v4811
        %v4813 = vpop.f32.mrf.mxu0
        %v4814 = vadd.f32 %v4153, %v4813
        %4815 = vmatmul.bf16.gmra.mxu0 %v3561
        %v4816 = vpop.f32.mrf.mxu0
        %v4817 = vadd.f32 %v4156, %v4816
        %v4818 = vpop.f32.mrf.mxu0
        %v4819 = vadd.f32 %v4158, %v4818
        %4820 = vmatmul.bf16.gmra.mxu0 %v3564
        %v4821 = vpop.f32.mrf.mxu0
        %v4822 = vadd.f32 %v4161, %v4821
        %v4823 = vpop.f32.mrf.mxu0
        %v4824 = vadd.f32 %v4163, %v4823
        %4825 = vmatmul.bf16.gmra.mxu0 %v3567
        %v4826 = vpop.f32.mrf.mxu0
        %v4827 = vadd.f32 %v4166, %v4826
        %v4828 = vpop.f32.mrf.mxu0
        %v4829 = vadd.f32 %v4168, %v4828
        %4830 = vmatmul.bf16.gmra.mxu0 %v3570
        %v4831 = vpop.f32.mrf.mxu0
        %v4832 = vadd.f32 %v4171, %v4831
        %v4833 = vpop.f32.mrf.mxu0
        %v4834 = vadd.f32 %v4173, %v4833
        %4835 = vmatmul.bf16.gmra.mxu0 %v3573
        %v4836 = vpop.f32.mrf.mxu0
        %v4837 = vadd.f32 %v4176, %v4836
        %v4838 = vpop.f32.mrf.mxu0
        %v4839 = vadd.f32 %v4178, %v4838
        %4840 = vmatmul.bf16.gmra.mxu0 %v3576
        %v4841 = vpop.f32.mrf.mxu0
        %v4842 = vadd.f32 %v4181, %v4841
        %v4843 = vpop.f32.mrf.mxu0
        %v4844 = vadd.f32 %v4183, %v4843
        %4845 = vmatmul.bf16.gmra.mxu0 %v3579
        %v4846 = vpop.f32.mrf.mxu0
        %v4847 = vadd.f32 %v4186, %v4846
        %v4848 = vpop.f32.mrf.mxu0
        %v4849 = vadd.f32 %v4188, %v4848
        %4850 = vmatmul.bf16.gmra.mxu0 %v3582
        %v4851 = vpop.f32.mrf.mxu0
        %v4852 = vadd.f32 %v4191, %v4851
        %v4853 = vpop.f32.mrf.mxu0
        %v4854 = vadd.f32 %v4193, %v4853
        %4855 = vmatmul.bf16.gmra.mxu0 %v3585
        %v4856 = vpop.f32.mrf.mxu0
        %v4857 = vadd.f32 %v4196, %v4856
        %v4858 = vpop.f32.mrf.mxu0
        %v4859 = vadd.f32 %v4198, %v4858
        %4860 = vmatmul.bf16.gmra.mxu0 %v3588
        %v4861 = vpop.f32.mrf.mxu0
        %v4862 = vadd.f32 %v4201, %v4861
        %v4863 = vpop.f32.mrf.mxu0
        %v4864 = vadd.f32 %v4203, %v4863
        %4865 = vmatmul.bf16.gmra.mxu0 %v3591
        %v4866 = vpop.f32.mrf.mxu0
        %v4867 = vadd.f32 %v4206, %v4866
        %v4868 = vpop.f32.mrf.mxu0
        %v4869 = vadd.f32 %v4208, %v4868
        %4870 = vmatmul.bf16.gmra.mxu0 %v3594
        %v4871 = vpop.f32.mrf.mxu0
        %v4872 = vadd.f32 %v4211, %v4871
        %v4873 = vpop.f32.mrf.mxu0
        %v4874 = vadd.f32 %v4213, %v4873
        %4875 = vmatmul.bf16.gmra.mxu0 %v3597
        %v4876 = vpop.f32.mrf.mxu0
        %v4877 = vadd.f32 %v4216, %v4876
        %v4878 = vpop.f32.mrf.mxu0
        %v4879 = vadd.f32 %v4218, %v4878
        %4880 = vmatmul.bf16.gmra.mxu0 %v3600
        %v4881 = vpop.f32.mrf.mxu0
        %v4882 = vadd.f32 %v4221, %v4881
        %v4883 = vpop.f32.mrf.mxu0
        %v4884 = vadd.f32 %v4223, %v4883
        %4885 = vmatmul.bf16.gmra.mxu0 %v3603
        %v4886 = vpop.f32.mrf.mxu0
        %v4887 = vadd.f32 %v4226, %v4886
        %v4888 = vpop.f32.mrf.mxu0
        %v4889 = vadd.f32 %v4228, %v4888
        %4890 = vmatmul.bf16.gmra.mxu0 %v3606
        %v4891 = vpop.f32.mrf.mxu0
        %v4892 = vadd.f32 %v4231, %v4891
        %v4893 = vpop.f32.mrf.mxu0
        %v4894 = vadd.f32 %v4233, %v4893
        %4895 = vmatmul.bf16.gmra.mxu0 %v3609
        %v4896 = vpop.f32.mrf.mxu0
        %v4897 = vadd.f32 %v4236, %v4896
        %v4898 = vpop.f32.mrf.mxu0
        %v4899 = vadd.f32 %v4238, %v4898
        %4900 = vmatmul.bf16.gmra.mxu0 %v3612
        %v4901 = vpop.f32.mrf.mxu0
        %v4902 = vadd.f32 %v4241, %v4901
        %v4903 = vpop.f32.mrf.mxu0
        %v4904 = vadd.f32 %v4243, %v4903
        %4905 = vmatmul.bf16.gmra.mxu0 %v3615
        %v4906 = vpop.f32.mrf.mxu0
        %v4907 = vadd.f32 %v4246, %v4906
        %v4908 = vpop.f32.mrf.mxu0
        %v4909 = vadd.f32 %v4248, %v4908
        %4910 = vmatmul.bf16.gmra.mxu0 %v3618
        %v4911 = vpop.f32.mrf.mxu0
        %v4912 = vadd.f32 %v4251, %v4911
        %v4913 = vpop.f32.mrf.mxu0
        %v4914 = vadd.f32 %v4253, %v4913
        %4915 = vmatmul.bf16.gmra.mxu0 %v3621
        %v4916 = vpop.f32.mrf.mxu0
        %v4917 = vadd.f32 %v4256, %v4916
        %v4918 = vpop.f32.mrf.mxu0
        %v4919 = vadd.f32 %v4258, %v4918
        %4920 = vmatmul.bf16.gmra.mxu0 %v3624
        %v4921 = vpop.f32.mrf.mxu0
        %v4922 = vadd.f32 %v4261, %v4921
        %v4923 = vpop.f32.mrf.mxu0
        %v4924 = vadd.f32 %v4263, %v4923
        %4925 = vmatmul.bf16.gmra.mxu0 %v3627
        %v4926 = vpop.f32.mrf.mxu0
        %v4927 = vadd.f32 %v4266, %v4926
        %v4928 = vpop.f32.mrf.mxu0
        %v4929 = vadd.f32 %v4268, %v4928
        %4930 = vmatmul.bf16.gmra.mxu0 %v3630
        %v4931 = vpop.f32.mrf.mxu0
        %v4932 = vadd.f32 %v4271, %v4931
        %v4933 = vpop.f32.mrf.mxu0
        %v4934 = vadd.f32 %v4273, %v4933
        %4935 = vmatmul.bf16.gmra.mxu0 %v3633
        %v4936 = vpop.f32.mrf.mxu0
        %v4937 = vadd.f32 %v4276, %v4936
        %v4938 = vpop.f32.mrf.mxu0
        %v4939 = vadd.f32 %v4278, %v4938
        %4940 = vmatmul.bf16.gmra.mxu0 %v3636
        %v4941 = vpop.f32.mrf.mxu0
        %v4942 = vadd.f32 %v4281, %v4941
        %v4943 = vpop.f32.mrf.mxu0
        %v4944 = vadd.f32 %v4283, %v4943
        %4945 = vmatmul.bf16.gmra.mxu0 %v3639
        %v4946 = vpop.f32.mrf.mxu0
        %v4947 = vadd.f32 %v4286, %v4946
        %v4948 = vpop.f32.mrf.mxu0
        %v4949 = vadd.f32 %v4288, %v4948
        %4950 = vdwg.mxu0
        %v4952 = vsel %vm938, %v2475, 0
        %v4955 = vsel %vm938, %v2476, 0
        %v4958 = vsel %vm938, %v2477, 0
        %v4961 = vsel %vm938, %v2478, 0
        %v4964 = vsel %vm938, %v2479, 0
        %v4967 = vsel %vm938, %v2480, 0
        %v4970 = vsel %vm938, %v2481, 0
        %v4973 = vsel %vm938, %v2482, 0
        %v4976 = vsel %vm938, %v2483, 0
        %v4979 = vsel %vm938, %v2484, 0
        %v4982 = vsel %vm938, %v2485, 0
        %v4985 = vsel %vm938, %v2486, 0
        %v4988 = vsel %vm938, %v2487, 0
        %v4991 = vsel %vm938, %v2488, 0
        %v4994 = vsel %vm938, %v2489, 0
        %v4997 = vsel %vm938, %v2490, 0
        %v5000 = vsel %vm938, %v2491, 0
        %v5003 = vsel %vm938, %v2492, 0
        %v5006 = vsel %vm938, %v2493, 0
        %v5009 = vsel %vm938, %v2494, 0
        %v5012 = vsel %vm938, %v2495, 0
        %v5015 = vsel %vm938, %v2496, 0
        %v5018 = vsel %vm938, %v2497, 0
        %v5021 = vsel %vm938, %v2498, 0
        %v5024 = vsel %vm938, %v2499, 0
        %v5027 = vsel %vm938, %v2500, 0
        %v5030 = vsel %vm938, %v2501, 0
        %v5033 = vsel %vm938, %v2502, 0
        %v5036 = vsel %vm938, %v2503, 0
        %v5039 = vsel %vm938, %v2504, 0
        %v5042 = vsel %vm938, %v2505, 0
        %v5045 = vsel %vm938, %v2506, 0
        %v5048 = vsel %vm938, %v2507, 0
        %v5051 = vsel %vm938, %v2508, 0
        %v5054 = vsel %vm938, %v2509, 0
        %v5057 = vsel %vm938, %v2510, 0
        %v5060 = vsel %vm938, %v2511, 0
        %v5063 = vsel %vm938, %v2512, 0
        %v5066 = vsel %vm938, %v2513, 0
        %v5069 = vsel %vm938, %v2514, 0
        %v5072 = vsel %vm938, %v2515, 0
        %v5075 = vsel %vm938, %v2516, 0
        %v5078 = vsel %vm938, %v2517, 0
        %v5081 = vsel %vm938, %v2518, 0
        %v5084 = vsel %vm938, %v2519, 0
        %v5087 = vsel %vm938, %v2520, 0
        %v5090 = vsel %vm938, %v2521, 0
        %v5093 = vsel %vm938, %v2522, 0
        %v5096 = vsel %vm938, %v2523, 0
        %v5099 = vsel %vm938, %v2524, 0
        %v5102 = vsel %vm938, %v2525, 0
        %v5105 = vsel %vm938, %v2526, 0
        %v5108 = vsel %vm938, %v2527, 0
        %v5111 = vsel %vm938, %v2528, 0
        %v5114 = vsel %vm938, %v2529, 0
        %v5117 = vsel %vm938, %v2530, 0
        %v5120 = vsel %vm938, %v2531, 0
        %v5123 = vsel %vm938, %v2532, 0
        %v5126 = vsel %vm938, %v2533, 0
        %v5129 = vsel %vm938, %v2534, 0
        %v5132 = vsel %vm938, %v2535, 0
        %v5135 = vsel %vm938, %v2536, 0
        %v5138 = vsel %vm938, %v2537, 0
        %v5141 = vsel %vm938, %v2538, 0
        %v5144 = vsel %vm938, %v2539, 0
        %v5147 = vsel %vm938, %v2540, 0
        %v5150 = vsel %vm938, %v2541, 0
        %v5153 = vsel %vm938, %v2542, 0
        %v5156 = vsel %vm938, %v2543, 0
        %v5159 = vsel %vm938, %v2544, 0
        %v5162 = vsel %vm938, %v2545, 0
        %v5165 = vsel %vm938, %v2546, 0
        %v5168 = vsel %vm938, %v2547, 0
        %v5171 = vsel %vm938, %v2548, 0
        %v5174 = vsel %vm938, %v2549, 0
        %v5177 = vsel %vm938, %v2550, 0
        %v5180 = vsel %vm938, %v2551, 0
        %v5183 = vsel %vm938, %v2552, 0
        %v5186 = vsel %vm938, %v2553, 0
        %v5189 = vsel %vm938, %v2554, 0
        %v5192 = vsel %vm938, %v2555, 0
        %v5195 = vsel %vm938, %v2556, 0
        %v5198 = vsel %vm938, %v2557, 0
        %v5201 = vsel %vm938, %v2558, 0
        %v5204 = vsel %vm938, %v2559, 0
        %v5207 = vsel %vm938, %v2560, 0
        %v5210 = vsel %vm938, %v2561, 0
        %v5213 = vsel %vm938, %v2562, 0
        %v5216 = vsel %vm938, %v2563, 0
        %v5219 = vsel %vm938, %v2564, 0
        %v5222 = vsel %vm938, %v2565, 0
        %v5225 = vsel %vm938, %v2566, 0
        %v5228 = vsel %vm938, %v2567, 0
        %v5231 = vsel %vm938, %v2568, 0
        %v5234 = vsel %vm938, %v2569, 0
        %v5237 = vsel %vm938, %v2570, 0
        %v5240 = vsel %vm938, %v2571, 0
        %v5243 = vsel %vm938, %v2572, 0
        %v5246 = vsel %vm938, %v2573, 0
        %v5249 = vsel %vm938, %v2574, 0
        %v5252 = vsel %vm938, %v2575, 0
        %v5255 = vsel %vm938, %v2576, 0
        %v5258 = vsel %vm938, %v2577, 0
        %v5261 = vsel %vm938, %v2578, 0
        %v5264 = vsel %vm938, %v2579, 0
        %v5267 = vsel %vm938, %v2580, 0
        %v5270 = vsel %vm938, %v2581, 0
        %v5273 = vsel %vm938, %v2582, 0
        %v5276 = vsel %vm938, %v2583, 0
        %v5279 = vsel %vm938, %v2584, 0
        %v5282 = vsel %vm938, %v2585, 0
        %v5285 = vsel %vm938, %v2586, 0
        %v5288 = vsel %vm938, %v2587, 0
        %v5291 = vsel %vm938, %v2588, 0
        %v5294 = vsel %vm938, %v2589, 0
        %v5297 = vsel %vm938, %v2590, 0
        %v5300 = vsel %vm938, %v2591, 0
        %v5303 = vsel %vm938, %v2592, 0
        %v5306 = vsel %vm938, %v2593, 0
        %v5309 = vsel %vm938, %v2594, 0
        %v5312 = vsel %vm938, %v2595, 0
        %v5315 = vsel %vm938, %v2596, 0
        %v5318 = vsel %vm938, %v2597, 0
        %v5321 = vsel %vm938, %v2598, 0
        %v5324 = vsel %vm938, %v2599, 0
        %v5327 = vsel %vm938, %v2600, 0
        %v5330 = vsel %vm938, %v2601, 0
        %v5333 = vsel %vm938, %v2602, 0
        %5335 = vmatpush.bf16.msra.mxu0 0
        %5336 = vmatpush.bf16.msra.mxu0 0
        %5337 = vmatpush.bf16.msra.mxu0 0
        %5338 = vmatpush.bf16.msra.mxu0 0
        %5339 = vmatpush.bf16.msra.mxu0 0
        %5340 = vmatpush.bf16.msra.mxu0 0
        %5341 = vmatpush.bf16.msra.mxu0 %v4299
        %5342 = vmatpush.bf16.msra.mxu0 %v4298
        %5343 = vmatmul.bf16.gmra.mxu0 %v4952
        %v5344 = vpop.f32.mrf.mxu0
        %v5345 = vadd.f32 0.0, %v5344
        %v5346 = vpop.f32.mrf.mxu0
        %v5347 = vadd.f32 0.0, %v5346
        %5348 = vmatmul.bf16.gmra.mxu0 %v4955
        %v5349 = vpop.f32.mrf.mxu0
        %v5350 = vadd.f32 0.0, %v5349
        %v5351 = vpop.f32.mrf.mxu0
        %v5352 = vadd.f32 0.0, %v5351
        %5353 = vmatmul.bf16.gmra.mxu0 %v4958
        %v5354 = vpop.f32.mrf.mxu0
        %v5355 = vadd.f32 0.0, %v5354
        %v5356 = vpop.f32.mrf.mxu0
        %v5357 = vadd.f32 0.0, %v5356
        %5358 = vmatmul.bf16.gmra.mxu0 %v4961
        %v5359 = vpop.f32.mrf.mxu0
        %v5360 = vadd.f32 0.0, %v5359
        %v5361 = vpop.f32.mrf.mxu0
        %v5362 = vadd.f32 0.0, %v5361
        %5363 = vmatmul.bf16.gmra.mxu0 %v4964
        %v5364 = vpop.f32.mrf.mxu0
        %v5365 = vadd.f32 0.0, %v5364
        %v5366 = vpop.f32.mrf.mxu0
        %v5367 = vadd.f32 0.0, %v5366
        %5368 = vmatmul.bf16.gmra.mxu0 %v4967
        %v5369 = vpop.f32.mrf.mxu0
        %v5370 = vadd.f32 0.0, %v5369
        %v5371 = vpop.f32.mrf.mxu0
        %v5372 = vadd.f32 0.0, %v5371
        %5373 = vmatmul.bf16.gmra.mxu0 %v4970
        %v5374 = vpop.f32.mrf.mxu0
        %v5375 = vadd.f32 0.0, %v5374
        %v5376 = vpop.f32.mrf.mxu0
        %v5377 = vadd.f32 0.0, %v5376
        %5378 = vmatmul.bf16.gmra.mxu0 %v4973
        %v5379 = vpop.f32.mrf.mxu0
        %v5380 = vadd.f32 0.0, %v5379
        %v5381 = vpop.f32.mrf.mxu0
        %v5382 = vadd.f32 0.0, %v5381
        %5383 = vmatmul.bf16.gmra.mxu0 %v4976
        %v5384 = vpop.f32.mrf.mxu0
        %v5385 = vadd.f32 0.0, %v5384
        %v5386 = vpop.f32.mrf.mxu0
        %v5387 = vadd.f32 0.0, %v5386
        %5388 = vmatmul.bf16.gmra.mxu0 %v4979
        %v5389 = vpop.f32.mrf.mxu0
        %v5390 = vadd.f32 0.0, %v5389
        %v5391 = vpop.f32.mrf.mxu0
        %v5392 = vadd.f32 0.0, %v5391
        %5393 = vmatmul.bf16.gmra.mxu0 %v4982
        %v5394 = vpop.f32.mrf.mxu0
        %v5395 = vadd.f32 0.0, %v5394
        %v5396 = vpop.f32.mrf.mxu0
        %v5397 = vadd.f32 0.0, %v5396
        %5398 = vmatmul.bf16.gmra.mxu0 %v4985
        %v5399 = vpop.f32.mrf.mxu0
        %v5400 = vadd.f32 0.0, %v5399
        %v5401 = vpop.f32.mrf.mxu0
        %v5402 = vadd.f32 0.0, %v5401
        %5403 = vmatmul.bf16.gmra.mxu0 %v4988
        %v5404 = vpop.f32.mrf.mxu0
        %v5405 = vadd.f32 0.0, %v5404
        %v5406 = vpop.f32.mrf.mxu0
        %v5407 = vadd.f32 0.0, %v5406
        %5408 = vmatmul.bf16.gmra.mxu0 %v4991
        %v5409 = vpop.f32.mrf.mxu0
        %v5410 = vadd.f32 0.0, %v5409
        %v5411 = vpop.f32.mrf.mxu0
        %v5412 = vadd.f32 0.0, %v5411
        %5413 = vmatmul.bf16.gmra.mxu0 %v4994
        %v5414 = vpop.f32.mrf.mxu0
        %v5415 = vadd.f32 0.0, %v5414
        %v5416 = vpop.f32.mrf.mxu0
        %v5417 = vadd.f32 0.0, %v5416
        %5418 = vmatmul.bf16.gmra.mxu0 %v4997
        %v5419 = vpop.f32.mrf.mxu0
        %v5420 = vadd.f32 0.0, %v5419
        %v5421 = vpop.f32.mrf.mxu0
        %v5422 = vadd.f32 0.0, %v5421
        %5423 = vmatmul.bf16.gmra.mxu0 %v5000
        %v5424 = vpop.f32.mrf.mxu0
        %v5425 = vadd.f32 0.0, %v5424
        %v5426 = vpop.f32.mrf.mxu0
        %v5427 = vadd.f32 0.0, %v5426
        %5428 = vmatmul.bf16.gmra.mxu0 %v5003
        %v5429 = vpop.f32.mrf.mxu0
        %v5430 = vadd.f32 0.0, %v5429
        %v5431 = vpop.f32.mrf.mxu0
        %v5432 = vadd.f32 0.0, %v5431
        %5433 = vmatmul.bf16.gmra.mxu0 %v5006
        %v5434 = vpop.f32.mrf.mxu0
        %v5435 = vadd.f32 0.0, %v5434
        %v5436 = vpop.f32.mrf.mxu0
        %v5437 = vadd.f32 0.0, %v5436
        %5438 = vmatmul.bf16.gmra.mxu0 %v5009
        %v5439 = vpop.f32.mrf.mxu0
        %v5440 = vadd.f32 0.0, %v5439
        %v5441 = vpop.f32.mrf.mxu0
        %v5442 = vadd.f32 0.0, %v5441
        %5443 = vmatmul.bf16.gmra.mxu0 %v5012
        %v5444 = vpop.f32.mrf.mxu0
        %v5445 = vadd.f32 0.0, %v5444
        %v5446 = vpop.f32.mrf.mxu0
        %v5447 = vadd.f32 0.0, %v5446
        %5448 = vmatmul.bf16.gmra.mxu0 %v5015
        %v5449 = vpop.f32.mrf.mxu0
        %v5450 = vadd.f32 0.0, %v5449
        %v5451 = vpop.f32.mrf.mxu0
        %v5452 = vadd.f32 0.0, %v5451
        %5453 = vmatmul.bf16.gmra.mxu0 %v5018
        %v5454 = vpop.f32.mrf.mxu0
        %v5455 = vadd.f32 0.0, %v5454
        %v5456 = vpop.f32.mrf.mxu0
        %v5457 = vadd.f32 0.0, %v5456
        %5458 = vmatmul.bf16.gmra.mxu0 %v5021
        %v5459 = vpop.f32.mrf.mxu0
        %v5460 = vadd.f32 0.0, %v5459
        %v5461 = vpop.f32.mrf.mxu0
        %v5462 = vadd.f32 0.0, %v5461
        %5463 = vmatmul.bf16.gmra.mxu0 %v5024
        %v5464 = vpop.f32.mrf.mxu0
        %v5465 = vadd.f32 0.0, %v5464
        %v5466 = vpop.f32.mrf.mxu0
        %v5467 = vadd.f32 0.0, %v5466
        %5468 = vmatmul.bf16.gmra.mxu0 %v5027
        %v5469 = vpop.f32.mrf.mxu0
        %v5470 = vadd.f32 0.0, %v5469
        %v5471 = vpop.f32.mrf.mxu0
        %v5472 = vadd.f32 0.0, %v5471
        %5473 = vmatmul.bf16.gmra.mxu0 %v5030
        %v5474 = vpop.f32.mrf.mxu0
        %v5475 = vadd.f32 0.0, %v5474
        %v5476 = vpop.f32.mrf.mxu0
        %v5477 = vadd.f32 0.0, %v5476
        %5478 = vmatmul.bf16.gmra.mxu0 %v5033
        %v5479 = vpop.f32.mrf.mxu0
        %v5480 = vadd.f32 0.0, %v5479
        %v5481 = vpop.f32.mrf.mxu0
        %v5482 = vadd.f32 0.0, %v5481
        %5483 = vmatmul.bf16.gmra.mxu0 %v5036
        %v5484 = vpop.f32.mrf.mxu0
        %v5485 = vadd.f32 0.0, %v5484
        %v5486 = vpop.f32.mrf.mxu0
        %v5487 = vadd.f32 0.0, %v5486
        %5488 = vmatmul.bf16.gmra.mxu0 %v5039
        %v5489 = vpop.f32.mrf.mxu0
        %v5490 = vadd.f32 0.0, %v5489
        %v5491 = vpop.f32.mrf.mxu0
        %v5492 = vadd.f32 0.0, %v5491
        %5493 = vmatmul.bf16.gmra.mxu0 %v5042
        %v5494 = vpop.f32.mrf.mxu0
        %v5495 = vadd.f32 0.0, %v5494
        %v5496 = vpop.f32.mrf.mxu0
        %v5497 = vadd.f32 0.0, %v5496
        %5498 = vmatmul.bf16.gmra.mxu0 %v5045
        %v5499 = vpop.f32.mrf.mxu0
        %v5500 = vadd.f32 0.0, %v5499
        %v5501 = vpop.f32.mrf.mxu0
        %v5502 = vadd.f32 0.0, %v5501
        %5503 = vmatmul.bf16.gmra.mxu0 %v5048
        %v5504 = vpop.f32.mrf.mxu0
        %v5505 = vadd.f32 0.0, %v5504
        %v5506 = vpop.f32.mrf.mxu0
        %v5507 = vadd.f32 0.0, %v5506
        %5508 = vmatmul.bf16.gmra.mxu0 %v5051
        %v5509 = vpop.f32.mrf.mxu0
        %v5510 = vadd.f32 0.0, %v5509
        %v5511 = vpop.f32.mrf.mxu0
        %v5512 = vadd.f32 0.0, %v5511
        %5513 = vmatmul.bf16.gmra.mxu0 %v5054
        %v5514 = vpop.f32.mrf.mxu0
        %v5515 = vadd.f32 0.0, %v5514
        %v5516 = vpop.f32.mrf.mxu0
        %v5517 = vadd.f32 0.0, %v5516
        %5518 = vmatmul.bf16.gmra.mxu0 %v5057
        %v5519 = vpop.f32.mrf.mxu0
        %v5520 = vadd.f32 0.0, %v5519
        %v5521 = vpop.f32.mrf.mxu0
        %v5522 = vadd.f32 0.0, %v5521
        %5523 = vmatmul.bf16.gmra.mxu0 %v5060
        %v5524 = vpop.f32.mrf.mxu0
        %v5525 = vadd.f32 0.0, %v5524
        %v5526 = vpop.f32.mrf.mxu0
        %v5527 = vadd.f32 0.0, %v5526
        %5528 = vmatmul.bf16.gmra.mxu0 %v5063
        %v5529 = vpop.f32.mrf.mxu0
        %v5530 = vadd.f32 0.0, %v5529
        %v5531 = vpop.f32.mrf.mxu0
        %v5532 = vadd.f32 0.0, %v5531
        %5533 = vmatmul.bf16.gmra.mxu0 %v5066
        %v5534 = vpop.f32.mrf.mxu0
        %v5535 = vadd.f32 0.0, %v5534
        %v5536 = vpop.f32.mrf.mxu0
        %v5537 = vadd.f32 0.0, %v5536
        %5538 = vmatmul.bf16.gmra.mxu0 %v5069
        %v5539 = vpop.f32.mrf.mxu0
        %v5540 = vadd.f32 0.0, %v5539
        %v5541 = vpop.f32.mrf.mxu0
        %v5542 = vadd.f32 0.0, %v5541
        %5543 = vmatmul.bf16.gmra.mxu0 %v5072
        %v5544 = vpop.f32.mrf.mxu0
        %v5545 = vadd.f32 0.0, %v5544
        %v5546 = vpop.f32.mrf.mxu0
        %v5547 = vadd.f32 0.0, %v5546
        %5548 = vmatmul.bf16.gmra.mxu0 %v5075
        %v5549 = vpop.f32.mrf.mxu0
        %v5550 = vadd.f32 0.0, %v5549
        %v5551 = vpop.f32.mrf.mxu0
        %v5552 = vadd.f32 0.0, %v5551
        %5553 = vmatmul.bf16.gmra.mxu0 %v5078
        %v5554 = vpop.f32.mrf.mxu0
        %v5555 = vadd.f32 0.0, %v5554
        %v5556 = vpop.f32.mrf.mxu0
        %v5557 = vadd.f32 0.0, %v5556
        %5558 = vmatmul.bf16.gmra.mxu0 %v5081
        %v5559 = vpop.f32.mrf.mxu0
        %v5560 = vadd.f32 0.0, %v5559
        %v5561 = vpop.f32.mrf.mxu0
        %v5562 = vadd.f32 0.0, %v5561
        %5563 = vmatmul.bf16.gmra.mxu0 %v5084
        %v5564 = vpop.f32.mrf.mxu0
        %v5565 = vadd.f32 0.0, %v5564
        %v5566 = vpop.f32.mrf.mxu0
        %v5567 = vadd.f32 0.0, %v5566
        %5568 = vmatmul.bf16.gmra.mxu0 %v5087
        %v5569 = vpop.f32.mrf.mxu0
        %v5570 = vadd.f32 0.0, %v5569
        %v5571 = vpop.f32.mrf.mxu0
        %v5572 = vadd.f32 0.0, %v5571
        %5573 = vmatmul.bf16.gmra.mxu0 %v5090
        %v5574 = vpop.f32.mrf.mxu0
        %v5575 = vadd.f32 0.0, %v5574
        %v5576 = vpop.f32.mrf.mxu0
        %v5577 = vadd.f32 0.0, %v5576
        %5578 = vmatmul.bf16.gmra.mxu0 %v5093
        %v5579 = vpop.f32.mrf.mxu0
        %v5580 = vadd.f32 0.0, %v5579
        %v5581 = vpop.f32.mrf.mxu0
        %v5582 = vadd.f32 0.0, %v5581
        %5583 = vmatmul.bf16.gmra.mxu0 %v5096
        %v5584 = vpop.f32.mrf.mxu0
        %v5585 = vadd.f32 0.0, %v5584
        %v5586 = vpop.f32.mrf.mxu0
        %v5587 = vadd.f32 0.0, %v5586
        %5588 = vmatmul.bf16.gmra.mxu0 %v5099
        %v5589 = vpop.f32.mrf.mxu0
        %v5590 = vadd.f32 0.0, %v5589
        %v5591 = vpop.f32.mrf.mxu0
        %v5592 = vadd.f32 0.0, %v5591
        %5593 = vmatmul.bf16.gmra.mxu0 %v5102
        %v5594 = vpop.f32.mrf.mxu0
        %v5595 = vadd.f32 0.0, %v5594
        %v5596 = vpop.f32.mrf.mxu0
        %v5597 = vadd.f32 0.0, %v5596
        %5598 = vmatmul.bf16.gmra.mxu0 %v5105
        %v5599 = vpop.f32.mrf.mxu0
        %v5600 = vadd.f32 0.0, %v5599
        %v5601 = vpop.f32.mrf.mxu0
        %v5602 = vadd.f32 0.0, %v5601
        %5603 = vmatmul.bf16.gmra.mxu0 %v5108
        %v5604 = vpop.f32.mrf.mxu0
        %v5605 = vadd.f32 0.0, %v5604
        %v5606 = vpop.f32.mrf.mxu0
        %v5607 = vadd.f32 0.0, %v5606
        %5608 = vmatmul.bf16.gmra.mxu0 %v5111
        %v5609 = vpop.f32.mrf.mxu0
        %v5610 = vadd.f32 0.0, %v5609
        %v5611 = vpop.f32.mrf.mxu0
        %v5612 = vadd.f32 0.0, %v5611
        %5613 = vmatmul.bf16.gmra.mxu0 %v5114
        %v5614 = vpop.f32.mrf.mxu0
        %v5615 = vadd.f32 0.0, %v5614
        %v5616 = vpop.f32.mrf.mxu0
        %v5617 = vadd.f32 0.0, %v5616
        %5618 = vmatmul.bf16.gmra.mxu0 %v5117
        %v5619 = vpop.f32.mrf.mxu0
        %v5620 = vadd.f32 0.0, %v5619
        %v5621 = vpop.f32.mrf.mxu0
        %v5622 = vadd.f32 0.0, %v5621
        %5623 = vmatmul.bf16.gmra.mxu0 %v5120
        %v5624 = vpop.f32.mrf.mxu0
        %v5625 = vadd.f32 0.0, %v5624
        %v5626 = vpop.f32.mrf.mxu0
        %v5627 = vadd.f32 0.0, %v5626
        %5628 = vmatmul.bf16.gmra.mxu0 %v5123
        %v5629 = vpop.f32.mrf.mxu0
        %v5630 = vadd.f32 0.0, %v5629
        %v5631 = vpop.f32.mrf.mxu0
        %v5632 = vadd.f32 0.0, %v5631
        %5633 = vmatmul.bf16.gmra.mxu0 %v5126
        %v5634 = vpop.f32.mrf.mxu0
        %v5635 = vadd.f32 0.0, %v5634
        %v5636 = vpop.f32.mrf.mxu0
        %v5637 = vadd.f32 0.0, %v5636
        %5638 = vmatmul.bf16.gmra.mxu0 %v5129
        %v5639 = vpop.f32.mrf.mxu0
        %v5640 = vadd.f32 0.0, %v5639
        %v5641 = vpop.f32.mrf.mxu0
        %v5642 = vadd.f32 0.0, %v5641
        %5643 = vmatmul.bf16.gmra.mxu0 %v5132
        %v5644 = vpop.f32.mrf.mxu0
        %v5645 = vadd.f32 0.0, %v5644
        %v5646 = vpop.f32.mrf.mxu0
        %v5647 = vadd.f32 0.0, %v5646
        %5648 = vmatmul.bf16.gmra.mxu0 %v5135
        %v5649 = vpop.f32.mrf.mxu0
        %v5650 = vadd.f32 0.0, %v5649
        %v5651 = vpop.f32.mrf.mxu0
        %v5652 = vadd.f32 0.0, %v5651
        %5653 = vmatmul.bf16.gmra.mxu0 %v5138
        %v5654 = vpop.f32.mrf.mxu0
        %v5655 = vadd.f32 0.0, %v5654
        %v5656 = vpop.f32.mrf.mxu0
        %v5657 = vadd.f32 0.0, %v5656
        %5658 = vmatmul.bf16.gmra.mxu0 %v5141
        %v5659 = vpop.f32.mrf.mxu0
        %v5660 = vadd.f32 0.0, %v5659
        %v5661 = vpop.f32.mrf.mxu0
        %v5662 = vadd.f32 0.0, %v5661
        %5663 = vmatmul.bf16.gmra.mxu0 %v5144
        %v5664 = vpop.f32.mrf.mxu0
        %v5665 = vadd.f32 0.0, %v5664
        %v5666 = vpop.f32.mrf.mxu0
        %v5667 = vadd.f32 0.0, %v5666
        %5668 = vmatmul.bf16.gmra.mxu0 %v5147
        %v5669 = vpop.f32.mrf.mxu0
        %v5670 = vadd.f32 0.0, %v5669
        %v5671 = vpop.f32.mrf.mxu0
        %v5672 = vadd.f32 0.0, %v5671
        %5673 = vmatmul.bf16.gmra.mxu0 %v5150
        %v5674 = vpop.f32.mrf.mxu0
        %v5675 = vadd.f32 0.0, %v5674
        %v5676 = vpop.f32.mrf.mxu0
        %v5677 = vadd.f32 0.0, %v5676
        %5678 = vmatmul.bf16.gmra.mxu0 %v5153
        %v5679 = vpop.f32.mrf.mxu0
        %v5680 = vadd.f32 0.0, %v5679
        %v5681 = vpop.f32.mrf.mxu0
        %v5682 = vadd.f32 0.0, %v5681
        %5683 = vmatmul.bf16.gmra.mxu0 %v5156
        %v5684 = vpop.f32.mrf.mxu0
        %v5685 = vadd.f32 0.0, %v5684
        %v5686 = vpop.f32.mrf.mxu0
        %v5687 = vadd.f32 0.0, %v5686
        %5688 = vmatmul.bf16.gmra.mxu0 %v5159
        %v5689 = vpop.f32.mrf.mxu0
        %v5690 = vadd.f32 0.0, %v5689
        %v5691 = vpop.f32.mrf.mxu0
        %v5692 = vadd.f32 0.0, %v5691
        %5693 = vmatmul.bf16.gmra.mxu0 %v5162
        %v5694 = vpop.f32.mrf.mxu0
        %v5695 = vadd.f32 0.0, %v5694
        %v5696 = vpop.f32.mrf.mxu0
        %v5697 = vadd.f32 0.0, %v5696
        %5698 = vmatmul.bf16.gmra.mxu0 %v5165
        %v5699 = vpop.f32.mrf.mxu0
        %v5700 = vadd.f32 0.0, %v5699
        %v5701 = vpop.f32.mrf.mxu0
        %v5702 = vadd.f32 0.0, %v5701
        %5703 = vmatmul.bf16.gmra.mxu0 %v5168
        %v5704 = vpop.f32.mrf.mxu0
        %v5705 = vadd.f32 0.0, %v5704
        %v5706 = vpop.f32.mrf.mxu0
        %v5707 = vadd.f32 0.0, %v5706
        %5708 = vmatmul.bf16.gmra.mxu0 %v5171
        %v5709 = vpop.f32.mrf.mxu0
        %v5710 = vadd.f32 0.0, %v5709
        %v5711 = vpop.f32.mrf.mxu0
        %v5712 = vadd.f32 0.0, %v5711
        %5713 = vmatmul.bf16.gmra.mxu0 %v5174
        %v5714 = vpop.f32.mrf.mxu0
        %v5715 = vadd.f32 0.0, %v5714
        %v5716 = vpop.f32.mrf.mxu0
        %v5717 = vadd.f32 0.0, %v5716
        %5718 = vmatmul.bf16.gmra.mxu0 %v5177
        %v5719 = vpop.f32.mrf.mxu0
        %v5720 = vadd.f32 0.0, %v5719
        %v5721 = vpop.f32.mrf.mxu0
        %v5722 = vadd.f32 0.0, %v5721
        %5723 = vmatmul.bf16.gmra.mxu0 %v5180
        %v5724 = vpop.f32.mrf.mxu0
        %v5725 = vadd.f32 0.0, %v5724
        %v5726 = vpop.f32.mrf.mxu0
        %v5727 = vadd.f32 0.0, %v5726
        %5728 = vmatmul.bf16.gmra.mxu0 %v5183
        %v5729 = vpop.f32.mrf.mxu0
        %v5730 = vadd.f32 0.0, %v5729
        %v5731 = vpop.f32.mrf.mxu0
        %v5732 = vadd.f32 0.0, %v5731
        %5733 = vmatmul.bf16.gmra.mxu0 %v5186
        %v5734 = vpop.f32.mrf.mxu0
        %v5735 = vadd.f32 0.0, %v5734
        %v5736 = vpop.f32.mrf.mxu0
        %v5737 = vadd.f32 0.0, %v5736
        %5738 = vmatmul.bf16.gmra.mxu0 %v5189
        %v5739 = vpop.f32.mrf.mxu0
        %v5740 = vadd.f32 0.0, %v5739
        %v5741 = vpop.f32.mrf.mxu0
        %v5742 = vadd.f32 0.0, %v5741
        %5743 = vmatmul.bf16.gmra.mxu0 %v5192
        %v5744 = vpop.f32.mrf.mxu0
        %v5745 = vadd.f32 0.0, %v5744
        %v5746 = vpop.f32.mrf.mxu0
        %v5747 = vadd.f32 0.0, %v5746
        %5748 = vmatmul.bf16.gmra.mxu0 %v5195
        %v5749 = vpop.f32.mrf.mxu0
        %v5750 = vadd.f32 0.0, %v5749
        %v5751 = vpop.f32.mrf.mxu0
        %v5752 = vadd.f32 0.0, %v5751
        %5753 = vmatmul.bf16.gmra.mxu0 %v5198
        %v5754 = vpop.f32.mrf.mxu0
        %v5755 = vadd.f32 0.0, %v5754
        %v5756 = vpop.f32.mrf.mxu0
        %v5757 = vadd.f32 0.0, %v5756
        %5758 = vmatmul.bf16.gmra.mxu0 %v5201
        %v5759 = vpop.f32.mrf.mxu0
        %v5760 = vadd.f32 0.0, %v5759
        %v5761 = vpop.f32.mrf.mxu0
        %v5762 = vadd.f32 0.0, %v5761
        %5763 = vmatmul.bf16.gmra.mxu0 %v5204
        %v5764 = vpop.f32.mrf.mxu0
        %v5765 = vadd.f32 0.0, %v5764
        %v5766 = vpop.f32.mrf.mxu0
        %v5767 = vadd.f32 0.0, %v5766
        %5768 = vmatmul.bf16.gmra.mxu0 %v5207
        %v5769 = vpop.f32.mrf.mxu0
        %v5770 = vadd.f32 0.0, %v5769
        %v5771 = vpop.f32.mrf.mxu0
        %v5772 = vadd.f32 0.0, %v5771
        %5773 = vmatmul.bf16.gmra.mxu0 %v5210
        %v5774 = vpop.f32.mrf.mxu0
        %v5775 = vadd.f32 0.0, %v5774
        %v5776 = vpop.f32.mrf.mxu0
        %v5777 = vadd.f32 0.0, %v5776
        %5778 = vmatmul.bf16.gmra.mxu0 %v5213
        %v5779 = vpop.f32.mrf.mxu0
        %v5780 = vadd.f32 0.0, %v5779
        %v5781 = vpop.f32.mrf.mxu0
        %v5782 = vadd.f32 0.0, %v5781
        %5783 = vmatmul.bf16.gmra.mxu0 %v5216
        %v5784 = vpop.f32.mrf.mxu0
        %v5785 = vadd.f32 0.0, %v5784
        %v5786 = vpop.f32.mrf.mxu0
        %v5787 = vadd.f32 0.0, %v5786
        %5788 = vmatmul.bf16.gmra.mxu0 %v5219
        %v5789 = vpop.f32.mrf.mxu0
        %v5790 = vadd.f32 0.0, %v5789
        %v5791 = vpop.f32.mrf.mxu0
        %v5792 = vadd.f32 0.0, %v5791
        %5793 = vmatmul.bf16.gmra.mxu0 %v5222
        %v5794 = vpop.f32.mrf.mxu0
        %v5795 = vadd.f32 0.0, %v5794
        %v5796 = vpop.f32.mrf.mxu0
        %v5797 = vadd.f32 0.0, %v5796
        %5798 = vmatmul.bf16.gmra.mxu0 %v5225
        %v5799 = vpop.f32.mrf.mxu0
        %v5800 = vadd.f32 0.0, %v5799
        %v5801 = vpop.f32.mrf.mxu0
        %v5802 = vadd.f32 0.0, %v5801
        %5803 = vmatmul.bf16.gmra.mxu0 %v5228
        %v5804 = vpop.f32.mrf.mxu0
        %v5805 = vadd.f32 0.0, %v5804
        %v5806 = vpop.f32.mrf.mxu0
        %v5807 = vadd.f32 0.0, %v5806
        %5808 = vmatmul.bf16.gmra.mxu0 %v5231
        %v5809 = vpop.f32.mrf.mxu0
        %v5810 = vadd.f32 0.0, %v5809
        %v5811 = vpop.f32.mrf.mxu0
        %v5812 = vadd.f32 0.0, %v5811
        %5813 = vmatmul.bf16.gmra.mxu0 %v5234
        %v5814 = vpop.f32.mrf.mxu0
        %v5815 = vadd.f32 0.0, %v5814
        %v5816 = vpop.f32.mrf.mxu0
        %v5817 = vadd.f32 0.0, %v5816
        %5818 = vmatmul.bf16.gmra.mxu0 %v5237
        %v5819 = vpop.f32.mrf.mxu0
        %v5820 = vadd.f32 0.0, %v5819
        %v5821 = vpop.f32.mrf.mxu0
        %v5822 = vadd.f32 0.0, %v5821
        %5823 = vmatmul.bf16.gmra.mxu0 %v5240
        %v5824 = vpop.f32.mrf.mxu0
        %v5825 = vadd.f32 0.0, %v5824
        %v5826 = vpop.f32.mrf.mxu0
        %v5827 = vadd.f32 0.0, %v5826
        %5828 = vmatmul.bf16.gmra.mxu0 %v5243
        %v5829 = vpop.f32.mrf.mxu0
        %v5830 = vadd.f32 0.0, %v5829
        %v5831 = vpop.f32.mrf.mxu0
        %v5832 = vadd.f32 0.0, %v5831
        %5833 = vmatmul.bf16.gmra.mxu0 %v5246
        %v5834 = vpop.f32.mrf.mxu0
        %v5835 = vadd.f32 0.0, %v5834
        %v5836 = vpop.f32.mrf.mxu0
        %v5837 = vadd.f32 0.0, %v5836
        %5838 = vmatmul.bf16.gmra.mxu0 %v5249
        %v5839 = vpop.f32.mrf.mxu0
        %v5840 = vadd.f32 0.0, %v5839
        %v5841 = vpop.f32.mrf.mxu0
        %v5842 = vadd.f32 0.0, %v5841
        %5843 = vmatmul.bf16.gmra.mxu0 %v5252
        %v5844 = vpop.f32.mrf.mxu0
        %v5845 = vadd.f32 0.0, %v5844
        %v5846 = vpop.f32.mrf.mxu0
        %v5847 = vadd.f32 0.0, %v5846
        %5848 = vmatmul.bf16.gmra.mxu0 %v5255
        %v5849 = vpop.f32.mrf.mxu0
        %v5850 = vadd.f32 0.0, %v5849
        %v5851 = vpop.f32.mrf.mxu0
        %v5852 = vadd.f32 0.0, %v5851
        %5853 = vmatmul.bf16.gmra.mxu0 %v5258
        %v5854 = vpop.f32.mrf.mxu0
        %v5855 = vadd.f32 0.0, %v5854
        %v5856 = vpop.f32.mrf.mxu0
        %v5857 = vadd.f32 0.0, %v5856
        %5858 = vmatmul.bf16.gmra.mxu0 %v5261
        %v5859 = vpop.f32.mrf.mxu0
        %v5860 = vadd.f32 0.0, %v5859
        %v5861 = vpop.f32.mrf.mxu0
        %v5862 = vadd.f32 0.0, %v5861
        %5863 = vmatmul.bf16.gmra.mxu0 %v5264
        %v5864 = vpop.f32.mrf.mxu0
        %v5865 = vadd.f32 0.0, %v5864
        %v5866 = vpop.f32.mrf.mxu0
        %v5867 = vadd.f32 0.0, %v5866
        %5868 = vmatmul.bf16.gmra.mxu0 %v5267
        %v5869 = vpop.f32.mrf.mxu0
        %v5870 = vadd.f32 0.0, %v5869
        %v5871 = vpop.f32.mrf.mxu0
        %v5872 = vadd.f32 0.0, %v5871
        %5873 = vmatmul.bf16.gmra.mxu0 %v5270
        %v5874 = vpop.f32.mrf.mxu0
        %v5875 = vadd.f32 0.0, %v5874
        %v5876 = vpop.f32.mrf.mxu0
        %v5877 = vadd.f32 0.0, %v5876
        %5878 = vmatmul.bf16.gmra.mxu0 %v5273
        %v5879 = vpop.f32.mrf.mxu0
        %v5880 = vadd.f32 0.0, %v5879
        %v5881 = vpop.f32.mrf.mxu0
        %v5882 = vadd.f32 0.0, %v5881
        %5883 = vmatmul.bf16.gmra.mxu0 %v5276
        %v5884 = vpop.f32.mrf.mxu0
        %v5885 = vadd.f32 0.0, %v5884
        %v5886 = vpop.f32.mrf.mxu0
        %v5887 = vadd.f32 0.0, %v5886
        %5888 = vmatmul.bf16.gmra.mxu0 %v5279
        %v5889 = vpop.f32.mrf.mxu0
        %v5890 = vadd.f32 0.0, %v5889
        %v5891 = vpop.f32.mrf.mxu0
        %v5892 = vadd.f32 0.0, %v5891
        %5893 = vmatmul.bf16.gmra.mxu0 %v5282
        %v5894 = vpop.f32.mrf.mxu0
        %v5895 = vadd.f32 0.0, %v5894
        %v5896 = vpop.f32.mrf.mxu0
        %v5897 = vadd.f32 0.0, %v5896
        %5898 = vmatmul.bf16.gmra.mxu0 %v5285
        %v5899 = vpop.f32.mrf.mxu0
        %v5900 = vadd.f32 0.0, %v5899
        %v5901 = vpop.f32.mrf.mxu0
        %v5902 = vadd.f32 0.0, %v5901
        %5903 = vmatmul.bf16.gmra.mxu0 %v5288
        %v5904 = vpop.f32.mrf.mxu0
        %v5905 = vadd.f32 0.0, %v5904
        %v5906 = vpop.f32.mrf.mxu0
        %v5907 = vadd.f32 0.0, %v5906
        %5908 = vmatmul.bf16.gmra.mxu0 %v5291
        %v5909 = vpop.f32.mrf.mxu0
        %v5910 = vadd.f32 0.0, %v5909
        %v5911 = vpop.f32.mrf.mxu0
        %v5912 = vadd.f32 0.0, %v5911
        %5913 = vmatmul.bf16.gmra.mxu0 %v5294
        %v5914 = vpop.f32.mrf.mxu0
        %v5915 = vadd.f32 0.0, %v5914
        %v5916 = vpop.f32.mrf.mxu0
        %v5917 = vadd.f32 0.0, %v5916
        %5918 = vmatmul.bf16.gmra.mxu0 %v5297
        %v5919 = vpop.f32.mrf.mxu0
        %v5920 = vadd.f32 0.0, %v5919
        %v5921 = vpop.f32.mrf.mxu0
        %v5922 = vadd.f32 0.0, %v5921
        %5923 = vmatmul.bf16.gmra.mxu0 %v5300
        %v5924 = vpop.f32.mrf.mxu0
        %v5925 = vadd.f32 0.0, %v5924
        %v5926 = vpop.f32.mrf.mxu0
        %v5927 = vadd.f32 0.0, %v5926
        %5928 = vmatmul.bf16.gmra.mxu0 %v5303
        %v5929 = vpop.f32.mrf.mxu0
        %v5930 = vadd.f32 0.0, %v5929
        %v5931 = vpop.f32.mrf.mxu0
        %v5932 = vadd.f32 0.0, %v5931
        %5933 = vmatmul.bf16.gmra.mxu0 %v5306
        %v5934 = vpop.f32.mrf.mxu0
        %v5935 = vadd.f32 0.0, %v5934
        %v5936 = vpop.f32.mrf.mxu0
        %v5937 = vadd.f32 0.0, %v5936
        %5938 = vmatmul.bf16.gmra.mxu0 %v5309
        %v5939 = vpop.f32.mrf.mxu0
        %v5940 = vadd.f32 0.0, %v5939
        %v5941 = vpop.f32.mrf.mxu0
        %v5942 = vadd.f32 0.0, %v5941
        %5943 = vmatmul.bf16.gmra.mxu0 %v5312
        %v5944 = vpop.f32.mrf.mxu0
        %v5945 = vadd.f32 0.0, %v5944
        %v5946 = vpop.f32.mrf.mxu0
        %v5947 = vadd.f32 0.0, %v5946
        %5948 = vmatmul.bf16.gmra.mxu0 %v5315
        %v5949 = vpop.f32.mrf.mxu0
        %v5950 = vadd.f32 0.0, %v5949
        %v5951 = vpop.f32.mrf.mxu0
        %v5952 = vadd.f32 0.0, %v5951
        %5953 = vmatmul.bf16.gmra.mxu0 %v5318
        %v5954 = vpop.f32.mrf.mxu0
        %v5955 = vadd.f32 0.0, %v5954
        %v5956 = vpop.f32.mrf.mxu0
        %v5957 = vadd.f32 0.0, %v5956
        %5958 = vmatmul.bf16.gmra.mxu0 %v5321
        %v5959 = vpop.f32.mrf.mxu0
        %v5960 = vadd.f32 0.0, %v5959
        %v5961 = vpop.f32.mrf.mxu0
        %v5962 = vadd.f32 0.0, %v5961
        %5963 = vmatmul.bf16.gmra.mxu0 %v5324
        %v5964 = vpop.f32.mrf.mxu0
        %v5965 = vadd.f32 0.0, %v5964
        %v5966 = vpop.f32.mrf.mxu0
        %v5967 = vadd.f32 0.0, %v5966
        %5968 = vmatmul.bf16.gmra.mxu0 %v5327
        %v5969 = vpop.f32.mrf.mxu0
        %v5970 = vadd.f32 0.0, %v5969
        %v5971 = vpop.f32.mrf.mxu0
        %v5972 = vadd.f32 0.0, %v5971
        %5973 = vmatmul.bf16.gmra.mxu0 %v5330
        %v5974 = vpop.f32.mrf.mxu0
        %v5975 = vadd.f32 0.0, %v5974
        %v5976 = vpop.f32.mrf.mxu0
        %v5977 = vadd.f32 0.0, %v5976
        %5978 = vmatmul.bf16.gmra.mxu0 %v5333
        %v5979 = vpop.f32.mrf.mxu0
        %v5980 = vadd.f32 0.0, %v5979
        %v5981 = vpop.f32.mrf.mxu0
        %v5982 = vadd.f32 0.0, %v5981
        %5983 = vdwg.mxu0
        %v5984 = vadd.f32 %v4312, %v5345
        %v5985 = vadd.f32 %v4314, %v5347
        %v5986 = vadd.f32 %v4317, %v5350
        %v5987 = vadd.f32 %v4319, %v5352
        %v5988 = vadd.f32 %v4322, %v5355
        %v5989 = vadd.f32 %v4324, %v5357
        %v5990 = vadd.f32 %v4327, %v5360
        %v5991 = vadd.f32 %v4329, %v5362
        %v5992 = vadd.f32 %v4332, %v5365
        %v5993 = vadd.f32 %v4334, %v5367
        %v5994 = vadd.f32 %v4337, %v5370
        %v5995 = vadd.f32 %v4339, %v5372
        %v5996 = vadd.f32 %v4342, %v5375
        %v5997 = vadd.f32 %v4344, %v5377
        %v5998 = vadd.f32 %v4347, %v5380
        %v5999 = vadd.f32 %v4349, %v5382
        %v6000 = vadd.f32 %v4352, %v5385
        %v6001 = vadd.f32 %v4354, %v5387
        %v6002 = vadd.f32 %v4357, %v5390
        %v6003 = vadd.f32 %v4359, %v5392
        %v6004 = vadd.f32 %v4362, %v5395
        %v6005 = vadd.f32 %v4364, %v5397
        %v6006 = vadd.f32 %v4367, %v5400
        %v6007 = vadd.f32 %v4369, %v5402
        %v6008 = vadd.f32 %v4372, %v5405
        %v6009 = vadd.f32 %v4374, %v5407
        %v6010 = vadd.f32 %v4377, %v5410
        %v6011 = vadd.f32 %v4379, %v5412
        %v6012 = vadd.f32 %v4382, %v5415
        %v6013 = vadd.f32 %v4384, %v5417
        %v6014 = vadd.f32 %v4387, %v5420
        %v6015 = vadd.f32 %v4389, %v5422
        %v6016 = vadd.f32 %v4392, %v5425
        %v6017 = vadd.f32 %v4394, %v5427
        %v6018 = vadd.f32 %v4397, %v5430
        %v6019 = vadd.f32 %v4399, %v5432
        %v6020 = vadd.f32 %v4402, %v5435
        %v6021 = vadd.f32 %v4404, %v5437
        %v6022 = vadd.f32 %v4407, %v5440
        %v6023 = vadd.f32 %v4409, %v5442
        %v6024 = vadd.f32 %v4412, %v5445
        %v6025 = vadd.f32 %v4414, %v5447
        %v6026 = vadd.f32 %v4417, %v5450
        %v6027 = vadd.f32 %v4419, %v5452
        %v6028 = vadd.f32 %v4422, %v5455
        %v6029 = vadd.f32 %v4424, %v5457
        %v6030 = vadd.f32 %v4427, %v5460
        %v6031 = vadd.f32 %v4429, %v5462
        %v6032 = vadd.f32 %v4432, %v5465
        %v6033 = vadd.f32 %v4434, %v5467
        %v6034 = vadd.f32 %v4437, %v5470
        %v6035 = vadd.f32 %v4439, %v5472
        %v6036 = vadd.f32 %v4442, %v5475
        %v6037 = vadd.f32 %v4444, %v5477
        %v6038 = vadd.f32 %v4447, %v5480
        %v6039 = vadd.f32 %v4449, %v5482
        %v6040 = vadd.f32 %v4452, %v5485
        %v6041 = vadd.f32 %v4454, %v5487
        %v6042 = vadd.f32 %v4457, %v5490
        %v6043 = vadd.f32 %v4459, %v5492
        %v6044 = vadd.f32 %v4462, %v5495
        %v6045 = vadd.f32 %v4464, %v5497
        %v6046 = vadd.f32 %v4467, %v5500
        %v6047 = vadd.f32 %v4469, %v5502
        %v6048 = vadd.f32 %v4472, %v5505
        %v6049 = vadd.f32 %v4474, %v5507
        %v6050 = vadd.f32 %v4477, %v5510
        %v6051 = vadd.f32 %v4479, %v5512
        %v6052 = vadd.f32 %v4482, %v5515
        %v6053 = vadd.f32 %v4484, %v5517
        %v6054 = vadd.f32 %v4487, %v5520
        %v6055 = vadd.f32 %v4489, %v5522
        %v6056 = vadd.f32 %v4492, %v5525
        %v6057 = vadd.f32 %v4494, %v5527
        %v6058 = vadd.f32 %v4497, %v5530
        %v6059 = vadd.f32 %v4499, %v5532
        %v6060 = vadd.f32 %v4502, %v5535
        %v6061 = vadd.f32 %v4504, %v5537
        %v6062 = vadd.f32 %v4507, %v5540
        %v6063 = vadd.f32 %v4509, %v5542
        %v6064 = vadd.f32 %v4512, %v5545
        %v6065 = vadd.f32 %v4514, %v5547
        %v6066 = vadd.f32 %v4517, %v5550
        %v6067 = vadd.f32 %v4519, %v5552
        %v6068 = vadd.f32 %v4522, %v5555
        %v6069 = vadd.f32 %v4524, %v5557
        %v6070 = vadd.f32 %v4527, %v5560
        %v6071 = vadd.f32 %v4529, %v5562
        %v6072 = vadd.f32 %v4532, %v5565
        %v6073 = vadd.f32 %v4534, %v5567
        %v6074 = vadd.f32 %v4537, %v5570
        %v6075 = vadd.f32 %v4539, %v5572
        %v6076 = vadd.f32 %v4542, %v5575
        %v6077 = vadd.f32 %v4544, %v5577
        %v6078 = vadd.f32 %v4547, %v5580
        %v6079 = vadd.f32 %v4549, %v5582
        %v6080 = vadd.f32 %v4552, %v5585
        %v6081 = vadd.f32 %v4554, %v5587
        %v6082 = vadd.f32 %v4557, %v5590
        %v6083 = vadd.f32 %v4559, %v5592
        %v6084 = vadd.f32 %v4562, %v5595
        %v6085 = vadd.f32 %v4564, %v5597
        %v6086 = vadd.f32 %v4567, %v5600
        %v6087 = vadd.f32 %v4569, %v5602
        %v6088 = vadd.f32 %v4572, %v5605
        %v6089 = vadd.f32 %v4574, %v5607
        %v6090 = vadd.f32 %v4577, %v5610
        %v6091 = vadd.f32 %v4579, %v5612
        %v6092 = vadd.f32 %v4582, %v5615
        %v6093 = vadd.f32 %v4584, %v5617
        %v6094 = vadd.f32 %v4587, %v5620
        %v6095 = vadd.f32 %v4589, %v5622
        %v6096 = vadd.f32 %v4592, %v5625
        %v6097 = vadd.f32 %v4594, %v5627
        %v6098 = vadd.f32 %v4597, %v5630
        %v6099 = vadd.f32 %v4599, %v5632
        %v6100 = vadd.f32 %v4602, %v5635
        %v6101 = vadd.f32 %v4604, %v5637
        %v6102 = vadd.f32 %v4607, %v5640
        %v6103 = vadd.f32 %v4609, %v5642
        %v6104 = vadd.f32 %v4612, %v5645
        %v6105 = vadd.f32 %v4614, %v5647
        %v6106 = vadd.f32 %v4617, %v5650
        %v6107 = vadd.f32 %v4619, %v5652
        %v6108 = vadd.f32 %v4622, %v5655
        %v6109 = vadd.f32 %v4624, %v5657
        %v6110 = vadd.f32 %v4627, %v5660
        %v6111 = vadd.f32 %v4629, %v5662
        %v6112 = vadd.f32 %v4632, %v5665
        %v6113 = vadd.f32 %v4634, %v5667
        %v6114 = vadd.f32 %v4637, %v5670
        %v6115 = vadd.f32 %v4639, %v5672
        %v6116 = vadd.f32 %v4642, %v5675
        %v6117 = vadd.f32 %v4644, %v5677
        %v6118 = vadd.f32 %v4647, %v5680
        %v6119 = vadd.f32 %v4649, %v5682
        %v6120 = vadd.f32 %v4652, %v5685
        %v6121 = vadd.f32 %v4654, %v5687
        %v6122 = vadd.f32 %v4657, %v5690
        %v6123 = vadd.f32 %v4659, %v5692
        %v6124 = vadd.f32 %v4662, %v5695
        %v6125 = vadd.f32 %v4664, %v5697
        %v6126 = vadd.f32 %v4667, %v5700
        %v6127 = vadd.f32 %v4669, %v5702
        %v6128 = vadd.f32 %v4672, %v5705
        %v6129 = vadd.f32 %v4674, %v5707
        %v6130 = vadd.f32 %v4677, %v5710
        %v6131 = vadd.f32 %v4679, %v5712
        %v6132 = vadd.f32 %v4682, %v5715
        %v6133 = vadd.f32 %v4684, %v5717
        %v6134 = vadd.f32 %v4687, %v5720
        %v6135 = vadd.f32 %v4689, %v5722
        %v6136 = vadd.f32 %v4692, %v5725
        %v6137 = vadd.f32 %v4694, %v5727
        %v6138 = vadd.f32 %v4697, %v5730
        %v6139 = vadd.f32 %v4699, %v5732
        %v6140 = vadd.f32 %v4702, %v5735
        %v6141 = vadd.f32 %v4704, %v5737
        %v6142 = vadd.f32 %v4707, %v5740
        %v6143 = vadd.f32 %v4709, %v5742
        %v6144 = vadd.f32 %v4712, %v5745
        %v6145 = vadd.f32 %v4714, %v5747
        %v6146 = vadd.f32 %v4717, %v5750
        %v6147 = vadd.f32 %v4719, %v5752
        %v6148 = vadd.f32 %v4722, %v5755
        %v6149 = vadd.f32 %v4724, %v5757
        %v6150 = vadd.f32 %v4727, %v5760
        %v6151 = vadd.f32 %v4729, %v5762
        %v6152 = vadd.f32 %v4732, %v5765
        %v6153 = vadd.f32 %v4734, %v5767
        %v6154 = vadd.f32 %v4737, %v5770
        %v6155 = vadd.f32 %v4739, %v5772
        %v6156 = vadd.f32 %v4742, %v5775
        %v6157 = vadd.f32 %v4744, %v5777
        %v6158 = vadd.f32 %v4747, %v5780
        %v6159 = vadd.f32 %v4749, %v5782
        %v6160 = vadd.f32 %v4752, %v5785
        %v6161 = vadd.f32 %v4754, %v5787
        %v6162 = vadd.f32 %v4757, %v5790
        %v6163 = vadd.f32 %v4759, %v5792
        %v6164 = vadd.f32 %v4762, %v5795
        %v6165 = vadd.f32 %v4764, %v5797
        %v6166 = vadd.f32 %v4767, %v5800
        %v6167 = vadd.f32 %v4769, %v5802
        %v6168 = vadd.f32 %v4772, %v5805
        %v6169 = vadd.f32 %v4774, %v5807
        %v6170 = vadd.f32 %v4777, %v5810
        %v6171 = vadd.f32 %v4779, %v5812
        %v6172 = vadd.f32 %v4782, %v5815
        %v6173 = vadd.f32 %v4784, %v5817
        %v6174 = vadd.f32 %v4787, %v5820
        %v6175 = vadd.f32 %v4789, %v5822
        %v6176 = vadd.f32 %v4792, %v5825
        %v6177 = vadd.f32 %v4794, %v5827
        %v6178 = vadd.f32 %v4797, %v5830
        %v6179 = vadd.f32 %v4799, %v5832
        %v6180 = vadd.f32 %v4802, %v5835
        %v6181 = vadd.f32 %v4804, %v5837
        %v6182 = vadd.f32 %v4807, %v5840
        %v6183 = vadd.f32 %v4809, %v5842
        %v6184 = vadd.f32 %v4812, %v5845
        %v6185 = vadd.f32 %v4814, %v5847
        %v6186 = vadd.f32 %v4817, %v5850
        %v6187 = vadd.f32 %v4819, %v5852
        %v6188 = vadd.f32 %v4822, %v5855
        %v6189 = vadd.f32 %v4824, %v5857
        %v6190 = vadd.f32 %v4827, %v5860
        %v6191 = vadd.f32 %v4829, %v5862
        %v6192 = vadd.f32 %v4832, %v5865
        %v6193 = vadd.f32 %v4834, %v5867
        %v6194 = vadd.f32 %v4837, %v5870
        %v6195 = vadd.f32 %v4839, %v5872
        %v6196 = vadd.f32 %v4842, %v5875
        %v6197 = vadd.f32 %v4844, %v5877
        %v6198 = vadd.f32 %v4847, %v5880
        %v6199 = vadd.f32 %v4849, %v5882
        %v6200 = vadd.f32 %v4852, %v5885
        %v6201 = vadd.f32 %v4854, %v5887
        %v6202 = vadd.f32 %v4857, %v5890
        %v6203 = vadd.f32 %v4859, %v5892
        %v6204 = vadd.f32 %v4862, %v5895
        %v6205 = vadd.f32 %v4864, %v5897
        %v6206 = vadd.f32 %v4867, %v5900
        %v6207 = vadd.f32 %v4869, %v5902
        %v6208 = vadd.f32 %v4872, %v5905
        %v6209 = vadd.f32 %v4874, %v5907
        %v6210 = vadd.f32 %v4877, %v5910
        %v6211 = vadd.f32 %v4879, %v5912
        %v6212 = vadd.f32 %v4882, %v5915
        %v6213 = vadd.f32 %v4884, %v5917
        %v6214 = vadd.f32 %v4887, %v5920
        %v6215 = vadd.f32 %v4889, %v5922
        %v6216 = vadd.f32 %v4892, %v5925
        %v6217 = vadd.f32 %v4894, %v5927
        %v6218 = vadd.f32 %v4897, %v5930
        %v6219 = vadd.f32 %v4899, %v5932
        %v6220 = vadd.f32 %v4902, %v5935
        %v6221 = vadd.f32 %v4904, %v5937
        %v6222 = vadd.f32 %v4907, %v5940
        %v6223 = vadd.f32 %v4909, %v5942
        %v6224 = vadd.f32 %v4912, %v5945
        %v6225 = vadd.f32 %v4914, %v5947
        %v6226 = vadd.f32 %v4917, %v5950
        %v6227 = vadd.f32 %v4919, %v5952
        %v6228 = vadd.f32 %v4922, %v5955
        %v6229 = vadd.f32 %v4924, %v5957
        %v6230 = vadd.f32 %v4927, %v5960
        %v6231 = vadd.f32 %v4929, %v5962
        %v6232 = vadd.f32 %v4932, %v5965
        %v6233 = vadd.f32 %v4934, %v5967
        %v6234 = vadd.f32 %v4937, %v5970
        %v6235 = vadd.f32 %v4939, %v5972
        %v6236 = vadd.f32 %v4942, %v5975
        %v6237 = vadd.f32 %v4944, %v5977
        %v6238 = vadd.f32 %v4947, %v5980
        %v6239 = vadd.f32 %v4949, %v5982
        %v6240 = vld [vmem:[%s285] sm:$0x1]
        %v6241 = vld [vmem:[%s285 + $0x1] sm:$0x1]
        %v6242 = vld [vmem:[%s285 + $0x2] sm:$0x1]
        %v6243 = vld [vmem:[%s285 + $0x3] sm:$0x1]
        %v6244 = vld [vmem:[%s285 + $0x4] sm:$0x1]
        %v6245 = vld [vmem:[%s285 + $0x5] sm:$0x1]
        %v6246 = vld [vmem:[%s285 + $0x6] sm:$0x1]
        %v6247 = vld [vmem:[%s285 + $0x7] sm:$0x1]
        %v6248 = vld [vmem:[%s285 + $0x8] sm:$0x1]
        %v6249 = vld [vmem:[%s285 + $0x9] sm:$0x1]
        %v6250 = vld [vmem:[%s285 + $0xa] sm:$0x1]
        %v6251 = vld [vmem:[%s285 + $0xb] sm:$0x1]
        %v6252 = vld [vmem:[%s285 + $0xc] sm:$0x1]
        %v6253 = vld [vmem:[%s285 + $0xd] sm:$0x1]
        %v6254 = vld [vmem:[%s285 + $0xe] sm:$0x1]
        %v6255 = vld [vmem:[%s285 + $0xf] sm:$0x1]
        %v6272 = vperm.slane %v6240, 0
        %v6273 = vperm.slane %v6241, 0
        %v6274 = vperm.slane %v6242, 0
        %v6275 = vperm.slane %v6243, 0
        %v6276 = vperm.slane %v6244, 0
        %v6277 = vperm.slane %v6245, 0
        %v6278 = vperm.slane %v6246, 0
        %v6279 = vperm.slane %v6247, 0
        %v6280 = vperm.slane %v6248, 0
        %v6281 = vperm.slane %v6249, 0
        %v6282 = vperm.slane %v6250, 0
        %v6283 = vperm.slane %v6251, 0
        %v6284 = vperm.slane %v6252, 0
        %v6285 = vperm.slane %v6253, 0
        %v6286 = vperm.slane %v6254, 0
        %v6287 = vperm.slane %v6255, 0
        %v6304 = vadd.f32 %v941, %v6272
        %v6305 = vadd.f32 %v944, %v6272
        %v6306 = vadd.f32 %v947, %v6272
        %v6307 = vadd.f32 %v950, %v6272
        %v6308 = vadd.f32 %v953, %v6272
        %v6309 = vadd.f32 %v956, %v6272
        %v6310 = vadd.f32 %v959, %v6272
        %v6311 = vadd.f32 %v962, %v6272
        %v6312 = vadd.f32 %v965, %v6272
        %v6313 = vadd.f32 %v968, %v6272
        %v6314 = vadd.f32 %v971, %v6272
        %v6315 = vadd.f32 %v974, %v6272
        %v6316 = vadd.f32 %v977, %v6272
        %v6317 = vadd.f32 %v980, %v6272
        %v6318 = vadd.f32 %v983, %v6272
        %v6319 = vadd.f32 %v986, %v6272
        %v6320 = vadd.f32 %v989, %v6273
        %v6321 = vadd.f32 %v992, %v6273
        %v6322 = vadd.f32 %v995, %v6273
        %v6323 = vadd.f32 %v998, %v6273
        %v6324 = vadd.f32 %v1001, %v6273
        %v6325 = vadd.f32 %v1004, %v6273
        %v6326 = vadd.f32 %v1007, %v6273
        %v6327 = vadd.f32 %v1010, %v6273
        %v6328 = vadd.f32 %v1013, %v6273
        %v6329 = vadd.f32 %v1016, %v6273
        %v6330 = vadd.f32 %v1019, %v6273
        %v6331 = vadd.f32 %v1022, %v6273
        %v6332 = vadd.f32 %v1025, %v6273
        %v6333 = vadd.f32 %v1028, %v6273
        %v6334 = vadd.f32 %v1031, %v6273
        %v6335 = vadd.f32 %v1034, %v6273
        %v6336 = vadd.f32 %v1037, %v6274
        %v6337 = vadd.f32 %v1040, %v6274
        %v6338 = vadd.f32 %v1043, %v6274
        %v6339 = vadd.f32 %v1046, %v6274
        %v6340 = vadd.f32 %v1049, %v6274
        %v6341 = vadd.f32 %v1052, %v6274
        %v6342 = vadd.f32 %v1055, %v6274
        %v6343 = vadd.f32 %v1058, %v6274
        %v6344 = vadd.f32 %v1061, %v6274
        %v6345 = vadd.f32 %v1064, %v6274
        %v6346 = vadd.f32 %v1067, %v6274
        %v6347 = vadd.f32 %v1070, %v6274
        %v6348 = vadd.f32 %v1073, %v6274
        %v6349 = vadd.f32 %v1076, %v6274
        %v6350 = vadd.f32 %v1079, %v6274
        %v6351 = vadd.f32 %v1082, %v6274
        %v6352 = vadd.f32 %v1085, %v6275
        %v6353 = vadd.f32 %v1088, %v6275
        %v6354 = vadd.f32 %v1091, %v6275
        %v6355 = vadd.f32 %v1094, %v6275
        %v6356 = vadd.f32 %v1097, %v6275
        %v6357 = vadd.f32 %v1100, %v6275
        %v6358 = vadd.f32 %v1103, %v6275
        %v6359 = vadd.f32 %v1106, %v6275
        %v6360 = vadd.f32 %v1109, %v6275
        %v6361 = vadd.f32 %v1112, %v6275
        %v6362 = vadd.f32 %v1115, %v6275
        %v6363 = vadd.f32 %v1118, %v6275
        %v6364 = vadd.f32 %v1121, %v6275
        %v6365 = vadd.f32 %v1124, %v6275
        %v6366 = vadd.f32 %v1127, %v6275
        %v6367 = vadd.f32 %v1130, %v6275
        %v6368 = vadd.f32 %v1133, %v6276
        %v6369 = vadd.f32 %v1136, %v6276
        %v6370 = vadd.f32 %v1139, %v6276
        %v6371 = vadd.f32 %v1142, %v6276
        %v6372 = vadd.f32 %v1145, %v6276
        %v6373 = vadd.f32 %v1148, %v6276
        %v6374 = vadd.f32 %v1151, %v6276
        %v6375 = vadd.f32 %v1154, %v6276
        %v6376 = vadd.f32 %v1157, %v6276
        %v6377 = vadd.f32 %v1160, %v6276
        %v6378 = vadd.f32 %v1163, %v6276
        %v6379 = vadd.f32 %v1166, %v6276
        %v6380 = vadd.f32 %v1169, %v6276
        %v6381 = vadd.f32 %v1172, %v6276
        %v6382 = vadd.f32 %v1175, %v6276
        %v6383 = vadd.f32 %v1178, %v6276
        %v6384 = vadd.f32 %v1181, %v6277
        %v6385 = vadd.f32 %v1184, %v6277
        %v6386 = vadd.f32 %v1187, %v6277
        %v6387 = vadd.f32 %v1190, %v6277
        %v6388 = vadd.f32 %v1193, %v6277
        %v6389 = vadd.f32 %v1196, %v6277
        %v6390 = vadd.f32 %v1199, %v6277
        %v6391 = vadd.f32 %v1202, %v6277
        %v6392 = vadd.f32 %v1205, %v6277
        %v6393 = vadd.f32 %v1208, %v6277
        %v6394 = vadd.f32 %v1211, %v6277
        %v6395 = vadd.f32 %v1214, %v6277
        %v6396 = vadd.f32 %v1217, %v6277
        %v6397 = vadd.f32 %v1220, %v6277
        %v6398 = vadd.f32 %v1223, %v6277
        %v6399 = vadd.f32 %v1226, %v6277
        %v6400 = vadd.f32 %v1229, %v6278
        %v6401 = vadd.f32 %v1232, %v6278
        %v6402 = vadd.f32 %v1235, %v6278
        %v6403 = vadd.f32 %v1238, %v6278
        %v6404 = vadd.f32 %v1241, %v6278
        %v6405 = vadd.f32 %v1244, %v6278
        %v6406 = vadd.f32 %v1247, %v6278
        %v6407 = vadd.f32 %v1250, %v6278
        %v6408 = vadd.f32 %v1253, %v6278
        %v6409 = vadd.f32 %v1256, %v6278
        %v6410 = vadd.f32 %v1259, %v6278
        %v6411 = vadd.f32 %v1262, %v6278
        %v6412 = vadd.f32 %v1265, %v6278
        %v6413 = vadd.f32 %v1268, %v6278
        %v6414 = vadd.f32 %v1271, %v6278
        %v6415 = vadd.f32 %v1274, %v6278
        %v6416 = vadd.f32 %v1277, %v6279
        %v6417 = vadd.f32 %v1280, %v6279
        %v6418 = vadd.f32 %v1283, %v6279
        %v6419 = vadd.f32 %v1286, %v6279
        %v6420 = vadd.f32 %v1289, %v6279
        %v6421 = vadd.f32 %v1292, %v6279
        %v6422 = vadd.f32 %v1295, %v6279
        %v6423 = vadd.f32 %v1298, %v6279
        %v6424 = vadd.f32 %v1301, %v6279
        %v6425 = vadd.f32 %v1304, %v6279
        %v6426 = vadd.f32 %v1307, %v6279
        %v6427 = vadd.f32 %v1310, %v6279
        %v6428 = vadd.f32 %v1313, %v6279
        %v6429 = vadd.f32 %v1316, %v6279
        %v6430 = vadd.f32 %v1319, %v6279
        %v6431 = vadd.f32 %v1322, %v6279
        %v6432 = vadd.f32 %v1325, %v6280
        %v6433 = vadd.f32 %v1328, %v6280
        %v6434 = vadd.f32 %v1331, %v6280
        %v6435 = vadd.f32 %v1334, %v6280
        %v6436 = vadd.f32 %v1337, %v6280
        %v6437 = vadd.f32 %v1340, %v6280
        %v6438 = vadd.f32 %v1343, %v6280
        %v6439 = vadd.f32 %v1346, %v6280
        %v6440 = vadd.f32 %v1349, %v6280
        %v6441 = vadd.f32 %v1352, %v6280
        %v6442 = vadd.f32 %v1355, %v6280
        %v6443 = vadd.f32 %v1358, %v6280
        %v6444 = vadd.f32 %v1361, %v6280
        %v6445 = vadd.f32 %v1364, %v6280
        %v6446 = vadd.f32 %v1367, %v6280
        %v6447 = vadd.f32 %v1370, %v6280
        %v6448 = vadd.f32 %v1373, %v6281
        %v6449 = vadd.f32 %v1376, %v6281
        %v6450 = vadd.f32 %v1379, %v6281
        %v6451 = vadd.f32 %v1382, %v6281
        %v6452 = vadd.f32 %v1385, %v6281
        %v6453 = vadd.f32 %v1388, %v6281
        %v6454 = vadd.f32 %v1391, %v6281
        %v6455 = vadd.f32 %v1394, %v6281
        %v6456 = vadd.f32 %v1397, %v6281
        %v6457 = vadd.f32 %v1400, %v6281
        %v6458 = vadd.f32 %v1403, %v6281
        %v6459 = vadd.f32 %v1406, %v6281
        %v6460 = vadd.f32 %v1409, %v6281
        %v6461 = vadd.f32 %v1412, %v6281
        %v6462 = vadd.f32 %v1415, %v6281
        %v6463 = vadd.f32 %v1418, %v6281
        %v6464 = vadd.f32 %v1421, %v6282
        %v6465 = vadd.f32 %v1424, %v6282
        %v6466 = vadd.f32 %v1427, %v6282
        %v6467 = vadd.f32 %v1430, %v6282
        %v6468 = vadd.f32 %v1433, %v6282
        %v6469 = vadd.f32 %v1436, %v6282
        %v6470 = vadd.f32 %v1439, %v6282
        %v6471 = vadd.f32 %v1442, %v6282
        %v6472 = vadd.f32 %v1445, %v6282
        %v6473 = vadd.f32 %v1448, %v6282
        %v6474 = vadd.f32 %v1451, %v6282
        %v6475 = vadd.f32 %v1454, %v6282
        %v6476 = vadd.f32 %v1457, %v6282
        %v6477 = vadd.f32 %v1460, %v6282
        %v6478 = vadd.f32 %v1463, %v6282
        %v6479 = vadd.f32 %v1466, %v6282
        %v6480 = vadd.f32 %v1469, %v6283
        %v6481 = vadd.f32 %v1472, %v6283
        %v6482 = vadd.f32 %v1475, %v6283
        %v6483 = vadd.f32 %v1478, %v6283
        %v6484 = vadd.f32 %v1481, %v6283
        %v6485 = vadd.f32 %v1484, %v6283
        %v6486 = vadd.f32 %v1487, %v6283
        %v6487 = vadd.f32 %v1490, %v6283
        %v6488 = vadd.f32 %v1493, %v6283
        %v6489 = vadd.f32 %v1496, %v6283
        %v6490 = vadd.f32 %v1499, %v6283
        %v6491 = vadd.f32 %v1502, %v6283
        %v6492 = vadd.f32 %v1505, %v6283
        %v6493 = vadd.f32 %v1508, %v6283
        %v6494 = vadd.f32 %v1511, %v6283
        %v6495 = vadd.f32 %v1514, %v6283
        %v6496 = vadd.f32 %v1517, %v6284
        %v6497 = vadd.f32 %v1520, %v6284
        %v6498 = vadd.f32 %v1523, %v6284
        %v6499 = vadd.f32 %v1526, %v6284
        %v6500 = vadd.f32 %v1529, %v6284
        %v6501 = vadd.f32 %v1532, %v6284
        %v6502 = vadd.f32 %v1535, %v6284
        %v6503 = vadd.f32 %v1538, %v6284
        %v6504 = vadd.f32 %v1541, %v6284
        %v6505 = vadd.f32 %v1544, %v6284
        %v6506 = vadd.f32 %v1547, %v6284
        %v6507 = vadd.f32 %v1550, %v6284
        %v6508 = vadd.f32 %v1553, %v6284
        %v6509 = vadd.f32 %v1556, %v6284
        %v6510 = vadd.f32 %v1559, %v6284
        %v6511 = vadd.f32 %v1562, %v6284
        %v6512 = vadd.f32 %v1565, %v6285
        %v6513 = vadd.f32 %v1568, %v6285
        %v6514 = vadd.f32 %v1571, %v6285
        %v6515 = vadd.f32 %v1574, %v6285
        %v6516 = vadd.f32 %v1577, %v6285
        %v6517 = vadd.f32 %v1580, %v6285
        %v6518 = vadd.f32 %v1583, %v6285
        %v6519 = vadd.f32 %v1586, %v6285
        %v6520 = vadd.f32 %v1589, %v6285
        %v6521 = vadd.f32 %v1592, %v6285
        %v6522 = vadd.f32 %v1595, %v6285
        %v6523 = vadd.f32 %v1598, %v6285
        %v6524 = vadd.f32 %v1601, %v6285
        %v6525 = vadd.f32 %v1604, %v6285
        %v6526 = vadd.f32 %v1607, %v6285
        %v6527 = vadd.f32 %v1610, %v6285
        %v6528 = vadd.f32 %v1613, %v6286
        %v6529 = vadd.f32 %v1616, %v6286
        %v6530 = vadd.f32 %v1619, %v6286
        %v6531 = vadd.f32 %v1622, %v6286
        %v6532 = vadd.f32 %v1625, %v6286
        %v6533 = vadd.f32 %v1628, %v6286
        %v6534 = vadd.f32 %v1631, %v6286
        %v6535 = vadd.f32 %v1634, %v6286
        %v6536 = vadd.f32 %v1637, %v6286
        %v6537 = vadd.f32 %v1640, %v6286
        %v6538 = vadd.f32 %v1643, %v6286
        %v6539 = vadd.f32 %v1646, %v6286
        %v6540 = vadd.f32 %v1649, %v6286
        %v6541 = vadd.f32 %v1652, %v6286
        %v6542 = vadd.f32 %v1655, %v6286
        %v6543 = vadd.f32 %v1658, %v6286
        %v6544 = vadd.f32 %v1661, %v6287
        %v6545 = vadd.f32 %v1664, %v6287
        %v6546 = vadd.f32 %v1667, %v6287
        %v6547 = vadd.f32 %v1670, %v6287
        %v6548 = vadd.f32 %v1673, %v6287
        %v6549 = vadd.f32 %v1676, %v6287
        %v6550 = vadd.f32 %v1679, %v6287
        %v6551 = vadd.f32 %v1682, %v6287
        %v6552 = vadd.f32 %v1685, %v6287
        %v6553 = vadd.f32 %v1688, %v6287
        %v6554 = vadd.f32 %v1691, %v6287
        %v6555 = vadd.f32 %v1694, %v6287
        %v6556 = vadd.f32 %v1697, %v6287
        %v6557 = vadd.f32 %v1700, %v6287
        %v6558 = vadd.f32 %v1703, %v6287
        %v6559 = vadd.f32 %v1706, %v6287
        %v6560 = vadd.f32 %v6304, %v5984
        %v6561 = vadd.f32 %v6305, %v5985
        %v6562 = vadd.f32 %v6306, %v5986
        %v6563 = vadd.f32 %v6307, %v5987
        %v6564 = vadd.f32 %v6308, %v5988
        %v6565 = vadd.f32 %v6309, %v5989
        %v6566 = vadd.f32 %v6310, %v5990
        %v6567 = vadd.f32 %v6311, %v5991
        %v6568 = vadd.f32 %v6312, %v5992
        %v6569 = vadd.f32 %v6313, %v5993
        %v6570 = vadd.f32 %v6314, %v5994
        %v6571 = vadd.f32 %v6315, %v5995
        %v6572 = vadd.f32 %v6316, %v5996
        %v6573 = vadd.f32 %v6317, %v5997
        %v6574 = vadd.f32 %v6318, %v5998
        %v6575 = vadd.f32 %v6319, %v5999
        %v6576 = vadd.f32 %v6320, %v6000
        %v6577 = vadd.f32 %v6321, %v6001
        %v6578 = vadd.f32 %v6322, %v6002
        %v6579 = vadd.f32 %v6323, %v6003
        %v6580 = vadd.f32 %v6324, %v6004
        %v6581 = vadd.f32 %v6325, %v6005
        %v6582 = vadd.f32 %v6326, %v6006
        %v6583 = vadd.f32 %v6327, %v6007
        %v6584 = vadd.f32 %v6328, %v6008
        %v6585 = vadd.f32 %v6329, %v6009
        %v6586 = vadd.f32 %v6330, %v6010
        %v6587 = vadd.f32 %v6331, %v6011
        %v6588 = vadd.f32 %v6332, %v6012
        %v6589 = vadd.f32 %v6333, %v6013
        %v6590 = vadd.f32 %v6334, %v6014
        %v6591 = vadd.f32 %v6335, %v6015
        %v6592 = vadd.f32 %v6336, %v6016
        %v6593 = vadd.f32 %v6337, %v6017
        %v6594 = vadd.f32 %v6338, %v6018
        %v6595 = vadd.f32 %v6339, %v6019
        %v6596 = vadd.f32 %v6340, %v6020
        %v6597 = vadd.f32 %v6341, %v6021
        %v6598 = vadd.f32 %v6342, %v6022
        %v6599 = vadd.f32 %v6343, %v6023
        %v6600 = vadd.f32 %v6344, %v6024
        %v6601 = vadd.f32 %v6345, %v6025
        %v6602 = vadd.f32 %v6346, %v6026
        %v6603 = vadd.f32 %v6347, %v6027
        %v6604 = vadd.f32 %v6348, %v6028
        %v6605 = vadd.f32 %v6349, %v6029
        %v6606 = vadd.f32 %v6350, %v6030
        %v6607 = vadd.f32 %v6351, %v6031
        %v6608 = vadd.f32 %v6352, %v6032
        %v6609 = vadd.f32 %v6353, %v6033
        %v6610 = vadd.f32 %v6354, %v6034
        %v6611 = vadd.f32 %v6355, %v6035
        %v6612 = vadd.f32 %v6356, %v6036
        %v6613 = vadd.f32 %v6357, %v6037
        %v6614 = vadd.f32 %v6358, %v6038
        %v6615 = vadd.f32 %v6359, %v6039
        %v6616 = vadd.f32 %v6360, %v6040
        %v6617 = vadd.f32 %v6361, %v6041
        %v6618 = vadd.f32 %v6362, %v6042
        %v6619 = vadd.f32 %v6363, %v6043
        %v6620 = vadd.f32 %v6364, %v6044
        %v6621 = vadd.f32 %v6365, %v6045
        %v6622 = vadd.f32 %v6366, %v6046
        %v6623 = vadd.f32 %v6367, %v6047
        %v6624 = vadd.f32 %v6368, %v6048
        %v6625 = vadd.f32 %v6369, %v6049
        %v6626 = vadd.f32 %v6370, %v6050
        %v6627 = vadd.f32 %v6371, %v6051
        %v6628 = vadd.f32 %v6372, %v6052
        %v6629 = vadd.f32 %v6373, %v6053
        %v6630 = vadd.f32 %v6374, %v6054
        %v6631 = vadd.f32 %v6375, %v6055
        %v6632 = vadd.f32 %v6376, %v6056
        %v6633 = vadd.f32 %v6377, %v6057
        %v6634 = vadd.f32 %v6378, %v6058
        %v6635 = vadd.f32 %v6379, %v6059
        %v6636 = vadd.f32 %v6380, %v6060
        %v6637 = vadd.f32 %v6381, %v6061
        %v6638 = vadd.f32 %v6382, %v6062
        %v6639 = vadd.f32 %v6383, %v6063
        %v6640 = vadd.f32 %v6384, %v6064
        %v6641 = vadd.f32 %v6385, %v6065
        %v6642 = vadd.f32 %v6386, %v6066
        %v6643 = vadd.f32 %v6387, %v6067
        %v6644 = vadd.f32 %v6388, %v6068
        %v6645 = vadd.f32 %v6389, %v6069
        %v6646 = vadd.f32 %v6390, %v6070
        %v6647 = vadd.f32 %v6391, %v6071
        %v6648 = vadd.f32 %v6392, %v6072
        %v6649 = vadd.f32 %v6393, %v6073
        %v6650 = vadd.f32 %v6394, %v6074
        %v6651 = vadd.f32 %v6395, %v6075
        %v6652 = vadd.f32 %v6396, %v6076
        %v6653 = vadd.f32 %v6397, %v6077
        %v6654 = vadd.f32 %v6398, %v6078
        %v6655 = vadd.f32 %v6399, %v6079
        %v6656 = vadd.f32 %v6400, %v6080
        %v6657 = vadd.f32 %v6401, %v6081
        %v6658 = vadd.f32 %v6402, %v6082
        %v6659 = vadd.f32 %v6403, %v6083
        %v6660 = vadd.f32 %v6404, %v6084
        %v6661 = vadd.f32 %v6405, %v6085
        %v6662 = vadd.f32 %v6406, %v6086
        %v6663 = vadd.f32 %v6407, %v6087
        %v6664 = vadd.f32 %v6408, %v6088
        %v6665 = vadd.f32 %v6409, %v6089
        %v6666 = vadd.f32 %v6410, %v6090
        %v6667 = vadd.f32 %v6411, %v6091
        %v6668 = vadd.f32 %v6412, %v6092
        %v6669 = vadd.f32 %v6413, %v6093
        %v6670 = vadd.f32 %v6414, %v6094
        %v6671 = vadd.f32 %v6415, %v6095
        %v6672 = vadd.f32 %v6416, %v6096
        %v6673 = vadd.f32 %v6417, %v6097
        %v6674 = vadd.f32 %v6418, %v6098
        %v6675 = vadd.f32 %v6419, %v6099
        %v6676 = vadd.f32 %v6420, %v6100
        %v6677 = vadd.f32 %v6421, %v6101
        %v6678 = vadd.f32 %v6422, %v6102
        %v6679 = vadd.f32 %v6423, %v6103
        %v6680 = vadd.f32 %v6424, %v6104
        %v6681 = vadd.f32 %v6425, %v6105
        %v6682 = vadd.f32 %v6426, %v6106
        %v6683 = vadd.f32 %v6427, %v6107
        %v6684 = vadd.f32 %v6428, %v6108
        %v6685 = vadd.f32 %v6429, %v6109
        %v6686 = vadd.f32 %v6430, %v6110
        %v6687 = vadd.f32 %v6431, %v6111
        %v6688 = vadd.f32 %v6432, %v6112
        %v6689 = vadd.f32 %v6433, %v6113
        %v6690 = vadd.f32 %v6434, %v6114
        %v6691 = vadd.f32 %v6435, %v6115
        %v6692 = vadd.f32 %v6436, %v6116
        %v6693 = vadd.f32 %v6437, %v6117
        %v6694 = vadd.f32 %v6438, %v6118
        %v6695 = vadd.f32 %v6439, %v6119
        %v6696 = vadd.f32 %v6440, %v6120
        %v6697 = vadd.f32 %v6441, %v6121
        %v6698 = vadd.f32 %v6442, %v6122
        %v6699 = vadd.f32 %v6443, %v6123
        %v6700 = vadd.f32 %v6444, %v6124
        %v6701 = vadd.f32 %v6445, %v6125
        %v6702 = vadd.f32 %v6446, %v6126
        %v6703 = vadd.f32 %v6447, %v6127
        %v6704 = vadd.f32 %v6448, %v6128
        %v6705 = vadd.f32 %v6449, %v6129
        %v6706 = vadd.f32 %v6450, %v6130
        %v6707 = vadd.f32 %v6451, %v6131
        %v6708 = vadd.f32 %v6452, %v6132
        %v6709 = vadd.f32 %v6453, %v6133
        %v6710 = vadd.f32 %v6454, %v6134
        %v6711 = vadd.f32 %v6455, %v6135
        %v6712 = vadd.f32 %v6456, %v6136
        %v6713 = vadd.f32 %v6457, %v6137
        %v6714 = vadd.f32 %v6458, %v6138
        %v6715 = vadd.f32 %v6459, %v6139
        %v6716 = vadd.f32 %v6460, %v6140
        %v6717 = vadd.f32 %v6461, %v6141
        %v6718 = vadd.f32 %v6462, %v6142
        %v6719 = vadd.f32 %v6463, %v6143
        %v6720 = vadd.f32 %v6464, %v6144
        %v6721 = vadd.f32 %v6465, %v6145
        %v6722 = vadd.f32 %v6466, %v6146
        %v6723 = vadd.f32 %v6467, %v6147
        %v6724 = vadd.f32 %v6468, %v6148
        %v6725 = vadd.f32 %v6469, %v6149
        %v6726 = vadd.f32 %v6470, %v6150
        %v6727 = vadd.f32 %v6471, %v6151
        %v6728 = vadd.f32 %v6472, %v6152
        %v6729 = vadd.f32 %v6473, %v6153
        %v6730 = vadd.f32 %v6474, %v6154
        %v6731 = vadd.f32 %v6475, %v6155
        %v6732 = vadd.f32 %v6476, %v6156
        %v6733 = vadd.f32 %v6477, %v6157
        %v6734 = vadd.f32 %v6478, %v6158
        %v6735 = vadd.f32 %v6479, %v6159
        %v6736 = vadd.f32 %v6480, %v6160
        %v6737 = vadd.f32 %v6481, %v6161
        %v6738 = vadd.f32 %v6482, %v6162
        %v6739 = vadd.f32 %v6483, %v6163
        %v6740 = vadd.f32 %v6484, %v6164
        %v6741 = vadd.f32 %v6485, %v6165
        %v6742 = vadd.f32 %v6486, %v6166
        %v6743 = vadd.f32 %v6487, %v6167
        %v6744 = vadd.f32 %v6488, %v6168
        %v6745 = vadd.f32 %v6489, %v6169
        %v6746 = vadd.f32 %v6490, %v6170
        %v6747 = vadd.f32 %v6491, %v6171
        %v6748 = vadd.f32 %v6492, %v6172
        %v6749 = vadd.f32 %v6493, %v6173
        %v6750 = vadd.f32 %v6494, %v6174
        %v6751 = vadd.f32 %v6495, %v6175
        %v6752 = vadd.f32 %v6496, %v6176
        %v6753 = vadd.f32 %v6497, %v6177
        %v6754 = vadd.f32 %v6498, %v6178
        %v6755 = vadd.f32 %v6499, %v6179
        %v6756 = vadd.f32 %v6500, %v6180
        %v6757 = vadd.f32 %v6501, %v6181
        %v6758 = vadd.f32 %v6502, %v6182
        %v6759 = vadd.f32 %v6503, %v6183
        %v6760 = vadd.f32 %v6504, %v6184
        %v6761 = vadd.f32 %v6505, %v6185
        %v6762 = vadd.f32 %v6506, %v6186
        %v6763 = vadd.f32 %v6507, %v6187
        %v6764 = vadd.f32 %v6508, %v6188
        %v6765 = vadd.f32 %v6509, %v6189
        %v6766 = vadd.f32 %v6510, %v6190
        %v6767 = vadd.f32 %v6511, %v6191
        %v6768 = vadd.f32 %v6512, %v6192
        %v6769 = vadd.f32 %v6513, %v6193
        %v6770 = vadd.f32 %v6514, %v6194
        %v6771 = vadd.f32 %v6515, %v6195
        %v6772 = vadd.f32 %v6516, %v6196
        %v6773 = vadd.f32 %v6517, %v6197
        %v6774 = vadd.f32 %v6518, %v6198
        %v6775 = vadd.f32 %v6519, %v6199
        %v6776 = vadd.f32 %v6520, %v6200
        %v6777 = vadd.f32 %v6521, %v6201
        %v6778 = vadd.f32 %v6522, %v6202
        %v6779 = vadd.f32 %v6523, %v6203
        %v6780 = vadd.f32 %v6524, %v6204
        %v6781 = vadd.f32 %v6525, %v6205
        %v6782 = vadd.f32 %v6526, %v6206
        %v6783 = vadd.f32 %v6527, %v6207
        %v6784 = vadd.f32 %v6528, %v6208
        %v6785 = vadd.f32 %v6529, %v6209
        %v6786 = vadd.f32 %v6530, %v6210
        %v6787 = vadd.f32 %v6531, %v6211
        %v6788 = vadd.f32 %v6532, %v6212
        %v6789 = vadd.f32 %v6533, %v6213
        %v6790 = vadd.f32 %v6534, %v6214
        %v6791 = vadd.f32 %v6535, %v6215
        %v6792 = vadd.f32 %v6536, %v6216
        %v6793 = vadd.f32 %v6537, %v6217
        %v6794 = vadd.f32 %v6538, %v6218
        %v6795 = vadd.f32 %v6539, %v6219
        %v6796 = vadd.f32 %v6540, %v6220
        %v6797 = vadd.f32 %v6541, %v6221
        %v6798 = vadd.f32 %v6542, %v6222
        %v6799 = vadd.f32 %v6543, %v6223
        %v6800 = vadd.f32 %v6544, %v6224
        %v6801 = vadd.f32 %v6545, %v6225
        %v6802 = vadd.f32 %v6546, %v6226
        %v6803 = vadd.f32 %v6547, %v6227
        %v6804 = vadd.f32 %v6548, %v6228
        %v6805 = vadd.f32 %v6549, %v6229
        %v6806 = vadd.f32 %v6550, %v6230
        %v6807 = vadd.f32 %v6551, %v6231
        %v6808 = vadd.f32 %v6552, %v6232
        %v6809 = vadd.f32 %v6553, %v6233
        %v6810 = vadd.f32 %v6554, %v6234
        %v6811 = vadd.f32 %v6555, %v6235
        %v6812 = vadd.f32 %v6556, %v6236
        %v6813 = vadd.f32 %v6557, %v6237
        %v6814 = vadd.f32 %v6558, %v6238
        %v6815 = vadd.f32 %v6559, %v6239
        %v6816 = vmax.f32 %v6560, %v6576
        %v6817 = vmax.f32 %v6816, %v6592
        %v6818 = vmax.f32 %v6817, %v6608
        %v6819 = vmax.f32 %v6818, %v6624
        %v6820 = vmax.f32 %v6819, %v6640
        %v6821 = vmax.f32 %v6820, %v6656
        %v6822 = vmax.f32 %v6821, %v6672
        %v6823 = vmax.f32 %v6822, %v6688
        %v6824 = vmax.f32 %v6823, %v6704
        %v6825 = vmax.f32 %v6824, %v6720
        %v6826 = vmax.f32 %v6825, %v6736
        %v6827 = vmax.f32 %v6826, %v6752
        %v6828 = vmax.f32 %v6827, %v6768
        %v6829 = vmax.f32 %v6828, %v6784
        %v6830 = vmax.f32 %v6829, %v6800
        %v6831 = vmax.f32 %v6561, %v6577
        %v6832 = vmax.f32 %v6831, %v6593
        %v6833 = vmax.f32 %v6832, %v6609
        %v6834 = vmax.f32 %v6833, %v6625
        %v6835 = vmax.f32 %v6834, %v6641
        %v6836 = vmax.f32 %v6835, %v6657
        %v6837 = vmax.f32 %v6836, %v6673
        %v6838 = vmax.f32 %v6837, %v6689
        %v6839 = vmax.f32 %v6838, %v6705
        %v6840 = vmax.f32 %v6839, %v6721
        %v6841 = vmax.f32 %v6840, %v6737
        %v6842 = vmax.f32 %v6841, %v6753
        %v6843 = vmax.f32 %v6842, %v6769
        %v6844 = vmax.f32 %v6843, %v6785
        %v6845 = vmax.f32 %v6844, %v6801
        %v6846 = vmax.f32 %v6562, %v6578
        %v6847 = vmax.f32 %v6846, %v6594
        %v6848 = vmax.f32 %v6847, %v6610
        %v6849 = vmax.f32 %v6848, %v6626
        %v6850 = vmax.f32 %v6849, %v6642
        %v6851 = vmax.f32 %v6850, %v6658
        %v6852 = vmax.f32 %v6851, %v6674
        %v6853 = vmax.f32 %v6852, %v6690
        %v6854 = vmax.f32 %v6853, %v6706
        %v6855 = vmax.f32 %v6854, %v6722
        %v6856 = vmax.f32 %v6855, %v6738
        %v6857 = vmax.f32 %v6856, %v6754
        %v6858 = vmax.f32 %v6857, %v6770
        %v6859 = vmax.f32 %v6858, %v6786
        %v6860 = vmax.f32 %v6859, %v6802
        %v6861 = vmax.f32 %v6563, %v6579
        %v6862 = vmax.f32 %v6861, %v6595
        %v6863 = vmax.f32 %v6862, %v6611
        %v6864 = vmax.f32 %v6863, %v6627
        %v6865 = vmax.f32 %v6864, %v6643
        %v6866 = vmax.f32 %v6865, %v6659
        %v6867 = vmax.f32 %v6866, %v6675
        %v6868 = vmax.f32 %v6867, %v6691
        %v6869 = vmax.f32 %v6868, %v6707
        %v6870 = vmax.f32 %v6869, %v6723
        %v6871 = vmax.f32 %v6870, %v6739
        %v6872 = vmax.f32 %v6871, %v6755
        %v6873 = vmax.f32 %v6872, %v6771
        %v6874 = vmax.f32 %v6873, %v6787
        %v6875 = vmax.f32 %v6874, %v6803
        %v6876 = vmax.f32 %v6564, %v6580
        %v6877 = vmax.f32 %v6876, %v6596
        %v6878 = vmax.f32 %v6877, %v6612
        %v6879 = vmax.f32 %v6878, %v6628
        %v6880 = vmax.f32 %v6879, %v6644
        %v6881 = vmax.f32 %v6880, %v6660
        %v6882 = vmax.f32 %v6881, %v6676
        %v6883 = vmax.f32 %v6882, %v6692
        %v6884 = vmax.f32 %v6883, %v6708
        %v6885 = vmax.f32 %v6884, %v6724
        %v6886 = vmax.f32 %v6885, %v6740
        %v6887 = vmax.f32 %v6886, %v6756
        %v6888 = vmax.f32 %v6887, %v6772
        %v6889 = vmax.f32 %v6888, %v6788
        %v6890 = vmax.f32 %v6889, %v6804
        %v6891 = vmax.f32 %v6565, %v6581
        %v6892 = vmax.f32 %v6891, %v6597
        %v6893 = vmax.f32 %v6892, %v6613
        %v6894 = vmax.f32 %v6893, %v6629
        %v6895 = vmax.f32 %v6894, %v6645
        %v6896 = vmax.f32 %v6895, %v6661
        %v6897 = vmax.f32 %v6896, %v6677
        %v6898 = vmax.f32 %v6897, %v6693
        %v6899 = vmax.f32 %v6898, %v6709
        %v6900 = vmax.f32 %v6899, %v6725
        %v6901 = vmax.f32 %v6900, %v6741
        %v6902 = vmax.f32 %v6901, %v6757
        %v6903 = vmax.f32 %v6902, %v6773
        %v6904 = vmax.f32 %v6903, %v6789
        %v6905 = vmax.f32 %v6904, %v6805
        %v6906 = vmax.f32 %v6566, %v6582
        %v6907 = vmax.f32 %v6906, %v6598
        %v6908 = vmax.f32 %v6907, %v6614
        %v6909 = vmax.f32 %v6908, %v6630
        %v6910 = vmax.f32 %v6909, %v6646
        %v6911 = vmax.f32 %v6910, %v6662
        %v6912 = vmax.f32 %v6911, %v6678
        %v6913 = vmax.f32 %v6912, %v6694
        %v6914 = vmax.f32 %v6913, %v6710
        %v6915 = vmax.f32 %v6914, %v6726
        %v6916 = vmax.f32 %v6915, %v6742
        %v6917 = vmax.f32 %v6916, %v6758
        %v6918 = vmax.f32 %v6917, %v6774
        %v6919 = vmax.f32 %v6918, %v6790
        %v6920 = vmax.f32 %v6919, %v6806
        %v6921 = vmax.f32 %v6567, %v6583
        %v6922 = vmax.f32 %v6921, %v6599
        %v6923 = vmax.f32 %v6922, %v6615
        %v6924 = vmax.f32 %v6923, %v6631
        %v6925 = vmax.f32 %v6924, %v6647
        %v6926 = vmax.f32 %v6925, %v6663
        %v6927 = vmax.f32 %v6926, %v6679
        %v6928 = vmax.f32 %v6927, %v6695
        %v6929 = vmax.f32 %v6928, %v6711
        %v6930 = vmax.f32 %v6929, %v6727
        %v6931 = vmax.f32 %v6930, %v6743
        %v6932 = vmax.f32 %v6931, %v6759
        %v6933 = vmax.f32 %v6932, %v6775
        %v6934 = vmax.f32 %v6933, %v6791
        %v6935 = vmax.f32 %v6934, %v6807
        %v6936 = vmax.f32 %v6568, %v6584
        %v6937 = vmax.f32 %v6936, %v6600
        %v6938 = vmax.f32 %v6937, %v6616
        %v6939 = vmax.f32 %v6938, %v6632
        %v6940 = vmax.f32 %v6939, %v6648
        %v6941 = vmax.f32 %v6940, %v6664
        %v6942 = vmax.f32 %v6941, %v6680
        %v6943 = vmax.f32 %v6942, %v6696
        %v6944 = vmax.f32 %v6943, %v6712
        %v6945 = vmax.f32 %v6944, %v6728
        %v6946 = vmax.f32 %v6945, %v6744
        %v6947 = vmax.f32 %v6946, %v6760
        %v6948 = vmax.f32 %v6947, %v6776
        %v6949 = vmax.f32 %v6948, %v6792
        %v6950 = vmax.f32 %v6949, %v6808
        %v6951 = vmax.f32 %v6569, %v6585
        %v6952 = vmax.f32 %v6951, %v6601
        %v6953 = vmax.f32 %v6952, %v6617
        %v6954 = vmax.f32 %v6953, %v6633
        %v6955 = vmax.f32 %v6954, %v6649
        %v6956 = vmax.f32 %v6955, %v6665
        %v6957 = vmax.f32 %v6956, %v6681
        %v6958 = vmax.f32 %v6957, %v6697
        %v6959 = vmax.f32 %v6958, %v6713
        %v6960 = vmax.f32 %v6959, %v6729
        %v6961 = vmax.f32 %v6960, %v6745
        %v6962 = vmax.f32 %v6961, %v6761
        %v6963 = vmax.f32 %v6962, %v6777
        %v6964 = vmax.f32 %v6963, %v6793
        %v6965 = vmax.f32 %v6964, %v6809
        %v6966 = vmax.f32 %v6570, %v6586
        %v6967 = vmax.f32 %v6966, %v6602
        %v6968 = vmax.f32 %v6967, %v6618
        %v6969 = vmax.f32 %v6968, %v6634
        %v6970 = vmax.f32 %v6969, %v6650
        %v6971 = vmax.f32 %v6970, %v6666
        %v6972 = vmax.f32 %v6971, %v6682
        %v6973 = vmax.f32 %v6972, %v6698
        %v6974 = vmax.f32 %v6973, %v6714
        %v6975 = vmax.f32 %v6974, %v6730
        %v6976 = vmax.f32 %v6975, %v6746
        %v6977 = vmax.f32 %v6976, %v6762
        %v6978 = vmax.f32 %v6977, %v6778
        %v6979 = vmax.f32 %v6978, %v6794
        %v6980 = vmax.f32 %v6979, %v6810
        %v6981 = vmax.f32 %v6571, %v6587
        %v6982 = vmax.f32 %v6981, %v6603
        %v6983 = vmax.f32 %v6982, %v6619
        %v6984 = vmax.f32 %v6983, %v6635
        %v6985 = vmax.f32 %v6984, %v6651
        %v6986 = vmax.f32 %v6985, %v6667
        %v6987 = vmax.f32 %v6986, %v6683
        %v6988 = vmax.f32 %v6987, %v6699
        %v6989 = vmax.f32 %v6988, %v6715
        %v6990 = vmax.f32 %v6989, %v6731
        %v6991 = vmax.f32 %v6990, %v6747
        %v6992 = vmax.f32 %v6991, %v6763
        %v6993 = vmax.f32 %v6992, %v6779
        %v6994 = vmax.f32 %v6993, %v6795
        %v6995 = vmax.f32 %v6994, %v6811
        %v6996 = vmax.f32 %v6572, %v6588
        %v6997 = vmax.f32 %v6996, %v6604
        %v6998 = vmax.f32 %v6997, %v6620
        %v6999 = vmax.f32 %v6998, %v6636
        %v7000 = vmax.f32 %v6999, %v6652
        %v7001 = vmax.f32 %v7000, %v6668
        %v7002 = vmax.f32 %v7001, %v6684
        %v7003 = vmax.f32 %v7002, %v6700
        %v7004 = vmax.f32 %v7003, %v6716
        %v7005 = vmax.f32 %v7004, %v6732
        %v7006 = vmax.f32 %v7005, %v6748
        %v7007 = vmax.f32 %v7006, %v6764
        %v7008 = vmax.f32 %v7007, %v6780
        %v7009 = vmax.f32 %v7008, %v6796
        %v7010 = vmax.f32 %v7009, %v6812
        %v7011 = vmax.f32 %v6573, %v6589
        %v7012 = vmax.f32 %v7011, %v6605
        %v7013 = vmax.f32 %v7012, %v6621
        %v7014 = vmax.f32 %v7013, %v6637
        %v7015 = vmax.f32 %v7014, %v6653
        %v7016 = vmax.f32 %v7015, %v6669
        %v7017 = vmax.f32 %v7016, %v6685
        %v7018 = vmax.f32 %v7017, %v6701
        %v7019 = vmax.f32 %v7018, %v6717
        %v7020 = vmax.f32 %v7019, %v6733
        %v7021 = vmax.f32 %v7020, %v6749
        %v7022 = vmax.f32 %v7021, %v6765
        %v7023 = vmax.f32 %v7022, %v6781
        %v7024 = vmax.f32 %v7023, %v6797
        %v7025 = vmax.f32 %v7024, %v6813
        %v7026 = vmax.f32 %v6574, %v6590
        %v7027 = vmax.f32 %v7026, %v6606
        %v7028 = vmax.f32 %v7027, %v6622
        %v7029 = vmax.f32 %v7028, %v6638
        %v7030 = vmax.f32 %v7029, %v6654
        %v7031 = vmax.f32 %v7030, %v6670
        %v7032 = vmax.f32 %v7031, %v6686
        %v7033 = vmax.f32 %v7032, %v6702
        %v7034 = vmax.f32 %v7033, %v6718
        %v7035 = vmax.f32 %v7034, %v6734
        %v7036 = vmax.f32 %v7035, %v6750
        %v7037 = vmax.f32 %v7036, %v6766
        %v7038 = vmax.f32 %v7037, %v6782
        %v7039 = vmax.f32 %v7038, %v6798
        %v7040 = vmax.f32 %v7039, %v6814
        %v7041 = vmax.f32 %v6575, %v6591
        %v7042 = vmax.f32 %v7041, %v6607
        %v7043 = vmax.f32 %v7042, %v6623
        %v7044 = vmax.f32 %v7043, %v6639
        %v7045 = vmax.f32 %v7044, %v6655
        %v7046 = vmax.f32 %v7045, %v6671
        %v7047 = vmax.f32 %v7046, %v6687
        %v7048 = vmax.f32 %v7047, %v6703
        %v7049 = vmax.f32 %v7048, %v6719
        %v7050 = vmax.f32 %v7049, %v6735
        %v7051 = vmax.f32 %v7050, %v6751
        %v7052 = vmax.f32 %v7051, %v6767
        %v7053 = vmax.f32 %v7052, %v6783
        %v7054 = vmax.f32 %v7053, %v6799
        %v7055 = vmax.f32 %v7054, %v6815
        %v7056 = vsub.f32 %v6560, %v6830
        %v7057 = vsub.f32 %v6561, %v6845
        %v7058 = vsub.f32 %v6562, %v6860
        %v7059 = vsub.f32 %v6563, %v6875
        %v7060 = vsub.f32 %v6564, %v6890
        %v7061 = vsub.f32 %v6565, %v6905
        %v7062 = vsub.f32 %v6566, %v6920
        %v7063 = vsub.f32 %v6567, %v6935
        %v7064 = vsub.f32 %v6568, %v6950
        %v7065 = vsub.f32 %v6569, %v6965
        %v7066 = vsub.f32 %v6570, %v6980
        %v7067 = vsub.f32 %v6571, %v6995
        %v7068 = vsub.f32 %v6572, %v7010
        %v7069 = vsub.f32 %v6573, %v7025
        %v7070 = vsub.f32 %v6574, %v7040
        %v7071 = vsub.f32 %v6575, %v7055
        %v7072 = vsub.f32 %v6576, %v6830
        %v7073 = vsub.f32 %v6577, %v6845
        %v7074 = vsub.f32 %v6578, %v6860
        %v7075 = vsub.f32 %v6579, %v6875
        %v7076 = vsub.f32 %v6580, %v6890
        %v7077 = vsub.f32 %v6581, %v6905
        %v7078 = vsub.f32 %v6582, %v6920
        %v7079 = vsub.f32 %v6583, %v6935
        %v7080 = vsub.f32 %v6584, %v6950
        %v7081 = vsub.f32 %v6585, %v6965
        %v7082 = vsub.f32 %v6586, %v6980
        %v7083 = vsub.f32 %v6587, %v6995
        %v7084 = vsub.f32 %v6588, %v7010
        %v7085 = vsub.f32 %v6589, %v7025
        %v7086 = vsub.f32 %v6590, %v7040
        %v7087 = vsub.f32 %v6591, %v7055
        %v7088 = vsub.f32 %v6592, %v6830
        %v7089 = vsub.f32 %v6593, %v6845
        %v7090 = vsub.f32 %v6594, %v6860
        %v7091 = vsub.f32 %v6595, %v6875
        %v7092 = vsub.f32 %v6596, %v6890
        %v7093 = vsub.f32 %v6597, %v6905
        %v7094 = vsub.f32 %v6598, %v6920
        %v7095 = vsub.f32 %v6599, %v6935
        %v7096 = vsub.f32 %v6600, %v6950
        %v7097 = vsub.f32 %v6601, %v6965
        %v7098 = vsub.f32 %v6602, %v6980
        %v7099 = vsub.f32 %v6603, %v6995
        %v7100 = vsub.f32 %v6604, %v7010
        %v7101 = vsub.f32 %v6605, %v7025
        %v7102 = vsub.f32 %v6606, %v7040
        %v7103 = vsub.f32 %v6607, %v7055
        %v7104 = vsub.f32 %v6608, %v6830
        %v7105 = vsub.f32 %v6609, %v6845
        %v7106 = vsub.f32 %v6610, %v6860
        %v7107 = vsub.f32 %v6611, %v6875
        %v7108 = vsub.f32 %v6612, %v6890
        %v7109 = vsub.f32 %v6613, %v6905
        %v7110 = vsub.f32 %v6614, %v6920
        %v7111 = vsub.f32 %v6615, %v6935
        %v7112 = vsub.f32 %v6616, %v6950
        %v7113 = vsub.f32 %v6617, %v6965
        %v7114 = vsub.f32 %v6618, %v6980
        %v7115 = vsub.f32 %v6619, %v6995
        %v7116 = vsub.f32 %v6620, %v7010
        %v7117 = vsub.f32 %v6621, %v7025
        %v7118 = vsub.f32 %v6622, %v7040
        %v7119 = vsub.f32 %v6623, %v7055
        %v7120 = vsub.f32 %v6624, %v6830
        %v7121 = vsub.f32 %v6625, %v6845
        %v7122 = vsub.f32 %v6626, %v6860
        %v7123 = vsub.f32 %v6627, %v6875
        %v7124 = vsub.f32 %v6628, %v6890
        %v7125 = vsub.f32 %v6629, %v6905
        %v7126 = vsub.f32 %v6630, %v6920
        %v7127 = vsub.f32 %v6631, %v6935
        %v7128 = vsub.f32 %v6632, %v6950
        %v7129 = vsub.f32 %v6633, %v6965
        %v7130 = vsub.f32 %v6634, %v6980
        %v7131 = vsub.f32 %v6635, %v6995
        %v7132 = vsub.f32 %v6636, %v7010
        %v7133 = vsub.f32 %v6637, %v7025
        %v7134 = vsub.f32 %v6638, %v7040
        %v7135 = vsub.f32 %v6639, %v7055
        %v7136 = vsub.f32 %v6640, %v6830
        %v7137 = vsub.f32 %v6641, %v6845
        %v7138 = vsub.f32 %v6642, %v6860
        %v7139 = vsub.f32 %v6643, %v6875
        %v7140 = vsub.f32 %v6644, %v6890
        %v7141 = vsub.f32 %v6645, %v6905
        %v7142 = vsub.f32 %v6646, %v6920
        %v7143 = vsub.f32 %v6647, %v6935
        %v7144 = vsub.f32 %v6648, %v6950
        %v7145 = vsub.f32 %v6649, %v6965
        %v7146 = vsub.f32 %v6650, %v6980
        %v7147 = vsub.f32 %v6651, %v6995
        %v7148 = vsub.f32 %v6652, %v7010
        %v7149 = vsub.f32 %v6653, %v7025
        %v7150 = vsub.f32 %v6654, %v7040
        %v7151 = vsub.f32 %v6655, %v7055
        %v7152 = vsub.f32 %v6656, %v6830
        %v7153 = vsub.f32 %v6657, %v6845
        %v7154 = vsub.f32 %v6658, %v6860
        %v7155 = vsub.f32 %v6659, %v6875
        %v7156 = vsub.f32 %v6660, %v6890
        %v7157 = vsub.f32 %v6661, %v6905
        %v7158 = vsub.f32 %v6662, %v6920
        %v7159 = vsub.f32 %v6663, %v6935
        %v7160 = vsub.f32 %v6664, %v6950
        %v7161 = vsub.f32 %v6665, %v6965
        %v7162 = vsub.f32 %v6666, %v6980
        %v7163 = vsub.f32 %v6667, %v6995
        %v7164 = vsub.f32 %v6668, %v7010
        %v7165 = vsub.f32 %v6669, %v7025
        %v7166 = vsub.f32 %v6670, %v7040
        %v7167 = vsub.f32 %v6671, %v7055
        %v7168 = vsub.f32 %v6672, %v6830
        %v7169 = vsub.f32 %v6673, %v6845
        %v7170 = vsub.f32 %v6674, %v6860
        %v7171 = vsub.f32 %v6675, %v6875
        %v7172 = vsub.f32 %v6676, %v6890
        %v7173 = vsub.f32 %v6677, %v6905
        %v7174 = vsub.f32 %v6678, %v6920
        %v7175 = vsub.f32 %v6679, %v6935
        %v7176 = vsub.f32 %v6680, %v6950
        %v7177 = vsub.f32 %v6681, %v6965
        %v7178 = vsub.f32 %v6682, %v6980
        %v7179 = vsub.f32 %v6683, %v6995
        %v7180 = vsub.f32 %v6684, %v7010
        %v7181 = vsub.f32 %v6685, %v7025
        %v7182 = vsub.f32 %v6686, %v7040
        %v7183 = vsub.f32 %v6687, %v7055
        %v7184 = vsub.f32 %v6688, %v6830
        %v7185 = vsub.f32 %v6689, %v6845
        %v7186 = vsub.f32 %v6690, %v6860
        %v7187 = vsub.f32 %v6691, %v6875
        %v7188 = vsub.f32 %v6692, %v6890
        %v7189 = vsub.f32 %v6693, %v6905
        %v7190 = vsub.f32 %v6694, %v6920
        %v7191 = vsub.f32 %v6695, %v6935
        %v7192 = vsub.f32 %v6696, %v6950
        %v7193 = vsub.f32 %v6697, %v6965
        %v7194 = vsub.f32 %v6698, %v6980
        %v7195 = vsub.f32 %v6699, %v6995
        %v7196 = vsub.f32 %v6700, %v7010
        %v7197 = vsub.f32 %v6701, %v7025
        %v7198 = vsub.f32 %v6702, %v7040
        %v7199 = vsub.f32 %v6703, %v7055
        %v7200 = vsub.f32 %v6704, %v6830
        %v7201 = vsub.f32 %v6705, %v6845
        %v7202 = vsub.f32 %v6706, %v6860
        %v7203 = vsub.f32 %v6707, %v6875
        %v7204 = vsub.f32 %v6708, %v6890
        %v7205 = vsub.f32 %v6709, %v6905
        %v7206 = vsub.f32 %v6710, %v6920
        %v7207 = vsub.f32 %v6711, %v6935
        %v7208 = vsub.f32 %v6712, %v6950
        %v7209 = vsub.f32 %v6713, %v6965
        %v7210 = vsub.f32 %v6714, %v6980
        %v7211 = vsub.f32 %v6715, %v6995
        %v7212 = vsub.f32 %v6716, %v7010
        %v7213 = vsub.f32 %v6717, %v7025
        %v7214 = vsub.f32 %v6718, %v7040
        %v7215 = vsub.f32 %v6719, %v7055
        %v7216 = vsub.f32 %v6720, %v6830
        %v7217 = vsub.f32 %v6721, %v6845
        %v7218 = vsub.f32 %v6722, %v6860
        %v7219 = vsub.f32 %v6723, %v6875
        %v7220 = vsub.f32 %v6724, %v6890
        %v7221 = vsub.f32 %v6725, %v6905
        %v7222 = vsub.f32 %v6726, %v6920
        %v7223 = vsub.f32 %v6727, %v6935
        %v7224 = vsub.f32 %v6728, %v6950
        %v7225 = vsub.f32 %v6729, %v6965
        %v7226 = vsub.f32 %v6730, %v6980
        %v7227 = vsub.f32 %v6731, %v6995
        %v7228 = vsub.f32 %v6732, %v7010
        %v7229 = vsub.f32 %v6733, %v7025
        %v7230 = vsub.f32 %v6734, %v7040
        %v7231 = vsub.f32 %v6735, %v7055
        %v7232 = vsub.f32 %v6736, %v6830
        %v7233 = vsub.f32 %v6737, %v6845
        %v7234 = vsub.f32 %v6738, %v6860
        %v7235 = vsub.f32 %v6739, %v6875
        %v7236 = vsub.f32 %v6740, %v6890
        %v7237 = vsub.f32 %v6741, %v6905
        %v7238 = vsub.f32 %v6742, %v6920
        %v7239 = vsub.f32 %v6743, %v6935
        %v7240 = vsub.f32 %v6744, %v6950
        %v7241 = vsub.f32 %v6745, %v6965
        %v7242 = vsub.f32 %v6746, %v6980
        %v7243 = vsub.f32 %v6747, %v6995
        %v7244 = vsub.f32 %v6748, %v7010
        %v7245 = vsub.f32 %v6749, %v7025
        %v7246 = vsub.f32 %v6750, %v7040
        %v7247 = vsub.f32 %v6751, %v7055
        %v7248 = vsub.f32 %v6752, %v6830
        %v7249 = vsub.f32 %v6753, %v6845
        %v7250 = vsub.f32 %v6754, %v6860
        %v7251 = vsub.f32 %v6755, %v6875
        %v7252 = vsub.f32 %v6756, %v6890
        %v7253 = vsub.f32 %v6757, %v6905
        %v7254 = vsub.f32 %v6758, %v6920
        %v7255 = vsub.f32 %v6759, %v6935
        %v7256 = vsub.f32 %v6760, %v6950
        %v7257 = vsub.f32 %v6761, %v6965
        %v7258 = vsub.f32 %v6762, %v6980
        %v7259 = vsub.f32 %v6763, %v6995
        %v7260 = vsub.f32 %v6764, %v7010
        %v7261 = vsub.f32 %v6765, %v7025
        %v7262 = vsub.f32 %v6766, %v7040
        %v7263 = vsub.f32 %v6767, %v7055
        %v7264 = vsub.f32 %v6768, %v6830
        %v7265 = vsub.f32 %v6769, %v6845
        %v7266 = vsub.f32 %v6770, %v6860
        %v7267 = vsub.f32 %v6771, %v6875
        %v7268 = vsub.f32 %v6772, %v6890
        %v7269 = vsub.f32 %v6773, %v6905
        %v7270 = vsub.f32 %v6774, %v6920
        %v7271 = vsub.f32 %v6775, %v6935
        %v7272 = vsub.f32 %v6776, %v6950
        %v7273 = vsub.f32 %v6777, %v6965
        %v7274 = vsub.f32 %v6778, %v6980
        %v7275 = vsub.f32 %v6779, %v6995
        %v7276 = vsub.f32 %v6780, %v7010
        %v7277 = vsub.f32 %v6781, %v7025
        %v7278 = vsub.f32 %v6782, %v7040
        %v7279 = vsub.f32 %v6783, %v7055
        %v7280 = vsub.f32 %v6784, %v6830
        %v7281 = vsub.f32 %v6785, %v6845
        %v7282 = vsub.f32 %v6786, %v6860
        %v7283 = vsub.f32 %v6787, %v6875
        %v7284 = vsub.f32 %v6788, %v6890
        %v7285 = vsub.f32 %v6789, %v6905
        %v7286 = vsub.f32 %v6790, %v6920
        %v7287 = vsub.f32 %v6791, %v6935
        %v7288 = vsub.f32 %v6792, %v6950
        %v7289 = vsub.f32 %v6793, %v6965
        %v7290 = vsub.f32 %v6794, %v6980
        %v7291 = vsub.f32 %v6795, %v6995
        %v7292 = vsub.f32 %v6796, %v7010
        %v7293 = vsub.f32 %v6797, %v7025
        %v7294 = vsub.f32 %v6798, %v7040
        %v7295 = vsub.f32 %v6799, %v7055
        %v7296 = vsub.f32 %v6800, %v6830
        %v7297 = vsub.f32 %v6801, %v6845
        %v7298 = vsub.f32 %v6802, %v6860
        %v7299 = vsub.f32 %v6803, %v6875
        %v7300 = vsub.f32 %v6804, %v6890
        %v7301 = vsub.f32 %v6805, %v6905
        %v7302 = vsub.f32 %v6806, %v6920
        %v7303 = vsub.f32 %v6807, %v6935
        %v7304 = vsub.f32 %v6808, %v6950
        %v7305 = vsub.f32 %v6809, %v6965
        %v7306 = vsub.f32 %v6810, %v6980
        %v7307 = vsub.f32 %v6811, %v6995
        %v7308 = vsub.f32 %v6812, %v7010
        %v7309 = vsub.f32 %v6813, %v7025
        %v7310 = vsub.f32 %v6814, %v7040
        %v7311 = vsub.f32 %v6815, %v7055
        %v7312 = vmul.f32 %v7056, 1.442695
        %v7313 = vpow.pop %v7312
        %v7314 = vmul.f32 %v7057, 1.442695
        %v7315 = vpow.pop %v7314
        %v7316 = vmul.f32 %v7058, 1.442695
        %v7317 = vpow.pop %v7316
        %v7318 = vmul.f32 %v7059, 1.442695
        %v7319 = vpow.pop %v7318
        %v7320 = vmul.f32 %v7060, 1.442695
        %v7321 = vpow.pop %v7320
        %v7322 = vmul.f32 %v7061, 1.442695
        %v7323 = vpow.pop %v7322
        %v7324 = vmul.f32 %v7062, 1.442695
        %v7325 = vpow.pop %v7324
        %v7326 = vmul.f32 %v7063, 1.442695
        %v7327 = vpow.pop %v7326
        %v7328 = vmul.f32 %v7064, 1.442695
        %v7329 = vpow.pop %v7328
        %v7330 = vmul.f32 %v7065, 1.442695
        %v7331 = vpow.pop %v7330
        %v7332 = vmul.f32 %v7066, 1.442695
        %v7333 = vpow.pop %v7332
        %v7334 = vmul.f32 %v7067, 1.442695
        %v7335 = vpow.pop %v7334
        %v7336 = vmul.f32 %v7068, 1.442695
        %v7337 = vpow.pop %v7336
        %v7338 = vmul.f32 %v7069, 1.442695
        %v7339 = vpow.pop %v7338
        %v7340 = vmul.f32 %v7070, 1.442695
        %v7341 = vpow.pop %v7340
        %v7342 = vmul.f32 %v7071, 1.442695
        %v7343 = vpow.pop %v7342
        %v7344 = vmul.f32 %v7072, 1.442695
        %v7345 = vpow.pop %v7344
        %v7346 = vmul.f32 %v7073, 1.442695
        %v7347 = vpow.pop %v7346
        %v7348 = vmul.f32 %v7074, 1.442695
        %v7349 = vpow.pop %v7348
        %v7350 = vmul.f32 %v7075, 1.442695
        %v7351 = vpow.pop %v7350
        %v7352 = vmul.f32 %v7076, 1.442695
        %v7353 = vpow.pop %v7352
        %v7354 = vmul.f32 %v7077, 1.442695
        %v7355 = vpow.pop %v7354
        %v7356 = vmul.f32 %v7078, 1.442695
        %v7357 = vpow.pop %v7356
        %v7358 = vmul.f32 %v7079, 1.442695
        %v7359 = vpow.pop %v7358
        %v7360 = vmul.f32 %v7080, 1.442695
        %v7361 = vpow.pop %v7360
        %v7362 = vmul.f32 %v7081, 1.442695
        %v7363 = vpow.pop %v7362
        %v7364 = vmul.f32 %v7082, 1.442695
        %v7365 = vpow.pop %v7364
        %v7366 = vmul.f32 %v7083, 1.442695
        %v7367 = vpow.pop %v7366
        %v7368 = vmul.f32 %v7084, 1.442695
        %v7369 = vpow.pop %v7368
        %v7370 = vmul.f32 %v7085, 1.442695
        %v7371 = vpow.pop %v7370
        %v7372 = vmul.f32 %v7086, 1.442695
        %v7373 = vpow.pop %v7372
        %v7374 = vmul.f32 %v7087, 1.442695
        %v7375 = vpow.pop %v7374
        %v7376 = vmul.f32 %v7088, 1.442695
        %v7377 = vpow.pop %v7376
        %v7378 = vmul.f32 %v7089, 1.442695
        %v7379 = vpow.pop %v7378
        %v7380 = vmul.f32 %v7090, 1.442695
        %v7381 = vpow.pop %v7380
        %v7382 = vmul.f32 %v7091, 1.442695
        %v7383 = vpow.pop %v7382
        %v7384 = vmul.f32 %v7092, 1.442695
        %v7385 = vpow.pop %v7384
        %v7386 = vmul.f32 %v7093, 1.442695
        %v7387 = vpow.pop %v7386
        %v7388 = vmul.f32 %v7094, 1.442695
        %v7389 = vpow.pop %v7388
        %v7390 = vmul.f32 %v7095, 1.442695
        %v7391 = vpow.pop %v7390
        %v7392 = vmul.f32 %v7096, 1.442695
        %v7393 = vpow.pop %v7392
        %v7394 = vmul.f32 %v7097, 1.442695
        %v7395 = vpow.pop %v7394
        %v7396 = vmul.f32 %v7098, 1.442695
        %v7397 = vpow.pop %v7396
        %v7398 = vmul.f32 %v7099, 1.442695
        %v7399 = vpow.pop %v7398
        %v7400 = vmul.f32 %v7100, 1.442695
        %v7401 = vpow.pop %v7400
        %v7402 = vmul.f32 %v7101, 1.442695
        %v7403 = vpow.pop %v7402
        %v7404 = vmul.f32 %v7102, 1.442695
        %v7405 = vpow.pop %v7404
        %v7406 = vmul.f32 %v7103, 1.442695
        %v7407 = vpow.pop %v7406
        %v7408 = vmul.f32 %v7104, 1.442695
        %v7409 = vpow.pop %v7408
        %v7410 = vmul.f32 %v7105, 1.442695
        %v7411 = vpow.pop %v7410
        %v7412 = vmul.f32 %v7106, 1.442695
        %v7413 = vpow.pop %v7412
        %v7414 = vmul.f32 %v7107, 1.442695
        %v7415 = vpow.pop %v7414
        %v7416 = vmul.f32 %v7108, 1.442695
        %v7417 = vpow.pop %v7416
        %v7418 = vmul.f32 %v7109, 1.442695
        %v7419 = vpow.pop %v7418
        %v7420 = vmul.f32 %v7110, 1.442695
        %v7421 = vpow.pop %v7420
        %v7422 = vmul.f32 %v7111, 1.442695
        %v7423 = vpow.pop %v7422
        %v7424 = vmul.f32 %v7112, 1.442695
        %v7425 = vpow.pop %v7424
        %v7426 = vmul.f32 %v7113, 1.442695
        %v7427 = vpow.pop %v7426
        %v7428 = vmul.f32 %v7114, 1.442695
        %v7429 = vpow.pop %v7428
        %v7430 = vmul.f32 %v7115, 1.442695
        %v7431 = vpow.pop %v7430
        %v7432 = vmul.f32 %v7116, 1.442695
        %v7433 = vpow.pop %v7432
        %v7434 = vmul.f32 %v7117, 1.442695
        %v7435 = vpow.pop %v7434
        %v7436 = vmul.f32 %v7118, 1.442695
        %v7437 = vpow.pop %v7436
        %v7438 = vmul.f32 %v7119, 1.442695
        %v7439 = vpow.pop %v7438
        %v7440 = vmul.f32 %v7120, 1.442695
        %v7441 = vpow.pop %v7440
        %v7442 = vmul.f32 %v7121, 1.442695
        %v7443 = vpow.pop %v7442
        %v7444 = vmul.f32 %v7122, 1.442695
        %v7445 = vpow.pop %v7444
        %v7446 = vmul.f32 %v7123, 1.442695
        %v7447 = vpow.pop %v7446
        %v7448 = vmul.f32 %v7124, 1.442695
        %v7449 = vpow.pop %v7448
        %v7450 = vmul.f32 %v7125, 1.442695
        %v7451 = vpow.pop %v7450
        %v7452 = vmul.f32 %v7126, 1.442695
        %v7453 = vpow.pop %v7452
        %v7454 = vmul.f32 %v7127, 1.442695
        %v7455 = vpow.pop %v7454
        %v7456 = vmul.f32 %v7128, 1.442695
        %v7457 = vpow.pop %v7456
        %v7458 = vmul.f32 %v7129, 1.442695
        %v7459 = vpow.pop %v7458
        %v7460 = vmul.f32 %v7130, 1.442695
        %v7461 = vpow.pop %v7460
        %v7462 = vmul.f32 %v7131, 1.442695
        %v7463 = vpow.pop %v7462
        %v7464 = vmul.f32 %v7132, 1.442695
        %v7465 = vpow.pop %v7464
        %v7466 = vmul.f32 %v7133, 1.442695
        %v7467 = vpow.pop %v7466
        %v7468 = vmul.f32 %v7134, 1.442695
        %v7469 = vpow.pop %v7468
        %v7470 = vmul.f32 %v7135, 1.442695
        %v7471 = vpow.pop %v7470
        %v7472 = vmul.f32 %v7136, 1.442695
        %v7473 = vpow.pop %v7472
        %v7474 = vmul.f32 %v7137, 1.442695
        %v7475 = vpow.pop %v7474
        %v7476 = vmul.f32 %v7138, 1.442695
        %v7477 = vpow.pop %v7476
        %v7478 = vmul.f32 %v7139, 1.442695
        %v7479 = vpow.pop %v7478
        %v7480 = vmul.f32 %v7140, 1.442695
        %v7481 = vpow.pop %v7480
        %v7482 = vmul.f32 %v7141, 1.442695
        %v7483 = vpow.pop %v7482
        %v7484 = vmul.f32 %v7142, 1.442695
        %v7485 = vpow.pop %v7484
        %v7486 = vmul.f32 %v7143, 1.442695
        %v7487 = vpow.pop %v7486
        %v7488 = vmul.f32 %v7144, 1.442695
        %v7489 = vpow.pop %v7488
        %v7490 = vmul.f32 %v7145, 1.442695
        %v7491 = vpow.pop %v7490
        %v7492 = vmul.f32 %v7146, 1.442695
        %v7493 = vpow.pop %v7492
        %v7494 = vmul.f32 %v7147, 1.442695
        %v7495 = vpow.pop %v7494
        %v7496 = vmul.f32 %v7148, 1.442695
        %v7497 = vpow.pop %v7496
        %v7498 = vmul.f32 %v7149, 1.442695
        %v7499 = vpow.pop %v7498
        %v7500 = vmul.f32 %v7150, 1.442695
        %v7501 = vpow.pop %v7500
        %v7502 = vmul.f32 %v7151, 1.442695
        %v7503 = vpow.pop %v7502
        %v7504 = vmul.f32 %v7152, 1.442695
        %v7505 = vpow.pop %v7504
        %v7506 = vmul.f32 %v7153, 1.442695
        %v7507 = vpow.pop %v7506
        %v7508 = vmul.f32 %v7154, 1.442695
        %v7509 = vpow.pop %v7508
        %v7510 = vmul.f32 %v7155, 1.442695
        %v7511 = vpow.pop %v7510
        %v7512 = vmul.f32 %v7156, 1.442695
        %v7513 = vpow.pop %v7512
        %v7514 = vmul.f32 %v7157, 1.442695
        %v7515 = vpow.pop %v7514
        %v7516 = vmul.f32 %v7158, 1.442695
        %v7517 = vpow.pop %v7516
        %v7518 = vmul.f32 %v7159, 1.442695
        %v7519 = vpow.pop %v7518
        %v7520 = vmul.f32 %v7160, 1.442695
        %v7521 = vpow.pop %v7520
        %v7522 = vmul.f32 %v7161, 1.442695
        %v7523 = vpow.pop %v7522
        %v7524 = vmul.f32 %v7162, 1.442695
        %v7525 = vpow.pop %v7524
        %v7526 = vmul.f32 %v7163, 1.442695
        %v7527 = vpow.pop %v7526
        %v7528 = vmul.f32 %v7164, 1.442695
        %v7529 = vpow.pop %v7528
        %v7530 = vmul.f32 %v7165, 1.442695
        %v7531 = vpow.pop %v7530
        %v7532 = vmul.f32 %v7166, 1.442695
        %v7533 = vpow.pop %v7532
        %v7534 = vmul.f32 %v7167, 1.442695
        %v7535 = vpow.pop %v7534
        %v7536 = vmul.f32 %v7168, 1.442695
        %v7537 = vpow.pop %v7536
        %v7538 = vmul.f32 %v7169, 1.442695
        %v7539 = vpow.pop %v7538
        %v7540 = vmul.f32 %v7170, 1.442695
        %v7541 = vpow.pop %v7540
        %v7542 = vmul.f32 %v7171, 1.442695
        %v7543 = vpow.pop %v7542
        %v7544 = vmul.f32 %v7172, 1.442695
        %v7545 = vpow.pop %v7544
        %v7546 = vmul.f32 %v7173, 1.442695
        %v7547 = vpow.pop %v7546
        %v7548 = vmul.f32 %v7174, 1.442695
        %v7549 = vpow.pop %v7548
        %v7550 = vmul.f32 %v7175, 1.442695
        %v7551 = vpow.pop %v7550
        %v7552 = vmul.f32 %v7176, 1.442695
        %v7553 = vpow.pop %v7552
        %v7554 = vmul.f32 %v7177, 1.442695
        %v7555 = vpow.pop %v7554
        %v7556 = vmul.f32 %v7178, 1.442695
        %v7557 = vpow.pop %v7556
        %v7558 = vmul.f32 %v7179, 1.442695
        %v7559 = vpow.pop %v7558
        %v7560 = vmul.f32 %v7180, 1.442695
        %v7561 = vpow.pop %v7560
        %v7562 = vmul.f32 %v7181, 1.442695
        %v7563 = vpow.pop %v7562
        %v7564 = vmul.f32 %v7182, 1.442695
        %v7565 = vpow.pop %v7564
        %v7566 = vmul.f32 %v7183, 1.442695
        %v7567 = vpow.pop %v7566
        %v7568 = vmul.f32 %v7184, 1.442695
        %v7569 = vpow.pop %v7568
        %v7570 = vmul.f32 %v7185, 1.442695
        %v7571 = vpow.pop %v7570
        %v7572 = vmul.f32 %v7186, 1.442695
        %v7573 = vpow.pop %v7572
        %v7574 = vmul.f32 %v7187, 1.442695
        %v7575 = vpow.pop %v7574
        %v7576 = vmul.f32 %v7188, 1.442695
        %v7577 = vpow.pop %v7576
        %v7578 = vmul.f32 %v7189, 1.442695
        %v7579 = vpow.pop %v7578
        %v7580 = vmul.f32 %v7190, 1.442695
        %v7581 = vpow.pop %v7580
        %v7582 = vmul.f32 %v7191, 1.442695
        %v7583 = vpow.pop %v7582
        %v7584 = vmul.f32 %v7192, 1.442695
        %v7585 = vpow.pop %v7584
        %v7586 = vmul.f32 %v7193, 1.442695
        %v7587 = vpow.pop %v7586
        %v7588 = vmul.f32 %v7194, 1.442695
        %v7589 = vpow.pop %v7588
        %v7590 = vmul.f32 %v7195, 1.442695
        %v7591 = vpow.pop %v7590
        %v7592 = vmul.f32 %v7196, 1.442695
        %v7593 = vpow.pop %v7592
        %v7594 = vmul.f32 %v7197, 1.442695
        %v7595 = vpow.pop %v7594
        %v7596 = vmul.f32 %v7198, 1.442695
        %v7597 = vpow.pop %v7596
        %v7598 = vmul.f32 %v7199, 1.442695
        %v7599 = vpow.pop %v7598
        %v7600 = vmul.f32 %v7200, 1.442695
        %v7601 = vpow.pop %v7600
        %v7602 = vmul.f32 %v7201, 1.442695
        %v7603 = vpow.pop %v7602
        %v7604 = vmul.f32 %v7202, 1.442695
        %v7605 = vpow.pop %v7604
        %v7606 = vmul.f32 %v7203, 1.442695
        %v7607 = vpow.pop %v7606
        %v7608 = vmul.f32 %v7204, 1.442695
        %v7609 = vpow.pop %v7608
        %v7610 = vmul.f32 %v7205, 1.442695
        %v7611 = vpow.pop %v7610
        %v7612 = vmul.f32 %v7206, 1.442695
        %v7613 = vpow.pop %v7612
        %v7614 = vmul.f32 %v7207, 1.442695
        %v7615 = vpow.pop %v7614
        %v7616 = vmul.f32 %v7208, 1.442695
        %v7617 = vpow.pop %v7616
        %v7618 = vmul.f32 %v7209, 1.442695
        %v7619 = vpow.pop %v7618
        %v7620 = vmul.f32 %v7210, 1.442695
        %v7621 = vpow.pop %v7620
        %v7622 = vmul.f32 %v7211, 1.442695
        %v7623 = vpow.pop %v7622
        %v7624 = vmul.f32 %v7212, 1.442695
        %v7625 = vpow.pop %v7624
        %v7626 = vmul.f32 %v7213, 1.442695
        %v7627 = vpow.pop %v7626
        %v7628 = vmul.f32 %v7214, 1.442695
        %v7629 = vpow.pop %v7628
        %v7630 = vmul.f32 %v7215, 1.442695
        %v7631 = vpow.pop %v7630
        %v7632 = vmul.f32 %v7216, 1.442695
        %v7633 = vpow.pop %v7632
        %v7634 = vmul.f32 %v7217, 1.442695
        %v7635 = vpow.pop %v7634
        %v7636 = vmul.f32 %v7218, 1.442695
        %v7637 = vpow.pop %v7636
        %v7638 = vmul.f32 %v7219, 1.442695
        %v7639 = vpow.pop %v7638
        %v7640 = vmul.f32 %v7220, 1.442695
        %v7641 = vpow.pop %v7640
        %v7642 = vmul.f32 %v7221, 1.442695
        %v7643 = vpow.pop %v7642
        %v7644 = vmul.f32 %v7222, 1.442695
        %v7645 = vpow.pop %v7644
        %v7646 = vmul.f32 %v7223, 1.442695
        %v7647 = vpow.pop %v7646
        %v7648 = vmul.f32 %v7224, 1.442695
        %v7649 = vpow.pop %v7648
        %v7650 = vmul.f32 %v7225, 1.442695
        %v7651 = vpow.pop %v7650
        %v7652 = vmul.f32 %v7226, 1.442695
        %v7653 = vpow.pop %v7652
        %v7654 = vmul.f32 %v7227, 1.442695
        %v7655 = vpow.pop %v7654
        %v7656 = vmul.f32 %v7228, 1.442695
        %v7657 = vpow.pop %v7656
        %v7658 = vmul.f32 %v7229, 1.442695
        %v7659 = vpow.pop %v7658
        %v7660 = vmul.f32 %v7230, 1.442695
        %v7661 = vpow.pop %v7660
        %v7662 = vmul.f32 %v7231, 1.442695
        %v7663 = vpow.pop %v7662
        %v7664 = vmul.f32 %v7232, 1.442695
        %v7665 = vpow.pop %v7664
        %v7666 = vmul.f32 %v7233, 1.442695
        %v7667 = vpow.pop %v7666
        %v7668 = vmul.f32 %v7234, 1.442695
        %v7669 = vpow.pop %v7668
        %v7670 = vmul.f32 %v7235, 1.442695
        %v7671 = vpow.pop %v7670
        %v7672 = vmul.f32 %v7236, 1.442695
        %v7673 = vpow.pop %v7672
        %v7674 = vmul.f32 %v7237, 1.442695
        %v7675 = vpow.pop %v7674
        %v7676 = vmul.f32 %v7238, 1.442695
        %v7677 = vpow.pop %v7676
        %v7678 = vmul.f32 %v7239, 1.442695
        %v7679 = vpow.pop %v7678
        %v7680 = vmul.f32 %v7240, 1.442695
        %v7681 = vpow.pop %v7680
        %v7682 = vmul.f32 %v7241, 1.442695
        %v7683 = vpow.pop %v7682
        %v7684 = vmul.f32 %v7242, 1.442695
        %v7685 = vpow.pop %v7684
        %v7686 = vmul.f32 %v7243, 1.442695
        %v7687 = vpow.pop %v7686
        %v7688 = vmul.f32 %v7244, 1.442695
        %v7689 = vpow.pop %v7688
        %v7690 = vmul.f32 %v7245, 1.442695
        %v7691 = vpow.pop %v7690
        %v7692 = vmul.f32 %v7246, 1.442695
        %v7693 = vpow.pop %v7692
        %v7694 = vmul.f32 %v7247, 1.442695
        %v7695 = vpow.pop %v7694
        %v7696 = vmul.f32 %v7248, 1.442695
        %v7697 = vpow.pop %v7696
        %v7698 = vmul.f32 %v7249, 1.442695
        %v7699 = vpow.pop %v7698
        %v7700 = vmul.f32 %v7250, 1.442695
        %v7701 = vpow.pop %v7700
        %v7702 = vmul.f32 %v7251, 1.442695
        %v7703 = vpow.pop %v7702
        %v7704 = vmul.f32 %v7252, 1.442695
        %v7705 = vpow.pop %v7704
        %v7706 = vmul.f32 %v7253, 1.442695
        %v7707 = vpow.pop %v7706
        %v7708 = vmul.f32 %v7254, 1.442695
        %v7709 = vpow.pop %v7708
        %v7710 = vmul.f32 %v7255, 1.442695
        %v7711 = vpow.pop %v7710
        %v7712 = vmul.f32 %v7256, 1.442695
        %v7713 = vpow.pop %v7712
        %v7714 = vmul.f32 %v7257, 1.442695
        %v7715 = vpow.pop %v7714
        %v7716 = vmul.f32 %v7258, 1.442695
        %v7717 = vpow.pop %v7716
        %v7718 = vmul.f32 %v7259, 1.442695
        %v7719 = vpow.pop %v7718
        %v7720 = vmul.f32 %v7260, 1.442695
        %v7721 = vpow.pop %v7720
        %v7722 = vmul.f32 %v7261, 1.442695
        %v7723 = vpow.pop %v7722
        %v7724 = vmul.f32 %v7262, 1.442695
        %v7725 = vpow.pop %v7724
        %v7726 = vmul.f32 %v7263, 1.442695
        %v7727 = vpow.pop %v7726
        %v7728 = vmul.f32 %v7264, 1.442695
        %v7729 = vpow.pop %v7728
        %v7730 = vmul.f32 %v7265, 1.442695
        %v7731 = vpow.pop %v7730
        %v7732 = vmul.f32 %v7266, 1.442695
        %v7733 = vpow.pop %v7732
        %v7734 = vmul.f32 %v7267, 1.442695
        %v7735 = vpow.pop %v7734
        %v7736 = vmul.f32 %v7268, 1.442695
        %v7737 = vpow.pop %v7736
        %v7738 = vmul.f32 %v7269, 1.442695
        %v7739 = vpow.pop %v7738
        %v7740 = vmul.f32 %v7270, 1.442695
        %v7741 = vpow.pop %v7740
        %v7742 = vmul.f32 %v7271, 1.442695
        %v7743 = vpow.pop %v7742
        %v7744 = vmul.f32 %v7272, 1.442695
        %v7745 = vpow.pop %v7744
        %v7746 = vmul.f32 %v7273, 1.442695
        %v7747 = vpow.pop %v7746
        %v7748 = vmul.f32 %v7274, 1.442695
        %v7749 = vpow.pop %v7748
        %v7750 = vmul.f32 %v7275, 1.442695
        %v7751 = vpow.pop %v7750
        %v7752 = vmul.f32 %v7276, 1.442695
        %v7753 = vpow.pop %v7752
        %v7754 = vmul.f32 %v7277, 1.442695
        %v7755 = vpow.pop %v7754
        %v7756 = vmul.f32 %v7278, 1.442695
        %v7757 = vpow.pop %v7756
        %v7758 = vmul.f32 %v7279, 1.442695
        %v7759 = vpow.pop %v7758
        %v7760 = vmul.f32 %v7280, 1.442695
        %v7761 = vpow.pop %v7760
        %v7762 = vmul.f32 %v7281, 1.442695
        %v7763 = vpow.pop %v7762
        %v7764 = vmul.f32 %v7282, 1.442695
        %v7765 = vpow.pop %v7764
        %v7766 = vmul.f32 %v7283, 1.442695
        %v7767 = vpow.pop %v7766
        %v7768 = vmul.f32 %v7284, 1.442695
        %v7769 = vpow.pop %v7768
        %v7770 = vmul.f32 %v7285, 1.442695
        %v7771 = vpow.pop %v7770
        %v7772 = vmul.f32 %v7286, 1.442695
        %v7773 = vpow.pop %v7772
        %v7774 = vmul.f32 %v7287, 1.442695
        %v7775 = vpow.pop %v7774
        %v7776 = vmul.f32 %v7288, 1.442695
        %v7777 = vpow.pop %v7776
        %v7778 = vmul.f32 %v7289, 1.442695
        %v7779 = vpow.pop %v7778
        %v7780 = vmul.f32 %v7290, 1.442695
        %v7781 = vpow.pop %v7780
        %v7782 = vmul.f32 %v7291, 1.442695
        %v7783 = vpow.pop %v7782
        %v7784 = vmul.f32 %v7292, 1.442695
        %v7785 = vpow.pop %v7784
        %v7786 = vmul.f32 %v7293, 1.442695
        %v7787 = vpow.pop %v7786
        %v7788 = vmul.f32 %v7294, 1.442695
        %v7789 = vpow.pop %v7788
        %v7790 = vmul.f32 %v7295, 1.442695
        %v7791 = vpow.pop %v7790
        %v7792 = vmul.f32 %v7296, 1.442695
        %v7793 = vpow.pop %v7792
        %v7794 = vmul.f32 %v7297, 1.442695
        %v7795 = vpow.pop %v7794
        %v7796 = vmul.f32 %v7298, 1.442695
        %v7797 = vpow.pop %v7796
        %v7798 = vmul.f32 %v7299, 1.442695
        %v7799 = vpow.pop %v7798
        %v7800 = vmul.f32 %v7300, 1.442695
        %v7801 = vpow.pop %v7800
        %v7802 = vmul.f32 %v7301, 1.442695
        %v7803 = vpow.pop %v7802
        %v7804 = vmul.f32 %v7302, 1.442695
        %v7805 = vpow.pop %v7804
        %v7806 = vmul.f32 %v7303, 1.442695
        %v7807 = vpow.pop %v7806
        %v7808 = vmul.f32 %v7304, 1.442695
        %v7809 = vpow.pop %v7808
        %v7810 = vmul.f32 %v7305, 1.442695
        %v7811 = vpow.pop %v7810
        %v7812 = vmul.f32 %v7306, 1.442695
        %v7813 = vpow.pop %v7812
        %v7814 = vmul.f32 %v7307, 1.442695
        %v7815 = vpow.pop %v7814
        %v7816 = vmul.f32 %v7308, 1.442695
        %v7817 = vpow.pop %v7816
        %v7818 = vmul.f32 %v7309, 1.442695
        %v7819 = vpow.pop %v7818
        %v7820 = vmul.f32 %v7310, 1.442695
        %v7821 = vpow.pop %v7820
        %v7822 = vmul.f32 %v7311, 1.442695
        %v7823 = vpow.pop %v7822
        %v7824 = vadd.f32 %v7313, %v7345
        %v7825 = vadd.f32 %v7824, %v7377
        %v7826 = vadd.f32 %v7825, %v7409
        %v7827 = vadd.f32 %v7826, %v7441
        %v7828 = vadd.f32 %v7827, %v7473
        %v7829 = vadd.f32 %v7828, %v7505
        %v7830 = vadd.f32 %v7829, %v7537
        %v7831 = vadd.f32 %v7830, %v7569
        %v7832 = vadd.f32 %v7831, %v7601
        %v7833 = vadd.f32 %v7832, %v7633
        %v7834 = vadd.f32 %v7833, %v7665
        %v7835 = vadd.f32 %v7834, %v7697
        %v7836 = vadd.f32 %v7835, %v7729
        %v7837 = vadd.f32 %v7836, %v7761
        %v7838 = vadd.f32 %v7837, %v7793
        %v7839 = vadd.f32 %v7315, %v7347
        %v7840 = vadd.f32 %v7839, %v7379
        %v7841 = vadd.f32 %v7840, %v7411
        %v7842 = vadd.f32 %v7841, %v7443
        %v7843 = vadd.f32 %v7842, %v7475
        %v7844 = vadd.f32 %v7843, %v7507
        %v7845 = vadd.f32 %v7844, %v7539
        %v7846 = vadd.f32 %v7845, %v7571
        %v7847 = vadd.f32 %v7846, %v7603
        %v7848 = vadd.f32 %v7847, %v7635
        %v7849 = vadd.f32 %v7848, %v7667
        %v7850 = vadd.f32 %v7849, %v7699
        %v7851 = vadd.f32 %v7850, %v7731
        %v7852 = vadd.f32 %v7851, %v7763
        %v7853 = vadd.f32 %v7852, %v7795
        %v7854 = vadd.f32 %v7317, %v7349
        %v7855 = vadd.f32 %v7854, %v7381
        %v7856 = vadd.f32 %v7855, %v7413
        %v7857 = vadd.f32 %v7856, %v7445
        %v7858 = vadd.f32 %v7857, %v7477
        %v7859 = vadd.f32 %v7858, %v7509
        %v7860 = vadd.f32 %v7859, %v7541
        %v7861 = vadd.f32 %v7860, %v7573
        %v7862 = vadd.f32 %v7861, %v7605
        %v7863 = vadd.f32 %v7862, %v7637
        %v7864 = vadd.f32 %v7863, %v7669
        %v7865 = vadd.f32 %v7864, %v7701
        %v7866 = vadd.f32 %v7865, %v7733
        %v7867 = vadd.f32 %v7866, %v7765
        %v7868 = vadd.f32 %v7867, %v7797
        %v7869 = vadd.f32 %v7319, %v7351
        %v7870 = vadd.f32 %v7869, %v7383
        %v7871 = vadd.f32 %v7870, %v7415
        %v7872 = vadd.f32 %v7871, %v7447
        %v7873 = vadd.f32 %v7872, %v7479
        %v7874 = vadd.f32 %v7873, %v7511
        %v7875 = vadd.f32 %v7874, %v7543
        %v7876 = vadd.f32 %v7875, %v7575
        %v7877 = vadd.f32 %v7876, %v7607
        %v7878 = vadd.f32 %v7877, %v7639
        %v7879 = vadd.f32 %v7878, %v7671
        %v7880 = vadd.f32 %v7879, %v7703
        %v7881 = vadd.f32 %v7880, %v7735
        %v7882 = vadd.f32 %v7881, %v7767
        %v7883 = vadd.f32 %v7882, %v7799
        %v7884 = vadd.f32 %v7321, %v7353
        %v7885 = vadd.f32 %v7884, %v7385
        %v7886 = vadd.f32 %v7885, %v7417
        %v7887 = vadd.f32 %v7886, %v7449
        %v7888 = vadd.f32 %v7887, %v7481
        %v7889 = vadd.f32 %v7888, %v7513
        %v7890 = vadd.f32 %v7889, %v7545
        %v7891 = vadd.f32 %v7890, %v7577
        %v7892 = vadd.f32 %v7891, %v7609
        %v7893 = vadd.f32 %v7892, %v7641
        %v7894 = vadd.f32 %v7893, %v7673
        %v7895 = vadd.f32 %v7894, %v7705
        %v7896 = vadd.f32 %v7895, %v7737
        %v7897 = vadd.f32 %v7896, %v7769
        %v7898 = vadd.f32 %v7897, %v7801
        %v7899 = vadd.f32 %v7323, %v7355
        %v7900 = vadd.f32 %v7899, %v7387
        %v7901 = vadd.f32 %v7900, %v7419
        %v7902 = vadd.f32 %v7901, %v7451
        %v7903 = vadd.f32 %v7902, %v7483
        %v7904 = vadd.f32 %v7903, %v7515
        %v7905 = vadd.f32 %v7904, %v7547
        %v7906 = vadd.f32 %v7905, %v7579
        %v7907 = vadd.f32 %v7906, %v7611
        %v7908 = vadd.f32 %v7907, %v7643
        %v7909 = vadd.f32 %v7908, %v7675
        %v7910 = vadd.f32 %v7909, %v7707
        %v7911 = vadd.f32 %v7910, %v7739
        %v7912 = vadd.f32 %v7911, %v7771
        %v7913 = vadd.f32 %v7912, %v7803
        %v7914 = vadd.f32 %v7325, %v7357
        %v7915 = vadd.f32 %v7914, %v7389
        %v7916 = vadd.f32 %v7915, %v7421
        %v7917 = vadd.f32 %v7916, %v7453
        %v7918 = vadd.f32 %v7917, %v7485
        %v7919 = vadd.f32 %v7918, %v7517
        %v7920 = vadd.f32 %v7919, %v7549
        %v7921 = vadd.f32 %v7920, %v7581
        %v7922 = vadd.f32 %v7921, %v7613
        %v7923 = vadd.f32 %v7922, %v7645
        %v7924 = vadd.f32 %v7923, %v7677
        %v7925 = vadd.f32 %v7924, %v7709
        %v7926 = vadd.f32 %v7925, %v7741
        %v7927 = vadd.f32 %v7926, %v7773
        %v7928 = vadd.f32 %v7927, %v7805
        %v7929 = vadd.f32 %v7327, %v7359
        %v7930 = vadd.f32 %v7929, %v7391
        %v7931 = vadd.f32 %v7930, %v7423
        %v7932 = vadd.f32 %v7931, %v7455
        %v7933 = vadd.f32 %v7932, %v7487
        %v7934 = vadd.f32 %v7933, %v7519
        %v7935 = vadd.f32 %v7934, %v7551
        %v7936 = vadd.f32 %v7935, %v7583
        %v7937 = vadd.f32 %v7936, %v7615
        %v7938 = vadd.f32 %v7937, %v7647
        %v7939 = vadd.f32 %v7938, %v7679
        %v7940 = vadd.f32 %v7939, %v7711
        %v7941 = vadd.f32 %v7940, %v7743
        %v7942 = vadd.f32 %v7941, %v7775
        %v7943 = vadd.f32 %v7942, %v7807
        %v7944 = vadd.f32 %v7329, %v7361
        %v7945 = vadd.f32 %v7944, %v7393
        %v7946 = vadd.f32 %v7945, %v7425
        %v7947 = vadd.f32 %v7946, %v7457
        %v7948 = vadd.f32 %v7947, %v7489
        %v7949 = vadd.f32 %v7948, %v7521
        %v7950 = vadd.f32 %v7949, %v7553
        %v7951 = vadd.f32 %v7950, %v7585
        %v7952 = vadd.f32 %v7951, %v7617
        %v7953 = vadd.f32 %v7952, %v7649
        %v7954 = vadd.f32 %v7953, %v7681
        %v7955 = vadd.f32 %v7954, %v7713
        %v7956 = vadd.f32 %v7955, %v7745
        %v7957 = vadd.f32 %v7956, %v7777
        %v7958 = vadd.f32 %v7957, %v7809
        %v7959 = vadd.f32 %v7331, %v7363
        %v7960 = vadd.f32 %v7959, %v7395
        %v7961 = vadd.f32 %v7960, %v7427
        %v7962 = vadd.f32 %v7961, %v7459
        %v7963 = vadd.f32 %v7962, %v7491
        %v7964 = vadd.f32 %v7963, %v7523
        %v7965 = vadd.f32 %v7964, %v7555
        %v7966 = vadd.f32 %v7965, %v7587
        %v7967 = vadd.f32 %v7966, %v7619
        %v7968 = vadd.f32 %v7967, %v7651
        %v7969 = vadd.f32 %v7968, %v7683
        %v7970 = vadd.f32 %v7969, %v7715
        %v7971 = vadd.f32 %v7970, %v7747
        %v7972 = vadd.f32 %v7971, %v7779
        %v7973 = vadd.f32 %v7972, %v7811
        %v7974 = vadd.f32 %v7333, %v7365
        %v7975 = vadd.f32 %v7974, %v7397
        %v7976 = vadd.f32 %v7975, %v7429
        %v7977 = vadd.f32 %v7976, %v7461
        %v7978 = vadd.f32 %v7977, %v7493
        %v7979 = vadd.f32 %v7978, %v7525
        %v7980 = vadd.f32 %v7979, %v7557
        %v7981 = vadd.f32 %v7980, %v7589
        %v7982 = vadd.f32 %v7981, %v7621
        %v7983 = vadd.f32 %v7982, %v7653
        %v7984 = vadd.f32 %v7983, %v7685
        %v7985 = vadd.f32 %v7984, %v7717
        %v7986 = vadd.f32 %v7985, %v7749
        %v7987 = vadd.f32 %v7986, %v7781
        %v7988 = vadd.f32 %v7987, %v7813
        %v7989 = vadd.f32 %v7335, %v7367
        %v7990 = vadd.f32 %v7989, %v7399
        %v7991 = vadd.f32 %v7990, %v7431
        %v7992 = vadd.f32 %v7991, %v7463
        %v7993 = vadd.f32 %v7992, %v7495
        %v7994 = vadd.f32 %v7993, %v7527
        %v7995 = vadd.f32 %v7994, %v7559
        %v7996 = vadd.f32 %v7995, %v7591
        %v7997 = vadd.f32 %v7996, %v7623
        %v7998 = vadd.f32 %v7997, %v7655
        %v7999 = vadd.f32 %v7998, %v7687
        %v8000 = vadd.f32 %v7999, %v7719
        %v8001 = vadd.f32 %v8000, %v7751
        %v8002 = vadd.f32 %v8001, %v7783
        %v8003 = vadd.f32 %v8002, %v7815
        %v8004 = vadd.f32 %v7337, %v7369
        %v8005 = vadd.f32 %v8004, %v7401
        %v8006 = vadd.f32 %v8005, %v7433
        %v8007 = vadd.f32 %v8006, %v7465
        %v8008 = vadd.f32 %v8007, %v7497
        %v8009 = vadd.f32 %v8008, %v7529
        %v8010 = vadd.f32 %v8009, %v7561
        %v8011 = vadd.f32 %v8010, %v7593
        %v8012 = vadd.f32 %v8011, %v7625
        %v8013 = vadd.f32 %v8012, %v7657
        %v8014 = vadd.f32 %v8013, %v7689
        %v8015 = vadd.f32 %v8014, %v7721
        %v8016 = vadd.f32 %v8015, %v7753
        %v8017 = vadd.f32 %v8016, %v7785
        %v8018 = vadd.f32 %v8017, %v7817
        %v8019 = vadd.f32 %v7339, %v7371
        %v8020 = vadd.f32 %v8019, %v7403
        %v8021 = vadd.f32 %v8020, %v7435
        %v8022 = vadd.f32 %v8021, %v7467
        %v8023 = vadd.f32 %v8022, %v7499
        %v8024 = vadd.f32 %v8023, %v7531
        %v8025 = vadd.f32 %v8024, %v7563
        %v8026 = vadd.f32 %v8025, %v7595
        %v8027 = vadd.f32 %v8026, %v7627
        %v8028 = vadd.f32 %v8027, %v7659
        %v8029 = vadd.f32 %v8028, %v7691
        %v8030 = vadd.f32 %v8029, %v7723
        %v8031 = vadd.f32 %v8030, %v7755
        %v8032 = vadd.f32 %v8031, %v7787
        %v8033 = vadd.f32 %v8032, %v7819
        %v8034 = vadd.f32 %v7341, %v7373
        %v8035 = vadd.f32 %v8034, %v7405
        %v8036 = vadd.f32 %v8035, %v7437
        %v8037 = vadd.f32 %v8036, %v7469
        %v8038 = vadd.f32 %v8037, %v7501
        %v8039 = vadd.f32 %v8038, %v7533
        %v8040 = vadd.f32 %v8039, %v7565
        %v8041 = vadd.f32 %v8040, %v7597
        %v8042 = vadd.f32 %v8041, %v7629
        %v8043 = vadd.f32 %v8042, %v7661
        %v8044 = vadd.f32 %v8043, %v7693
        %v8045 = vadd.f32 %v8044, %v7725
        %v8046 = vadd.f32 %v8045, %v7757
        %v8047 = vadd.f32 %v8046, %v7789
        %v8048 = vadd.f32 %v8047, %v7821
        %v8049 = vadd.f32 %v7343, %v7375
        %v8050 = vadd.f32 %v8049, %v7407
        %v8051 = vadd.f32 %v8050, %v7439
        %v8052 = vadd.f32 %v8051, %v7471
        %v8053 = vadd.f32 %v8052, %v7503
        %v8054 = vadd.f32 %v8053, %v7535
        %v8055 = vadd.f32 %v8054, %v7567
        %v8056 = vadd.f32 %v8055, %v7599
        %v8057 = vadd.f32 %v8056, %v7631
        %v8058 = vadd.f32 %v8057, %v7663
        %v8059 = vadd.f32 %v8058, %v7695
        %v8060 = vadd.f32 %v8059, %v7727
        %v8061 = vadd.f32 %v8060, %v7759
        %v8062 = vadd.f32 %v8061, %v7791
        %v8063 = vadd.f32 %v8062, %v7823
        %v8064 = vlog2.pop %v7838
        %v8065 = vmul.f32 %v8064, 0.6931472
        %v8066 = vlog2.pop %v7853
        %v8067 = vmul.f32 %v8066, 0.6931472
        %v8068 = vlog2.pop %v7868
        %v8069 = vmul.f32 %v8068, 0.6931472
        %v8070 = vlog2.pop %v7883
        %v8071 = vmul.f32 %v8070, 0.6931472
        %v8072 = vlog2.pop %v7898
        %v8073 = vmul.f32 %v8072, 0.6931472
        %v8074 = vlog2.pop %v7913
        %v8075 = vmul.f32 %v8074, 0.6931472
        %v8076 = vlog2.pop %v7928
        %v8077 = vmul.f32 %v8076, 0.6931472
        %v8078 = vlog2.pop %v7943
        %v8079 = vmul.f32 %v8078, 0.6931472
        %v8080 = vlog2.pop %v7958
        %v8081 = vmul.f32 %v8080, 0.6931472
        %v8082 = vlog2.pop %v7973
        %v8083 = vmul.f32 %v8082, 0.6931472
        %v8084 = vlog2.pop %v7988
        %v8085 = vmul.f32 %v8084, 0.6931472
        %v8086 = vlog2.pop %v8003
        %v8087 = vmul.f32 %v8086, 0.6931472
        %v8088 = vlog2.pop %v8018
        %v8089 = vmul.f32 %v8088, 0.6931472
        %v8090 = vlog2.pop %v8033
        %v8091 = vmul.f32 %v8090, 0.6931472
        %v8092 = vlog2.pop %v8048
        %v8093 = vmul.f32 %v8092, 0.6931472
        %v8094 = vlog2.pop %v8063
        %v8095 = vmul.f32 %v8094, 0.6931472
        %v8096 = vadd.f32 %v6830, %v8065
        %v8097 = vadd.f32 %v6845, %v8067
        %v8098 = vadd.f32 %v6860, %v8069
        %v8099 = vadd.f32 %v6875, %v8071
        %v8100 = vadd.f32 %v6890, %v8073
        %v8101 = vadd.f32 %v6905, %v8075
        %v8102 = vadd.f32 %v6920, %v8077
        %v8103 = vadd.f32 %v6935, %v8079
        %v8104 = vadd.f32 %v6950, %v8081
        %v8105 = vadd.f32 %v6965, %v8083
        %v8106 = vadd.f32 %v6980, %v8085
        %v8107 = vadd.f32 %v6995, %v8087
        %v8108 = vadd.f32 %v7010, %v8089
        %v8109 = vadd.f32 %v7025, %v8091
        %v8110 = vadd.f32 %v7040, %v8093
        %v8111 = vadd.f32 %v7055, %v8095
        %v8112 = vsub.f32 %v6560, %v8096
        %v8113 = vsub.f32 %v6561, %v8097
        %v8114 = vsub.f32 %v6562, %v8098
        %v8115 = vsub.f32 %v6563, %v8099
        %v8116 = vsub.f32 %v6564, %v8100
        %v8117 = vsub.f32 %v6565, %v8101
        %v8118 = vsub.f32 %v6566, %v8102
        %v8119 = vsub.f32 %v6567, %v8103
        %v8120 = vsub.f32 %v6568, %v8104
        %v8121 = vsub.f32 %v6569, %v8105
        %v8122 = vsub.f32 %v6570, %v8106
        %v8123 = vsub.f32 %v6571, %v8107
        %v8124 = vsub.f32 %v6572, %v8108
        %v8125 = vsub.f32 %v6573, %v8109
        %v8126 = vsub.f32 %v6574, %v8110
        %v8127 = vsub.f32 %v6575, %v8111
        %v8128 = vsub.f32 %v6576, %v8096
        %v8129 = vsub.f32 %v6577, %v8097
        %v8130 = vsub.f32 %v6578, %v8098
        %v8131 = vsub.f32 %v6579, %v8099
        %v8132 = vsub.f32 %v6580, %v8100
        %v8133 = vsub.f32 %v6581, %v8101
        %v8134 = vsub.f32 %v6582, %v8102
        %v8135 = vsub.f32 %v6583, %v8103
        %v8136 = vsub.f32 %v6584, %v8104
        %v8137 = vsub.f32 %v6585, %v8105
        %v8138 = vsub.f32 %v6586, %v8106
        %v8139 = vsub.f32 %v6587, %v8107
        %v8140 = vsub.f32 %v6588, %v8108
        %v8141 = vsub.f32 %v6589, %v8109
        %v8142 = vsub.f32 %v6590, %v8110
        %v8143 = vsub.f32 %v6591, %v8111
        %v8144 = vsub.f32 %v6592, %v8096
        %v8145 = vsub.f32 %v6593, %v8097
        %v8146 = vsub.f32 %v6594, %v8098
        %v8147 = vsub.f32 %v6595, %v8099
        %v8148 = vsub.f32 %v6596, %v8100
        %v8149 = vsub.f32 %v6597, %v8101
        %v8150 = vsub.f32 %v6598, %v8102
        %v8151 = vsub.f32 %v6599, %v8103
        %v8152 = vsub.f32 %v6600, %v8104
        %v8153 = vsub.f32 %v6601, %v8105
        %v8154 = vsub.f32 %v6602, %v8106
        %v8155 = vsub.f32 %v6603, %v8107
        %v8156 = vsub.f32 %v6604, %v8108
        %v8157 = vsub.f32 %v6605, %v8109
        %v8158 = vsub.f32 %v6606, %v8110
        %v8159 = vsub.f32 %v6607, %v8111
        %v8160 = vsub.f32 %v6608, %v8096
        %v8161 = vsub.f32 %v6609, %v8097
        %v8162 = vsub.f32 %v6610, %v8098
        %v8163 = vsub.f32 %v6611, %v8099
        %v8164 = vsub.f32 %v6612, %v8100
        %v8165 = vsub.f32 %v6613, %v8101
        %v8166 = vsub.f32 %v6614, %v8102
        %v8167 = vsub.f32 %v6615, %v8103
        %v8168 = vsub.f32 %v6616, %v8104
        %v8169 = vsub.f32 %v6617, %v8105
        %v8170 = vsub.f32 %v6618, %v8106
        %v8171 = vsub.f32 %v6619, %v8107
        %v8172 = vsub.f32 %v6620, %v8108
        %v8173 = vsub.f32 %v6621, %v8109
        %v8174 = vsub.f32 %v6622, %v8110
        %v8175 = vsub.f32 %v6623, %v8111
        %v8176 = vsub.f32 %v6624, %v8096
        %v8177 = vsub.f32 %v6625, %v8097
        %v8178 = vsub.f32 %v6626, %v8098
        %v8179 = vsub.f32 %v6627, %v8099
        %v8180 = vsub.f32 %v6628, %v8100
        %v8181 = vsub.f32 %v6629, %v8101
        %v8182 = vsub.f32 %v6630, %v8102
        %v8183 = vsub.f32 %v6631, %v8103
        %v8184 = vsub.f32 %v6632, %v8104
        %v8185 = vsub.f32 %v6633, %v8105
        %v8186 = vsub.f32 %v6634, %v8106
        %v8187 = vsub.f32 %v6635, %v8107
        %v8188 = vsub.f32 %v6636, %v8108
        %v8189 = vsub.f32 %v6637, %v8109
        %v8190 = vsub.f32 %v6638, %v8110
        %v8191 = vsub.f32 %v6639, %v8111
        %v8192 = vsub.f32 %v6640, %v8096
        %v8193 = vsub.f32 %v6641, %v8097
        %v8194 = vsub.f32 %v6642, %v8098
        %v8195 = vsub.f32 %v6643, %v8099
        %v8196 = vsub.f32 %v6644, %v8100
        %v8197 = vsub.f32 %v6645, %v8101
        %v8198 = vsub.f32 %v6646, %v8102
        %v8199 = vsub.f32 %v6647, %v8103
        %v8200 = vsub.f32 %v6648, %v8104
        %v8201 = vsub.f32 %v6649, %v8105
        %v8202 = vsub.f32 %v6650, %v8106
        %v8203 = vsub.f32 %v6651, %v8107
        %v8204 = vsub.f32 %v6652, %v8108
        %v8205 = vsub.f32 %v6653, %v8109
        %v8206 = vsub.f32 %v6654, %v8110
        %v8207 = vsub.f32 %v6655, %v8111
        %v8208 = vsub.f32 %v6656, %v8096
        %v8209 = vsub.f32 %v6657, %v8097
        %v8210 = vsub.f32 %v6658, %v8098
        %v8211 = vsub.f32 %v6659, %v8099
        %v8212 = vsub.f32 %v6660, %v8100
        %v8213 = vsub.f32 %v6661, %v8101
        %v8214 = vsub.f32 %v6662, %v8102
        %v8215 = vsub.f32 %v6663, %v8103
        %v8216 = vsub.f32 %v6664, %v8104
        %v8217 = vsub.f32 %v6665, %v8105
        %v8218 = vsub.f32 %v6666, %v8106
        %v8219 = vsub.f32 %v6667, %v8107
        %v8220 = vsub.f32 %v6668, %v8108
        %v8221 = vsub.f32 %v6669, %v8109
        %v8222 = vsub.f32 %v6670, %v8110
        %v8223 = vsub.f32 %v6671, %v8111
        %v8224 = vsub.f32 %v6672, %v8096
        %v8225 = vsub.f32 %v6673, %v8097
        %v8226 = vsub.f32 %v6674, %v8098
        %v8227 = vsub.f32 %v6675, %v8099
        %v8228 = vsub.f32 %v6676, %v8100
        %v8229 = vsub.f32 %v6677, %v8101
        %v8230 = vsub.f32 %v6678, %v8102
        %v8231 = vsub.f32 %v6679, %v8103
        %v8232 = vsub.f32 %v6680, %v8104
        %v8233 = vsub.f32 %v6681, %v8105
        %v8234 = vsub.f32 %v6682, %v8106
        %v8235 = vsub.f32 %v6683, %v8107
        %v8236 = vsub.f32 %v6684, %v8108
        %v8237 = vsub.f32 %v6685, %v8109
        %v8238 = vsub.f32 %v6686, %v8110
        %v8239 = vsub.f32 %v6687, %v8111
        %v8240 = vsub.f32 %v6688, %v8096
        %v8241 = vsub.f32 %v6689, %v8097
        %v8242 = vsub.f32 %v6690, %v8098
        %v8243 = vsub.f32 %v6691, %v8099
        %v8244 = vsub.f32 %v6692, %v8100
        %v8245 = vsub.f32 %v6693, %v8101
        %v8246 = vsub.f32 %v6694, %v8102
        %v8247 = vsub.f32 %v6695, %v8103
        %v8248 = vsub.f32 %v6696, %v8104
        %v8249 = vsub.f32 %v6697, %v8105
        %v8250 = vsub.f32 %v6698, %v8106
        %v8251 = vsub.f32 %v6699, %v8107
        %v8252 = vsub.f32 %v6700, %v8108
        %v8253 = vsub.f32 %v6701, %v8109
        %v8254 = vsub.f32 %v6702, %v8110
        %v8255 = vsub.f32 %v6703, %v8111
        %v8256 = vsub.f32 %v6704, %v8096
        %v8257 = vsub.f32 %v6705, %v8097
        %v8258 = vsub.f32 %v6706, %v8098
        %v8259 = vsub.f32 %v6707, %v8099
        %v8260 = vsub.f32 %v6708, %v8100
        %v8261 = vsub.f32 %v6709, %v8101
        %v8262 = vsub.f32 %v6710, %v8102
        %v8263 = vsub.f32 %v6711, %v8103
        %v8264 = vsub.f32 %v6712, %v8104
        %v8265 = vsub.f32 %v6713, %v8105
        %v8266 = vsub.f32 %v6714, %v8106
        %v8267 = vsub.f32 %v6715, %v8107
        %v8268 = vsub.f32 %v6716, %v8108
        %v8269 = vsub.f32 %v6717, %v8109
        %v8270 = vsub.f32 %v6718, %v8110
        %v8271 = vsub.f32 %v6719, %v8111
        %v8272 = vsub.f32 %v6720, %v8096
        %v8273 = vsub.f32 %v6721, %v8097
        %v8274 = vsub.f32 %v6722, %v8098
        %v8275 = vsub.f32 %v6723, %v8099
        %v8276 = vsub.f32 %v6724, %v8100
        %v8277 = vsub.f32 %v6725, %v8101
        %v8278 = vsub.f32 %v6726, %v8102
        %v8279 = vsub.f32 %v6727, %v8103
        %v8280 = vsub.f32 %v6728, %v8104
        %v8281 = vsub.f32 %v6729, %v8105
        %v8282 = vsub.f32 %v6730, %v8106
        %v8283 = vsub.f32 %v6731, %v8107
        %v8284 = vsub.f32 %v6732, %v8108
        %v8285 = vsub.f32 %v6733, %v8109
        %v8286 = vsub.f32 %v6734, %v8110
        %v8287 = vsub.f32 %v6735, %v8111
        %v8288 = vsub.f32 %v6736, %v8096
        %v8289 = vsub.f32 %v6737, %v8097
        %v8290 = vsub.f32 %v6738, %v8098
        %v8291 = vsub.f32 %v6739, %v8099
        %v8292 = vsub.f32 %v6740, %v8100
        %v8293 = vsub.f32 %v6741, %v8101
        %v8294 = vsub.f32 %v6742, %v8102
        %v8295 = vsub.f32 %v6743, %v8103
        %v8296 = vsub.f32 %v6744, %v8104
        %v8297 = vsub.f32 %v6745, %v8105
        %v8298 = vsub.f32 %v6746, %v8106
        %v8299 = vsub.f32 %v6747, %v8107
        %v8300 = vsub.f32 %v6748, %v8108
        %v8301 = vsub.f32 %v6749, %v8109
        %v8302 = vsub.f32 %v6750, %v8110
        %v8303 = vsub.f32 %v6751, %v8111
        %v8304 = vsub.f32 %v6752, %v8096
        %v8305 = vsub.f32 %v6753, %v8097
        %v8306 = vsub.f32 %v6754, %v8098
        %v8307 = vsub.f32 %v6755, %v8099
        %v8308 = vsub.f32 %v6756, %v8100
        %v8309 = vsub.f32 %v6757, %v8101
        %v8310 = vsub.f32 %v6758, %v8102
        %v8311 = vsub.f32 %v6759, %v8103
        %v8312 = vsub.f32 %v6760, %v8104
        %v8313 = vsub.f32 %v6761, %v8105
        %v8314 = vsub.f32 %v6762, %v8106
        %v8315 = vsub.f32 %v6763, %v8107
        %v8316 = vsub.f32 %v6764, %v8108
        %v8317 = vsub.f32 %v6765, %v8109
        %v8318 = vsub.f32 %v6766, %v8110
        %v8319 = vsub.f32 %v6767, %v8111
        %v8320 = vsub.f32 %v6768, %v8096
        %v8321 = vsub.f32 %v6769, %v8097
        %v8322 = vsub.f32 %v6770, %v8098
        %v8323 = vsub.f32 %v6771, %v8099
        %v8324 = vsub.f32 %v6772, %v8100
        %v8325 = vsub.f32 %v6773, %v8101
        %v8326 = vsub.f32 %v6774, %v8102
        %v8327 = vsub.f32 %v6775, %v8103
        %v8328 = vsub.f32 %v6776, %v8104
        %v8329 = vsub.f32 %v6777, %v8105
        %v8330 = vsub.f32 %v6778, %v8106
        %v8331 = vsub.f32 %v6779, %v8107
        %v8332 = vsub.f32 %v6780, %v8108
        %v8333 = vsub.f32 %v6781, %v8109
        %v8334 = vsub.f32 %v6782, %v8110
        %v8335 = vsub.f32 %v6783, %v8111
        %v8336 = vsub.f32 %v6784, %v8096
        %v8337 = vsub.f32 %v6785, %v8097
        %v8338 = vsub.f32 %v6786, %v8098
        %v8339 = vsub.f32 %v6787, %v8099
        %v8340 = vsub.f32 %v6788, %v8100
        %v8341 = vsub.f32 %v6789, %v8101
        %v8342 = vsub.f32 %v6790, %v8102
        %v8343 = vsub.f32 %v6791, %v8103
        %v8344 = vsub.f32 %v6792, %v8104
        %v8345 = vsub.f32 %v6793, %v8105
        %v8346 = vsub.f32 %v6794, %v8106
        %v8347 = vsub.f32 %v6795, %v8107
        %v8348 = vsub.f32 %v6796, %v8108
        %v8349 = vsub.f32 %v6797, %v8109
        %v8350 = vsub.f32 %v6798, %v8110
        %v8351 = vsub.f32 %v6799, %v8111
        %v8352 = vsub.f32 %v6800, %v8096
        %v8353 = vsub.f32 %v6801, %v8097
        %v8354 = vsub.f32 %v6802, %v8098
        %v8355 = vsub.f32 %v6803, %v8099
        %v8356 = vsub.f32 %v6804, %v8100
        %v8357 = vsub.f32 %v6805, %v8101
        %v8358 = vsub.f32 %v6806, %v8102
        %v8359 = vsub.f32 %v6807, %v8103
        %v8360 = vsub.f32 %v6808, %v8104
        %v8361 = vsub.f32 %v6809, %v8105
        %v8362 = vsub.f32 %v6810, %v8106
        %v8363 = vsub.f32 %v6811, %v8107
        %v8364 = vsub.f32 %v6812, %v8108
        %v8365 = vsub.f32 %v6813, %v8109
        %v8366 = vsub.f32 %v6814, %v8110
        %v8367 = vsub.f32 %v6815, %v8111
        %8368 = vst [vmem:[%s329] sm:$0xff] %v8112
        %8369 = vst [vmem:[%s329 + $0x8] sm:$0xff] %v8113
        %8370 = vst [vmem:[%s329 + $0x10] sm:$0xff] %v8114
        %8371 = vst [vmem:[%s329 + $0x18] sm:$0xff] %v8115
        %8372 = vst [vmem:[%s329 + $0x20] sm:$0xff] %v8116
        %8373 = vst [vmem:[%s329 + $0x28] sm:$0xff] %v8117
        %8374 = vst [vmem:[%s329 + $0x30] sm:$0xff] %v8118
        %8375 = vst [vmem:[%s329 + $0x38] sm:$0xff] %v8119
        %8376 = vst [vmem:[%s329 + $0x40] sm:$0xff] %v8120
        %8377 = vst [vmem:[%s329 + $0x48] sm:$0xff] %v8121
        %8378 = vst [vmem:[%s329 + $0x50] sm:$0xff] %v8122
        %8379 = vst [vmem:[%s329 + $0x58] sm:$0xff] %v8123
        %8380 = vst [vmem:[%s329 + $0x60] sm:$0xff] %v8124
        %8381 = vst [vmem:[%s329 + $0x68] sm:$0xff] %v8125
        %8382 = vst [vmem:[%s329 + $0x70] sm:$0xff] %v8126
        %8383 = vst [vmem:[%s329 + $0x78] sm:$0xff] %v8127
        %8384 = vst [vmem:[%s329 + $0x80] sm:$0xff] %v8128
        %8385 = vst [vmem:[%s329 + $0x88] sm:$0xff] %v8129
        %8386 = vst [vmem:[%s329 + $0x90] sm:$0xff] %v8130
        %8387 = vst [vmem:[%s329 + $0x98] sm:$0xff] %v8131
        %8388 = vst [vmem:[%s329 + $0xa0] sm:$0xff] %v8132
        %8389 = vst [vmem:[%s329 + $0xa8] sm:$0xff] %v8133
        %8390 = vst [vmem:[%s329 + $0xb0] sm:$0xff] %v8134
        %8391 = vst [vmem:[%s329 + $0xb8] sm:$0xff] %v8135
        %8392 = vst [vmem:[%s329 + $0xc0] sm:$0xff] %v8136
        %8393 = vst [vmem:[%s329 + $0xc8] sm:$0xff] %v8137
        %8394 = vst [vmem:[%s329 + $0xd0] sm:$0xff] %v8138
        %8395 = vst [vmem:[%s329 + $0xd8] sm:$0xff] %v8139
        %8396 = vst [vmem:[%s329 + $0xe0] sm:$0xff] %v8140
        %8397 = vst [vmem:[%s329 + $0xe8] sm:$0xff] %v8141
        %8398 = vst [vmem:[%s329 + $0xf0] sm:$0xff] %v8142
        %8399 = vst [vmem:[%s329 + $0xf8] sm:$0xff] %v8143
        %8400 = vst [vmem:[%s329 + $0x100] sm:$0xff] %v8144
        %8401 = vst [vmem:[%s329 + $0x108] sm:$0xff] %v8145
        %8402 = vst [vmem:[%s329 + $0x110] sm:$0xff] %v8146
        %8403 = vst [vmem:[%s329 + $0x118] sm:$0xff] %v8147
        %8404 = vst [vmem:[%s329 + $0x120] sm:$0xff] %v8148
        %8405 = vst [vmem:[%s329 + $0x128] sm:$0xff] %v8149
        %8406 = vst [vmem:[%s329 + $0x130] sm:$0xff] %v8150
        %8407 = vst [vmem:[%s329 + $0x138] sm:$0xff] %v8151
        %8408 = vst [vmem:[%s329 + $0x140] sm:$0xff] %v8152
        %8409 = vst [vmem:[%s329 + $0x148] sm:$0xff] %v8153
        %8410 = vst [vmem:[%s329 + $0x150] sm:$0xff] %v8154
        %8411 = vst [vmem:[%s329 + $0x158] sm:$0xff] %v8155
        %8412 = vst [vmem:[%s329 + $0x160] sm:$0xff] %v8156
        %8413 = vst [vmem:[%s329 + $0x168] sm:$0xff] %v8157
        %8414 = vst [vmem:[%s329 + $0x170] sm:$0xff] %v8158
        %8415 = vst [vmem:[%s329 + $0x178] sm:$0xff] %v8159
        %8416 = vst [vmem:[%s329 + $0x180] sm:$0xff] %v8160
        %8417 = vst [vmem:[%s329 + $0x188] sm:$0xff] %v8161
        %8418 = vst [vmem:[%s329 + $0x190] sm:$0xff] %v8162
        %8419 = vst [vmem:[%s329 + $0x198] sm:$0xff] %v8163
        %8420 = vst [vmem:[%s329 + $0x1a0] sm:$0xff] %v8164
        %8421 = vst [vmem:[%s329 + $0x1a8] sm:$0xff] %v8165
        %8422 = vst [vmem:[%s329 + $0x1b0] sm:$0xff] %v8166
        %8423 = vst [vmem:[%s329 + $0x1b8] sm:$0xff] %v8167
        %8424 = vst [vmem:[%s329 + $0x1c0] sm:$0xff] %v8168
        %8425 = vst [vmem:[%s329 + $0x1c8] sm:$0xff] %v8169
        %8426 = vst [vmem:[%s329 + $0x1d0] sm:$0xff] %v8170
        %8427 = vst [vmem:[%s329 + $0x1d8] sm:$0xff] %v8171
        %8428 = vst [vmem:[%s329 + $0x1e0] sm:$0xff] %v8172
        %8429 = vst [vmem:[%s329 + $0x1e8] sm:$0xff] %v8173
        %8430 = vst [vmem:[%s329 + $0x1f0] sm:$0xff] %v8174
        %8431 = vst [vmem:[%s329 + $0x1f8] sm:$0xff] %v8175
        %8432 = vst [vmem:[%s329 + $0x200] sm:$0xff] %v8176
        %8433 = vst [vmem:[%s329 + $0x208] sm:$0xff] %v8177
        %8434 = vst [vmem:[%s329 + $0x210] sm:$0xff] %v8178
        %8435 = vst [vmem:[%s329 + $0x218] sm:$0xff] %v8179
        %8436 = vst [vmem:[%s329 + $0x220] sm:$0xff] %v8180
        %8437 = vst [vmem:[%s329 + $0x228] sm:$0xff] %v8181
        %8438 = vst [vmem:[%s329 + $0x230] sm:$0xff] %v8182
        %8439 = vst [vmem:[%s329 + $0x238] sm:$0xff] %v8183
        %8440 = vst [vmem:[%s329 + $0x240] sm:$0xff] %v8184
        %8441 = vst [vmem:[%s329 + $0x248] sm:$0xff] %v8185
        %8442 = vst [vmem:[%s329 + $0x250] sm:$0xff] %v8186
        %8443 = vst [vmem:[%s329 + $0x258] sm:$0xff] %v8187
        %8444 = vst [vmem:[%s329 + $0x260] sm:$0xff] %v8188
        %8445 = vst [vmem:[%s329 + $0x268] sm:$0xff] %v8189
        %8446 = vst [vmem:[%s329 + $0x270] sm:$0xff] %v8190
        %8447 = vst [vmem:[%s329 + $0x278] sm:$0xff] %v8191
        %8448 = vst [vmem:[%s329 + $0x280] sm:$0xff] %v8192
        %8449 = vst [vmem:[%s329 + $0x288] sm:$0xff] %v8193
        %8450 = vst [vmem:[%s329 + $0x290] sm:$0xff] %v8194
        %8451 = vst [vmem:[%s329 + $0x298] sm:$0xff] %v8195
        %8452 = vst [vmem:[%s329 + $0x2a0] sm:$0xff] %v8196
        %8453 = vst [vmem:[%s329 + $0x2a8] sm:$0xff] %v8197
        %8454 = vst [vmem:[%s329 + $0x2b0] sm:$0xff] %v8198
        %8455 = vst [vmem:[%s329 + $0x2b8] sm:$0xff] %v8199
        %8456 = vst [vmem:[%s329 + $0x2c0] sm:$0xff] %v8200
        %8457 = vst [vmem:[%s329 + $0x2c8] sm:$0xff] %v8201
        %8458 = vst [vmem:[%s329 + $0x2d0] sm:$0xff] %v8202
        %8459 = vst [vmem:[%s329 + $0x2d8] sm:$0xff] %v8203
        %8460 = vst [vmem:[%s329 + $0x2e0] sm:$0xff] %v8204
        %8461 = vst [vmem:[%s329 + $0x2e8] sm:$0xff] %v8205
        %8462 = vst [vmem:[%s329 + $0x2f0] sm:$0xff] %v8206
        %8463 = vst [vmem:[%s329 + $0x2f8] sm:$0xff] %v8207
        %8464 = vst [vmem:[%s329 + $0x300] sm:$0xff] %v8208
        %8465 = vst [vmem:[%s329 + $0x308] sm:$0xff] %v8209
        %8466 = vst [vmem:[%s329 + $0x310] sm:$0xff] %v8210
        %8467 = vst [vmem:[%s329 + $0x318] sm:$0xff] %v8211
        %8468 = vst [vmem:[%s329 + $0x320] sm:$0xff] %v8212
        %8469 = vst [vmem:[%s329 + $0x328] sm:$0xff] %v8213
        %8470 = vst [vmem:[%s329 + $0x330] sm:$0xff] %v8214
        %8471 = vst [vmem:[%s329 + $0x338] sm:$0xff] %v8215
        %8472 = vst [vmem:[%s329 + $0x340] sm:$0xff] %v8216
        %8473 = vst [vmem:[%s329 + $0x348] sm:$0xff] %v8217
        %8474 = vst [vmem:[%s329 + $0x350] sm:$0xff] %v8218
        %8475 = vst [vmem:[%s329 + $0x358] sm:$0xff] %v8219
        %8476 = vst [vmem:[%s329 + $0x360] sm:$0xff] %v8220
        %8477 = vst [vmem:[%s329 + $0x368] sm:$0xff] %v8221
        %8478 = vst [vmem:[%s329 + $0x370] sm:$0xff] %v8222
        %8479 = vst [vmem:[%s329 + $0x378] sm:$0xff] %v8223
        %8480 = vst [vmem:[%s329 + $0x380] sm:$0xff] %v8224
        %8481 = vst [vmem:[%s329 + $0x388] sm:$0xff] %v8225
        %8482 = vst [vmem:[%s329 + $0x390] sm:$0xff] %v8226
        %8483 = vst [vmem:[%s329 + $0x398] sm:$0xff] %v8227
        %8484 = vst [vmem:[%s329 + $0x3a0] sm:$0xff] %v8228
        %8485 = vst [vmem:[%s329 + $0x3a8] sm:$0xff] %v8229
        %8486 = vst [vmem:[%s329 + $0x3b0] sm:$0xff] %v8230
        %8487 = vst [vmem:[%s329 + $0x3b8] sm:$0xff] %v8231
        %8488 = vst [vmem:[%s329 + $0x3c0] sm:$0xff] %v8232
        %8489 = vst [vmem:[%s329 + $0x3c8] sm:$0xff] %v8233
        %8490 = vst [vmem:[%s329 + $0x3d0] sm:$0xff] %v8234
        %8491 = vst [vmem:[%s329 + $0x3d8] sm:$0xff] %v8235
        %8492 = vst [vmem:[%s329 + $0x3e0] sm:$0xff] %v8236
        %8493 = vst [vmem:[%s329 + $0x3e8] sm:$0xff] %v8237
        %8494 = vst [vmem:[%s329 + $0x3f0] sm:$0xff] %v8238
        %8495 = vst [vmem:[%s329 + $0x3f8] sm:$0xff] %v8239
        %8496 = vst [vmem:[%s329 + $0x400] sm:$0xff] %v8240
        %8497 = vst [vmem:[%s329 + $0x408] sm:$0xff] %v8241
        %8498 = vst [vmem:[%s329 + $0x410] sm:$0xff] %v8242
        %8499 = vst [vmem:[%s329 + $0x418] sm:$0xff] %v8243
        %8500 = vst [vmem:[%s329 + $0x420] sm:$0xff] %v8244
        %8501 = vst [vmem:[%s329 + $0x428] sm:$0xff] %v8245
        %8502 = vst [vmem:[%s329 + $0x430] sm:$0xff] %v8246
        %8503 = vst [vmem:[%s329 + $0x438] sm:$0xff] %v8247
        %8504 = vst [vmem:[%s329 + $0x440] sm:$0xff] %v8248
        %8505 = vst [vmem:[%s329 + $0x448] sm:$0xff] %v8249
        %8506 = vst [vmem:[%s329 + $0x450] sm:$0xff] %v8250
        %8507 = vst [vmem:[%s329 + $0x458] sm:$0xff] %v8251
        %8508 = vst [vmem:[%s329 + $0x460] sm:$0xff] %v8252
        %8509 = vst [vmem:[%s329 + $0x468] sm:$0xff] %v8253
        %8510 = vst [vmem:[%s329 + $0x470] sm:$0xff] %v8254
        %8511 = vst [vmem:[%s329 + $0x478] sm:$0xff] %v8255
        %8512 = vst [vmem:[%s329 + $0x480] sm:$0xff] %v8256
        %8513 = vst [vmem:[%s329 + $0x488] sm:$0xff] %v8257
        %8514 = vst [vmem:[%s329 + $0x490] sm:$0xff] %v8258
        %8515 = vst [vmem:[%s329 + $0x498] sm:$0xff] %v8259
        %8516 = vst [vmem:[%s329 + $0x4a0] sm:$0xff] %v8260
        %8517 = vst [vmem:[%s329 + $0x4a8] sm:$0xff] %v8261
        %8518 = vst [vmem:[%s329 + $0x4b0] sm:$0xff] %v8262
        %8519 = vst [vmem:[%s329 + $0x4b8] sm:$0xff] %v8263
        %8520 = vst [vmem:[%s329 + $0x4c0] sm:$0xff] %v8264
        %8521 = vst [vmem:[%s329 + $0x4c8] sm:$0xff] %v8265
        %8522 = vst [vmem:[%s329 + $0x4d0] sm:$0xff] %v8266
        %8523 = vst [vmem:[%s329 + $0x4d8] sm:$0xff] %v8267
        %8524 = vst [vmem:[%s329 + $0x4e0] sm:$0xff] %v8268
        %8525 = vst [vmem:[%s329 + $0x4e8] sm:$0xff] %v8269
        %8526 = vst [vmem:[%s329 + $0x4f0] sm:$0xff] %v8270
        %8527 = vst [vmem:[%s329 + $0x4f8] sm:$0xff] %v8271
        %8528 = vst [vmem:[%s329 + $0x500] sm:$0xff] %v8272
        %8529 = vst [vmem:[%s329 + $0x508] sm:$0xff] %v8273
        %8530 = vst [vmem:[%s329 + $0x510] sm:$0xff] %v8274
        %8531 = vst [vmem:[%s329 + $0x518] sm:$0xff] %v8275
        %8532 = vst [vmem:[%s329 + $0x520] sm:$0xff] %v8276
        %8533 = vst [vmem:[%s329 + $0x528] sm:$0xff] %v8277
        %8534 = vst [vmem:[%s329 + $0x530] sm:$0xff] %v8278
        %8535 = vst [vmem:[%s329 + $0x538] sm:$0xff] %v8279
        %8536 = vst [vmem:[%s329 + $0x540] sm:$0xff] %v8280
        %8537 = vst [vmem:[%s329 + $0x548] sm:$0xff] %v8281
        %8538 = vst [vmem:[%s329 + $0x550] sm:$0xff] %v8282
        %8539 = vst [vmem:[%s329 + $0x558] sm:$0xff] %v8283
        %8540 = vst [vmem:[%s329 + $0x560] sm:$0xff] %v8284
        %8541 = vst [vmem:[%s329 + $0x568] sm:$0xff] %v8285
        %8542 = vst [vmem:[%s329 + $0x570] sm:$0xff] %v8286
        %8543 = vst [vmem:[%s329 + $0x578] sm:$0xff] %v8287
        %8544 = vst [vmem:[%s329 + $0x580] sm:$0xff] %v8288
        %8545 = vst [vmem:[%s329 + $0x588] sm:$0xff] %v8289
        %8546 = vst [vmem:[%s329 + $0x590] sm:$0xff] %v8290
        %8547 = vst [vmem:[%s329 + $0x598] sm:$0xff] %v8291
        %8548 = vst [vmem:[%s329 + $0x5a0] sm:$0xff] %v8292
        %8549 = vst [vmem:[%s329 + $0x5a8] sm:$0xff] %v8293
        %8550 = vst [vmem:[%s329 + $0x5b0] sm:$0xff] %v8294
        %8551 = vst [vmem:[%s329 + $0x5b8] sm:$0xff] %v8295
        %8552 = vst [vmem:[%s329 + $0x5c0] sm:$0xff] %v8296
        %8553 = vst [vmem:[%s329 + $0x5c8] sm:$0xff] %v8297
        %8554 = vst [vmem:[%s329 + $0x5d0] sm:$0xff] %v8298
        %8555 = vst [vmem:[%s329 + $0x5d8] sm:$0xff] %v8299
        %8556 = vst [vmem:[%s329 + $0x5e0] sm:$0xff] %v8300
        %8557 = vst [vmem:[%s329 + $0x5e8] sm:$0xff] %v8301
        %8558 = vst [vmem:[%s329 + $0x5f0] sm:$0xff] %v8302
        %8559 = vst [vmem:[%s329 + $0x5f8] sm:$0xff] %v8303
        %8560 = vst [vmem:[%s329 + $0x600] sm:$0xff] %v8304
        %8561 = vst [vmem:[%s329 + $0x608] sm:$0xff] %v8305
        %8562 = vst [vmem:[%s329 + $0x610] sm:$0xff] %v8306
        %8563 = vst [vmem:[%s329 + $0x618] sm:$0xff] %v8307
        %8564 = vst [vmem:[%s329 + $0x620] sm:$0xff] %v8308
        %8565 = vst [vmem:[%s329 + $0x628] sm:$0xff] %v8309
        %8566 = vst [vmem:[%s329 + $0x630] sm:$0xff] %v8310
        %8567 = vst [vmem:[%s329 + $0x638] sm:$0xff] %v8311
        %8568 = vst [vmem:[%s329 + $0x640] sm:$0xff] %v8312
        %8569 = vst [vmem:[%s329 + $0x648] sm:$0xff] %v8313
        %8570 = vst [vmem:[%s329 + $0x650] sm:$0xff] %v8314
        %8571 = vst [vmem:[%s329 + $0x658] sm:$0xff] %v8315
        %8572 = vst [vmem:[%s329 + $0x660] sm:$0xff] %v8316
        %8573 = vst [vmem:[%s329 + $0x668] sm:$0xff] %v8317
        %8574 = vst [vmem:[%s329 + $0x670] sm:$0xff] %v8318
        %8575 = vst [vmem:[%s329 + $0x678] sm:$0xff] %v8319
        %8576 = vst [vmem:[%s329 + $0x680] sm:$0xff] %v8320
        %8577 = vst [vmem:[%s329 + $0x688] sm:$0xff] %v8321
        %8578 = vst [vmem:[%s329 + $0x690] sm:$0xff] %v8322
        %8579 = vst [vmem:[%s329 + $0x698] sm:$0xff] %v8323
        %8580 = vst [vmem:[%s329 + $0x6a0] sm:$0xff] %v8324
        %8581 = vst [vmem:[%s329 + $0x6a8] sm:$0xff] %v8325
        %8582 = vst [vmem:[%s329 + $0x6b0] sm:$0xff] %v8326
        %8583 = vst [vmem:[%s329 + $0x6b8] sm:$0xff] %v8327
        %8584 = vst [vmem:[%s329 + $0x6c0] sm:$0xff] %v8328
        %8585 = vst [vmem:[%s329 + $0x6c8] sm:$0xff] %v8329
        %8586 = vst [vmem:[%s329 + $0x6d0] sm:$0xff] %v8330
        %8587 = vst [vmem:[%s329 + $0x6d8] sm:$0xff] %v8331
        %8588 = vst [vmem:[%s329 + $0x6e0] sm:$0xff] %v8332
        %8589 = vst [vmem:[%s329 + $0x6e8] sm:$0xff] %v8333
        %8590 = vst [vmem:[%s329 + $0x6f0] sm:$0xff] %v8334
        %8591 = vst [vmem:[%s329 + $0x6f8] sm:$0xff] %v8335
        %8592 = vst [vmem:[%s329 + $0x700] sm:$0xff] %v8336
        %8593 = vst [vmem:[%s329 + $0x708] sm:$0xff] %v8337
        %8594 = vst [vmem:[%s329 + $0x710] sm:$0xff] %v8338
        %8595 = vst [vmem:[%s329 + $0x718] sm:$0xff] %v8339
        %8596 = vst [vmem:[%s329 + $0x720] sm:$0xff] %v8340
        %8597 = vst [vmem:[%s329 + $0x728] sm:$0xff] %v8341
        %8598 = vst [vmem:[%s329 + $0x730] sm:$0xff] %v8342
        %8599 = vst [vmem:[%s329 + $0x738] sm:$0xff] %v8343
        %8600 = vst [vmem:[%s329 + $0x740] sm:$0xff] %v8344
        %8601 = vst [vmem:[%s329 + $0x748] sm:$0xff] %v8345
        %8602 = vst [vmem:[%s329 + $0x750] sm:$0xff] %v8346
        %8603 = vst [vmem:[%s329 + $0x758] sm:$0xff] %v8347
        %8604 = vst [vmem:[%s329 + $0x760] sm:$0xff] %v8348
        %8605 = vst [vmem:[%s329 + $0x768] sm:$0xff] %v8349
        %8606 = vst [vmem:[%s329 + $0x770] sm:$0xff] %v8350
        %8607 = vst [vmem:[%s329 + $0x778] sm:$0xff] %v8351
        %8608 = vst [vmem:[%s329 + $0x780] sm:$0xff] %v8352
        %8609 = vst [vmem:[%s329 + $0x788] sm:$0xff] %v8353
        %8610 = vst [vmem:[%s329 + $0x790] sm:$0xff] %v8354
        %8611 = vst [vmem:[%s329 + $0x798] sm:$0xff] %v8355
        %8612 = vst [vmem:[%s329 + $0x7a0] sm:$0xff] %v8356
        %8613 = vst [vmem:[%s329 + $0x7a8] sm:$0xff] %v8357
        %8614 = vst [vmem:[%s329 + $0x7b0] sm:$0xff] %v8358
        %8615 = vst [vmem:[%s329 + $0x7b8] sm:$0xff] %v8359
        %8616 = vst [vmem:[%s329 + $0x7c0] sm:$0xff] %v8360
        %8617 = vst [vmem:[%s329 + $0x7c8] sm:$0xff] %v8361
        %8618 = vst [vmem:[%s329 + $0x7d0] sm:$0xff] %v8362
        %8619 = vst [vmem:[%s329 + $0x7d8] sm:$0xff] %v8363
        %8620 = vst [vmem:[%s329 + $0x7e0] sm:$0xff] %v8364
        %8621 = vst [vmem:[%s329 + $0x7e8] sm:$0xff] %v8365
        %8622 = vst [vmem:[%s329 + $0x7f0] sm:$0xff] %v8366
        %8623 = vst [vmem:[%s329 + $0x7f8] sm:$0xff] %v8367
        %s8624 = sand.u32 %s160, 1
        %s8625 = scalar_lea.sflag [#allocation4], %s8624
        %s8626 = sand.u32 %s160, 1
        %s8627 = smul.addr %s8626, 2048
        %s8628 = scalar_lea.vmem [#allocation8], %s8627
        // Predicated region
        $region49: #{tpu_custom_call.1} parent=35 // pred_check
          %p8629 = pneg %p170
        $region50: #{tpu_custom_call.1} parent=35 // pred_check_branch
          %8631 = sbr.rel (%p8629) target = $region52
        $region51: #{tpu_custom_call.1} parent=35 // pred_region
          %s8632 = smul.u32 16, %s30
          %8634 = vsyncadd %s8625, 0
          %s8635 = sadd.s32 %s31, %s8632
          %s8636 = smul.addr %s29, 256
          %s8637 = sadd.s32 %s8635, %s8636
          %s8638 = smul.addr %s8637, 8
          %s8639 = scalar_lea.hbm %s4, %s8638
          %s8640 = sshll.u32 %s8628, 4
          %s8641 = int_to_ptr.vmem [resolvable:$true] %s8640
          %s8642 = sshll.u32 %s8639, 4
          %s8643 = int_to_ptr.hbm [resolvable:$true] %s8642
          %8648 = dma.vmem_to_hbm [thread:$0]  %s8641, 32768, %s8643, %s8625, 128, 128, 8
        $region52: #{tpu_custom_call.1} parent=35 // pred_fallthru
          _
      $region36: #{tpu_custom_call.1} parent=5 // pred_fallthru
        _
      %p8649 = scmp.le.s32.totalorder 2, %s19
      // Predicated region
      $region53: #{tpu_custom_call.1} parent=5 // pred_check
        %p8650 = pneg %p8649
      $region54: #{tpu_custom_call.1} parent=5 // pred_check_branch
        %8652 = sbr.rel (%p8650) target = $region56
      $region55: #{tpu_custom_call.1} parent=5 // pred_region
        %s8653 = ssub.s32 %s19, 2
        // Predicated region
        $region57: #{tpu_custom_call.1} parent=55 // pred_check
          %p8654 = pneg %p176
        $region58: #{tpu_custom_call.1} parent=55 // pred_check_branch
          %8656 = sbr.rel (%p8654) target = $region60
        $region59: #{tpu_custom_call.1} parent=55 // pred_region
          %s8657 = sand.u32 %s161, 1
          %s8658 = scalar_lea.sflag [#allocation4], %s8657
          %s8659 = sand.u32 %s161, 1
          %s8660 = smul.addr %s8659, 2048
          %s8661 = scalar_lea.vmem [#allocation8], %s8660
          %8663 = dma.done %s8658, 32768
        $region60: #{tpu_custom_call.1} parent=55 // pred_fallthru
          _
      $region56: #{tpu_custom_call.1} parent=5 // pred_fallthru
        _
    $region6: #{tpu_custom_call.1} parent=1 // loop_footer
      %s23 = sadd.s32 1, %s19
    $region7: #{tpu_custom_call.1} parent=1 // loop_footer_branch
      %18 = sbr.rel target = $region3
    $region8: #{tpu_custom_call.1} parent=1 // loop_exit
      _
    %8664 = vsyncpa [#allocation3], 1
    %s8665 = scalar_lea.sflag [#allocation3], 1
    %8666 = vsyncpa %s8665, 1
    %8667 = vsyncpa [#allocation6], 1
    %s8668 = scalar_lea.sflag [#allocation6], 1
    %8669 = vsyncpa %s8668, 1
    %8670 = vsyncpa [#allocation4], 1
    %s8671 = scalar_lea.sflag [#allocation4], 1
    %8672 = vsyncpa %s8671, 1

</llo_original>
